<compile_context>
chip_gen: v7x
topology: tpu7x:2x2x1
jax: 0.10.0
libtpu: 0.0.40
codegen_flags: <defaults>
</compile_context>

<pallas_src>
import numpy as np

import jax
import jax.numpy as jnp
from jax.experimental import pallas as pl
from jax.experimental.pallas import tpu as pltpu

# ---- module configuration ---------------------------------------------------
DIMENSION = 10            # `dimension` global
LENGTH = 20               # `length` global
D_MODEL = 16
N_HEADS = 2
D_K = 8
D_V = 8                   # forward is only shape-valid when d_k == d_v
SEQ = 12                  # width of the Q/K conv inputs
SEQ_P = SEQ + 2           # Conv1d(k=3, padding=2): out_len = 14
QK_CH = N_HEADS * D_K     # 16
HD_V = N_HEADS * D_V      # 16
CTX_ROWS = (N_HEADS * D_K * LENGTH) // HD_V   # 20

assert D_K == D_V, "torch forward is only shape-consistent when d_k == d_v"

# packed input-feature layout (one column per batch element)
XQ_OFF, XK_OFF, XV_OFF = 0, 160, 320     # padded Q (10x16), padded K, V (20x10)
ONE_ROW = 520                            # constant 1.0 row (bias column of W1)
F_IN = 528                               # padded to a multiple of 8

# stage-1 projected-feature layout (rows of the [768, TB] slab)
QV_OFF = 0      # 224 rows: flat (channel, width) conv output == torch .view flat
KV_OFF = 224    # 224 rows
WV_OFF = 448    # 320 rows: order (head, e, l)  ->  W_V(v_fc(V))[l, h*8+e]
F_MID = 768

F_CTX = 320     # context rows, order (head, d, l)
F_OUT = 320     # output rows, order (r, m) == row-major (20, 16)


# =============================================================================
# Kernel: one grid step = TB batch elements (batch on lanes).
# =============================================================================
def _mha_kernel(x_ref, w1_ref, wfin_ref, out_ref, attn_ref, feat_ref, ctx_ref):
    f32 = jnp.float32
    tb = x_ref.shape[1]

    # ---- 1. all projections as ONE MXU matmul: [768,528] @ [528,TB] ---------
    feat_ref[...] = jnp.dot(w1_ref[...], x_ref[...], preferred_element_type=f32)

    # ---- 2. per-head scores: contract over the 14 conv positions (VPU, batch
    #         on lanes).  Only the within-head blocks are ever computed, so no
    #         masking is needed. --------------------------------------------
    s0 = jnp.zeros((D_K, D_K, tb), f32)
    s1 = jnp.zeros((D_K, D_K, tb), f32)
    for s in range(SEQ_P):
        q = feat_ref[QV_OFF + s * QK_CH: QV_OFF + (s + 1) * QK_CH, :]   # [16,TB]
        k = feat_ref[KV_OFF + s * QK_CH: KV_OFF + (s + 1) * QK_CH, :]
        s0 = s0 + q[0:D_K][:, None, :] * k[0:D_K][None, :, :]
        s1 = s1 + q[D_K:QK_CH][:, None, :] * k[D_K:QK_CH][None, :, :]

    # ---- 3. softmax over the key dim (manual reductions: cheap + safe) ------
    def softmax_e(sc):                          # sc: [8, 8, TB]
        m = sc[:, 0:1, :]
        for e in range(1, D_K):
            m = jnp.maximum(m, sc[:, e:e + 1, :])
        p = jnp.exp(sc - m)
        den = p[:, 0:1, :]
        for e in range(1, D_K):
            den = den + p[:, e:e + 1, :]
        return p / den

    a0 = softmax_e(s0)                          # [8, 8, TB]
    a1 = softmax_e(s1)
    attn_ref[0:D_K] = a0                        # rows = h*8 + d, cols = e
    attn_ref[D_K:QK_CH] = a1

    # ---- 4. context = attn @ v_s  (VPU, batch on lanes) ----------------------
    c0 = jnp.zeros((D_K, LENGTH, tb), f32)
    c1 = jnp.zeros((D_K, LENGTH, tb), f32)
    for e in range(D_V):
        v0 = feat_ref[WV_OFF + e * LENGTH: WV_OFF + (e + 1) * LENGTH, :]
        v1 = feat_ref[WV_OFF + 160 + e * LENGTH:
                      WV_OFF + 160 + (e + 1) * LENGTH, :]
        c0 = c0 + a0[:, e:e + 1, :] * v0[None, :, :]
        c1 = c1 + a1[:, e:e + 1, :] * v1[None, :, :]

    for d in range(D_K):                        # context rows: h*160 + d*20 + l
        ctx_ref[d * LENGTH: (d + 1) * LENGTH, :] = c0[d]
        ctx_ref[160 + d * LENGTH: 160 + (d + 1) * LENGTH, :] = c1[d]

    # ---- 5. torch `.transpose(1,2).contiguous().view()` + W_O, folded into a
    #         single precomputed [320,320] matrix (MXU). ----------------------
    out_ref[...] = jnp.dot(wfin_ref[...], ctx_ref[...], preferred_element_type=f32)


# =============================================================================
# Wrapper-side algebraic precomposition of all the weights.
# =============================================================================
def _build_tables(params):
    f32 = jnp.float32

    def conv_matrix(dw, db, pw, pb):
        # depthwise(k=3,pad=2) o pointwise(1x1) as ONE dense matrix acting on the
        # zero-padded flattened input [10*16] -> flattened NCW output [16*14].
        wf = pw[:, :, None] * dw[None, :, :]                    # [16, 10, 3]
        bf = pw @ db[:, 0] + pb[:, 0]                           # [16]
        m = jnp.zeros((QK_CH, SEQ_P, DIMENSION, SEQ + 4), f32)
        for t in range(3):
            sel = np.zeros((SEQ_P, SEQ + 4), np.float32)
            sel[np.arange(SEQ_P), np.arange(SEQ_P) + t] = 1.0
            m = m + wf[:, None, :, t:t + 1] * jnp.asarray(sel)[None, :, None, :]
        return (m.reshape(QK_CH * SEQ_P, DIMENSION * (SEQ + 4)),
                jnp.repeat(bf, SEQ_P))

    aq, bq = conv_matrix(params["conv1_w"], params["conv1_b"],
                         params["conv1_5_w"], params["conv1_5_b"])
    ak, bk = conv_matrix(params["conv2_w"], params["conv2_b"],
                         params["conv2_5_w"], params["conv2_5_b"])
    scale = D_K ** -0.5                       # fold 1/sqrt(d_k) into the Q rows
    aq = aq * scale
    bq = bq * scale

    # v_fc composed with W_V (exact: no nonlinearity in between)
    w_comb = params["wv_w"] @ params["v_fc_w"]                  # [16, 10]
    b_comb = params["wv_w"] @ params["v_fc_b"][0]               # [16]
    # rows (h,e,l) -> value wv[l, h*8+e];  cols (l', m) of V.reshape(20*10)
    av = (w_comb[:, None, None, :] *
          jnp.eye(LENGTH, dtype=f32)[None, :, :, None]
          ).reshape(HD_V * LENGTH, LENGTH * DIMENSION)          # [320, 200]
    bv = jnp.repeat(b_comb, LENGTH)

    w1 = jnp.zeros((F_MID, F_IN), f32)
    w1 = w1.at[QV_OFF:QV_OFF + 224, XQ_OFF:XQ_OFF + 160].set(aq)
    w1 = w1.at[KV_OFF:KV_OFF + 224, XK_OFF:XK_OFF + 160].set(ak)
    w1 = w1.at[WV_OFF:WV_OFF + 320, XV_OFF:XV_OFF + 200].set(av)
    w1 = w1.at[QV_OFF:QV_OFF + 224, ONE_ROW].set(bq)
    w1 = w1.at[KV_OFF:KV_OFF + 224, ONE_ROW].set(bk)
    w1 = w1.at[WV_OFF:WV_OFF + 320, ONE_ROW].set(bv)

    # context rows (h, d, l) -> torch raw-memory order (d, h, l) -> rows of 16
    # -> W_O.   wfin = blockdiag_20(W_O) @ permutation.
    p = np.arange(F_CTX)
    h = p // 160
    d = (p % 160) // LENGTH
    l = p % LENGTH
    f = d * (N_HEADS * LENGTH) + h * LENGTH + l
    perm = np.zeros((F_CTX, F_CTX), np.float32)
    perm[f, p] = 1.0
    wfin = jnp.kron(jnp.eye(CTX_ROWS, dtype=f32), params["wo_w"]) @ jnp.asarray(perm)
    return w1, wfin


# =============================================================================
# Forward wrapper: one pallas_call, batch blocked on a "parallel" grid axis.
# =============================================================================
@jax.jit
def multihead_attention_forward(params, Q, K, V):
    f32 = jnp.float32
    bs = Q.shape[0]
    w1, wfin = _build_tables(params)

    # batch blocking: lane-dense batch, TB elements per grid step
    if bs <= 128:
        tb, bs_pad = bs, bs
    else:
        tb = 128
        bs_pad = ((bs + 127) // 128) * 128

    qp = jnp.pad(Q.astype(f32), ((0, 0), (0, 0), (2, 2)))   # conv padding=2
    kp = jnp.pad(K.astype(f32), ((0, 0), (0, 0), (2, 2)))
    x = jnp.concatenate(
        [qp.reshape(bs, DIMENSION * (SEQ + 4)),
         kp.reshape(bs, DIMENSION * (SEQ + 4)),
         V.astype(f32).reshape(bs, LENGTH * DIMENSION),
         jnp.ones((bs, 1), f32),
         jnp.zeros((bs, F_IN - ONE_ROW - 1), f32)], axis=1).T    # [528, bs]
    if bs_pad > bs:
        x = jnp.pad(x, ((0, 0), (0, bs_pad - bs)))

    out_flat, attn_sl = pl.pallas_call(
        _mha_kernel,
        out_shape=(jax.ShapeDtypeStruct((F_OUT, bs_pad), f32),
                   jax.ShapeDtypeStruct((QK_CH, D_K, bs_pad), f32)),
        grid=(bs_pad // tb,),
        in_specs=[pl.BlockSpec((F_IN, tb), lambda i: (0, i)),      # packed inputs
                  pl.BlockSpec((F_MID, F_IN), lambda i: (0, 0)),   # W1 slab
                  pl.BlockSpec((F_OUT, F_CTX), lambda i: (0, 0))], # Wfin slab
        out_specs=(pl.BlockSpec((F_OUT, tb), lambda i: (0, i)),
                   pl.BlockSpec((QK_CH, D_K, tb), lambda i: (0, 0, i))),
        scratch_shapes=[pltpu.VMEM((F_MID, tb), f32),
                        pltpu.VMEM((F_CTX, tb), f32)],
        compiler_params=pltpu.CompilerParams(
            dimension_semantics=("parallel",)),
    )(x, w1, wfin)

    output = out_flat[:, :bs].T.reshape(bs, CTX_ROWS, D_MODEL)
    attn = jnp.transpose(attn_sl[:, :, :bs], (2, 0, 1)).reshape(
        bs, N_HEADS, D_K, D_K)
    return output, attn


# =============================================================================
# Pure-JAX reference (matches the torch forward; correctness check).
# =============================================================================
def reference_forward(params, Q, K, V):
    def dw_pw(x, dw, db, pw, pb):
        xp = jnp.pad(x, ((0, 0), (0, 0), (2, 2)))
        lp = x.shape[-1] + 2
        y = (dw[None, :, 0:1] * xp[:, :, 0:lp]
             + dw[None, :, 1:2] * xp[:, :, 1:lp + 1]
             + dw[None, :, 2:3] * xp[:, :, 2:lp + 2]) + db[None]
        return jnp.einsum("oc,bcl->bol", pw, y) + pb[None]

    bs = Q.shape[0]
    wq_out = dw_pw(Q, params["conv1_w"], params["conv1_b"],
                   params["conv1_5_w"], params["conv1_5_b"])
    wk_out = dw_pw(K, params["conv2_w"], params["conv2_b"],
                   params["conv2_5_w"], params["conv2_5_b"])
    q_s = jnp.transpose(wq_out.reshape(bs, SEQ_P, N_HEADS, D_K), (0, 2, 3, 1))
    k_s = jnp.transpose(wk_out.reshape(bs, SEQ_P, N_HEADS, D_K), (0, 2, 1, 3))
    vfc = V @ params["v_fc_w"].T + params["v_fc_b"]
    wv = vfc @ params["wv_w"].T
    v_s = jnp.transpose(wv.reshape(bs, LENGTH, N_HEADS, D_V), (0, 2, 3, 1))
    scores = jnp.einsum("bhdl,bhle->bhde", q_s, k_s) / (D_K ** 0.5)
    attn = jax.nn.softmax(scores, axis=-1)
    context = jnp.einsum("bhde,bhel->bhdl", attn, v_s)
    ctx_flat = jnp.transpose(context, (0, 2, 1, 3)).reshape(bs, -1, N_HEADS * D_V)
    return ctx_flat @ params["wo_w"].T, attn


# =============================================================================
def make_params(key):
    keys = jax.random.split(key, 12)
    s = 0.1

    def n(k, shape):
        return s * jax.random.normal(k, shape, dtype=jnp.float32)

    return {
        # depthwise Conv1d(10,10,3,groups=10): weight [10,1,3] -> stored [10,3]
        "conv1_w": n(keys[0], (DIMENSION, 3)),
        "conv1_b": n(keys[1], (DIMENSION, 1)),
        # pointwise Conv1d(10, H*d_k, 1): weight [H*d_k,10,1] -> [H*d_k,10]
        "conv1_5_w": n(keys[2], (QK_CH, DIMENSION)),
        "conv1_5_b": n(keys[3], (QK_CH, 1)),
        "conv2_w": n(keys[4], (DIMENSION, 3)),
        "conv2_b": n(keys[5], (DIMENSION, 1)),
        "conv2_5_w": n(keys[6], (QK_CH, DIMENSION)),
        "conv2_5_b": n(keys[7], (QK_CH, 1)),
        # v_fc: Linear(10, d_model)
        "v_fc_w": n(keys[8], (D_MODEL, DIMENSION)),
        "v_fc_b": n(keys[9], (1, D_MODEL)),
        # W_V: Linear(d_model, H*d_v, bias=False)
        "wv_w": n(keys[10], (HD_V, D_MODEL)),
        # W_O: Linear(H*d_v, d_model, bias=False)
        "wo_w": n(keys[11], (D_MODEL, HD_V)),
    }


if __name__ == "__main__":
    key = jax.random.PRNGKey(0)
    kp, kq, kk, kv = jax.random.split(key, 4)
    params = make_params(kp)

    bs = 2
    Q = jax.random.normal(kq, (bs, DIMENSION, SEQ), dtype=jnp.float32)   # NCW
    K = jax.random.normal(kk, (bs, DIMENSION, SEQ), dtype=jnp.float32)   # NCW
    V = jax.random.normal(kv, (bs, LENGTH, DIMENSION), dtype=jnp.float32)

    output, attn = multihead_attention_forward(params, Q, K, V)
    output = jax.block_until_ready(output)
    attn = jax.block_until_ready(attn)

    ref_out, ref_attn = reference_forward(params, Q, K, V)
    assert output.shape == (bs, CTX_ROWS, D_MODEL)
    assert attn.shape == (bs, N_HEADS, D_K, D_K)
    assert jnp.allclose(output, ref_out, rtol=5e-3, atol=5e-3), \
        float(jnp.max(jnp.abs(output - ref_out)))
    assert jnp.allclose(attn, ref_attn, rtol=5e-3, atol=5e-3), \
        float(jnp.max(jnp.abs(attn - ref_attn)))

    print("KERNEL_OK")
</pallas_src>

<mosaic_0001>
module attributes {stable_mosaic.version = 11 : i64} {
  func.func @_mha_kernel(%arg0: i32, %arg1: memref<528x2xf32, #tpu.memory_space<vmem>>, %arg2: memref<768x528xf32, #tpu.memory_space<vmem>>, %arg3: memref<320x320xf32, #tpu.memory_space<vmem>>, %arg4: memref<320x2xf32, #tpu.memory_space<vmem>>, %arg5: memref<16x8x2xf32, #tpu.memory_space<vmem>>, %arg6: memref<768x2xf32, #tpu.memory_space<vmem>>, %arg7: memref<320x2xf32, #tpu.memory_space<vmem>>) attributes {dimension_semantics = [#tpu.dimension_semantics<parallel>], iteration_bounds = array<i64: 1>, scalar_prefetch = 0 : i64, scratch_operands = 2 : i64, tpu.core_type = #tpu.core_type<tc>, window_params = [{transform_indices = @transform_0, window_bounds = array<i64: 528, 2>}, {pipeline_mode = #tpu.pipeline_mode<synchronous>, transform_indices = @transform_1, window_bounds = array<i64: 768, 528>}, {pipeline_mode = #tpu.pipeline_mode<synchronous>, transform_indices = @transform_2, window_bounds = array<i64: 320, 320>}, {transform_indices = @transform_3, window_bounds = array<i64: 320, 2>}, {transform_indices = @transform_4, window_bounds = array<i64: 16, 8, 2>}]} {
    %c0 = arith.constant 0 : index
    %c0_0 = arith.constant 0 : index
    %0 = vector.load %arg2[%c0, %c0_0] : memref<768x528xf32, #tpu.memory_space<vmem>>, vector<768x528xf32>
    %c0_1 = arith.constant 0 : index
    %c0_2 = arith.constant 0 : index
    %1 = vector.load %arg1[%c0_1, %c0_2] : memref<528x2xf32, #tpu.memory_space<vmem>>, vector<528x2xf32>
    %cst = arith.constant dense<0.000000e+00> : vector<768x2xf32>
    %2 = tpu.matmul %0, %1, %cst {dimension_numbers = #tpu.dot_dimension_numbers<[1], [0], [0], [1], [0, 0, 1, 1], [], []>} : vector<768x528xf32>, vector<528x2xf32>, vector<768x2xf32> -> vector<768x2xf32>
    %c0_3 = arith.constant 0 : index
    %c0_4 = arith.constant 0 : index
    %3 = vector.load %arg6[%c0_3, %c0_4] : memref<768x2xf32, #tpu.memory_space<vmem>>, vector<768x2xf32>
    tpu.vector_store %arg6[%c0_3, %c0_4], %2 {strides = array<i32>} : memref<768x2xf32, #tpu.memory_space<vmem>>, vector<768x2xf32>,
    %cst_5 = arith.constant 0.000000e+00 : f32
    %4 = vector.broadcast %cst_5 : f32 to vector<8x8x2xf32>
    %cst_6 = arith.constant 0.000000e+00 : f32
    %5 = vector.broadcast %cst_6 : f32 to vector<8x8x2xf32>
    %c0_7 = arith.constant 0 : index
    %c0_8 = arith.constant 0 : index
    %6 = vector.load %arg6[%c0_7, %c0_8] : memref<768x2xf32, #tpu.memory_space<vmem>>, vector<16x2xf32>
    %c224 = arith.constant 224 : index
    %c0_9 = arith.constant 0 : index
    %7 = vector.load %arg6[%c224, %c0_9] : memref<768x2xf32, #tpu.memory_space<vmem>>, vector<16x2xf32>
    %8 = vector.extract_strided_slice %6 {offsets = [0, 0], sizes = [8, 2], strides = [1, 1]} : vector<16x2xf32> to vector<8x2xf32>
    %9 = vector.shape_cast %8 : vector<8x2xf32> to vector<8x1x2xf32>
    %10 = vector.extract_strided_slice %7 {offsets = [0, 0], sizes = [8, 2], strides = [1, 1]} : vector<16x2xf32> to vector<8x2xf32>
    %11 = vector.shape_cast %10 : vector<8x2xf32> to vector<1x8x2xf32>
    %12 = vector.broadcast %9 : vector<8x1x2xf32> to vector<8x8x2xf32>
    %13 = vector.broadcast %11 : vector<1x8x2xf32> to vector<8x8x2xf32>
    %14 = arith.mulf %12, %13 : vector<8x8x2xf32>
    %15 = arith.addf %4, %14 : vector<8x8x2xf32>
    %16 = vector.extract_strided_slice %6 {offsets = [8, 0], sizes = [8, 2], strides = [1, 1]} : vector<16x2xf32> to vector<8x2xf32>
    %17 = vector.shape_cast %16 : vector<8x2xf32> to vector<8x1x2xf32>
    %18 = vector.extract_strided_slice %7 {offsets = [8, 0], sizes = [8, 2], strides = [1, 1]} : vector<16x2xf32> to vector<8x2xf32>
    %19 = vector.shape_cast %18 : vector<8x2xf32> to vector<1x8x2xf32>
    %20 = vector.broadcast %17 : vector<8x1x2xf32> to vector<8x8x2xf32>
    %21 = vector.broadcast %19 : vector<1x8x2xf32> to vector<8x8x2xf32>
    %22 = arith.mulf %20, %21 : vector<8x8x2xf32>
    %23 = arith.addf %5, %22 : vector<8x8x2xf32>
    %c16 = arith.constant 16 : index
    %c0_10 = arith.constant 0 : index
    %24 = vector.load %arg6[%c16, %c0_10] : memref<768x2xf32, #tpu.memory_space<vmem>>, vector<16x2xf32>
    %c240 = arith.constant 240 : index
    %c0_11 = arith.constant 0 : index
    %25 = vector.load %arg6[%c240, %c0_11] : memref<768x2xf32, #tpu.memory_space<vmem>>, vector<16x2xf32>
    %26 = vector.extract_strided_slice %24 {offsets = [0, 0], sizes = [8, 2], strides = [1, 1]} : vector<16x2xf32> to vector<8x2xf32>
    %27 = vector.shape_cast %26 : vector<8x2xf32> to vector<8x1x2xf32>
    %28 = vector.extract_strided_slice %25 {offsets = [0, 0], sizes = [8, 2], strides = [1, 1]} : vector<16x2xf32> to vector<8x2xf32>
    %29 = vector.shape_cast %28 : vector<8x2xf32> to vector<1x8x2xf32>
    %30 = vector.broadcast %27 : vector<8x1x2xf32> to vector<8x8x2xf32>
    %31 = vector.broadcast %29 : vector<1x8x2xf32> to vector<8x8x2xf32>
    %32 = arith.mulf %30, %31 : vector<8x8x2xf32>
    %33 = arith.addf %15, %32 : vector<8x8x2xf32>
    %34 = vector.extract_strided_slice %24 {offsets = [8, 0], sizes = [8, 2], strides = [1, 1]} : vector<16x2xf32> to vector<8x2xf32>
    %35 = vector.shape_cast %34 : vector<8x2xf32> to vector<8x1x2xf32>
    %36 = vector.extract_strided_slice %25 {offsets = [8, 0], sizes = [8, 2], strides = [1, 1]} : vector<16x2xf32> to vector<8x2xf32>
    %37 = vector.shape_cast %36 : vector<8x2xf32> to vector<1x8x2xf32>
    %38 = vector.broadcast %35 : vector<8x1x2xf32> to vector<8x8x2xf32>
    %39 = vector.broadcast %37 : vector<1x8x2xf32> to vector<8x8x2xf32>
    %40 = arith.mulf %38, %39 : vector<8x8x2xf32>
    %41 = arith.addf %23, %40 : vector<8x8x2xf32>
    %c32 = arith.constant 32 : index
    %c0_12 = arith.constant 0 : index
    %42 = vector.load %arg6[%c32, %c0_12] : memref<768x2xf32, #tpu.memory_space<vmem>>, vector<16x2xf32>
    %c256 = arith.constant 256 : index
    %c0_13 = arith.constant 0 : index
    %43 = vector.load %arg6[%c256, %c0_13] : memref<768x2xf32, #tpu.memory_space<vmem>>, vector<16x2xf32>
    %44 = vector.extract_strided_slice %42 {offsets = [0, 0], sizes = [8, 2], strides = [1, 1]} : vector<16x2xf32> to vector<8x2xf32>
    %45 = vector.shape_cast %44 : vector<8x2xf32> to vector<8x1x2xf32>
    %46 = vector.extract_strided_slice %43 {offsets = [0, 0], sizes = [8, 2], strides = [1, 1]} : vector<16x2xf32> to vector<8x2xf32>
    %47 = vector.shape_cast %46 : vector<8x2xf32> to vector<1x8x2xf32>
    %48 = vector.broadcast %45 : vector<8x1x2xf32> to vector<8x8x2xf32>
    %49 = vector.broadcast %47 : vector<1x8x2xf32> to vector<8x8x2xf32>
    %50 = arith.mulf %48, %49 : vector<8x8x2xf32>
    %51 = arith.addf %33, %50 : vector<8x8x2xf32>
    %52 = vector.extract_strided_slice %42 {offsets = [8, 0], sizes = [8, 2], strides = [1, 1]} : vector<16x2xf32> to vector<8x2xf32>
    %53 = vector.shape_cast %52 : vector<8x2xf32> to vector<8x1x2xf32>
    %54 = vector.extract_strided_slice %43 {offsets = [8, 0], sizes = [8, 2], strides = [1, 1]} : vector<16x2xf32> to vector<8x2xf32>
    %55 = vector.shape_cast %54 : vector<8x2xf32> to vector<1x8x2xf32>
    %56 = vector.broadcast %53 : vector<8x1x2xf32> to vector<8x8x2xf32>
    %57 = vector.broadcast %55 : vector<1x8x2xf32> to vector<8x8x2xf32>
    %58 = arith.mulf %56, %57 : vector<8x8x2xf32>
    %59 = arith.addf %41, %58 : vector<8x8x2xf32>
    %c48 = arith.constant 48 : index
    %c0_14 = arith.constant 0 : index
    %60 = vector.load %arg6[%c48, %c0_14] : memref<768x2xf32, #tpu.memory_space<vmem>>, vector<16x2xf32>
    %c272 = arith.constant 272 : index
    %c0_15 = arith.constant 0 : index
    %61 = vector.load %arg6[%c272, %c0_15] : memref<768x2xf32, #tpu.memory_space<vmem>>, vector<16x2xf32>
    %62 = vector.extract_strided_slice %60 {offsets = [0, 0], sizes = [8, 2], strides = [1, 1]} : vector<16x2xf32> to vector<8x2xf32>
    %63 = vector.shape_cast %62 : vector<8x2xf32> to vector<8x1x2xf32>
    %64 = vector.extract_strided_slice %61 {offsets = [0, 0], sizes = [8, 2], strides = [1, 1]} : vector<16x2xf32> to vector<8x2xf32>
    %65 = vector.shape_cast %64 : vector<8x2xf32> to vector<1x8x2xf32>
    %66 = vector.broadcast %63 : vector<8x1x2xf32> to vector<8x8x2xf32>
    %67 = vector.broadcast %65 : vector<1x8x2xf32> to vector<8x8x2xf32>
    %68 = arith.mulf %66, %67 : vector<8x8x2xf32>
    %69 = arith.addf %51, %68 : vector<8x8x2xf32>
    %70 = vector.extract_strided_slice %60 {offsets = [8, 0], sizes = [8, 2], strides = [1, 1]} : vector<16x2xf32> to vector<8x2xf32>
    %71 = vector.shape_cast %70 : vector<8x2xf32> to vector<8x1x2xf32>
    %72 = vector.extract_strided_slice %61 {offsets = [8, 0], sizes = [8, 2], strides = [1, 1]} : vector<16x2xf32> to vector<8x2xf32>
    %73 = vector.shape_cast %72 : vector<8x2xf32> to vector<1x8x2xf32>
    %74 = vector.broadcast %71 : vector<8x1x2xf32> to vector<8x8x2xf32>
    %75 = vector.broadcast %73 : vector<1x8x2xf32> to vector<8x8x2xf32>
    %76 = arith.mulf %74, %75 : vector<8x8x2xf32>
    %77 = arith.addf %59, %76 : vector<8x8x2xf32>
    %c64 = arith.constant 64 : index
    %c0_16 = arith.constant 0 : index
    %78 = vector.load %arg6[%c64, %c0_16] : memref<768x2xf32, #tpu.memory_space<vmem>>, vector<16x2xf32>
    %c288 = arith.constant 288 : index
    %c0_17 = arith.constant 0 : index
    %79 = vector.load %arg6[%c288, %c0_17] : memref<768x2xf32, #tpu.memory_space<vmem>>, vector<16x2xf32>
    %80 = vector.extract_strided_slice %78 {offsets = [0, 0], sizes = [8, 2], strides = [1, 1]} : vector<16x2xf32> to vector<8x2xf32>
    %81 = vector.shape_cast %80 : vector<8x2xf32> to vector<8x1x2xf32>
    %82 = vector.extract_strided_slice %79 {offsets = [0, 0], sizes = [8, 2], strides = [1, 1]} : vector<16x2xf32> to vector<8x2xf32>
    %83 = vector.shape_cast %82 : vector<8x2xf32> to vector<1x8x2xf32>
    %84 = vector.broadcast %81 : vector<8x1x2xf32> to vector<8x8x2xf32>
    %85 = vector.broadcast %83 : vector<1x8x2xf32> to vector<8x8x2xf32>
    %86 = arith.mulf %84, %85 : vector<8x8x2xf32>
    %87 = arith.addf %69, %86 : vector<8x8x2xf32>
    %88 = vector.extract_strided_slice %78 {offsets = [8, 0], sizes = [8, 2], strides = [1, 1]} : vector<16x2xf32> to vector<8x2xf32>
    %89 = vector.shape_cast %88 : vector<8x2xf32> to vector<8x1x2xf32>
    %90 = vector.extract_strided_slice %79 {offsets = [8, 0], sizes = [8, 2], strides = [1, 1]} : vector<16x2xf32> to vector<8x2xf32>
    %91 = vector.shape_cast %90 : vector<8x2xf32> to vector<1x8x2xf32>
    %92 = vector.broadcast %89 : vector<8x1x2xf32> to vector<8x8x2xf32>
    %93 = vector.broadcast %91 : vector<1x8x2xf32> to vector<8x8x2xf32>
    %94 = arith.mulf %92, %93 : vector<8x8x2xf32>
    %95 = arith.addf %77, %94 : vector<8x8x2xf32>
    %c80 = arith.constant 80 : index
    %c0_18 = arith.constant 0 : index
    %96 = vector.load %arg6[%c80, %c0_18] : memref<768x2xf32, #tpu.memory_space<vmem>>, vector<16x2xf32>
    %c304 = arith.constant 304 : index
    %c0_19 = arith.constant 0 : index
    %97 = vector.load %arg6[%c304, %c0_19] : memref<768x2xf32, #tpu.memory_space<vmem>>, vector<16x2xf32>
    %98 = vector.extract_strided_slice %96 {offsets = [0, 0], sizes = [8, 2], strides = [1, 1]} : vector<16x2xf32> to vector<8x2xf32>
    %99 = vector.shape_cast %98 : vector<8x2xf32> to vector<8x1x2xf32>
    %100 = vector.extract_strided_slice %97 {offsets = [0, 0], sizes = [8, 2], strides = [1, 1]} : vector<16x2xf32> to vector<8x2xf32>
    %101 = vector.shape_cast %100 : vector<8x2xf32> to vector<1x8x2xf32>
    %102 = vector.broadcast %99 : vector<8x1x2xf32> to vector<8x8x2xf32>
    %103 = vector.broadcast %101 : vector<1x8x2xf32> to vector<8x8x2xf32>
    %104 = arith.mulf %102, %103 : vector<8x8x2xf32>
    %105 = arith.addf %87, %104 : vector<8x8x2xf32>
    %106 = vector.extract_strided_slice %96 {offsets = [8, 0], sizes = [8, 2], strides = [1, 1]} : vector<16x2xf32> to vector<8x2xf32>
    %107 = vector.shape_cast %106 : vector<8x2xf32> to vector<8x1x2xf32>
    %108 = vector.extract_strided_slice %97 {offsets = [8, 0], sizes = [8, 2], strides = [1, 1]} : vector<16x2xf32> to vector<8x2xf32>
    %109 = vector.shape_cast %108 : vector<8x2xf32> to vector<1x8x2xf32>
    %110 = vector.broadcast %107 : vector<8x1x2xf32> to vector<8x8x2xf32>
    %111 = vector.broadcast %109 : vector<1x8x2xf32> to vector<8x8x2xf32>
    %112 = arith.mulf %110, %111 : vector<8x8x2xf32>
    %113 = arith.addf %95, %112 : vector<8x8x2xf32>
    %c96 = arith.constant 96 : index
    %c0_20 = arith.constant 0 : index
    %114 = vector.load %arg6[%c96, %c0_20] : memref<768x2xf32, #tpu.memory_space<vmem>>, vector<16x2xf32>
    %c320 = arith.constant 320 : index
    %c0_21 = arith.constant 0 : index
    %115 = vector.load %arg6[%c320, %c0_21] : memref<768x2xf32, #tpu.memory_space<vmem>>, vector<16x2xf32>
    %116 = vector.extract_strided_slice %114 {offsets = [0, 0], sizes = [8, 2], strides = [1, 1]} : vector<16x2xf32> to vector<8x2xf32>
    %117 = vector.shape_cast %116 : vector<8x2xf32> to vector<8x1x2xf32>
    %118 = vector.extract_strided_slice %115 {offsets = [0, 0], sizes = [8, 2], strides = [1, 1]} : vector<16x2xf32> to vector<8x2xf32>
    %119 = vector.shape_cast %118 : vector<8x2xf32> to vector<1x8x2xf32>
    %120 = vector.broadcast %117 : vector<8x1x2xf32> to vector<8x8x2xf32>
    %121 = vector.broadcast %119 : vector<1x8x2xf32> to vector<8x8x2xf32>
    %122 = arith.mulf %120, %121 : vector<8x8x2xf32>
    %123 = arith.addf %105, %122 : vector<8x8x2xf32>
    %124 = vector.extract_strided_slice %114 {offsets = [8, 0], sizes = [8, 2], strides = [1, 1]} : vector<16x2xf32> to vector<8x2xf32>
    %125 = vector.shape_cast %124 : vector<8x2xf32> to vector<8x1x2xf32>
    %126 = vector.extract_strided_slice %115 {offsets = [8, 0], sizes = [8, 2], strides = [1, 1]} : vector<16x2xf32> to vector<8x2xf32>
    %127 = vector.shape_cast %126 : vector<8x2xf32> to vector<1x8x2xf32>
    %128 = vector.broadcast %125 : vector<8x1x2xf32> to vector<8x8x2xf32>
    %129 = vector.broadcast %127 : vector<1x8x2xf32> to vector<8x8x2xf32>
    %130 = arith.mulf %128, %129 : vector<8x8x2xf32>
    %131 = arith.addf %113, %130 : vector<8x8x2xf32>
    %c112 = arith.constant 112 : index
    %c0_22 = arith.constant 0 : index
    %132 = vector.load %arg6[%c112, %c0_22] : memref<768x2xf32, #tpu.memory_space<vmem>>, vector<16x2xf32>
    %c336 = arith.constant 336 : index
    %c0_23 = arith.constant 0 : index
    %133 = vector.load %arg6[%c336, %c0_23] : memref<768x2xf32, #tpu.memory_space<vmem>>, vector<16x2xf32>
    %134 = vector.extract_strided_slice %132 {offsets = [0, 0], sizes = [8, 2], strides = [1, 1]} : vector<16x2xf32> to vector<8x2xf32>
    %135 = vector.shape_cast %134 : vector<8x2xf32> to vector<8x1x2xf32>
    %136 = vector.extract_strided_slice %133 {offsets = [0, 0], sizes = [8, 2], strides = [1, 1]} : vector<16x2xf32> to vector<8x2xf32>
    %137 = vector.shape_cast %136 : vector<8x2xf32> to vector<1x8x2xf32>
    %138 = vector.broadcast %135 : vector<8x1x2xf32> to vector<8x8x2xf32>
    %139 = vector.broadcast %137 : vector<1x8x2xf32> to vector<8x8x2xf32>
    %140 = arith.mulf %138, %139 : vector<8x8x2xf32>
    %141 = arith.addf %123, %140 : vector<8x8x2xf32>
    %142 = vector.extract_strided_slice %132 {offsets = [8, 0], sizes = [8, 2], strides = [1, 1]} : vector<16x2xf32> to vector<8x2xf32>
    %143 = vector.shape_cast %142 : vector<8x2xf32> to vector<8x1x2xf32>
    %144 = vector.extract_strided_slice %133 {offsets = [8, 0], sizes = [8, 2], strides = [1, 1]} : vector<16x2xf32> to vector<8x2xf32>
    %145 = vector.shape_cast %144 : vector<8x2xf32> to vector<1x8x2xf32>
    %146 = vector.broadcast %143 : vector<8x1x2xf32> to vector<8x8x2xf32>
    %147 = vector.broadcast %145 : vector<1x8x2xf32> to vector<8x8x2xf32>
    %148 = arith.mulf %146, %147 : vector<8x8x2xf32>
    %149 = arith.addf %131, %148 : vector<8x8x2xf32>
    %c128 = arith.constant 128 : index
    %c0_24 = arith.constant 0 : index
    %150 = vector.load %arg6[%c128, %c0_24] : memref<768x2xf32, #tpu.memory_space<vmem>>, vector<16x2xf32>
    %c352 = arith.constant 352 : index
    %c0_25 = arith.constant 0 : index
    %151 = vector.load %arg6[%c352, %c0_25] : memref<768x2xf32, #tpu.memory_space<vmem>>, vector<16x2xf32>
    %152 = vector.extract_strided_slice %150 {offsets = [0, 0], sizes = [8, 2], strides = [1, 1]} : vector<16x2xf32> to vector<8x2xf32>
    %153 = vector.shape_cast %152 : vector<8x2xf32> to vector<8x1x2xf32>
    %154 = vector.extract_strided_slice %151 {offsets = [0, 0], sizes = [8, 2], strides = [1, 1]} : vector<16x2xf32> to vector<8x2xf32>
    %155 = vector.shape_cast %154 : vector<8x2xf32> to vector<1x8x2xf32>
    %156 = vector.broadcast %153 : vector<8x1x2xf32> to vector<8x8x2xf32>
    %157 = vector.broadcast %155 : vector<1x8x2xf32> to vector<8x8x2xf32>
    %158 = arith.mulf %156, %157 : vector<8x8x2xf32>
    %159 = arith.addf %141, %158 : vector<8x8x2xf32>
    %160 = vector.extract_strided_slice %150 {offsets = [8, 0], sizes = [8, 2], strides = [1, 1]} : vector<16x2xf32> to vector<8x2xf32>
    %161 = vector.shape_cast %160 : vector<8x2xf32> to vector<8x1x2xf32>
    %162 = vector.extract_strided_slice %151 {offsets = [8, 0], sizes = [8, 2], strides = [1, 1]} : vector<16x2xf32> to vector<8x2xf32>
    %163 = vector.shape_cast %162 : vector<8x2xf32> to vector<1x8x2xf32>
    %164 = vector.broadcast %161 : vector<8x1x2xf32> to vector<8x8x2xf32>
    %165 = vector.broadcast %163 : vector<1x8x2xf32> to vector<8x8x2xf32>
    %166 = arith.mulf %164, %165 : vector<8x8x2xf32>
    %167 = arith.addf %149, %166 : vector<8x8x2xf32>
    %c144 = arith.constant 144 : index
    %c0_26 = arith.constant 0 : index
    %168 = vector.load %arg6[%c144, %c0_26] : memref<768x2xf32, #tpu.memory_space<vmem>>, vector<16x2xf32>
    %c368 = arith.constant 368 : index
    %c0_27 = arith.constant 0 : index
    %169 = vector.load %arg6[%c368, %c0_27] : memref<768x2xf32, #tpu.memory_space<vmem>>, vector<16x2xf32>
    %170 = vector.extract_strided_slice %168 {offsets = [0, 0], sizes = [8, 2], strides = [1, 1]} : vector<16x2xf32> to vector<8x2xf32>
    %171 = vector.shape_cast %170 : vector<8x2xf32> to vector<8x1x2xf32>
    %172 = vector.extract_strided_slice %169 {offsets = [0, 0], sizes = [8, 2], strides = [1, 1]} : vector<16x2xf32> to vector<8x2xf32>
    %173 = vector.shape_cast %172 : vector<8x2xf32> to vector<1x8x2xf32>
    %174 = vector.broadcast %171 : vector<8x1x2xf32> to vector<8x8x2xf32>
    %175 = vector.broadcast %173 : vector<1x8x2xf32> to vector<8x8x2xf32>
    %176 = arith.mulf %174, %175 : vector<8x8x2xf32>
    %177 = arith.addf %159, %176 : vector<8x8x2xf32>
    %178 = vector.extract_strided_slice %168 {offsets = [8, 0], sizes = [8, 2], strides = [1, 1]} : vector<16x2xf32> to vector<8x2xf32>
    %179 = vector.shape_cast %178 : vector<8x2xf32> to vector<8x1x2xf32>
    %180 = vector.extract_strided_slice %169 {offsets = [8, 0], sizes = [8, 2], strides = [1, 1]} : vector<16x2xf32> to vector<8x2xf32>
    %181 = vector.shape_cast %180 : vector<8x2xf32> to vector<1x8x2xf32>
    %182 = vector.broadcast %179 : vector<8x1x2xf32> to vector<8x8x2xf32>
    %183 = vector.broadcast %181 : vector<1x8x2xf32> to vector<8x8x2xf32>
    %184 = arith.mulf %182, %183 : vector<8x8x2xf32>
    %185 = arith.addf %167, %184 : vector<8x8x2xf32>
    %c160 = arith.constant 160 : index
    %c0_28 = arith.constant 0 : index
    %186 = vector.load %arg6[%c160, %c0_28] : memref<768x2xf32, #tpu.memory_space<vmem>>, vector<16x2xf32>
    %c384 = arith.constant 384 : index
    %c0_29 = arith.constant 0 : index
    %187 = vector.load %arg6[%c384, %c0_29] : memref<768x2xf32, #tpu.memory_space<vmem>>, vector<16x2xf32>
    %188 = vector.extract_strided_slice %186 {offsets = [0, 0], sizes = [8, 2], strides = [1, 1]} : vector<16x2xf32> to vector<8x2xf32>
    %189 = vector.shape_cast %188 : vector<8x2xf32> to vector<8x1x2xf32>
    %190 = vector.extract_strided_slice %187 {offsets = [0, 0], sizes = [8, 2], strides = [1, 1]} : vector<16x2xf32> to vector<8x2xf32>
    %191 = vector.shape_cast %190 : vector<8x2xf32> to vector<1x8x2xf32>
    %192 = vector.broadcast %189 : vector<8x1x2xf32> to vector<8x8x2xf32>
    %193 = vector.broadcast %191 : vector<1x8x2xf32> to vector<8x8x2xf32>
    %194 = arith.mulf %192, %193 : vector<8x8x2xf32>
    %195 = arith.addf %177, %194 : vector<8x8x2xf32>
    %196 = vector.extract_strided_slice %186 {offsets = [8, 0], sizes = [8, 2], strides = [1, 1]} : vector<16x2xf32> to vector<8x2xf32>
    %197 = vector.shape_cast %196 : vector<8x2xf32> to vector<8x1x2xf32>
    %198 = vector.extract_strided_slice %187 {offsets = [8, 0], sizes = [8, 2], strides = [1, 1]} : vector<16x2xf32> to vector<8x2xf32>
    %199 = vector.shape_cast %198 : vector<8x2xf32> to vector<1x8x2xf32>
    %200 = vector.broadcast %197 : vector<8x1x2xf32> to vector<8x8x2xf32>
    %201 = vector.broadcast %199 : vector<1x8x2xf32> to vector<8x8x2xf32>
    %202 = arith.mulf %200, %201 : vector<8x8x2xf32>
    %203 = arith.addf %185, %202 : vector<8x8x2xf32>
    %c176 = arith.constant 176 : index
    %c0_30 = arith.constant 0 : index
    %204 = vector.load %arg6[%c176, %c0_30] : memref<768x2xf32, #tpu.memory_space<vmem>>, vector<16x2xf32>
    %c400 = arith.constant 400 : index
    %c0_31 = arith.constant 0 : index
    %205 = vector.load %arg6[%c400, %c0_31] : memref<768x2xf32, #tpu.memory_space<vmem>>, vector<16x2xf32>
    %206 = vector.extract_strided_slice %204 {offsets = [0, 0], sizes = [8, 2], strides = [1, 1]} : vector<16x2xf32> to vector<8x2xf32>
    %207 = vector.shape_cast %206 : vector<8x2xf32> to vector<8x1x2xf32>
    %208 = vector.extract_strided_slice %205 {offsets = [0, 0], sizes = [8, 2], strides = [1, 1]} : vector<16x2xf32> to vector<8x2xf32>
    %209 = vector.shape_cast %208 : vector<8x2xf32> to vector<1x8x2xf32>
    %210 = vector.broadcast %207 : vector<8x1x2xf32> to vector<8x8x2xf32>
    %211 = vector.broadcast %209 : vector<1x8x2xf32> to vector<8x8x2xf32>
    %212 = arith.mulf %210, %211 : vector<8x8x2xf32>
    %213 = arith.addf %195, %212 : vector<8x8x2xf32>
    %214 = vector.extract_strided_slice %204 {offsets = [8, 0], sizes = [8, 2], strides = [1, 1]} : vector<16x2xf32> to vector<8x2xf32>
    %215 = vector.shape_cast %214 : vector<8x2xf32> to vector<8x1x2xf32>
    %216 = vector.extract_strided_slice %205 {offsets = [8, 0], sizes = [8, 2], strides = [1, 1]} : vector<16x2xf32> to vector<8x2xf32>
    %217 = vector.shape_cast %216 : vector<8x2xf32> to vector<1x8x2xf32>
    %218 = vector.broadcast %215 : vector<8x1x2xf32> to vector<8x8x2xf32>
    %219 = vector.broadcast %217 : vector<1x8x2xf32> to vector<8x8x2xf32>
    %220 = arith.mulf %218, %219 : vector<8x8x2xf32>
    %221 = arith.addf %203, %220 : vector<8x8x2xf32>
    %c192 = arith.constant 192 : index
    %c0_32 = arith.constant 0 : index
    %222 = vector.load %arg6[%c192, %c0_32] : memref<768x2xf32, #tpu.memory_space<vmem>>, vector<16x2xf32>
    %c416 = arith.constant 416 : index
    %c0_33 = arith.constant 0 : index
    %223 = vector.load %arg6[%c416, %c0_33] : memref<768x2xf32, #tpu.memory_space<vmem>>, vector<16x2xf32>
    %224 = vector.extract_strided_slice %222 {offsets = [0, 0], sizes = [8, 2], strides = [1, 1]} : vector<16x2xf32> to vector<8x2xf32>
    %225 = vector.shape_cast %224 : vector<8x2xf32> to vector<8x1x2xf32>
    %226 = vector.extract_strided_slice %223 {offsets = [0, 0], sizes = [8, 2], strides = [1, 1]} : vector<16x2xf32> to vector<8x2xf32>
    %227 = vector.shape_cast %226 : vector<8x2xf32> to vector<1x8x2xf32>
    %228 = vector.broadcast %225 : vector<8x1x2xf32> to vector<8x8x2xf32>
    %229 = vector.broadcast %227 : vector<1x8x2xf32> to vector<8x8x2xf32>
    %230 = arith.mulf %228, %229 : vector<8x8x2xf32>
    %231 = arith.addf %213, %230 : vector<8x8x2xf32>
    %232 = vector.extract_strided_slice %222 {offsets = [8, 0], sizes = [8, 2], strides = [1, 1]} : vector<16x2xf32> to vector<8x2xf32>
    %233 = vector.shape_cast %232 : vector<8x2xf32> to vector<8x1x2xf32>
    %234 = vector.extract_strided_slice %223 {offsets = [8, 0], sizes = [8, 2], strides = [1, 1]} : vector<16x2xf32> to vector<8x2xf32>
    %235 = vector.shape_cast %234 : vector<8x2xf32> to vector<1x8x2xf32>
    %236 = vector.broadcast %233 : vector<8x1x2xf32> to vector<8x8x2xf32>
    %237 = vector.broadcast %235 : vector<1x8x2xf32> to vector<8x8x2xf32>
    %238 = arith.mulf %236, %237 : vector<8x8x2xf32>
    %239 = arith.addf %221, %238 : vector<8x8x2xf32>
    %c208 = arith.constant 208 : index
    %c0_34 = arith.constant 0 : index
    %240 = vector.load %arg6[%c208, %c0_34] : memref<768x2xf32, #tpu.memory_space<vmem>>, vector<16x2xf32>
    %c432 = arith.constant 432 : index
    %c0_35 = arith.constant 0 : index
    %241 = vector.load %arg6[%c432, %c0_35] : memref<768x2xf32, #tpu.memory_space<vmem>>, vector<16x2xf32>
    %242 = vector.extract_strided_slice %240 {offsets = [0, 0], sizes = [8, 2], strides = [1, 1]} : vector<16x2xf32> to vector<8x2xf32>
    %243 = vector.shape_cast %242 : vector<8x2xf32> to vector<8x1x2xf32>
    %244 = vector.extract_strided_slice %241 {offsets = [0, 0], sizes = [8, 2], strides = [1, 1]} : vector<16x2xf32> to vector<8x2xf32>
    %245 = vector.shape_cast %244 : vector<8x2xf32> to vector<1x8x2xf32>
    %246 = vector.broadcast %243 : vector<8x1x2xf32> to vector<8x8x2xf32>
    %247 = vector.broadcast %245 : vector<1x8x2xf32> to vector<8x8x2xf32>
    %248 = arith.mulf %246, %247 : vector<8x8x2xf32>
    %249 = arith.addf %231, %248 : vector<8x8x2xf32>
    %250 = vector.extract_strided_slice %240 {offsets = [8, 0], sizes = [8, 2], strides = [1, 1]} : vector<16x2xf32> to vector<8x2xf32>
    %251 = vector.shape_cast %250 : vector<8x2xf32> to vector<8x1x2xf32>
    %252 = vector.extract_strided_slice %241 {offsets = [8, 0], sizes = [8, 2], strides = [1, 1]} : vector<16x2xf32> to vector<8x2xf32>
    %253 = vector.shape_cast %252 : vector<8x2xf32> to vector<1x8x2xf32>
    %254 = vector.broadcast %251 : vector<8x1x2xf32> to vector<8x8x2xf32>
    %255 = vector.broadcast %253 : vector<1x8x2xf32> to vector<8x8x2xf32>
    %256 = arith.mulf %254, %255 : vector<8x8x2xf32>
    %257 = arith.addf %239, %256 : vector<8x8x2xf32>
    %258 = vector.extract_strided_slice %249 {offsets = [0, 0, 0], sizes = [8, 1, 2], strides = [1, 1, 1]} : vector<8x8x2xf32> to vector<8x1x2xf32>
    %259 = vector.extract_strided_slice %249 {offsets = [0, 1, 0], sizes = [8, 1, 2], strides = [1, 1, 1]} : vector<8x8x2xf32> to vector<8x1x2xf32>
    %260 = arith.maximumf %258, %259 : vector<8x1x2xf32>
    %261 = vector.extract_strided_slice %249 {offsets = [0, 2, 0], sizes = [8, 1, 2], strides = [1, 1, 1]} : vector<8x8x2xf32> to vector<8x1x2xf32>
    %262 = arith.maximumf %260, %261 : vector<8x1x2xf32>
    %263 = vector.extract_strided_slice %249 {offsets = [0, 3, 0], sizes = [8, 1, 2], strides = [1, 1, 1]} : vector<8x8x2xf32> to vector<8x1x2xf32>
    %264 = arith.maximumf %262, %263 : vector<8x1x2xf32>
    %265 = vector.extract_strided_slice %249 {offsets = [0, 4, 0], sizes = [8, 1, 2], strides = [1, 1, 1]} : vector<8x8x2xf32> to vector<8x1x2xf32>
    %266 = arith.maximumf %264, %265 : vector<8x1x2xf32>
    %267 = vector.extract_strided_slice %249 {offsets = [0, 5, 0], sizes = [8, 1, 2], strides = [1, 1, 1]} : vector<8x8x2xf32> to vector<8x1x2xf32>
    %268 = arith.maximumf %266, %267 : vector<8x1x2xf32>
    %269 = vector.extract_strided_slice %249 {offsets = [0, 6, 0], sizes = [8, 1, 2], strides = [1, 1, 1]} : vector<8x8x2xf32> to vector<8x1x2xf32>
    %270 = arith.maximumf %268, %269 : vector<8x1x2xf32>
    %271 = vector.extract_strided_slice %249 {offsets = [0, 7, 0], sizes = [8, 1, 2], strides = [1, 1, 1]} : vector<8x8x2xf32> to vector<8x1x2xf32>
    %272 = arith.maximumf %270, %271 : vector<8x1x2xf32>
    %273 = vector.broadcast %272 : vector<8x1x2xf32> to vector<8x8x2xf32>
    %274 = arith.subf %249, %273 : vector<8x8x2xf32>
    %275 = math.exp %274 : vector<8x8x2xf32>
    %276 = vector.extract_strided_slice %275 {offsets = [0, 0, 0], sizes = [8, 1, 2], strides = [1, 1, 1]} : vector<8x8x2xf32> to vector<8x1x2xf32>
    %277 = vector.extract_strided_slice %275 {offsets = [0, 1, 0], sizes = [8, 1, 2], strides = [1, 1, 1]} : vector<8x8x2xf32> to vector<8x1x2xf32>
    %278 = arith.addf %276, %277 : vector<8x1x2xf32>
    %279 = vector.extract_strided_slice %275 {offsets = [0, 2, 0], sizes = [8, 1, 2], strides = [1, 1, 1]} : vector<8x8x2xf32> to vector<8x1x2xf32>
    %280 = arith.addf %278, %279 : vector<8x1x2xf32>
    %281 = vector.extract_strided_slice %275 {offsets = [0, 3, 0], sizes = [8, 1, 2], strides = [1, 1, 1]} : vector<8x8x2xf32> to vector<8x1x2xf32>
    %282 = arith.addf %280, %281 : vector<8x1x2xf32>
    %283 = vector.extract_strided_slice %275 {offsets = [0, 4, 0], sizes = [8, 1, 2], strides = [1, 1, 1]} : vector<8x8x2xf32> to vector<8x1x2xf32>
    %284 = arith.addf %282, %283 : vector<8x1x2xf32>
    %285 = vector.extract_strided_slice %275 {offsets = [0, 5, 0], sizes = [8, 1, 2], strides = [1, 1, 1]} : vector<8x8x2xf32> to vector<8x1x2xf32>
    %286 = arith.addf %284, %285 : vector<8x1x2xf32>
    %287 = vector.extract_strided_slice %275 {offsets = [0, 6, 0], sizes = [8, 1, 2], strides = [1, 1, 1]} : vector<8x8x2xf32> to vector<8x1x2xf32>
    %288 = arith.addf %286, %287 : vector<8x1x2xf32>
    %289 = vector.extract_strided_slice %275 {offsets = [0, 7, 0], sizes = [8, 1, 2], strides = [1, 1, 1]} : vector<8x8x2xf32> to vector<8x1x2xf32>
    %290 = arith.addf %288, %289 : vector<8x1x2xf32>
    %291 = vector.broadcast %290 : vector<8x1x2xf32> to vector<8x8x2xf32>
    %292 = arith.divf %275, %291 : vector<8x8x2xf32>
    %293 = vector.extract_strided_slice %257 {offsets = [0, 0, 0], sizes = [8, 1, 2], strides = [1, 1, 1]} : vector<8x8x2xf32> to vector<8x1x2xf32>
    %294 = vector.extract_strided_slice %257 {offsets = [0, 1, 0], sizes = [8, 1, 2], strides = [1, 1, 1]} : vector<8x8x2xf32> to vector<8x1x2xf32>
    %295 = arith.maximumf %293, %294 : vector<8x1x2xf32>
    %296 = vector.extract_strided_slice %257 {offsets = [0, 2, 0], sizes = [8, 1, 2], strides = [1, 1, 1]} : vector<8x8x2xf32> to vector<8x1x2xf32>
    %297 = arith.maximumf %295, %296 : vector<8x1x2xf32>
    %298 = vector.extract_strided_slice %257 {offsets = [0, 3, 0], sizes = [8, 1, 2], strides = [1, 1, 1]} : vector<8x8x2xf32> to vector<8x1x2xf32>
    %299 = arith.maximumf %297, %298 : vector<8x1x2xf32>
    %300 = vector.extract_strided_slice %257 {offsets = [0, 4, 0], sizes = [8, 1, 2], strides = [1, 1, 1]} : vector<8x8x2xf32> to vector<8x1x2xf32>
    %301 = arith.maximumf %299, %300 : vector<8x1x2xf32>
    %302 = vector.extract_strided_slice %257 {offsets = [0, 5, 0], sizes = [8, 1, 2], strides = [1, 1, 1]} : vector<8x8x2xf32> to vector<8x1x2xf32>
    %303 = arith.maximumf %301, %302 : vector<8x1x2xf32>
    %304 = vector.extract_strided_slice %257 {offsets = [0, 6, 0], sizes = [8, 1, 2], strides = [1, 1, 1]} : vector<8x8x2xf32> to vector<8x1x2xf32>
    %305 = arith.maximumf %303, %304 : vector<8x1x2xf32>
    %306 = vector.extract_strided_slice %257 {offsets = [0, 7, 0], sizes = [8, 1, 2], strides = [1, 1, 1]} : vector<8x8x2xf32> to vector<8x1x2xf32>
    %307 = arith.maximumf %305, %306 : vector<8x1x2xf32>
    %308 = vector.broadcast %307 : vector<8x1x2xf32> to vector<8x8x2xf32>
    %309 = arith.subf %257, %308 : vector<8x8x2xf32>
    %310 = math.exp %309 : vector<8x8x2xf32>
    %311 = vector.extract_strided_slice %310 {offsets = [0, 0, 0], sizes = [8, 1, 2], strides = [1, 1, 1]} : vector<8x8x2xf32> to vector<8x1x2xf32>
    %312 = vector.extract_strided_slice %310 {offsets = [0, 1, 0], sizes = [8, 1, 2], strides = [1, 1, 1]} : vector<8x8x2xf32> to vector<8x1x2xf32>
    %313 = arith.addf %311, %312 : vector<8x1x2xf32>
    %314 = vector.extract_strided_slice %310 {offsets = [0, 2, 0], sizes = [8, 1, 2], strides = [1, 1, 1]} : vector<8x8x2xf32> to vector<8x1x2xf32>
    %315 = arith.addf %313, %314 : vector<8x1x2xf32>
    %316 = vector.extract_strided_slice %310 {offsets = [0, 3, 0], sizes = [8, 1, 2], strides = [1, 1, 1]} : vector<8x8x2xf32> to vector<8x1x2xf32>
    %317 = arith.addf %315, %316 : vector<8x1x2xf32>
    %318 = vector.extract_strided_slice %310 {offsets = [0, 4, 0], sizes = [8, 1, 2], strides = [1, 1, 1]} : vector<8x8x2xf32> to vector<8x1x2xf32>
    %319 = arith.addf %317, %318 : vector<8x1x2xf32>
    %320 = vector.extract_strided_slice %310 {offsets = [0, 5, 0], sizes = [8, 1, 2], strides = [1, 1, 1]} : vector<8x8x2xf32> to vector<8x1x2xf32>
    %321 = arith.addf %319, %320 : vector<8x1x2xf32>
    %322 = vector.extract_strided_slice %310 {offsets = [0, 6, 0], sizes = [8, 1, 2], strides = [1, 1, 1]} : vector<8x8x2xf32> to vector<8x1x2xf32>
    %323 = arith.addf %321, %322 : vector<8x1x2xf32>
    %324 = vector.extract_strided_slice %310 {offsets = [0, 7, 0], sizes = [8, 1, 2], strides = [1, 1, 1]} : vector<8x8x2xf32> to vector<8x1x2xf32>
    %325 = arith.addf %323, %324 : vector<8x1x2xf32>
    %326 = vector.broadcast %325 : vector<8x1x2xf32> to vector<8x8x2xf32>
    %327 = arith.divf %310, %326 : vector<8x8x2xf32>
    %c0_36 = arith.constant 0 : index
    %c0_37 = arith.constant 0 : index
    %c0_38 = arith.constant 0 : index
    %328 = vector.load %arg5[%c0_36, %c0_37, %c0_38] : memref<16x8x2xf32, #tpu.memory_space<vmem>>, vector<8x8x2xf32>
    tpu.vector_store %arg5[%c0_36, %c0_37, %c0_38], %292 {strides = array<i32>} : memref<16x8x2xf32, #tpu.memory_space<vmem>>, vector<8x8x2xf32>,
    %c8 = arith.constant 8 : index
    %c0_39 = arith.constant 0 : index
    %c0_40 = arith.constant 0 : index
    %329 = vector.load %arg5[%c8, %c0_39, %c0_40] : memref<16x8x2xf32, #tpu.memory_space<vmem>>, vector<8x8x2xf32>
    tpu.vector_store %arg5[%c8, %c0_39, %c0_40], %327 {strides = array<i32>} : memref<16x8x2xf32, #tpu.memory_space<vmem>>, vector<8x8x2xf32>,
    %cst_41 = arith.constant 0.000000e+00 : f32
    %330 = vector.broadcast %cst_41 : f32 to vector<8x20x2xf32>
    %cst_42 = arith.constant 0.000000e+00 : f32
    %331 = vector.broadcast %cst_42 : f32 to vector<8x20x2xf32>
    %c448 = arith.constant 448 : index
    %c0_43 = arith.constant 0 : index
    %332 = vector.load %arg6[%c448, %c0_43] : memref<768x2xf32, #tpu.memory_space<vmem>>, vector<20x2xf32>
    %c608 = arith.constant 608 : index
    %c0_44 = arith.constant 0 : index
    %333 = vector.load %arg6[%c608, %c0_44] : memref<768x2xf32, #tpu.memory_space<vmem>>, vector<20x2xf32>
    %334 = vector.extract_strided_slice %292 {offsets = [0, 0, 0], sizes = [8, 1, 2], strides = [1, 1, 1]} : vector<8x8x2xf32> to vector<8x1x2xf32>
    %335 = vector.shape_cast %332 : vector<20x2xf32> to vector<1x20x2xf32>
    %336 = vector.broadcast %334 : vector<8x1x2xf32> to vector<8x20x2xf32>
    %337 = vector.broadcast %335 : vector<1x20x2xf32> to vector<8x20x2xf32>
    %338 = arith.mulf %336, %337 : vector<8x20x2xf32>
    %339 = arith.addf %330, %338 : vector<8x20x2xf32>
    %340 = vector.extract_strided_slice %327 {offsets = [0, 0, 0], sizes = [8, 1, 2], strides = [1, 1, 1]} : vector<8x8x2xf32> to vector<8x1x2xf32>
    %341 = vector.shape_cast %333 : vector<20x2xf32> to vector<1x20x2xf32>
    %342 = vector.broadcast %340 : vector<8x1x2xf32> to vector<8x20x2xf32>
    %343 = vector.broadcast %341 : vector<1x20x2xf32> to vector<8x20x2xf32>
    %344 = arith.mulf %342, %343 : vector<8x20x2xf32>
    %345 = arith.addf %331, %344 : vector<8x20x2xf32>
    %c468 = arith.constant 468 : index
    %c0_45 = arith.constant 0 : index
    %346 = vector.load %arg6[%c468, %c0_45] : memref<768x2xf32, #tpu.memory_space<vmem>>, vector<20x2xf32>
    %c628 = arith.constant 628 : index
    %c0_46 = arith.constant 0 : index
    %347 = vector.load %arg6[%c628, %c0_46] : memref<768x2xf32, #tpu.memory_space<vmem>>, vector<20x2xf32>
    %348 = vector.extract_strided_slice %292 {offsets = [0, 1, 0], sizes = [8, 1, 2], strides = [1, 1, 1]} : vector<8x8x2xf32> to vector<8x1x2xf32>
    %349 = vector.shape_cast %346 : vector<20x2xf32> to vector<1x20x2xf32>
    %350 = vector.broadcast %348 : vector<8x1x2xf32> to vector<8x20x2xf32>
    %351 = vector.broadcast %349 : vector<1x20x2xf32> to vector<8x20x2xf32>
    %352 = arith.mulf %350, %351 : vector<8x20x2xf32>
    %353 = arith.addf %339, %352 : vector<8x20x2xf32>
    %354 = vector.extract_strided_slice %327 {offsets = [0, 1, 0], sizes = [8, 1, 2], strides = [1, 1, 1]} : vector<8x8x2xf32> to vector<8x1x2xf32>
    %355 = vector.shape_cast %347 : vector<20x2xf32> to vector<1x20x2xf32>
    %356 = vector.broadcast %354 : vector<8x1x2xf32> to vector<8x20x2xf32>
    %357 = vector.broadcast %355 : vector<1x20x2xf32> to vector<8x20x2xf32>
    %358 = arith.mulf %356, %357 : vector<8x20x2xf32>
    %359 = arith.addf %345, %358 : vector<8x20x2xf32>
    %c488 = arith.constant 488 : index
    %c0_47 = arith.constant 0 : index
    %360 = vector.load %arg6[%c488, %c0_47] : memref<768x2xf32, #tpu.memory_space<vmem>>, vector<20x2xf32>
    %c648 = arith.constant 648 : index
    %c0_48 = arith.constant 0 : index
    %361 = vector.load %arg6[%c648, %c0_48] : memref<768x2xf32, #tpu.memory_space<vmem>>, vector<20x2xf32>
    %362 = vector.extract_strided_slice %292 {offsets = [0, 2, 0], sizes = [8, 1, 2], strides = [1, 1, 1]} : vector<8x8x2xf32> to vector<8x1x2xf32>
    %363 = vector.shape_cast %360 : vector<20x2xf32> to vector<1x20x2xf32>
    %364 = vector.broadcast %362 : vector<8x1x2xf32> to vector<8x20x2xf32>
    %365 = vector.broadcast %363 : vector<1x20x2xf32> to vector<8x20x2xf32>
    %366 = arith.mulf %364, %365 : vector<8x20x2xf32>
    %367 = arith.addf %353, %366 : vector<8x20x2xf32>
    %368 = vector.extract_strided_slice %327 {offsets = [0, 2, 0], sizes = [8, 1, 2], strides = [1, 1, 1]} : vector<8x8x2xf32> to vector<8x1x2xf32>
    %369 = vector.shape_cast %361 : vector<20x2xf32> to vector<1x20x2xf32>
    %370 = vector.broadcast %368 : vector<8x1x2xf32> to vector<8x20x2xf32>
    %371 = vector.broadcast %369 : vector<1x20x2xf32> to vector<8x20x2xf32>
    %372 = arith.mulf %370, %371 : vector<8x20x2xf32>
    %373 = arith.addf %359, %372 : vector<8x20x2xf32>
    %c508 = arith.constant 508 : index
    %c0_49 = arith.constant 0 : index
    %374 = vector.load %arg6[%c508, %c0_49] : memref<768x2xf32, #tpu.memory_space<vmem>>, vector<20x2xf32>
    %c668 = arith.constant 668 : index
    %c0_50 = arith.constant 0 : index
    %375 = vector.load %arg6[%c668, %c0_50] : memref<768x2xf32, #tpu.memory_space<vmem>>, vector<20x2xf32>
    %376 = vector.extract_strided_slice %292 {offsets = [0, 3, 0], sizes = [8, 1, 2], strides = [1, 1, 1]} : vector<8x8x2xf32> to vector<8x1x2xf32>
    %377 = vector.shape_cast %374 : vector<20x2xf32> to vector<1x20x2xf32>
    %378 = vector.broadcast %376 : vector<8x1x2xf32> to vector<8x20x2xf32>
    %379 = vector.broadcast %377 : vector<1x20x2xf32> to vector<8x20x2xf32>
    %380 = arith.mulf %378, %379 : vector<8x20x2xf32>
    %381 = arith.addf %367, %380 : vector<8x20x2xf32>
    %382 = vector.extract_strided_slice %327 {offsets = [0, 3, 0], sizes = [8, 1, 2], strides = [1, 1, 1]} : vector<8x8x2xf32> to vector<8x1x2xf32>
    %383 = vector.shape_cast %375 : vector<20x2xf32> to vector<1x20x2xf32>
    %384 = vector.broadcast %382 : vector<8x1x2xf32> to vector<8x20x2xf32>
    %385 = vector.broadcast %383 : vector<1x20x2xf32> to vector<8x20x2xf32>
    %386 = arith.mulf %384, %385 : vector<8x20x2xf32>
    %387 = arith.addf %373, %386 : vector<8x20x2xf32>
    %c528 = arith.constant 528 : index
    %c0_51 = arith.constant 0 : index
    %388 = vector.load %arg6[%c528, %c0_51] : memref<768x2xf32, #tpu.memory_space<vmem>>, vector<20x2xf32>
    %c688 = arith.constant 688 : index
    %c0_52 = arith.constant 0 : index
    %389 = vector.load %arg6[%c688, %c0_52] : memref<768x2xf32, #tpu.memory_space<vmem>>, vector<20x2xf32>
    %390 = vector.extract_strided_slice %292 {offsets = [0, 4, 0], sizes = [8, 1, 2], strides = [1, 1, 1]} : vector<8x8x2xf32> to vector<8x1x2xf32>
    %391 = vector.shape_cast %388 : vector<20x2xf32> to vector<1x20x2xf32>
    %392 = vector.broadcast %390 : vector<8x1x2xf32> to vector<8x20x2xf32>
    %393 = vector.broadcast %391 : vector<1x20x2xf32> to vector<8x20x2xf32>
    %394 = arith.mulf %392, %393 : vector<8x20x2xf32>
    %395 = arith.addf %381, %394 : vector<8x20x2xf32>
    %396 = vector.extract_strided_slice %327 {offsets = [0, 4, 0], sizes = [8, 1, 2], strides = [1, 1, 1]} : vector<8x8x2xf32> to vector<8x1x2xf32>
    %397 = vector.shape_cast %389 : vector<20x2xf32> to vector<1x20x2xf32>
    %398 = vector.broadcast %396 : vector<8x1x2xf32> to vector<8x20x2xf32>
    %399 = vector.broadcast %397 : vector<1x20x2xf32> to vector<8x20x2xf32>
    %400 = arith.mulf %398, %399 : vector<8x20x2xf32>
    %401 = arith.addf %387, %400 : vector<8x20x2xf32>
    %c548 = arith.constant 548 : index
    %c0_53 = arith.constant 0 : index
    %402 = vector.load %arg6[%c548, %c0_53] : memref<768x2xf32, #tpu.memory_space<vmem>>, vector<20x2xf32>
    %c708 = arith.constant 708 : index
    %c0_54 = arith.constant 0 : index
    %403 = vector.load %arg6[%c708, %c0_54] : memref<768x2xf32, #tpu.memory_space<vmem>>, vector<20x2xf32>
    %404 = vector.extract_strided_slice %292 {offsets = [0, 5, 0], sizes = [8, 1, 2], strides = [1, 1, 1]} : vector<8x8x2xf32> to vector<8x1x2xf32>
    %405 = vector.shape_cast %402 : vector<20x2xf32> to vector<1x20x2xf32>
    %406 = vector.broadcast %404 : vector<8x1x2xf32> to vector<8x20x2xf32>
    %407 = vector.broadcast %405 : vector<1x20x2xf32> to vector<8x20x2xf32>
    %408 = arith.mulf %406, %407 : vector<8x20x2xf32>
    %409 = arith.addf %395, %408 : vector<8x20x2xf32>
    %410 = vector.extract_strided_slice %327 {offsets = [0, 5, 0], sizes = [8, 1, 2], strides = [1, 1, 1]} : vector<8x8x2xf32> to vector<8x1x2xf32>
    %411 = vector.shape_cast %403 : vector<20x2xf32> to vector<1x20x2xf32>
    %412 = vector.broadcast %410 : vector<8x1x2xf32> to vector<8x20x2xf32>
    %413 = vector.broadcast %411 : vector<1x20x2xf32> to vector<8x20x2xf32>
    %414 = arith.mulf %412, %413 : vector<8x20x2xf32>
    %415 = arith.addf %401, %414 : vector<8x20x2xf32>
    %c568 = arith.constant 568 : index
    %c0_55 = arith.constant 0 : index
    %416 = vector.load %arg6[%c568, %c0_55] : memref<768x2xf32, #tpu.memory_space<vmem>>, vector<20x2xf32>
    %c728 = arith.constant 728 : index
    %c0_56 = arith.constant 0 : index
    %417 = vector.load %arg6[%c728, %c0_56] : memref<768x2xf32, #tpu.memory_space<vmem>>, vector<20x2xf32>
    %418 = vector.extract_strided_slice %292 {offsets = [0, 6, 0], sizes = [8, 1, 2], strides = [1, 1, 1]} : vector<8x8x2xf32> to vector<8x1x2xf32>
    %419 = vector.shape_cast %416 : vector<20x2xf32> to vector<1x20x2xf32>
    %420 = vector.broadcast %418 : vector<8x1x2xf32> to vector<8x20x2xf32>
    %421 = vector.broadcast %419 : vector<1x20x2xf32> to vector<8x20x2xf32>
    %422 = arith.mulf %420, %421 : vector<8x20x2xf32>
    %423 = arith.addf %409, %422 : vector<8x20x2xf32>
    %424 = vector.extract_strided_slice %327 {offsets = [0, 6, 0], sizes = [8, 1, 2], strides = [1, 1, 1]} : vector<8x8x2xf32> to vector<8x1x2xf32>
    %425 = vector.shape_cast %417 : vector<20x2xf32> to vector<1x20x2xf32>
    %426 = vector.broadcast %424 : vector<8x1x2xf32> to vector<8x20x2xf32>
    %427 = vector.broadcast %425 : vector<1x20x2xf32> to vector<8x20x2xf32>
    %428 = arith.mulf %426, %427 : vector<8x20x2xf32>
    %429 = arith.addf %415, %428 : vector<8x20x2xf32>
    %c588 = arith.constant 588 : index
    %c0_57 = arith.constant 0 : index
    %430 = vector.load %arg6[%c588, %c0_57] : memref<768x2xf32, #tpu.memory_space<vmem>>, vector<20x2xf32>
    %c748 = arith.constant 748 : index
    %c0_58 = arith.constant 0 : index
    %431 = vector.load %arg6[%c748, %c0_58] : memref<768x2xf32, #tpu.memory_space<vmem>>, vector<20x2xf32>
    %432 = vector.extract_strided_slice %292 {offsets = [0, 7, 0], sizes = [8, 1, 2], strides = [1, 1, 1]} : vector<8x8x2xf32> to vector<8x1x2xf32>
    %433 = vector.shape_cast %430 : vector<20x2xf32> to vector<1x20x2xf32>
    %434 = vector.broadcast %432 : vector<8x1x2xf32> to vector<8x20x2xf32>
    %435 = vector.broadcast %433 : vector<1x20x2xf32> to vector<8x20x2xf32>
    %436 = arith.mulf %434, %435 : vector<8x20x2xf32>
    %437 = arith.addf %423, %436 : vector<8x20x2xf32>
    %438 = vector.extract_strided_slice %327 {offsets = [0, 7, 0], sizes = [8, 1, 2], strides = [1, 1, 1]} : vector<8x8x2xf32> to vector<8x1x2xf32>
    %439 = vector.shape_cast %431 : vector<20x2xf32> to vector<1x20x2xf32>
    %440 = vector.broadcast %438 : vector<8x1x2xf32> to vector<8x20x2xf32>
    %441 = vector.broadcast %439 : vector<1x20x2xf32> to vector<8x20x2xf32>
    %442 = arith.mulf %440, %441 : vector<8x20x2xf32>
    %443 = arith.addf %429, %442 : vector<8x20x2xf32>
    %444 = vector.extract_strided_slice %437 {offsets = [0, 0, 0], sizes = [1, 20, 2], strides = [1, 1, 1]} : vector<8x20x2xf32> to vector<1x20x2xf32>
    %445 = vector.shape_cast %444 : vector<1x20x2xf32> to vector<20x2xf32>
    %c0_59 = arith.constant 0 : index
    %c0_60 = arith.constant 0 : index
    %446 = vector.load %arg7[%c0_59, %c0_60] : memref<320x2xf32, #tpu.memory_space<vmem>>, vector<20x2xf32>
    tpu.vector_store %arg7[%c0_59, %c0_60], %445 {strides = array<i32>} : memref<320x2xf32, #tpu.memory_space<vmem>>, vector<20x2xf32>,
    %447 = vector.extract_strided_slice %443 {offsets = [0, 0, 0], sizes = [1, 20, 2], strides = [1, 1, 1]} : vector<8x20x2xf32> to vector<1x20x2xf32>
    %448 = vector.shape_cast %447 : vector<1x20x2xf32> to vector<20x2xf32>
    %c160_61 = arith.constant 160 : index
    %c0_62 = arith.constant 0 : index
    %449 = vector.load %arg7[%c160_61, %c0_62] : memref<320x2xf32, #tpu.memory_space<vmem>>, vector<20x2xf32>
    tpu.vector_store %arg7[%c160_61, %c0_62], %448 {strides = array<i32>} : memref<320x2xf32, #tpu.memory_space<vmem>>, vector<20x2xf32>,
    %450 = vector.extract_strided_slice %437 {offsets = [1, 0, 0], sizes = [1, 20, 2], strides = [1, 1, 1]} : vector<8x20x2xf32> to vector<1x20x2xf32>
    %451 = vector.shape_cast %450 : vector<1x20x2xf32> to vector<20x2xf32>
    %c20 = arith.constant 20 : index
    %c0_63 = arith.constant 0 : index
    %452 = vector.load %arg7[%c20, %c0_63] : memref<320x2xf32, #tpu.memory_space<vmem>>, vector<20x2xf32>
    tpu.vector_store %arg7[%c20, %c0_63], %451 {strides = array<i32>} : memref<320x2xf32, #tpu.memory_space<vmem>>, vector<20x2xf32>,
    %453 = vector.extract_strided_slice %443 {offsets = [1, 0, 0], sizes = [1, 20, 2], strides = [1, 1, 1]} : vector<8x20x2xf32> to vector<1x20x2xf32>
    %454 = vector.shape_cast %453 : vector<1x20x2xf32> to vector<20x2xf32>
    %c180 = arith.constant 180 : index
    %c0_64 = arith.constant 0 : index
    %455 = vector.load %arg7[%c180, %c0_64] : memref<320x2xf32, #tpu.memory_space<vmem>>, vector<20x2xf32>
    tpu.vector_store %arg7[%c180, %c0_64], %454 {strides = array<i32>} : memref<320x2xf32, #tpu.memory_space<vmem>>, vector<20x2xf32>,
    %456 = vector.extract_strided_slice %437 {offsets = [2, 0, 0], sizes = [1, 20, 2], strides = [1, 1, 1]} : vector<8x20x2xf32> to vector<1x20x2xf32>
    %457 = vector.shape_cast %456 : vector<1x20x2xf32> to vector<20x2xf32>
    %c40 = arith.constant 40 : index
    %c0_65 = arith.constant 0 : index
    %458 = vector.load %arg7[%c40, %c0_65] : memref<320x2xf32, #tpu.memory_space<vmem>>, vector<20x2xf32>
    tpu.vector_store %arg7[%c40, %c0_65], %457 {strides = array<i32>} : memref<320x2xf32, #tpu.memory_space<vmem>>, vector<20x2xf32>,
    %459 = vector.extract_strided_slice %443 {offsets = [2, 0, 0], sizes = [1, 20, 2], strides = [1, 1, 1]} : vector<8x20x2xf32> to vector<1x20x2xf32>
    %460 = vector.shape_cast %459 : vector<1x20x2xf32> to vector<20x2xf32>
    %c200 = arith.constant 200 : index
    %c0_66 = arith.constant 0 : index
    %461 = vector.load %arg7[%c200, %c0_66] : memref<320x2xf32, #tpu.memory_space<vmem>>, vector<20x2xf32>
    tpu.vector_store %arg7[%c200, %c0_66], %460 {strides = array<i32>} : memref<320x2xf32, #tpu.memory_space<vmem>>, vector<20x2xf32>,
    %462 = vector.extract_strided_slice %437 {offsets = [3, 0, 0], sizes = [1, 20, 2], strides = [1, 1, 1]} : vector<8x20x2xf32> to vector<1x20x2xf32>
    %463 = vector.shape_cast %462 : vector<1x20x2xf32> to vector<20x2xf32>
    %c60 = arith.constant 60 : index
    %c0_67 = arith.constant 0 : index
    %464 = vector.load %arg7[%c60, %c0_67] : memref<320x2xf32, #tpu.memory_space<vmem>>, vector<20x2xf32>
    tpu.vector_store %arg7[%c60, %c0_67], %463 {strides = array<i32>} : memref<320x2xf32, #tpu.memory_space<vmem>>, vector<20x2xf32>,
    %465 = vector.extract_strided_slice %443 {offsets = [3, 0, 0], sizes = [1, 20, 2], strides = [1, 1, 1]} : vector<8x20x2xf32> to vector<1x20x2xf32>
    %466 = vector.shape_cast %465 : vector<1x20x2xf32> to vector<20x2xf32>
    %c220 = arith.constant 220 : index
    %c0_68 = arith.constant 0 : index
    %467 = vector.load %arg7[%c220, %c0_68] : memref<320x2xf32, #tpu.memory_space<vmem>>, vector<20x2xf32>
    tpu.vector_store %arg7[%c220, %c0_68], %466 {strides = array<i32>} : memref<320x2xf32, #tpu.memory_space<vmem>>, vector<20x2xf32>,
    %468 = vector.extract_strided_slice %437 {offsets = [4, 0, 0], sizes = [1, 20, 2], strides = [1, 1, 1]} : vector<8x20x2xf32> to vector<1x20x2xf32>
    %469 = vector.shape_cast %468 : vector<1x20x2xf32> to vector<20x2xf32>
    %c80_69 = arith.constant 80 : index
    %c0_70 = arith.constant 0 : index
    %470 = vector.load %arg7[%c80_69, %c0_70] : memref<320x2xf32, #tpu.memory_space<vmem>>, vector<20x2xf32>
    tpu.vector_store %arg7[%c80_69, %c0_70], %469 {strides = array<i32>} : memref<320x2xf32, #tpu.memory_space<vmem>>, vector<20x2xf32>,
    %471 = vector.extract_strided_slice %443 {offsets = [4, 0, 0], sizes = [1, 20, 2], strides = [1, 1, 1]} : vector<8x20x2xf32> to vector<1x20x2xf32>
    %472 = vector.shape_cast %471 : vector<1x20x2xf32> to vector<20x2xf32>
    %c240_71 = arith.constant 240 : index
    %c0_72 = arith.constant 0 : index
    %473 = vector.load %arg7[%c240_71, %c0_72] : memref<320x2xf32, #tpu.memory_space<vmem>>, vector<20x2xf32>
    tpu.vector_store %arg7[%c240_71, %c0_72], %472 {strides = array<i32>} : memref<320x2xf32, #tpu.memory_space<vmem>>, vector<20x2xf32>,
    %474 = vector.extract_strided_slice %437 {offsets = [5, 0, 0], sizes = [1, 20, 2], strides = [1, 1, 1]} : vector<8x20x2xf32> to vector<1x20x2xf32>
    %475 = vector.shape_cast %474 : vector<1x20x2xf32> to vector<20x2xf32>
    %c100 = arith.constant 100 : index
    %c0_73 = arith.constant 0 : index
    %476 = vector.load %arg7[%c100, %c0_73] : memref<320x2xf32, #tpu.memory_space<vmem>>, vector<20x2xf32>
    tpu.vector_store %arg7[%c100, %c0_73], %475 {strides = array<i32>} : memref<320x2xf32, #tpu.memory_space<vmem>>, vector<20x2xf32>,
    %477 = vector.extract_strided_slice %443 {offsets = [5, 0, 0], sizes = [1, 20, 2], strides = [1, 1, 1]} : vector<8x20x2xf32> to vector<1x20x2xf32>
    %478 = vector.shape_cast %477 : vector<1x20x2xf32> to vector<20x2xf32>
    %c260 = arith.constant 260 : index
    %c0_74 = arith.constant 0 : index
    %479 = vector.load %arg7[%c260, %c0_74] : memref<320x2xf32, #tpu.memory_space<vmem>>, vector<20x2xf32>
    tpu.vector_store %arg7[%c260, %c0_74], %478 {strides = array<i32>} : memref<320x2xf32, #tpu.memory_space<vmem>>, vector<20x2xf32>,
    %480 = vector.extract_strided_slice %437 {offsets = [6, 0, 0], sizes = [1, 20, 2], strides = [1, 1, 1]} : vector<8x20x2xf32> to vector<1x20x2xf32>
    %481 = vector.shape_cast %480 : vector<1x20x2xf32> to vector<20x2xf32>
    %c120 = arith.constant 120 : index
    %c0_75 = arith.constant 0 : index
    %482 = vector.load %arg7[%c120, %c0_75] : memref<320x2xf32, #tpu.memory_space<vmem>>, vector<20x2xf32>
    tpu.vector_store %arg7[%c120, %c0_75], %481 {strides = array<i32>} : memref<320x2xf32, #tpu.memory_space<vmem>>, vector<20x2xf32>,
    %483 = vector.extract_strided_slice %443 {offsets = [6, 0, 0], sizes = [1, 20, 2], strides = [1, 1, 1]} : vector<8x20x2xf32> to vector<1x20x2xf32>
    %484 = vector.shape_cast %483 : vector<1x20x2xf32> to vector<20x2xf32>
    %c280 = arith.constant 280 : index
    %c0_76 = arith.constant 0 : index
    %485 = vector.load %arg7[%c280, %c0_76] : memref<320x2xf32, #tpu.memory_space<vmem>>, vector<20x2xf32>
    tpu.vector_store %arg7[%c280, %c0_76], %484 {strides = array<i32>} : memref<320x2xf32, #tpu.memory_space<vmem>>, vector<20x2xf32>,
    %486 = vector.extract_strided_slice %437 {offsets = [7, 0, 0], sizes = [1, 20, 2], strides = [1, 1, 1]} : vector<8x20x2xf32> to vector<1x20x2xf32>
    %487 = vector.shape_cast %486 : vector<1x20x2xf32> to vector<20x2xf32>
    %c140 = arith.constant 140 : index
    %c0_77 = arith.constant 0 : index
    %488 = vector.load %arg7[%c140, %c0_77] : memref<320x2xf32, #tpu.memory_space<vmem>>, vector<20x2xf32>
    tpu.vector_store %arg7[%c140, %c0_77], %487 {strides = array<i32>} : memref<320x2xf32, #tpu.memory_space<vmem>>, vector<20x2xf32>,
    %489 = vector.extract_strided_slice %443 {offsets = [7, 0, 0], sizes = [1, 20, 2], strides = [1, 1, 1]} : vector<8x20x2xf32> to vector<1x20x2xf32>
    %490 = vector.shape_cast %489 : vector<1x20x2xf32> to vector<20x2xf32>
    %c300 = arith.constant 300 : index
    %c0_78 = arith.constant 0 : index
    %491 = vector.load %arg7[%c300, %c0_78] : memref<320x2xf32, #tpu.memory_space<vmem>>, vector<20x2xf32>
    tpu.vector_store %arg7[%c300, %c0_78], %490 {strides = array<i32>} : memref<320x2xf32, #tpu.memory_space<vmem>>, vector<20x2xf32>,
    %c0_79 = arith.constant 0 : index
    %c0_80 = arith.constant 0 : index
    %492 = vector.load %arg3[%c0_79, %c0_80] : memref<320x320xf32, #tpu.memory_space<vmem>>, vector<320x320xf32>
    %c0_81 = arith.constant 0 : index
    %c0_82 = arith.constant 0 : index
    %493 = vector.load %arg7[%c0_81, %c0_82] : memref<320x2xf32, #tpu.memory_space<vmem>>, vector<320x2xf32>
    %cst_83 = arith.constant dense<0.000000e+00> : vector<320x2xf32>
    %494 = tpu.matmul %492, %493, %cst_83 {dimension_numbers = #tpu.dot_dimension_numbers<[1], [0], [0], [1], [0, 0, 1, 1], [], []>} : vector<320x320xf32>, vector<320x2xf32>, vector<320x2xf32> -> vector<320x2xf32>
    %c0_84 = arith.constant 0 : index
    %c0_85 = arith.constant 0 : index
    %495 = vector.load %arg4[%c0_84, %c0_85] : memref<320x2xf32, #tpu.memory_space<vmem>>, vector<320x2xf32>
    tpu.vector_store %arg4[%c0_84, %c0_85], %494 {strides = array<i32>} : memref<320x2xf32, #tpu.memory_space<vmem>>, vector<320x2xf32>,
    return
  }
  func.func @transform_0(%arg0: i32) -> (i32, i32) {
    %c0_i32 = arith.constant 0 : i32
    %c0_i32_0 = arith.constant 0 : i32
    return %c0_i32, %arg0 : i32, i32
  }
  func.func @transform_1(%arg0: i32) -> (i32, i32) {
    %c0_i32 = arith.constant 0 : i32
    %c0_i32_0 = arith.constant 0 : i32
    %c0_i32_1 = arith.constant 0 : i32
    return %c0_i32, %c0_i32_0 : i32, i32
  }
  func.func @transform_2(%arg0: i32) -> (i32, i32) {
    %c0_i32 = arith.constant 0 : i32
    %c0_i32_0 = arith.constant 0 : i32
    %c0_i32_1 = arith.constant 0 : i32
    return %c0_i32, %c0_i32_0 : i32, i32
  }
  func.func @transform_3(%arg0: i32) -> (i32, i32) {
    %c0_i32 = arith.constant 0 : i32
    %c0_i32_0 = arith.constant 0 : i32
    return %c0_i32, %arg0 : i32, i32
  }
  func.func @transform_4(%arg0: i32) -> (i32, i32, i32) {
    %c0_i32 = arith.constant 0 : i32
    %c0_i32_0 = arith.constant 0 : i32
    %c0_i32_1 = arith.constant 0 : i32
    return %c0_i32, %c0_i32_0, %arg0 : i32, i32, i32
  }
}

</mosaic_0001>

<llo_original>
// kernel: multihead_attention_forward.1
$region0: #{multihead_attention_forward.1}
  #allocation0 [shape = 'u32[]', space=smem, size = 0x4, offset = 0x4, fixed_abs, tag = 'smem constant byte address 0x4 - core index']
  #allocation1 [shape = 'u32[144,128]{1,0:T(1,128)}', space=vmem, size = 0x12000, scoped, tag = 'internal scratch']
  #allocation2 [shape = 'f32[768,2]{1,0:T(8,128)}', space=vmem, size = 0x60000, scoped, tag = 'scratch operand']
  #allocation3 [shape = 'f32[320,2]{1,0:T(8,128)}', space=vmem, size = 0x28000, scoped, tag = 'scratch operand']
  %s0 = inlined_call_operand.vmem [shape: f32[528,2], index: 0, kind: input, shape index: {}]
  %s1 = inlined_call_operand.vmem [shape: f32[768,528], index: 1, kind: input, shape index: {}]
  %s2 = inlined_call_operand.vmem [shape: f32[320,320], index: 2, kind: input, shape index: {}]
  %s3 = inlined_call_operand.vmem [shape: f32[320,2], index: 3, kind: output, shape index: {0}]
  %s4 = inlined_call_operand.vmem [shape: f32[16,8,2], index: 4, kind: output, shape index: {1}]
  %5 = xla_tuple %s3, %s4
  %s6 = sld [smem:[#allocation0]]
  $region30: #{multihead_attention_forward.1} parent=0
    _
  %s8 = ssub.s32 1, %s6
  %s9 = scalar_select 0, %s8, %s6
  // Predicated region
  $region2: #{multihead_attention_forward.1} parent=0 // pred_check
    _
  $region3: #{multihead_attention_forward.1} parent=0 // pred_check_branch
    %11 = sbr.rel (0) target = $region5
  $region4: #{multihead_attention_forward.1} parent=0 // pred_region
    _
  $region5: #{multihead_attention_forward.1} parent=0 // pred_fallthru
    _
  // Predicated region
  $region6: #{multihead_attention_forward.1} parent=0 // pred_check
    _
  $region7: #{multihead_attention_forward.1} parent=0 // pred_check_branch
    %13 = sbr.rel (0) target = $region9
  $region8: #{multihead_attention_forward.1} parent=0 // pred_region
    _
  $region9: #{multihead_attention_forward.1} parent=0 // pred_fallthru
    _
  // Predicated region
  $region10: #{multihead_attention_forward.1} parent=0 // pred_check
    _
  $region11: #{multihead_attention_forward.1} parent=0 // pred_check_branch
    %15 = sbr.rel (0) target = $region13
  $region12: #{multihead_attention_forward.1} parent=0 // pred_region
    _
  $region13: #{multihead_attention_forward.1} parent=0 // pred_fallthru
    _
  %v16 = vld [vmem:[%s1] sm:$0xff]
  %v17 = vld [vmem:[%s1 + $0x8] sm:$0xff]
  %v18 = vld [vmem:[%s1 + $0x10] sm:$0xff]
  %v19 = vld [vmem:[%s1 + $0x18] sm:$0xff]
  %v20 = vld [vmem:[%s1 + $0x20] sm:$0xff]
  %v21 = vld [vmem:[%s1 + $0x28] sm:$0xff]
  %v22 = vld [vmem:[%s1 + $0x30] sm:$0xff]
  %v23 = vld [vmem:[%s1 + $0x38] sm:$0xff]
  %v24 = vld [vmem:[%s1 + $0x40] sm:$0xff]
  %v25 = vld [vmem:[%s1 + $0x48] sm:$0xff]
  %v26 = vld [vmem:[%s1 + $0x50] sm:$0xff]
  %v27 = vld [vmem:[%s1 + $0x58] sm:$0xff]
  %v28 = vld [vmem:[%s1 + $0x60] sm:$0xff]
  %v29 = vld [vmem:[%s1 + $0x68] sm:$0xff]
  %v30 = vld [vmem:[%s1 + $0x70] sm:$0xff]
  %v31 = vld [vmem:[%s1 + $0x78] sm:$0xff]
  %v32 = vld [vmem:[%s1 + $0x80] sm:$0xff]
  %v33 = vld [vmem:[%s1 + $0x88] sm:$0xff]
  %v34 = vld [vmem:[%s1 + $0x90] sm:$0xff]
  %v35 = vld [vmem:[%s1 + $0x98] sm:$0xff]
  %v36 = vld [vmem:[%s1 + $0xa0] sm:$0xff]
  %v37 = vld [vmem:[%s1 + $0xa8] sm:$0xff]
  %v38 = vld [vmem:[%s1 + $0xb0] sm:$0xff]
  %v39 = vld [vmem:[%s1 + $0xb8] sm:$0xff]
  %v40 = vld [vmem:[%s1 + $0xc0] sm:$0xff]
  %v41 = vld [vmem:[%s1 + $0xc8] sm:$0xff]
  %v42 = vld [vmem:[%s1 + $0xd0] sm:$0xff]
  %v43 = vld [vmem:[%s1 + $0xd8] sm:$0xff]
  %v44 = vld [vmem:[%s1 + $0xe0] sm:$0xff]
  %v45 = vld [vmem:[%s1 + $0xe8] sm:$0xff]
  %v46 = vld [vmem:[%s1 + $0xf0] sm:$0xff]
  %v47 = vld [vmem:[%s1 + $0xf8] sm:$0xff]
  %v48 = vld [vmem:[%s1 + $0x100] sm:$0xff]
  %v49 = vld [vmem:[%s1 + $0x108] sm:$0xff]
  %v50 = vld [vmem:[%s1 + $0x110] sm:$0xff]
  %v51 = vld [vmem:[%s1 + $0x118] sm:$0xff]
  %v52 = vld [vmem:[%s1 + $0x120] sm:$0xff]
  %v53 = vld [vmem:[%s1 + $0x128] sm:$0xff]
  %v54 = vld [vmem:[%s1 + $0x130] sm:$0xff]
  %v55 = vld [vmem:[%s1 + $0x138] sm:$0xff]
  %v56 = vld [vmem:[%s1 + $0x140] sm:$0xff]
  %v57 = vld [vmem:[%s1 + $0x148] sm:$0xff]
  %v58 = vld [vmem:[%s1 + $0x150] sm:$0xff]
  %v59 = vld [vmem:[%s1 + $0x158] sm:$0xff]
  %v60 = vld [vmem:[%s1 + $0x160] sm:$0xff]
  %v61 = vld [vmem:[%s1 + $0x168] sm:$0xff]
  %v62 = vld [vmem:[%s1 + $0x170] sm:$0xff]
  %v63 = vld [vmem:[%s1 + $0x178] sm:$0xff]
  %v64 = vld [vmem:[%s1 + $0x180] sm:$0xff]
  %v65 = vld [vmem:[%s1 + $0x188] sm:$0xff]
  %v66 = vld [vmem:[%s1 + $0x190] sm:$0xff]
  %v67 = vld [vmem:[%s1 + $0x198] sm:$0xff]
  %v68 = vld [vmem:[%s1 + $0x1a0] sm:$0xff]
  %v69 = vld [vmem:[%s1 + $0x1a8] sm:$0xff]
  %v70 = vld [vmem:[%s1 + $0x1b0] sm:$0xff]
  %v71 = vld [vmem:[%s1 + $0x1b8] sm:$0xff]
  %v72 = vld [vmem:[%s1 + $0x1c0] sm:$0xff]
  %v73 = vld [vmem:[%s1 + $0x1c8] sm:$0xff]
  %v74 = vld [vmem:[%s1 + $0x1d0] sm:$0xff]
  %v75 = vld [vmem:[%s1 + $0x1d8] sm:$0xff]
  %v76 = vld [vmem:[%s1 + $0x1e0] sm:$0xff]
  %v77 = vld [vmem:[%s1 + $0x1e8] sm:$0xff]
  %v78 = vld [vmem:[%s1 + $0x1f0] sm:$0xff]
  %v79 = vld [vmem:[%s1 + $0x1f8] sm:$0xff]
  %v80 = vld [vmem:[%s1 + $0x200] sm:$0xff]
  %v81 = vld [vmem:[%s1 + $0x208] sm:$0xff]
  %v82 = vld [vmem:[%s1 + $0x210] sm:$0xff]
  %v83 = vld [vmem:[%s1 + $0x218] sm:$0xff]
  %v84 = vld [vmem:[%s1 + $0x220] sm:$0xff]
  %v85 = vld [vmem:[%s1 + $0x228] sm:$0xff]
  %v86 = vld [vmem:[%s1 + $0x230] sm:$0xff]
  %v87 = vld [vmem:[%s1 + $0x238] sm:$0xff]
  %v88 = vld [vmem:[%s1 + $0x240] sm:$0xff]
  %v89 = vld [vmem:[%s1 + $0x248] sm:$0xff]
  %v90 = vld [vmem:[%s1 + $0x250] sm:$0xff]
  %v91 = vld [vmem:[%s1 + $0x258] sm:$0xff]
  %v92 = vld [vmem:[%s1 + $0x260] sm:$0xff]
  %v93 = vld [vmem:[%s1 + $0x268] sm:$0xff]
  %v94 = vld [vmem:[%s1 + $0x270] sm:$0xff]
  %v95 = vld [vmem:[%s1 + $0x278] sm:$0xff]
  %v96 = vld [vmem:[%s1 + $0x280] sm:$0xff]
  %v97 = vld [vmem:[%s1 + $0x288] sm:$0xff]
  %v98 = vld [vmem:[%s1 + $0x290] sm:$0xff]
  %v99 = vld [vmem:[%s1 + $0x298] sm:$0xff]
  %v100 = vld [vmem:[%s1 + $0x2a0] sm:$0xff]
  %v101 = vld [vmem:[%s1 + $0x2a8] sm:$0xff]
  %v102 = vld [vmem:[%s1 + $0x2b0] sm:$0xff]
  %v103 = vld [vmem:[%s1 + $0x2b8] sm:$0xff]
  %v104 = vld [vmem:[%s1 + $0x2c0] sm:$0xff]
  %v105 = vld [vmem:[%s1 + $0x2c8] sm:$0xff]
  %v106 = vld [vmem:[%s1 + $0x2d0] sm:$0xff]
  %v107 = vld [vmem:[%s1 + $0x2d8] sm:$0xff]
  %v108 = vld [vmem:[%s1 + $0x2e0] sm:$0xff]
  %v109 = vld [vmem:[%s1 + $0x2e8] sm:$0xff]
  %v110 = vld [vmem:[%s1 + $0x2f0] sm:$0xff]
  %v111 = vld [vmem:[%s1 + $0x2f8] sm:$0xff]
  %v112 = vld [vmem:[%s1 + $0x300] sm:$0xff]
  %v113 = vld [vmem:[%s1 + $0x308] sm:$0xff]
  %v114 = vld [vmem:[%s1 + $0x310] sm:$0xff]
  %v115 = vld [vmem:[%s1 + $0x318] sm:$0xff]
  %v116 = vld [vmem:[%s1 + $0x320] sm:$0xff]
  %v117 = vld [vmem:[%s1 + $0x328] sm:$0xff]
  %v118 = vld [vmem:[%s1 + $0x330] sm:$0xff]
  %v119 = vld [vmem:[%s1 + $0x338] sm:$0xff]
  %v120 = vld [vmem:[%s1 + $0x340] sm:$0xff]
  %v121 = vld [vmem:[%s1 + $0x348] sm:$0xff]
  %v122 = vld [vmem:[%s1 + $0x350] sm:$0xff]
  %v123 = vld [vmem:[%s1 + $0x358] sm:$0xff]
  %v124 = vld [vmem:[%s1 + $0x360] sm:$0xff]
  %v125 = vld [vmem:[%s1 + $0x368] sm:$0xff]
  %v126 = vld [vmem:[%s1 + $0x370] sm:$0xff]
  %v127 = vld [vmem:[%s1 + $0x378] sm:$0xff]
  %v128 = vld [vmem:[%s1 + $0x380] sm:$0xff]
  %v129 = vld [vmem:[%s1 + $0x388] sm:$0xff]
  %v130 = vld [vmem:[%s1 + $0x390] sm:$0xff]
  %v131 = vld [vmem:[%s1 + $0x398] sm:$0xff]
  %v132 = vld [vmem:[%s1 + $0x3a0] sm:$0xff]
  %v133 = vld [vmem:[%s1 + $0x3a8] sm:$0xff]
  %v134 = vld [vmem:[%s1 + $0x3b0] sm:$0xff]
  %v135 = vld [vmem:[%s1 + $0x3b8] sm:$0xff]
  %v136 = vld [vmem:[%s1 + $0x3c0] sm:$0xff]
  %v137 = vld [vmem:[%s1 + $0x3c8] sm:$0xff]
  %v138 = vld [vmem:[%s1 + $0x3d0] sm:$0xff]
  %v139 = vld [vmem:[%s1 + $0x3d8] sm:$0xff]
  %v140 = vld [vmem:[%s1 + $0x3e0] sm:$0xff]
  %v141 = vld [vmem:[%s1 + $0x3e8] sm:$0xff]
  %v142 = vld [vmem:[%s1 + $0x3f0] sm:$0xff]
  %v143 = vld [vmem:[%s1 + $0x3f8] sm:$0xff]
  %v144 = vld [vmem:[%s1 + $0x400] sm:$0xff]
  %v145 = vld [vmem:[%s1 + $0x408] sm:$0xff]
  %v146 = vld [vmem:[%s1 + $0x410] sm:$0xff]
  %v147 = vld [vmem:[%s1 + $0x418] sm:$0xff]
  %v148 = vld [vmem:[%s1 + $0x420] sm:$0xff]
  %v149 = vld [vmem:[%s1 + $0x428] sm:$0xff]
  %v150 = vld [vmem:[%s1 + $0x430] sm:$0xff]
  %v151 = vld [vmem:[%s1 + $0x438] sm:$0xff]
  %v152 = vld [vmem:[%s1 + $0x440] sm:$0xff]
  %v153 = vld [vmem:[%s1 + $0x448] sm:$0xff]
  %v154 = vld [vmem:[%s1 + $0x450] sm:$0xff]
  %v155 = vld [vmem:[%s1 + $0x458] sm:$0xff]
  %v156 = vld [vmem:[%s1 + $0x460] sm:$0xff]
  %v157 = vld [vmem:[%s1 + $0x468] sm:$0xff]
  %v158 = vld [vmem:[%s1 + $0x470] sm:$0xff]
  %v159 = vld [vmem:[%s1 + $0x478] sm:$0xff]
  %v160 = vld [vmem:[%s1 + $0x480] sm:$0xff]
  %v161 = vld [vmem:[%s1 + $0x488] sm:$0xff]
  %v162 = vld [vmem:[%s1 + $0x490] sm:$0xff]
  %v163 = vld [vmem:[%s1 + $0x498] sm:$0xff]
  %v164 = vld [vmem:[%s1 + $0x4a0] sm:$0xff]
  %v165 = vld [vmem:[%s1 + $0x4a8] sm:$0xff]
  %v166 = vld [vmem:[%s1 + $0x4b0] sm:$0xff]
  %v167 = vld [vmem:[%s1 + $0x4b8] sm:$0xff]
  %v168 = vld [vmem:[%s1 + $0x4c0] sm:$0xff]
  %v169 = vld [vmem:[%s1 + $0x4c8] sm:$0xff]
  %v170 = vld [vmem:[%s1 + $0x4d0] sm:$0xff]
  %v171 = vld [vmem:[%s1 + $0x4d8] sm:$0xff]
  %v172 = vld [vmem:[%s1 + $0x4e0] sm:$0xff]
  %v173 = vld [vmem:[%s1 + $0x4e8] sm:$0xff]
  %v174 = vld [vmem:[%s1 + $0x4f0] sm:$0xff]
  %v175 = vld [vmem:[%s1 + $0x4f8] sm:$0xff]
  %v176 = vld [vmem:[%s1 + $0x500] sm:$0xff]
  %v177 = vld [vmem:[%s1 + $0x508] sm:$0xff]
  %v178 = vld [vmem:[%s1 + $0x510] sm:$0xff]
  %v179 = vld [vmem:[%s1 + $0x518] sm:$0xff]
  %v180 = vld [vmem:[%s1 + $0x520] sm:$0xff]
  %v181 = vld [vmem:[%s1 + $0x528] sm:$0xff]
  %v182 = vld [vmem:[%s1 + $0x530] sm:$0xff]
  %v183 = vld [vmem:[%s1 + $0x538] sm:$0xff]
  %v184 = vld [vmem:[%s1 + $0x540] sm:$0xff]
  %v185 = vld [vmem:[%s1 + $0x548] sm:$0xff]
  %v186 = vld [vmem:[%s1 + $0x550] sm:$0xff]
  %v187 = vld [vmem:[%s1 + $0x558] sm:$0xff]
  %v188 = vld [vmem:[%s1 + $0x560] sm:$0xff]
  %v189 = vld [vmem:[%s1 + $0x568] sm:$0xff]
  %v190 = vld [vmem:[%s1 + $0x570] sm:$0xff]
  %v191 = vld [vmem:[%s1 + $0x578] sm:$0xff]
  %v192 = vld [vmem:[%s1 + $0x580] sm:$0xff]
  %v193 = vld [vmem:[%s1 + $0x588] sm:$0xff]
  %v194 = vld [vmem:[%s1 + $0x590] sm:$0xff]
  %v195 = vld [vmem:[%s1 + $0x598] sm:$0xff]
  %v196 = vld [vmem:[%s1 + $0x5a0] sm:$0xff]
  %v197 = vld [vmem:[%s1 + $0x5a8] sm:$0xff]
  %v198 = vld [vmem:[%s1 + $0x5b0] sm:$0xff]
  %v199 = vld [vmem:[%s1 + $0x5b8] sm:$0xff]
  %v200 = vld [vmem:[%s1 + $0x5c0] sm:$0xff]
  %v201 = vld [vmem:[%s1 + $0x5c8] sm:$0xff]
  %v202 = vld [vmem:[%s1 + $0x5d0] sm:$0xff]
  %v203 = vld [vmem:[%s1 + $0x5d8] sm:$0xff]
  %v204 = vld [vmem:[%s1 + $0x5e0] sm:$0xff]
  %v205 = vld [vmem:[%s1 + $0x5e8] sm:$0xff]
  %v206 = vld [vmem:[%s1 + $0x5f0] sm:$0xff]
  %v207 = vld [vmem:[%s1 + $0x5f8] sm:$0xff]
  %v208 = vld [vmem:[%s1 + $0x600] sm:$0xff]
  %v209 = vld [vmem:[%s1 + $0x608] sm:$0xff]
  %v210 = vld [vmem:[%s1 + $0x610] sm:$0xff]
  %v211 = vld [vmem:[%s1 + $0x618] sm:$0xff]
  %v212 = vld [vmem:[%s1 + $0x620] sm:$0xff]
  %v213 = vld [vmem:[%s1 + $0x628] sm:$0xff]
  %v214 = vld [vmem:[%s1 + $0x630] sm:$0xff]
  %v215 = vld [vmem:[%s1 + $0x638] sm:$0xff]
  %v216 = vld [vmem:[%s1 + $0x640] sm:$0xff]
  %v217 = vld [vmem:[%s1 + $0x648] sm:$0xff]
  %v218 = vld [vmem:[%s1 + $0x650] sm:$0xff]
  %v219 = vld [vmem:[%s1 + $0x658] sm:$0xff]
  %v220 = vld [vmem:[%s1 + $0x660] sm:$0xff]
  %v221 = vld [vmem:[%s1 + $0x668] sm:$0xff]
  %v222 = vld [vmem:[%s1 + $0x670] sm:$0xff]
  %v223 = vld [vmem:[%s1 + $0x678] sm:$0xff]
  %v224 = vld [vmem:[%s1 + $0x680] sm:$0xff]
  %v225 = vld [vmem:[%s1 + $0x688] sm:$0xff]
  %v226 = vld [vmem:[%s1 + $0x690] sm:$0xff]
  %v227 = vld [vmem:[%s1 + $0x698] sm:$0xff]
  %v228 = vld [vmem:[%s1 + $0x6a0] sm:$0xff]
  %v229 = vld [vmem:[%s1 + $0x6a8] sm:$0xff]
  %v230 = vld [vmem:[%s1 + $0x6b0] sm:$0xff]
  %v231 = vld [vmem:[%s1 + $0x6b8] sm:$0xff]
  %v232 = vld [vmem:[%s1 + $0x6c0] sm:$0xff]
  %v233 = vld [vmem:[%s1 + $0x6c8] sm:$0xff]
  %v234 = vld [vmem:[%s1 + $0x6d0] sm:$0xff]
  %v235 = vld [vmem:[%s1 + $0x6d8] sm:$0xff]
  %v236 = vld [vmem:[%s1 + $0x6e0] sm:$0xff]
  %v237 = vld [vmem:[%s1 + $0x6e8] sm:$0xff]
  %v238 = vld [vmem:[%s1 + $0x6f0] sm:$0xff]
  %v239 = vld [vmem:[%s1 + $0x6f8] sm:$0xff]
  %v240 = vld [vmem:[%s1 + $0x700] sm:$0xff]
  %v241 = vld [vmem:[%s1 + $0x708] sm:$0xff]
  %v242 = vld [vmem:[%s1 + $0x710] sm:$0xff]
  %v243 = vld [vmem:[%s1 + $0x718] sm:$0xff]
  %v244 = vld [vmem:[%s1 + $0x720] sm:$0xff]
  %v245 = vld [vmem:[%s1 + $0x728] sm:$0xff]
  %v246 = vld [vmem:[%s1 + $0x730] sm:$0xff]
  %v247 = vld [vmem:[%s1 + $0x738] sm:$0xff]
  %v248 = vld [vmem:[%s1 + $0x740] sm:$0xff]
  %v249 = vld [vmem:[%s1 + $0x748] sm:$0xff]
  %v250 = vld [vmem:[%s1 + $0x750] sm:$0xff]
  %v251 = vld [vmem:[%s1 + $0x758] sm:$0xff]
  %v252 = vld [vmem:[%s1 + $0x760] sm:$0xff]
  %v253 = vld [vmem:[%s1 + $0x768] sm:$0xff]
  %v254 = vld [vmem:[%s1 + $0x770] sm:$0xff]
  %v255 = vld [vmem:[%s1 + $0x778] sm:$0xff]
  %v256 = vld [vmem:[%s1 + $0x780] sm:$0xff]
  %v257 = vld [vmem:[%s1 + $0x788] sm:$0xff]
  %v258 = vld [vmem:[%s1 + $0x790] sm:$0xff]
  %v259 = vld [vmem:[%s1 + $0x798] sm:$0xff]
  %v260 = vld [vmem:[%s1 + $0x7a0] sm:$0xff]
  %v261 = vld [vmem:[%s1 + $0x7a8] sm:$0xff]
  %v262 = vld [vmem:[%s1 + $0x7b0] sm:$0xff]
  %v263 = vld [vmem:[%s1 + $0x7b8] sm:$0xff]
  %v264 = vld [vmem:[%s1 + $0x7c0] sm:$0xff]
  %v265 = vld [vmem:[%s1 + $0x7c8] sm:$0xff]
  %v266 = vld [vmem:[%s1 + $0x7d0] sm:$0xff]
  %v267 = vld [vmem:[%s1 + $0x7d8] sm:$0xff]
  %v268 = vld [vmem:[%s1 + $0x7e0] sm:$0xff]
  %v269 = vld [vmem:[%s1 + $0x7e8] sm:$0xff]
  %v270 = vld [vmem:[%s1 + $0x7f0] sm:$0xff]
  %v271 = vld [vmem:[%s1 + $0x7f8] sm:$0xff]
  %v272 = vld [vmem:[%s1 + $0x800] sm:$0xff]
  %v273 = vld [vmem:[%s1 + $0x808] sm:$0xff]
  %v274 = vld [vmem:[%s1 + $0x810] sm:$0xff]
  %v275 = vld [vmem:[%s1 + $0x818] sm:$0xff]
  %v276 = vld [vmem:[%s1 + $0x820] sm:$0xff]
  %v277 = vld [vmem:[%s1 + $0x828] sm:$0xff]
  %v278 = vld [vmem:[%s1 + $0x830] sm:$0xff]
  %v279 = vld [vmem:[%s1 + $0x838] sm:$0xff]
  %v280 = vld [vmem:[%s1 + $0x840] sm:$0xff]
  %v281 = vld [vmem:[%s1 + $0x848] sm:$0xff]
  %v282 = vld [vmem:[%s1 + $0x850] sm:$0xff]
  %v283 = vld [vmem:[%s1 + $0x858] sm:$0xff]
  %v284 = vld [vmem:[%s1 + $0x860] sm:$0xff]
  %v285 = vld [vmem:[%s1 + $0x868] sm:$0xff]
  %v286 = vld [vmem:[%s1 + $0x870] sm:$0xff]
  %v287 = vld [vmem:[%s1 + $0x878] sm:$0xff]
  %v288 = vld [vmem:[%s1 + $0x880] sm:$0xff]
  %v289 = vld [vmem:[%s1 + $0x888] sm:$0xff]
  %v290 = vld [vmem:[%s1 + $0x890] sm:$0xff]
  %v291 = vld [vmem:[%s1 + $0x898] sm:$0xff]
  %v292 = vld [vmem:[%s1 + $0x8a0] sm:$0xff]
  %v293 = vld [vmem:[%s1 + $0x8a8] sm:$0xff]
  %v294 = vld [vmem:[%s1 + $0x8b0] sm:$0xff]
  %v295 = vld [vmem:[%s1 + $0x8b8] sm:$0xff]
  %v296 = vld [vmem:[%s1 + $0x8c0] sm:$0xff]
  %v297 = vld [vmem:[%s1 + $0x8c8] sm:$0xff]
  %v298 = vld [vmem:[%s1 + $0x8d0] sm:$0xff]
  %v299 = vld [vmem:[%s1 + $0x8d8] sm:$0xff]
  %v300 = vld [vmem:[%s1 + $0x8e0] sm:$0xff]
  %v301 = vld [vmem:[%s1 + $0x8e8] sm:$0xff]
  %v302 = vld [vmem:[%s1 + $0x8f0] sm:$0xff]
  %v303 = vld [vmem:[%s1 + $0x8f8] sm:$0xff]
  %v304 = vld [vmem:[%s1 + $0x900] sm:$0xff]
  %v305 = vld [vmem:[%s1 + $0x908] sm:$0xff]
  %v306 = vld [vmem:[%s1 + $0x910] sm:$0xff]
  %v307 = vld [vmem:[%s1 + $0x918] sm:$0xff]
  %v308 = vld [vmem:[%s1 + $0x920] sm:$0xff]
  %v309 = vld [vmem:[%s1 + $0x928] sm:$0xff]
  %v310 = vld [vmem:[%s1 + $0x930] sm:$0xff]
  %v311 = vld [vmem:[%s1 + $0x938] sm:$0xff]
  %v312 = vld [vmem:[%s1 + $0x940] sm:$0xff]
  %v313 = vld [vmem:[%s1 + $0x948] sm:$0xff]
  %v314 = vld [vmem:[%s1 + $0x950] sm:$0xff]
  %v315 = vld [vmem:[%s1 + $0x958] sm:$0xff]
  %v316 = vld [vmem:[%s1 + $0x960] sm:$0xff]
  %v317 = vld [vmem:[%s1 + $0x968] sm:$0xff]
  %v318 = vld [vmem:[%s1 + $0x970] sm:$0xff]
  %v319 = vld [vmem:[%s1 + $0x978] sm:$0xff]
  %v320 = vld [vmem:[%s1 + $0x980] sm:$0xff]
  %v321 = vld [vmem:[%s1 + $0x988] sm:$0xff]
  %v322 = vld [vmem:[%s1 + $0x990] sm:$0xff]
  %v323 = vld [vmem:[%s1 + $0x998] sm:$0xff]
  %v324 = vld [vmem:[%s1 + $0x9a0] sm:$0xff]
  %v325 = vld [vmem:[%s1 + $0x9a8] sm:$0xff]
  %v326 = vld [vmem:[%s1 + $0x9b0] sm:$0xff]
  %v327 = vld [vmem:[%s1 + $0x9b8] sm:$0xff]
  %v328 = vld [vmem:[%s1 + $0x9c0] sm:$0xff]
  %v329 = vld [vmem:[%s1 + $0x9c8] sm:$0xff]
  %v330 = vld [vmem:[%s1 + $0x9d0] sm:$0xff]
  %v331 = vld [vmem:[%s1 + $0x9d8] sm:$0xff]
  %v332 = vld [vmem:[%s1 + $0x9e0] sm:$0xff]
  %v333 = vld [vmem:[%s1 + $0x9e8] sm:$0xff]
  %v334 = vld [vmem:[%s1 + $0x9f0] sm:$0xff]
  %v335 = vld [vmem:[%s1 + $0x9f8] sm:$0xff]
  %v336 = vld [vmem:[%s1 + $0xa00] sm:$0xff]
  %v337 = vld [vmem:[%s1 + $0xa08] sm:$0xff]
  %v338 = vld [vmem:[%s1 + $0xa10] sm:$0xff]
  %v339 = vld [vmem:[%s1 + $0xa18] sm:$0xff]
  %v340 = vld [vmem:[%s1 + $0xa20] sm:$0xff]
  %v341 = vld [vmem:[%s1 + $0xa28] sm:$0xff]
  %v342 = vld [vmem:[%s1 + $0xa30] sm:$0xff]
  %v343 = vld [vmem:[%s1 + $0xa38] sm:$0xff]
  %v344 = vld [vmem:[%s1 + $0xa40] sm:$0xff]
  %v345 = vld [vmem:[%s1 + $0xa48] sm:$0xff]
  %v346 = vld [vmem:[%s1 + $0xa50] sm:$0xff]
  %v347 = vld [vmem:[%s1 + $0xa58] sm:$0xff]
  %v348 = vld [vmem:[%s1 + $0xa60] sm:$0xff]
  %v349 = vld [vmem:[%s1 + $0xa68] sm:$0xff]
  %v350 = vld [vmem:[%s1 + $0xa70] sm:$0xff]
  %v351 = vld [vmem:[%s1 + $0xa78] sm:$0xff]
  %v352 = vld [vmem:[%s1 + $0xa80] sm:$0xff]
  %v353 = vld [vmem:[%s1 + $0xa88] sm:$0xff]
  %v354 = vld [vmem:[%s1 + $0xa90] sm:$0xff]
  %v355 = vld [vmem:[%s1 + $0xa98] sm:$0xff]
  %v356 = vld [vmem:[%s1 + $0xaa0] sm:$0xff]
  %v357 = vld [vmem:[%s1 + $0xaa8] sm:$0xff]
  %v358 = vld [vmem:[%s1 + $0xab0] sm:$0xff]
  %v359 = vld [vmem:[%s1 + $0xab8] sm:$0xff]
  %v360 = vld [vmem:[%s1 + $0xac0] sm:$0xff]
  %v361 = vld [vmem:[%s1 + $0xac8] sm:$0xff]
  %v362 = vld [vmem:[%s1 + $0xad0] sm:$0xff]
  %v363 = vld [vmem:[%s1 + $0xad8] sm:$0xff]
  %v364 = vld [vmem:[%s1 + $0xae0] sm:$0xff]
  %v365 = vld [vmem:[%s1 + $0xae8] sm:$0xff]
  %v366 = vld [vmem:[%s1 + $0xaf0] sm:$0xff]
  %v367 = vld [vmem:[%s1 + $0xaf8] sm:$0xff]
  %v368 = vld [vmem:[%s1 + $0xb00] sm:$0xff]
  %v369 = vld [vmem:[%s1 + $0xb08] sm:$0xff]
  %v370 = vld [vmem:[%s1 + $0xb10] sm:$0xff]
  %v371 = vld [vmem:[%s1 + $0xb18] sm:$0xff]
  %v372 = vld [vmem:[%s1 + $0xb20] sm:$0xff]
  %v373 = vld [vmem:[%s1 + $0xb28] sm:$0xff]
  %v374 = vld [vmem:[%s1 + $0xb30] sm:$0xff]
  %v375 = vld [vmem:[%s1 + $0xb38] sm:$0xff]
  %v376 = vld [vmem:[%s1 + $0xb40] sm:$0xff]
  %v377 = vld [vmem:[%s1 + $0xb48] sm:$0xff]
  %v378 = vld [vmem:[%s1 + $0xb50] sm:$0xff]
  %v379 = vld [vmem:[%s1 + $0xb58] sm:$0xff]
  %v380 = vld [vmem:[%s1 + $0xb60] sm:$0xff]
  %v381 = vld [vmem:[%s1 + $0xb68] sm:$0xff]
  %v382 = vld [vmem:[%s1 + $0xb70] sm:$0xff]
  %v383 = vld [vmem:[%s1 + $0xb78] sm:$0xff]
  %v384 = vld [vmem:[%s1 + $0xb80] sm:$0xff]
  %v385 = vld [vmem:[%s1 + $0xb88] sm:$0xff]
  %v386 = vld [vmem:[%s1 + $0xb90] sm:$0xff]
  %v387 = vld [vmem:[%s1 + $0xb98] sm:$0xff]
  %v388 = vld [vmem:[%s1 + $0xba0] sm:$0xff]
  %v389 = vld [vmem:[%s1 + $0xba8] sm:$0xff]
  %v390 = vld [vmem:[%s1 + $0xbb0] sm:$0xff]
  %v391 = vld [vmem:[%s1 + $0xbb8] sm:$0xff]
  %v392 = vld [vmem:[%s1 + $0xbc0] sm:$0xff]
  %v393 = vld [vmem:[%s1 + $0xbc8] sm:$0xff]
  %v394 = vld [vmem:[%s1 + $0xbd0] sm:$0xff]
  %v395 = vld [vmem:[%s1 + $0xbd8] sm:$0xff]
  %v396 = vld [vmem:[%s1 + $0xbe0] sm:$0xff]
  %v397 = vld [vmem:[%s1 + $0xbe8] sm:$0xff]
  %v398 = vld [vmem:[%s1 + $0xbf0] sm:$0xff]
  %v399 = vld [vmem:[%s1 + $0xbf8] sm:$0xff]
  %v400 = vld [vmem:[%s1 + $0xc00] sm:$0xff]
  %v401 = vld [vmem:[%s1 + $0xc08] sm:$0xff]
  %v402 = vld [vmem:[%s1 + $0xc10] sm:$0xff]
  %v403 = vld [vmem:[%s1 + $0xc18] sm:$0xff]
  %v404 = vld [vmem:[%s1 + $0xc20] sm:$0xff]
  %v405 = vld [vmem:[%s1 + $0xc28] sm:$0xff]
  %v406 = vld [vmem:[%s1 + $0xc30] sm:$0xff]
  %v407 = vld [vmem:[%s1 + $0xc38] sm:$0xff]
  %v408 = vld [vmem:[%s1 + $0xc40] sm:$0xff]
  %v409 = vld [vmem:[%s1 + $0xc48] sm:$0xff]
  %v410 = vld [vmem:[%s1 + $0xc50] sm:$0xff]
  %v411 = vld [vmem:[%s1 + $0xc58] sm:$0xff]
  %v412 = vld [vmem:[%s1 + $0xc60] sm:$0xff]
  %v413 = vld [vmem:[%s1 + $0xc68] sm:$0xff]
  %v414 = vld [vmem:[%s1 + $0xc70] sm:$0xff]
  %v415 = vld [vmem:[%s1 + $0xc78] sm:$0xff]
  %v416 = vld [vmem:[%s1 + $0xc80] sm:$0xff]
  %v417 = vld [vmem:[%s1 + $0xc88] sm:$0xff]
  %v418 = vld [vmem:[%s1 + $0xc90] sm:$0xff]
  %v419 = vld [vmem:[%s1 + $0xc98] sm:$0xff]
  %v420 = vld [vmem:[%s1 + $0xca0] sm:$0xff]
  %v421 = vld [vmem:[%s1 + $0xca8] sm:$0xff]
  %v422 = vld [vmem:[%s1 + $0xcb0] sm:$0xff]
  %v423 = vld [vmem:[%s1 + $0xcb8] sm:$0xff]
  %v424 = vld [vmem:[%s1 + $0xcc0] sm:$0xff]
  %v425 = vld [vmem:[%s1 + $0xcc8] sm:$0xff]
  %v426 = vld [vmem:[%s1 + $0xcd0] sm:$0xff]
  %v427 = vld [vmem:[%s1 + $0xcd8] sm:$0xff]
  %v428 = vld [vmem:[%s1 + $0xce0] sm:$0xff]
  %v429 = vld [vmem:[%s1 + $0xce8] sm:$0xff]
  %v430 = vld [vmem:[%s1 + $0xcf0] sm:$0xff]
  %v431 = vld [vmem:[%s1 + $0xcf8] sm:$0xff]
  %v432 = vld [vmem:[%s1 + $0xd00] sm:$0xff]
  %v433 = vld [vmem:[%s1 + $0xd08] sm:$0xff]
  %v434 = vld [vmem:[%s1 + $0xd10] sm:$0xff]
  %v435 = vld [vmem:[%s1 + $0xd18] sm:$0xff]
  %v436 = vld [vmem:[%s1 + $0xd20] sm:$0xff]
  %v437 = vld [vmem:[%s1 + $0xd28] sm:$0xff]
  %v438 = vld [vmem:[%s1 + $0xd30] sm:$0xff]
  %v439 = vld [vmem:[%s1 + $0xd38] sm:$0xff]
  %v440 = vld [vmem:[%s1 + $0xd40] sm:$0xff]
  %v441 = vld [vmem:[%s1 + $0xd48] sm:$0xff]
  %v442 = vld [vmem:[%s1 + $0xd50] sm:$0xff]
  %v443 = vld [vmem:[%s1 + $0xd58] sm:$0xff]
  %v444 = vld [vmem:[%s1 + $0xd60] sm:$0xff]
  %v445 = vld [vmem:[%s1 + $0xd68] sm:$0xff]
  %v446 = vld [vmem:[%s1 + $0xd70] sm:$0xff]
  %v447 = vld [vmem:[%s1 + $0xd78] sm:$0xff]
  %v448 = vld [vmem:[%s1 + $0xd80] sm:$0xff]
  %v449 = vld [vmem:[%s1 + $0xd88] sm:$0xff]
  %v450 = vld [vmem:[%s1 + $0xd90] sm:$0xff]
  %v451 = vld [vmem:[%s1 + $0xd98] sm:$0xff]
  %v452 = vld [vmem:[%s1 + $0xda0] sm:$0xff]
  %v453 = vld [vmem:[%s1 + $0xda8] sm:$0xff]
  %v454 = vld [vmem:[%s1 + $0xdb0] sm:$0xff]
  %v455 = vld [vmem:[%s1 + $0xdb8] sm:$0xff]
  %v456 = vld [vmem:[%s1 + $0xdc0] sm:$0xff]
  %v457 = vld [vmem:[%s1 + $0xdc8] sm:$0xff]
  %v458 = vld [vmem:[%s1 + $0xdd0] sm:$0xff]
  %v459 = vld [vmem:[%s1 + $0xdd8] sm:$0xff]
  %v460 = vld [vmem:[%s1 + $0xde0] sm:$0xff]
  %v461 = vld [vmem:[%s1 + $0xde8] sm:$0xff]
  %v462 = vld [vmem:[%s1 + $0xdf0] sm:$0xff]
  %v463 = vld [vmem:[%s1 + $0xdf8] sm:$0xff]
  %v464 = vld [vmem:[%s1 + $0xe00] sm:$0xff]
  %v465 = vld [vmem:[%s1 + $0xe08] sm:$0xff]
  %v466 = vld [vmem:[%s1 + $0xe10] sm:$0xff]
  %v467 = vld [vmem:[%s1 + $0xe18] sm:$0xff]
  %v468 = vld [vmem:[%s1 + $0xe20] sm:$0xff]
  %v469 = vld [vmem:[%s1 + $0xe28] sm:$0xff]
  %v470 = vld [vmem:[%s1 + $0xe30] sm:$0xff]
  %v471 = vld [vmem:[%s1 + $0xe38] sm:$0xff]
  %v472 = vld [vmem:[%s1 + $0xe40] sm:$0xff]
  %v473 = vld [vmem:[%s1 + $0xe48] sm:$0xff]
  %v474 = vld [vmem:[%s1 + $0xe50] sm:$0xff]
  %v475 = vld [vmem:[%s1 + $0xe58] sm:$0xff]
  %v476 = vld [vmem:[%s1 + $0xe60] sm:$0xff]
  %v477 = vld [vmem:[%s1 + $0xe68] sm:$0xff]
  %v478 = vld [vmem:[%s1 + $0xe70] sm:$0xff]
  %v479 = vld [vmem:[%s1 + $0xe78] sm:$0xff]
  %v480 = vld [vmem:[%s1 + $0xe80] sm:$0xff]
  %v481 = vld [vmem:[%s1 + $0xe88] sm:$0xff]
  %v482 = vld [vmem:[%s1 + $0xe90] sm:$0xff]
  %v483 = vld [vmem:[%s1 + $0xe98] sm:$0xff]
  %v484 = vld [vmem:[%s1 + $0xea0] sm:$0xff]
  %v485 = vld [vmem:[%s1 + $0xea8] sm:$0xff]
  %v486 = vld [vmem:[%s1 + $0xeb0] sm:$0xff]
  %v487 = vld [vmem:[%s1 + $0xeb8] sm:$0xff]
  %v488 = vld [vmem:[%s1 + $0xec0] sm:$0xff]
  %v489 = vld [vmem:[%s1 + $0xec8] sm:$0xff]
  %v490 = vld [vmem:[%s1 + $0xed0] sm:$0xff]
  %v491 = vld [vmem:[%s1 + $0xed8] sm:$0xff]
  %v492 = vld [vmem:[%s1 + $0xee0] sm:$0xff]
  %v493 = vld [vmem:[%s1 + $0xee8] sm:$0xff]
  %v494 = vld [vmem:[%s1 + $0xef0] sm:$0xff]
  %v495 = vld [vmem:[%s1 + $0xef8] sm:$0xff]
  %v496 = vld [vmem:[%s0] sm:$0xff]
  %v497 = vld [vmem:[%s0 + $0x8] sm:$0xff]
  %v498 = vld [vmem:[%s0 + $0x10] sm:$0xff]
  %v499 = vld [vmem:[%s0 + $0x18] sm:$0xff]
  %v500 = vld [vmem:[%s0 + $0x20] sm:$0xff]
  %v501 = vld [vmem:[%s0 + $0x28] sm:$0xff]
  %v502 = vld [vmem:[%s0 + $0x30] sm:$0xff]
  %v503 = vld [vmem:[%s0 + $0x38] sm:$0xff]
  %v504 = vld [vmem:[%s0 + $0x40] sm:$0xff]
  %v505 = vld [vmem:[%s0 + $0x48] sm:$0xff]
  %v506 = vld [vmem:[%s0 + $0x50] sm:$0xff]
  %v507 = vld [vmem:[%s0 + $0x58] sm:$0xff]
  %v508 = vld [vmem:[%s0 + $0x60] sm:$0xff]
  %v509 = vld [vmem:[%s0 + $0x68] sm:$0xff]
  %v510 = vld [vmem:[%s0 + $0x70] sm:$0xff]
  %v511 = vld [vmem:[%s0 + $0x78] sm:$0xff]
  %v512 = vld [vmem:[%s0 + $0x80] sm:$0xff]
  %v513 = vld [vmem:[%s0 + $0x88] sm:$0xff]
  %v514 = vld [vmem:[%s0 + $0x90] sm:$0xff]
  %v515 = vld [vmem:[%s0 + $0x98] sm:$0xff]
  %v516 = vld [vmem:[%s0 + $0xa0] sm:$0xff]
  %v517 = vld [vmem:[%s0 + $0xa8] sm:$0xff]
  %v518 = vld [vmem:[%s0 + $0xb0] sm:$0xff]
  %v519 = vld [vmem:[%s0 + $0xb8] sm:$0xff]
  %v520 = vld [vmem:[%s0 + $0xc0] sm:$0xff]
  %v521 = vld [vmem:[%s0 + $0xc8] sm:$0xff]
  %v522 = vld [vmem:[%s0 + $0xd0] sm:$0xff]
  %v523 = vld [vmem:[%s0 + $0xd8] sm:$0xff]
  %v524 = vld [vmem:[%s0 + $0xe0] sm:$0xff]
  %v525 = vld [vmem:[%s0 + $0xe8] sm:$0xff]
  %v526 = vld [vmem:[%s0 + $0xf0] sm:$0xff]
  %v527 = vld [vmem:[%s0 + $0xf8] sm:$0xff]
  %v528 = vld [vmem:[%s0 + $0x100] sm:$0xff]
  %v529 = vld [vmem:[%s0 + $0x108] sm:$0xff]
  %v530 = vld [vmem:[%s0 + $0x110] sm:$0xff]
  %v531 = vld [vmem:[%s0 + $0x118] sm:$0xff]
  %v532 = vld [vmem:[%s0 + $0x120] sm:$0xff]
  %v533 = vld [vmem:[%s0 + $0x128] sm:$0xff]
  %v534 = vld [vmem:[%s0 + $0x130] sm:$0xff]
  %v535 = vld [vmem:[%s0 + $0x138] sm:$0xff]
  %v536 = vld [vmem:[%s0 + $0x140] sm:$0xff]
  %v537 = vld [vmem:[%s0 + $0x148] sm:$0xff]
  %v538 = vld [vmem:[%s0 + $0x150] sm:$0xff]
  %v539 = vld [vmem:[%s0 + $0x158] sm:$0xff]
  %v540 = vld [vmem:[%s0 + $0x160] sm:$0xff]
  %v541 = vld [vmem:[%s0 + $0x168] sm:$0xff]
  %v542 = vld [vmem:[%s0 + $0x170] sm:$0xff]
  %v543 = vld [vmem:[%s0 + $0x178] sm:$0xff]
  %v544 = vld [vmem:[%s0 + $0x180] sm:$0xff]
  %v545 = vld [vmem:[%s0 + $0x188] sm:$0xff]
  %v546 = vld [vmem:[%s0 + $0x190] sm:$0xff]
  %v547 = vld [vmem:[%s0 + $0x198] sm:$0xff]
  %v548 = vld [vmem:[%s0 + $0x1a0] sm:$0xff]
  %v549 = vld [vmem:[%s0 + $0x1a8] sm:$0xff]
  %v550 = vld [vmem:[%s0 + $0x1b0] sm:$0xff]
  %v551 = vld [vmem:[%s0 + $0x1b8] sm:$0xff]
  %v552 = vld [vmem:[%s0 + $0x1c0] sm:$0xff]
  %v553 = vld [vmem:[%s0 + $0x1c8] sm:$0xff]
  %v554 = vld [vmem:[%s0 + $0x1d0] sm:$0xff]
  %v555 = vld [vmem:[%s0 + $0x1d8] sm:$0xff]
  %v556 = vld [vmem:[%s0 + $0x1e0] sm:$0xff]
  %v557 = vld [vmem:[%s0 + $0x1e8] sm:$0xff]
  %v558 = vld [vmem:[%s0 + $0x1f0] sm:$0xff]
  %v559 = vld [vmem:[%s0 + $0x1f8] sm:$0xff]
  %v560 = vld [vmem:[%s0 + $0x200] sm:$0xff]
  %v561 = vld [vmem:[%s0 + $0x208] sm:$0xff]
  %vm562 = vcmask 130048
  %v564 = vsel %vm562, %v20, 0
  %v567 = vsel %vm562, %v25, 0
  %v570 = vsel %vm562, %v30, 0
  %v573 = vsel %vm562, %v35, 0
  %v576 = vsel %vm562, %v40, 0
  %v579 = vsel %vm562, %v45, 0
  %v582 = vsel %vm562, %v50, 0
  %v585 = vsel %vm562, %v55, 0
  %v588 = vsel %vm562, %v60, 0
  %v591 = vsel %vm562, %v65, 0
  %v594 = vsel %vm562, %v70, 0
  %v597 = vsel %vm562, %v75, 0
  %v600 = vsel %vm562, %v80, 0
  %v603 = vsel %vm562, %v85, 0
  %v606 = vsel %vm562, %v90, 0
  %v609 = vsel %vm562, %v95, 0
  %v612 = vsel %vm562, %v100, 0
  %v615 = vsel %vm562, %v105, 0
  %v618 = vsel %vm562, %v110, 0
  %v621 = vsel %vm562, %v115, 0
  %v624 = vsel %vm562, %v120, 0
  %v627 = vsel %vm562, %v125, 0
  %v630 = vsel %vm562, %v130, 0
  %v633 = vsel %vm562, %v135, 0
  %v636 = vsel %vm562, %v140, 0
  %v639 = vsel %vm562, %v145, 0
  %v642 = vsel %vm562, %v150, 0
  %v645 = vsel %vm562, %v155, 0
  %v648 = vsel %vm562, %v160, 0
  %v651 = vsel %vm562, %v165, 0
  %v654 = vsel %vm562, %v170, 0
  %v657 = vsel %vm562, %v175, 0
  %v660 = vsel %vm562, %v180, 0
  %v663 = vsel %vm562, %v185, 0
  %v666 = vsel %vm562, %v190, 0
  %v669 = vsel %vm562, %v195, 0
  %v672 = vsel %vm562, %v200, 0
  %v675 = vsel %vm562, %v205, 0
  %v678 = vsel %vm562, %v210, 0
  %v681 = vsel %vm562, %v215, 0
  %v684 = vsel %vm562, %v220, 0
  %v687 = vsel %vm562, %v225, 0
  %v690 = vsel %vm562, %v230, 0
  %v693 = vsel %vm562, %v235, 0
  %v696 = vsel %vm562, %v240, 0
  %v699 = vsel %vm562, %v245, 0
  %v702 = vsel %vm562, %v250, 0
  %v705 = vsel %vm562, %v255, 0
  %v708 = vsel %vm562, %v260, 0
  %v711 = vsel %vm562, %v265, 0
  %v714 = vsel %vm562, %v270, 0
  %v717 = vsel %vm562, %v275, 0
  %v720 = vsel %vm562, %v280, 0
  %v723 = vsel %vm562, %v285, 0
  %v726 = vsel %vm562, %v290, 0
  %v729 = vsel %vm562, %v295, 0
  %v732 = vsel %vm562, %v300, 0
  %v735 = vsel %vm562, %v305, 0
  %v738 = vsel %vm562, %v310, 0
  %v741 = vsel %vm562, %v315, 0
  %v744 = vsel %vm562, %v320, 0
  %v747 = vsel %vm562, %v325, 0
  %v750 = vsel %vm562, %v330, 0
  %v753 = vsel %vm562, %v335, 0
  %v756 = vsel %vm562, %v340, 0
  %v759 = vsel %vm562, %v345, 0
  %v762 = vsel %vm562, %v350, 0
  %v765 = vsel %vm562, %v355, 0
  %v768 = vsel %vm562, %v360, 0
  %v771 = vsel %vm562, %v365, 0
  %v774 = vsel %vm562, %v370, 0
  %v777 = vsel %vm562, %v375, 0
  %v780 = vsel %vm562, %v380, 0
  %v783 = vsel %vm562, %v385, 0
  %v786 = vsel %vm562, %v390, 0
  %v789 = vsel %vm562, %v395, 0
  %v792 = vsel %vm562, %v400, 0
  %v795 = vsel %vm562, %v405, 0
  %v798 = vsel %vm562, %v410, 0
  %v801 = vsel %vm562, %v415, 0
  %v804 = vsel %vm562, %v420, 0
  %v807 = vsel %vm562, %v425, 0
  %v810 = vsel %vm562, %v430, 0
  %v813 = vsel %vm562, %v435, 0
  %v816 = vsel %vm562, %v440, 0
  %v819 = vsel %vm562, %v445, 0
  %v822 = vsel %vm562, %v450, 0
  %v825 = vsel %vm562, %v455, 0
  %v828 = vsel %vm562, %v460, 0
  %v831 = vsel %vm562, %v465, 0
  %v834 = vsel %vm562, %v470, 0
  %v837 = vsel %vm562, %v475, 0
  %v840 = vsel %vm562, %v480, 0
  %v843 = vsel %vm562, %v485, 0
  %v846 = vsel %vm562, %v490, 0
  %v849 = vsel %vm562, %v495, 0
  %851 = vmatprep.subr.mxu0 0.0
  %852 = vmatpush1.msra.mxu0 %v496
  %853 = vmatprep.subr.mxu0 0.0
  %854 = vmatpush1.msra.mxu0 %v497
  %855 = vmatprep.subr.mxu0 0.0
  %856 = vmatpush1.msra.mxu0 %v498
  %857 = vmatprep.subr.mxu0 0.0
  %858 = vmatpush1.msra.mxu0 %v499
  %859 = vmatprep.subr.mxu0 0.0
  %860 = vmatpush1.msra.mxu0 %v500
  %861 = vmatprep.subr.mxu0 0.0
  %862 = vmatpush1.msra.mxu0 %v501
  %863 = vmatprep.subr.mxu0 0.0
  %864 = vmatpush1.msra.mxu0 %v502
  %865 = vmatprep.subr.mxu0 0.0
  %866 = vmatpush1.msra.mxu0 %v503
  %867 = vmatprep.subr.mxu0 0.0
  %868 = vmatpush1.msra.mxu0 %v504
  %869 = vmatprep.subr.mxu0 0.0
  %870 = vmatpush1.msra.mxu0 %v505
  %871 = vmatprep.subr.mxu0 0.0
  %872 = vmatpush1.msra.mxu0 %v506
  %873 = vmatprep.subr.mxu0 0.0
  %874 = vmatpush1.msra.mxu0 %v507
  %875 = vmatprep.subr.mxu0 0.0
  %876 = vmatpush1.msra.mxu0 %v508
  %877 = vmatprep.subr.mxu0 0.0
  %878 = vmatpush1.msra.mxu0 %v509
  %879 = vmatprep.subr.mxu0 0.0
  %880 = vmatpush1.msra.mxu0 %v510
  %881 = vmatprep.subr.mxu0 0.0
  %882 = vmatpush1.msra.mxu0 %v511
  %883 = vmatprep.subr.mxu0 0.0
  %884 = vmatpush1.msra.mxu0 %v512
  %885 = vmatprep.subr.mxu0 0.0
  %886 = vmatpush1.msra.mxu0 %v513
  %887 = vmatprep.subr.mxu0 0.0
  %888 = vmatpush1.msra.mxu0 %v514
  %889 = vmatprep.subr.mxu0 0.0
  %890 = vmatpush1.msra.mxu0 %v515
  %891 = vmatprep.subr.mxu0 0.0
  %892 = vmatpush1.msra.mxu0 %v516
  %893 = vmatprep.subr.mxu0 0.0
  %894 = vmatpush1.msra.mxu0 %v517
  %895 = vmatprep.subr.mxu0 0.0
  %896 = vmatpush1.msra.mxu0 %v518
  %897 = vmatprep.subr.mxu0 0.0
  %898 = vmatpush1.msra.mxu0 %v519
  %899 = vmatprep.subr.mxu0 0.0
  %900 = vmatpush1.msra.mxu0 %v520
  %901 = vmatprep.subr.mxu0 0.0
  %902 = vmatpush1.msra.mxu0 %v521
  %903 = vmatprep.subr.mxu0 0.0
  %904 = vmatpush1.msra.mxu0 %v522
  %905 = vmatprep.subr.mxu0 0.0
  %906 = vmatpush1.msra.mxu0 %v523
  %907 = vmatprep.subr.mxu0 0.0
  %908 = vmatpush1.msra.mxu0 %v524
  %909 = vmatprep.subr.mxu0 0.0
  %910 = vmatpush1.msra.mxu0 %v525
  %911 = vmatprep.subr.mxu0 0.0
  %912 = vmatpush1.msra.mxu0 %v526
  %913 = vmatprep.subr.mxu0 0.0
  %914 = vmatpush1.msra.mxu0 %v527
  %915 = vmatprep.mubr.f32.mxu0 %v17
  %916 = vmatmul.mubr.f32.gmra.mrb[0].mxu0 %v16
  %v917 = vpop.f32.mrb[0].mxu0
  %v918 = vadd.f32 0.0, %v917
  %v919 = vpop.f32.mrb[0].mxu0
  %920 = vmatprep.mubr.f32.mxu0 %v22
  %921 = vmatmul.mubr.f32.gmra.mrb[0].mxu0 %v21
  %v922 = vpop.f32.mrb[0].mxu0
  %v923 = vadd.f32 0.0, %v922
  %v924 = vpop.f32.mrb[0].mxu0
  %925 = vmatprep.mubr.f32.mxu0 %v27
  %926 = vmatmul.mubr.f32.gmra.mrb[0].mxu0 %v26
  %v927 = vpop.f32.mrb[0].mxu0
  %v928 = vadd.f32 0.0, %v927
  %v929 = vpop.f32.mrb[0].mxu0
  %930 = vmatprep.mubr.f32.mxu0 %v32
  %931 = vmatmul.mubr.f32.gmra.mrb[0].mxu0 %v31
  %v932 = vpop.f32.mrb[0].mxu0
  %v933 = vadd.f32 0.0, %v932
  %v934 = vpop.f32.mrb[0].mxu0
  %935 = vmatprep.mubr.f32.mxu0 %v37
  %936 = vmatmul.mubr.f32.gmra.mrb[0].mxu0 %v36
  %v937 = vpop.f32.mrb[0].mxu0
  %v938 = vadd.f32 0.0, %v937
  %v939 = vpop.f32.mrb[0].mxu0
  %940 = vmatprep.mubr.f32.mxu0 %v42
  %941 = vmatmul.mubr.f32.gmra.mrb[0].mxu0 %v41
  %v942 = vpop.f32.mrb[0].mxu0
  %v943 = vadd.f32 0.0, %v942
  %v944 = vpop.f32.mrb[0].mxu0
  %945 = vmatprep.mubr.f32.mxu0 %v47
  %946 = vmatmul.mubr.f32.gmra.mrb[0].mxu0 %v46
  %v947 = vpop.f32.mrb[0].mxu0
  %v948 = vadd.f32 0.0, %v947
  %v949 = vpop.f32.mrb[0].mxu0
  %950 = vmatprep.mubr.f32.mxu0 %v52
  %951 = vmatmul.mubr.f32.gmra.mrb[0].mxu0 %v51
  %v952 = vpop.f32.mrb[0].mxu0
  %v953 = vadd.f32 0.0, %v952
  %v954 = vpop.f32.mrb[0].mxu0
  %955 = vmatprep.mubr.f32.mxu0 %v57
  %956 = vmatmul.mubr.f32.gmra.mrb[0].mxu0 %v56
  %v957 = vpop.f32.mrb[0].mxu0
  %v958 = vadd.f32 0.0, %v957
  %v959 = vpop.f32.mrb[0].mxu0
  %960 = vmatprep.mubr.f32.mxu0 %v62
  %961 = vmatmul.mubr.f32.gmra.mrb[0].mxu0 %v61
  %v962 = vpop.f32.mrb[0].mxu0
  %v963 = vadd.f32 0.0, %v962
  %v964 = vpop.f32.mrb[0].mxu0
  %965 = vmatprep.mubr.f32.mxu0 %v67
  %966 = vmatmul.mubr.f32.gmra.mrb[0].mxu0 %v66
  %v967 = vpop.f32.mrb[0].mxu0
  %v968 = vadd.f32 0.0, %v967
  %v969 = vpop.f32.mrb[0].mxu0
  %970 = vmatprep.mubr.f32.mxu0 %v72
  %971 = vmatmul.mubr.f32.gmra.mrb[0].mxu0 %v71
  %v972 = vpop.f32.mrb[0].mxu0
  %v973 = vadd.f32 0.0, %v972
  %v974 = vpop.f32.mrb[0].mxu0
  %975 = vmatprep.mubr.f32.mxu0 %v77
  %976 = vmatmul.mubr.f32.gmra.mrb[0].mxu0 %v76
  %v977 = vpop.f32.mrb[0].mxu0
  %v978 = vadd.f32 0.0, %v977
  %v979 = vpop.f32.mrb[0].mxu0
  %980 = vmatprep.mubr.f32.mxu0 %v82
  %981 = vmatmul.mubr.f32.gmra.mrb[0].mxu0 %v81
  %v982 = vpop.f32.mrb[0].mxu0
  %v983 = vadd.f32 0.0, %v982
  %v984 = vpop.f32.mrb[0].mxu0
  %985 = vmatprep.mubr.f32.mxu0 %v87
  %986 = vmatmul.mubr.f32.gmra.mrb[0].mxu0 %v86
  %v987 = vpop.f32.mrb[0].mxu0
  %v988 = vadd.f32 0.0, %v987
  %v989 = vpop.f32.mrb[0].mxu0
  %990 = vmatprep.mubr.f32.mxu0 %v92
  %991 = vmatmul.mubr.f32.gmra.mrb[0].mxu0 %v91
  %v992 = vpop.f32.mrb[0].mxu0
  %v993 = vadd.f32 0.0, %v992
  %v994 = vpop.f32.mrb[0].mxu0
  %995 = vmatprep.mubr.f32.mxu0 %v97
  %996 = vmatmul.mubr.f32.gmra.mrb[0].mxu0 %v96
  %v997 = vpop.f32.mrb[0].mxu0
  %v998 = vadd.f32 0.0, %v997
  %v999 = vpop.f32.mrb[0].mxu0
  %1000 = vmatprep.mubr.f32.mxu0 %v102
  %1001 = vmatmul.mubr.f32.gmra.mrb[0].mxu0 %v101
  %v1002 = vpop.f32.mrb[0].mxu0
  %v1003 = vadd.f32 0.0, %v1002
  %v1004 = vpop.f32.mrb[0].mxu0
  %1005 = vmatprep.mubr.f32.mxu0 %v107
  %1006 = vmatmul.mubr.f32.gmra.mrb[0].mxu0 %v106
  %v1007 = vpop.f32.mrb[0].mxu0
  %v1008 = vadd.f32 0.0, %v1007
  %v1009 = vpop.f32.mrb[0].mxu0
  %1010 = vmatprep.mubr.f32.mxu0 %v112
  %1011 = vmatmul.mubr.f32.gmra.mrb[0].mxu0 %v111
  %v1012 = vpop.f32.mrb[0].mxu0
  %v1013 = vadd.f32 0.0, %v1012
  %v1014 = vpop.f32.mrb[0].mxu0
  %1015 = vmatprep.mubr.f32.mxu0 %v117
  %1016 = vmatmul.mubr.f32.gmra.mrb[0].mxu0 %v116
  %v1017 = vpop.f32.mrb[0].mxu0
  %v1018 = vadd.f32 0.0, %v1017
  %v1019 = vpop.f32.mrb[0].mxu0
  %1020 = vmatprep.mubr.f32.mxu0 %v122
  %1021 = vmatmul.mubr.f32.gmra.mrb[0].mxu0 %v121
  %v1022 = vpop.f32.mrb[0].mxu0
  %v1023 = vadd.f32 0.0, %v1022
  %v1024 = vpop.f32.mrb[0].mxu0
  %1025 = vmatprep.mubr.f32.mxu0 %v127
  %1026 = vmatmul.mubr.f32.gmra.mrb[0].mxu0 %v126
  %v1027 = vpop.f32.mrb[0].mxu0
  %v1028 = vadd.f32 0.0, %v1027
  %v1029 = vpop.f32.mrb[0].mxu0
  %1030 = vmatprep.mubr.f32.mxu0 %v132
  %1031 = vmatmul.mubr.f32.gmra.mrb[0].mxu0 %v131
  %v1032 = vpop.f32.mrb[0].mxu0
  %v1033 = vadd.f32 0.0, %v1032
  %v1034 = vpop.f32.mrb[0].mxu0
  %1035 = vmatprep.mubr.f32.mxu0 %v137
  %1036 = vmatmul.mubr.f32.gmra.mrb[0].mxu0 %v136
  %v1037 = vpop.f32.mrb[0].mxu0
  %v1038 = vadd.f32 0.0, %v1037
  %v1039 = vpop.f32.mrb[0].mxu0
  %1040 = vmatprep.mubr.f32.mxu0 %v142
  %1041 = vmatmul.mubr.f32.gmra.mrb[0].mxu0 %v141
  %v1042 = vpop.f32.mrb[0].mxu0
  %v1043 = vadd.f32 0.0, %v1042
  %v1044 = vpop.f32.mrb[0].mxu0
  %1045 = vmatprep.mubr.f32.mxu0 %v147
  %1046 = vmatmul.mubr.f32.gmra.mrb[0].mxu0 %v146
  %v1047 = vpop.f32.mrb[0].mxu0
  %v1048 = vadd.f32 0.0, %v1047
  %v1049 = vpop.f32.mrb[0].mxu0
  %1050 = vmatprep.mubr.f32.mxu0 %v152
  %1051 = vmatmul.mubr.f32.gmra.mrb[0].mxu0 %v151
  %v1052 = vpop.f32.mrb[0].mxu0
  %v1053 = vadd.f32 0.0, %v1052
  %v1054 = vpop.f32.mrb[0].mxu0
  %1055 = vmatprep.mubr.f32.mxu0 %v157
  %1056 = vmatmul.mubr.f32.gmra.mrb[0].mxu0 %v156
  %v1057 = vpop.f32.mrb[0].mxu0
  %v1058 = vadd.f32 0.0, %v1057
  %v1059 = vpop.f32.mrb[0].mxu0
  %1060 = vmatprep.mubr.f32.mxu0 %v162
  %1061 = vmatmul.mubr.f32.gmra.mrb[0].mxu0 %v161
  %v1062 = vpop.f32.mrb[0].mxu0
  %v1063 = vadd.f32 0.0, %v1062
  %v1064 = vpop.f32.mrb[0].mxu0
  %1065 = vmatprep.mubr.f32.mxu0 %v167
  %1066 = vmatmul.mubr.f32.gmra.mrb[0].mxu0 %v166
  %v1067 = vpop.f32.mrb[0].mxu0
  %v1068 = vadd.f32 0.0, %v1067
  %v1069 = vpop.f32.mrb[0].mxu0
  %1070 = vmatprep.mubr.f32.mxu0 %v172
  %1071 = vmatmul.mubr.f32.gmra.mrb[0].mxu0 %v171
  %v1072 = vpop.f32.mrb[0].mxu0
  %v1073 = vadd.f32 0.0, %v1072
  %v1074 = vpop.f32.mrb[0].mxu0
  %1075 = vmatprep.mubr.f32.mxu0 %v177
  %1076 = vmatmul.mubr.f32.gmra.mrb[0].mxu0 %v176
  %v1077 = vpop.f32.mrb[0].mxu0
  %v1078 = vadd.f32 0.0, %v1077
  %v1079 = vpop.f32.mrb[0].mxu0
  %1080 = vmatprep.mubr.f32.mxu0 %v182
  %1081 = vmatmul.mubr.f32.gmra.mrb[0].mxu0 %v181
  %v1082 = vpop.f32.mrb[0].mxu0
  %v1083 = vadd.f32 0.0, %v1082
  %v1084 = vpop.f32.mrb[0].mxu0
  %1085 = vmatprep.mubr.f32.mxu0 %v187
  %1086 = vmatmul.mubr.f32.gmra.mrb[0].mxu0 %v186
  %v1087 = vpop.f32.mrb[0].mxu0
  %v1088 = vadd.f32 0.0, %v1087
  %v1089 = vpop.f32.mrb[0].mxu0
  %1090 = vmatprep.mubr.f32.mxu0 %v192
  %1091 = vmatmul.mubr.f32.gmra.mrb[0].mxu0 %v191
  %v1092 = vpop.f32.mrb[0].mxu0
  %v1093 = vadd.f32 0.0, %v1092
  %v1094 = vpop.f32.mrb[0].mxu0
  %1095 = vmatprep.mubr.f32.mxu0 %v197
  %1096 = vmatmul.mubr.f32.gmra.mrb[0].mxu0 %v196
  %v1097 = vpop.f32.mrb[0].mxu0
  %v1098 = vadd.f32 0.0, %v1097
  %v1099 = vpop.f32.mrb[0].mxu0
  %1100 = vmatprep.mubr.f32.mxu0 %v202
  %1101 = vmatmul.mubr.f32.gmra.mrb[0].mxu0 %v201
  %v1102 = vpop.f32.mrb[0].mxu0
  %v1103 = vadd.f32 0.0, %v1102
  %v1104 = vpop.f32.mrb[0].mxu0
  %1105 = vmatprep.mubr.f32.mxu0 %v207
  %1106 = vmatmul.mubr.f32.gmra.mrb[0].mxu0 %v206
  %v1107 = vpop.f32.mrb[0].mxu0
  %v1108 = vadd.f32 0.0, %v1107
  %v1109 = vpop.f32.mrb[0].mxu0
  %1110 = vmatprep.mubr.f32.mxu0 %v212
  %1111 = vmatmul.mubr.f32.gmra.mrb[0].mxu0 %v211
  %v1112 = vpop.f32.mrb[0].mxu0
  %v1113 = vadd.f32 0.0, %v1112
  %v1114 = vpop.f32.mrb[0].mxu0
  %1115 = vmatprep.mubr.f32.mxu0 %v217
  %1116 = vmatmul.mubr.f32.gmra.mrb[0].mxu0 %v216
  %v1117 = vpop.f32.mrb[0].mxu0
  %v1118 = vadd.f32 0.0, %v1117
  %v1119 = vpop.f32.mrb[0].mxu0
  %1120 = vmatprep.mubr.f32.mxu0 %v222
  %1121 = vmatmul.mubr.f32.gmra.mrb[0].mxu0 %v221
  %v1122 = vpop.f32.mrb[0].mxu0
  %v1123 = vadd.f32 0.0, %v1122
  %v1124 = vpop.f32.mrb[0].mxu0
  %1125 = vmatprep.mubr.f32.mxu0 %v227
  %1126 = vmatmul.mubr.f32.gmra.mrb[0].mxu0 %v226
  %v1127 = vpop.f32.mrb[0].mxu0
  %v1128 = vadd.f32 0.0, %v1127
  %v1129 = vpop.f32.mrb[0].mxu0
  %1130 = vmatprep.mubr.f32.mxu0 %v232
  %1131 = vmatmul.mubr.f32.gmra.mrb[0].mxu0 %v231
  %v1132 = vpop.f32.mrb[0].mxu0
  %v1133 = vadd.f32 0.0, %v1132
  %v1134 = vpop.f32.mrb[0].mxu0
  %1135 = vmatprep.mubr.f32.mxu0 %v237
  %1136 = vmatmul.mubr.f32.gmra.mrb[0].mxu0 %v236
  %v1137 = vpop.f32.mrb[0].mxu0
  %v1138 = vadd.f32 0.0, %v1137
  %v1139 = vpop.f32.mrb[0].mxu0
  %1140 = vmatprep.mubr.f32.mxu0 %v242
  %1141 = vmatmul.mubr.f32.gmra.mrb[0].mxu0 %v241
  %v1142 = vpop.f32.mrb[0].mxu0
  %v1143 = vadd.f32 0.0, %v1142
  %v1144 = vpop.f32.mrb[0].mxu0
  %1145 = vmatprep.mubr.f32.mxu0 %v247
  %1146 = vmatmul.mubr.f32.gmra.mrb[0].mxu0 %v246
  %v1147 = vpop.f32.mrb[0].mxu0
  %v1148 = vadd.f32 0.0, %v1147
  %v1149 = vpop.f32.mrb[0].mxu0
  %1150 = vmatprep.mubr.f32.mxu0 %v252
  %1151 = vmatmul.mubr.f32.gmra.mrb[0].mxu0 %v251
  %v1152 = vpop.f32.mrb[0].mxu0
  %v1153 = vadd.f32 0.0, %v1152
  %v1154 = vpop.f32.mrb[0].mxu0
  %1155 = vmatprep.mubr.f32.mxu0 %v257
  %1156 = vmatmul.mubr.f32.gmra.mrb[0].mxu0 %v256
  %v1157 = vpop.f32.mrb[0].mxu0
  %v1158 = vadd.f32 0.0, %v1157
  %v1159 = vpop.f32.mrb[0].mxu0
  %1160 = vmatprep.mubr.f32.mxu0 %v262
  %1161 = vmatmul.mubr.f32.gmra.mrb[0].mxu0 %v261
  %v1162 = vpop.f32.mrb[0].mxu0
  %v1163 = vadd.f32 0.0, %v1162
  %v1164 = vpop.f32.mrb[0].mxu0
  %1165 = vmatprep.mubr.f32.mxu0 %v267
  %1166 = vmatmul.mubr.f32.gmra.mrb[0].mxu0 %v266
  %v1167 = vpop.f32.mrb[0].mxu0
  %v1168 = vadd.f32 0.0, %v1167
  %v1169 = vpop.f32.mrb[0].mxu0
  %1170 = vmatprep.mubr.f32.mxu0 %v272
  %1171 = vmatmul.mubr.f32.gmra.mrb[0].mxu0 %v271
  %v1172 = vpop.f32.mrb[0].mxu0
  %v1173 = vadd.f32 0.0, %v1172
  %v1174 = vpop.f32.mrb[0].mxu0
  %1175 = vmatprep.mubr.f32.mxu0 %v277
  %1176 = vmatmul.mubr.f32.gmra.mrb[0].mxu0 %v276
  %v1177 = vpop.f32.mrb[0].mxu0
  %v1178 = vadd.f32 0.0, %v1177
  %v1179 = vpop.f32.mrb[0].mxu0
  %1180 = vmatprep.mubr.f32.mxu0 %v282
  %1181 = vmatmul.mubr.f32.gmra.mrb[0].mxu0 %v281
  %v1182 = vpop.f32.mrb[0].mxu0
  %v1183 = vadd.f32 0.0, %v1182
  %v1184 = vpop.f32.mrb[0].mxu0
  %1185 = vmatprep.mubr.f32.mxu0 %v287
  %1186 = vmatmul.mubr.f32.gmra.mrb[0].mxu0 %v286
  %v1187 = vpop.f32.mrb[0].mxu0
  %v1188 = vadd.f32 0.0, %v1187
  %v1189 = vpop.f32.mrb[0].mxu0
  %1190 = vmatprep.mubr.f32.mxu0 %v292
  %1191 = vmatmul.mubr.f32.gmra.mrb[0].mxu0 %v291
  %v1192 = vpop.f32.mrb[0].mxu0
  %v1193 = vadd.f32 0.0, %v1192
  %v1194 = vpop.f32.mrb[0].mxu0
  %1195 = vmatprep.mubr.f32.mxu0 %v297
  %1196 = vmatmul.mubr.f32.gmra.mrb[0].mxu0 %v296
  %v1197 = vpop.f32.mrb[0].mxu0
  %v1198 = vadd.f32 0.0, %v1197
  %v1199 = vpop.f32.mrb[0].mxu0
  %1200 = vmatprep.mubr.f32.mxu0 %v302
  %1201 = vmatmul.mubr.f32.gmra.mrb[0].mxu0 %v301
  %v1202 = vpop.f32.mrb[0].mxu0
  %v1203 = vadd.f32 0.0, %v1202
  %v1204 = vpop.f32.mrb[0].mxu0
  %1205 = vmatprep.mubr.f32.mxu0 %v307
  %1206 = vmatmul.mubr.f32.gmra.mrb[0].mxu0 %v306
  %v1207 = vpop.f32.mrb[0].mxu0
  %v1208 = vadd.f32 0.0, %v1207
  %v1209 = vpop.f32.mrb[0].mxu0
  %1210 = vmatprep.mubr.f32.mxu0 %v312
  %1211 = vmatmul.mubr.f32.gmra.mrb[0].mxu0 %v311
  %v1212 = vpop.f32.mrb[0].mxu0
  %v1213 = vadd.f32 0.0, %v1212
  %v1214 = vpop.f32.mrb[0].mxu0
  %1215 = vmatprep.mubr.f32.mxu0 %v317
  %1216 = vmatmul.mubr.f32.gmra.mrb[0].mxu0 %v316
  %v1217 = vpop.f32.mrb[0].mxu0
  %v1218 = vadd.f32 0.0, %v1217
  %v1219 = vpop.f32.mrb[0].mxu0
  %1220 = vmatprep.mubr.f32.mxu0 %v322
  %1221 = vmatmul.mubr.f32.gmra.mrb[0].mxu0 %v321
  %v1222 = vpop.f32.mrb[0].mxu0
  %v1223 = vadd.f32 0.0, %v1222
  %v1224 = vpop.f32.mrb[0].mxu0
  %1225 = vmatprep.mubr.f32.mxu0 %v327
  %1226 = vmatmul.mubr.f32.gmra.mrb[0].mxu0 %v326
  %v1227 = vpop.f32.mrb[0].mxu0
  %v1228 = vadd.f32 0.0, %v1227
  %v1229 = vpop.f32.mrb[0].mxu0
  %1230 = vmatprep.mubr.f32.mxu0 %v332
  %1231 = vmatmul.mubr.f32.gmra.mrb[0].mxu0 %v331
  %v1232 = vpop.f32.mrb[0].mxu0
  %v1233 = vadd.f32 0.0, %v1232
  %v1234 = vpop.f32.mrb[0].mxu0
  %1235 = vmatprep.mubr.f32.mxu0 %v337
  %1236 = vmatmul.mubr.f32.gmra.mrb[0].mxu0 %v336
  %v1237 = vpop.f32.mrb[0].mxu0
  %v1238 = vadd.f32 0.0, %v1237
  %v1239 = vpop.f32.mrb[0].mxu0
  %1240 = vmatprep.mubr.f32.mxu0 %v342
  %1241 = vmatmul.mubr.f32.gmra.mrb[0].mxu0 %v341
  %v1242 = vpop.f32.mrb[0].mxu0
  %v1243 = vadd.f32 0.0, %v1242
  %v1244 = vpop.f32.mrb[0].mxu0
  %1245 = vmatprep.mubr.f32.mxu0 %v347
  %1246 = vmatmul.mubr.f32.gmra.mrb[0].mxu0 %v346
  %v1247 = vpop.f32.mrb[0].mxu0
  %v1248 = vadd.f32 0.0, %v1247
  %v1249 = vpop.f32.mrb[0].mxu0
  %1250 = vmatprep.mubr.f32.mxu0 %v352
  %1251 = vmatmul.mubr.f32.gmra.mrb[0].mxu0 %v351
  %v1252 = vpop.f32.mrb[0].mxu0
  %v1253 = vadd.f32 0.0, %v1252
  %v1254 = vpop.f32.mrb[0].mxu0
  %1255 = vmatprep.mubr.f32.mxu0 %v357
  %1256 = vmatmul.mubr.f32.gmra.mrb[0].mxu0 %v356
  %v1257 = vpop.f32.mrb[0].mxu0
  %v1258 = vadd.f32 0.0, %v1257
  %v1259 = vpop.f32.mrb[0].mxu0
  %1260 = vmatprep.mubr.f32.mxu0 %v362
  %1261 = vmatmul.mubr.f32.gmra.mrb[0].mxu0 %v361
  %v1262 = vpop.f32.mrb[0].mxu0
  %v1263 = vadd.f32 0.0, %v1262
  %v1264 = vpop.f32.mrb[0].mxu0
  %1265 = vmatprep.mubr.f32.mxu0 %v367
  %1266 = vmatmul.mubr.f32.gmra.mrb[0].mxu0 %v366
  %v1267 = vpop.f32.mrb[0].mxu0
  %v1268 = vadd.f32 0.0, %v1267
  %v1269 = vpop.f32.mrb[0].mxu0
  %1270 = vmatprep.mubr.f32.mxu0 %v372
  %1271 = vmatmul.mubr.f32.gmra.mrb[0].mxu0 %v371
  %v1272 = vpop.f32.mrb[0].mxu0
  %v1273 = vadd.f32 0.0, %v1272
  %v1274 = vpop.f32.mrb[0].mxu0
  %1275 = vmatprep.mubr.f32.mxu0 %v377
  %1276 = vmatmul.mubr.f32.gmra.mrb[0].mxu0 %v376
  %v1277 = vpop.f32.mrb[0].mxu0
  %v1278 = vadd.f32 0.0, %v1277
  %v1279 = vpop.f32.mrb[0].mxu0
  %1280 = vmatprep.mubr.f32.mxu0 %v382
  %1281 = vmatmul.mubr.f32.gmra.mrb[0].mxu0 %v381
  %v1282 = vpop.f32.mrb[0].mxu0
  %v1283 = vadd.f32 0.0, %v1282
  %v1284 = vpop.f32.mrb[0].mxu0
  %1285 = vmatprep.mubr.f32.mxu0 %v387
  %1286 = vmatmul.mubr.f32.gmra.mrb[0].mxu0 %v386
  %v1287 = vpop.f32.mrb[0].mxu0
  %v1288 = vadd.f32 0.0, %v1287
  %v1289 = vpop.f32.mrb[0].mxu0
  %1290 = vmatprep.mubr.f32.mxu0 %v392
  %1291 = vmatmul.mubr.f32.gmra.mrb[0].mxu0 %v391
  %v1292 = vpop.f32.mrb[0].mxu0
  %v1293 = vadd.f32 0.0, %v1292
  %v1294 = vpop.f32.mrb[0].mxu0
  %1295 = vmatprep.mubr.f32.mxu0 %v397
  %1296 = vmatmul.mubr.f32.gmra.mrb[0].mxu0 %v396
  %v1297 = vpop.f32.mrb[0].mxu0
  %v1298 = vadd.f32 0.0, %v1297
  %v1299 = vpop.f32.mrb[0].mxu0
  %1300 = vmatprep.mubr.f32.mxu0 %v402
  %1301 = vmatmul.mubr.f32.gmra.mrb[0].mxu0 %v401
  %v1302 = vpop.f32.mrb[0].mxu0
  %v1303 = vadd.f32 0.0, %v1302
  %v1304 = vpop.f32.mrb[0].mxu0
  %1305 = vmatprep.mubr.f32.mxu0 %v407
  %1306 = vmatmul.mubr.f32.gmra.mrb[0].mxu0 %v406
  %v1307 = vpop.f32.mrb[0].mxu0
  %v1308 = vadd.f32 0.0, %v1307
  %v1309 = vpop.f32.mrb[0].mxu0
  %1310 = vmatprep.mubr.f32.mxu0 %v412
  %1311 = vmatmul.mubr.f32.gmra.mrb[0].mxu0 %v411
  %v1312 = vpop.f32.mrb[0].mxu0
  %v1313 = vadd.f32 0.0, %v1312
  %v1314 = vpop.f32.mrb[0].mxu0
  %1315 = vmatprep.mubr.f32.mxu0 %v417
  %1316 = vmatmul.mubr.f32.gmra.mrb[0].mxu0 %v416
  %v1317 = vpop.f32.mrb[0].mxu0
  %v1318 = vadd.f32 0.0, %v1317
  %v1319 = vpop.f32.mrb[0].mxu0
  %1320 = vmatprep.mubr.f32.mxu0 %v422
  %1321 = vmatmul.mubr.f32.gmra.mrb[0].mxu0 %v421
  %v1322 = vpop.f32.mrb[0].mxu0
  %v1323 = vadd.f32 0.0, %v1322
  %v1324 = vpop.f32.mrb[0].mxu0
  %1325 = vmatprep.mubr.f32.mxu0 %v427
  %1326 = vmatmul.mubr.f32.gmra.mrb[0].mxu0 %v426
  %v1327 = vpop.f32.mrb[0].mxu0
  %v1328 = vadd.f32 0.0, %v1327
  %v1329 = vpop.f32.mrb[0].mxu0
  %1330 = vmatprep.mubr.f32.mxu0 %v432
  %1331 = vmatmul.mubr.f32.gmra.mrb[0].mxu0 %v431
  %v1332 = vpop.f32.mrb[0].mxu0
  %v1333 = vadd.f32 0.0, %v1332
  %v1334 = vpop.f32.mrb[0].mxu0
  %1335 = vmatprep.mubr.f32.mxu0 %v437
  %1336 = vmatmul.mubr.f32.gmra.mrb[0].mxu0 %v436
  %v1337 = vpop.f32.mrb[0].mxu0
  %v1338 = vadd.f32 0.0, %v1337
  %v1339 = vpop.f32.mrb[0].mxu0
  %1340 = vmatprep.mubr.f32.mxu0 %v442
  %1341 = vmatmul.mubr.f32.gmra.mrb[0].mxu0 %v441
  %v1342 = vpop.f32.mrb[0].mxu0
  %v1343 = vadd.f32 0.0, %v1342
  %v1344 = vpop.f32.mrb[0].mxu0
  %1345 = vmatprep.mubr.f32.mxu0 %v447
  %1346 = vmatmul.mubr.f32.gmra.mrb[0].mxu0 %v446
  %v1347 = vpop.f32.mrb[0].mxu0
  %v1348 = vadd.f32 0.0, %v1347
  %v1349 = vpop.f32.mrb[0].mxu0
  %1350 = vmatprep.mubr.f32.mxu0 %v452
  %1351 = vmatmul.mubr.f32.gmra.mrb[0].mxu0 %v451
  %v1352 = vpop.f32.mrb[0].mxu0
  %v1353 = vadd.f32 0.0, %v1352
  %v1354 = vpop.f32.mrb[0].mxu0
  %1355 = vmatprep.mubr.f32.mxu0 %v457
  %1356 = vmatmul.mubr.f32.gmra.mrb[0].mxu0 %v456
  %v1357 = vpop.f32.mrb[0].mxu0
  %v1358 = vadd.f32 0.0, %v1357
  %v1359 = vpop.f32.mrb[0].mxu0
  %1360 = vmatprep.mubr.f32.mxu0 %v462
  %1361 = vmatmul.mubr.f32.gmra.mrb[0].mxu0 %v461
  %v1362 = vpop.f32.mrb[0].mxu0
  %v1363 = vadd.f32 0.0, %v1362
  %v1364 = vpop.f32.mrb[0].mxu0
  %1365 = vmatprep.mubr.f32.mxu0 %v467
  %1366 = vmatmul.mubr.f32.gmra.mrb[0].mxu0 %v466
  %v1367 = vpop.f32.mrb[0].mxu0
  %v1368 = vadd.f32 0.0, %v1367
  %v1369 = vpop.f32.mrb[0].mxu0
  %1370 = vmatprep.mubr.f32.mxu0 %v472
  %1371 = vmatmul.mubr.f32.gmra.mrb[0].mxu0 %v471
  %v1372 = vpop.f32.mrb[0].mxu0
  %v1373 = vadd.f32 0.0, %v1372
  %v1374 = vpop.f32.mrb[0].mxu0
  %1375 = vmatprep.mubr.f32.mxu0 %v477
  %1376 = vmatmul.mubr.f32.gmra.mrb[0].mxu0 %v476
  %v1377 = vpop.f32.mrb[0].mxu0
  %v1378 = vadd.f32 0.0, %v1377
  %v1379 = vpop.f32.mrb[0].mxu0
  %1380 = vmatprep.mubr.f32.mxu0 %v482
  %1381 = vmatmul.mubr.f32.gmra.mrb[0].mxu0 %v481
  %v1382 = vpop.f32.mrb[0].mxu0
  %v1383 = vadd.f32 0.0, %v1382
  %v1384 = vpop.f32.mrb[0].mxu0
  %1385 = vmatprep.mubr.f32.mxu0 %v487
  %1386 = vmatmul.mubr.f32.gmra.mrb[0].mxu0 %v486
  %v1387 = vpop.f32.mrb[0].mxu0
  %v1388 = vadd.f32 0.0, %v1387
  %v1389 = vpop.f32.mrb[0].mxu0
  %1390 = vmatprep.mubr.f32.mxu0 %v492
  %1391 = vmatmul.mubr.f32.gmra.mrb[0].mxu0 %v491
  %v1392 = vpop.f32.mrb[0].mxu0
  %v1393 = vadd.f32 0.0, %v1392
  %v1394 = vpop.f32.mrb[0].mxu0
  %1395 = vdwg.mxu0
  %1396 = vmatprep.subr.mxu0 0.0
  %1397 = vmatpush1.msra.mxu0 %v528
  %1398 = vmatprep.subr.mxu0 0.0
  %1399 = vmatpush1.msra.mxu0 %v529
  %1400 = vmatprep.subr.mxu0 0.0
  %1401 = vmatpush1.msra.mxu0 %v530
  %1402 = vmatprep.subr.mxu0 0.0
  %1403 = vmatpush1.msra.mxu0 %v531
  %1404 = vmatprep.subr.mxu0 0.0
  %1405 = vmatpush1.msra.mxu0 %v532
  %1406 = vmatprep.subr.mxu0 0.0
  %1407 = vmatpush1.msra.mxu0 %v533
  %1408 = vmatprep.subr.mxu0 0.0
  %1409 = vmatpush1.msra.mxu0 %v534
  %1410 = vmatprep.subr.mxu0 0.0
  %1411 = vmatpush1.msra.mxu0 %v535
  %1412 = vmatprep.subr.mxu0 0.0
  %1413 = vmatpush1.msra.mxu0 %v536
  %1414 = vmatprep.subr.mxu0 0.0
  %1415 = vmatpush1.msra.mxu0 %v537
  %1416 = vmatprep.subr.mxu0 0.0
  %1417 = vmatpush1.msra.mxu0 %v538
  %1418 = vmatprep.subr.mxu0 0.0
  %1419 = vmatpush1.msra.mxu0 %v539
  %1420 = vmatprep.subr.mxu0 0.0
  %1421 = vmatpush1.msra.mxu0 %v540
  %1422 = vmatprep.subr.mxu0 0.0
  %1423 = vmatpush1.msra.mxu0 %v541
  %1424 = vmatprep.subr.mxu0 0.0
  %1425 = vmatpush1.msra.mxu0 %v542
  %1426 = vmatprep.subr.mxu0 0.0
  %1427 = vmatpush1.msra.mxu0 %v543
  %1428 = vmatprep.subr.mxu0 0.0
  %1429 = vmatpush1.msra.mxu0 %v544
  %1430 = vmatprep.subr.mxu0 0.0
  %1431 = vmatpush1.msra.mxu0 %v545
  %1432 = vmatprep.subr.mxu0 0.0
  %1433 = vmatpush1.msra.mxu0 %v546
  %1434 = vmatprep.subr.mxu0 0.0
  %1435 = vmatpush1.msra.mxu0 %v547
  %1436 = vmatprep.subr.mxu0 0.0
  %1437 = vmatpush1.msra.mxu0 %v548
  %1438 = vmatprep.subr.mxu0 0.0
  %1439 = vmatpush1.msra.mxu0 %v549
  %1440 = vmatprep.subr.mxu0 0.0
  %1441 = vmatpush1.msra.mxu0 %v550
  %1442 = vmatprep.subr.mxu0 0.0
  %1443 = vmatpush1.msra.mxu0 %v551
  %1444 = vmatprep.subr.mxu0 0.0
  %1445 = vmatpush1.msra.mxu0 %v552
  %1446 = vmatprep.subr.mxu0 0.0
  %1447 = vmatpush1.msra.mxu0 %v553
  %1448 = vmatprep.subr.mxu0 0.0
  %1449 = vmatpush1.msra.mxu0 %v554
  %1450 = vmatprep.subr.mxu0 0.0
  %1451 = vmatpush1.msra.mxu0 %v555
  %1452 = vmatprep.subr.mxu0 0.0
  %1453 = vmatpush1.msra.mxu0 %v556
  %1454 = vmatprep.subr.mxu0 0.0
  %1455 = vmatpush1.msra.mxu0 %v557
  %1456 = vmatprep.subr.mxu0 0.0
  %1457 = vmatpush1.msra.mxu0 %v558
  %1458 = vmatprep.subr.mxu0 0.0
  %1459 = vmatpush1.msra.mxu0 %v559
  %1460 = vmatprep.mubr.f32.mxu0 %v19
  %1461 = vmatmul.mubr.f32.gmra.mrb[0].mxu0 %v18
  %v1462 = vpop.f32.mrb[0].mxu0
  %v1463 = vadd.f32 %v918, %v1462
  %v1464 = vpop.f32.mrb[0].mxu0
  %1465 = vmatprep.mubr.f32.mxu0 %v24
  %1466 = vmatmul.mubr.f32.gmra.mrb[0].mxu0 %v23
  %v1467 = vpop.f32.mrb[0].mxu0
  %v1468 = vadd.f32 %v923, %v1467
  %v1469 = vpop.f32.mrb[0].mxu0
  %1470 = vmatprep.mubr.f32.mxu0 %v29
  %1471 = vmatmul.mubr.f32.gmra.mrb[0].mxu0 %v28
  %v1472 = vpop.f32.mrb[0].mxu0
  %v1473 = vadd.f32 %v928, %v1472
  %v1474 = vpop.f32.mrb[0].mxu0
  %1475 = vmatprep.mubr.f32.mxu0 %v34
  %1476 = vmatmul.mubr.f32.gmra.mrb[0].mxu0 %v33
  %v1477 = vpop.f32.mrb[0].mxu0
  %v1478 = vadd.f32 %v933, %v1477
  %v1479 = vpop.f32.mrb[0].mxu0
  %1480 = vmatprep.mubr.f32.mxu0 %v39
  %1481 = vmatmul.mubr.f32.gmra.mrb[0].mxu0 %v38
  %v1482 = vpop.f32.mrb[0].mxu0
  %v1483 = vadd.f32 %v938, %v1482
  %v1484 = vpop.f32.mrb[0].mxu0
  %1485 = vmatprep.mubr.f32.mxu0 %v44
  %1486 = vmatmul.mubr.f32.gmra.mrb[0].mxu0 %v43
  %v1487 = vpop.f32.mrb[0].mxu0
  %v1488 = vadd.f32 %v943, %v1487
  %v1489 = vpop.f32.mrb[0].mxu0
  %1490 = vmatprep.mubr.f32.mxu0 %v49
  %1491 = vmatmul.mubr.f32.gmra.mrb[0].mxu0 %v48
  %v1492 = vpop.f32.mrb[0].mxu0
  %v1493 = vadd.f32 %v948, %v1492
  %v1494 = vpop.f32.mrb[0].mxu0
  %1495 = vmatprep.mubr.f32.mxu0 %v54
  %1496 = vmatmul.mubr.f32.gmra.mrb[0].mxu0 %v53
  %v1497 = vpop.f32.mrb[0].mxu0
  %v1498 = vadd.f32 %v953, %v1497
  %v1499 = vpop.f32.mrb[0].mxu0
  %1500 = vmatprep.mubr.f32.mxu0 %v59
  %1501 = vmatmul.mubr.f32.gmra.mrb[0].mxu0 %v58
  %v1502 = vpop.f32.mrb[0].mxu0
  %v1503 = vadd.f32 %v958, %v1502
  %v1504 = vpop.f32.mrb[0].mxu0
  %1505 = vmatprep.mubr.f32.mxu0 %v64
  %1506 = vmatmul.mubr.f32.gmra.mrb[0].mxu0 %v63
  %v1507 = vpop.f32.mrb[0].mxu0
  %v1508 = vadd.f32 %v963, %v1507
  %v1509 = vpop.f32.mrb[0].mxu0
  %1510 = vmatprep.mubr.f32.mxu0 %v69
  %1511 = vmatmul.mubr.f32.gmra.mrb[0].mxu0 %v68
  %v1512 = vpop.f32.mrb[0].mxu0
  %v1513 = vadd.f32 %v968, %v1512
  %v1514 = vpop.f32.mrb[0].mxu0
  %1515 = vmatprep.mubr.f32.mxu0 %v74
  %1516 = vmatmul.mubr.f32.gmra.mrb[0].mxu0 %v73
  %v1517 = vpop.f32.mrb[0].mxu0
  %v1518 = vadd.f32 %v973, %v1517
  %v1519 = vpop.f32.mrb[0].mxu0
  %1520 = vmatprep.mubr.f32.mxu0 %v79
  %1521 = vmatmul.mubr.f32.gmra.mrb[0].mxu0 %v78
  %v1522 = vpop.f32.mrb[0].mxu0
  %v1523 = vadd.f32 %v978, %v1522
  %v1524 = vpop.f32.mrb[0].mxu0
  %1525 = vmatprep.mubr.f32.mxu0 %v84
  %1526 = vmatmul.mubr.f32.gmra.mrb[0].mxu0 %v83
  %v1527 = vpop.f32.mrb[0].mxu0
  %v1528 = vadd.f32 %v983, %v1527
  %v1529 = vpop.f32.mrb[0].mxu0
  %1530 = vmatprep.mubr.f32.mxu0 %v89
  %1531 = vmatmul.mubr.f32.gmra.mrb[0].mxu0 %v88
  %v1532 = vpop.f32.mrb[0].mxu0
  %v1533 = vadd.f32 %v988, %v1532
  %v1534 = vpop.f32.mrb[0].mxu0
  %1535 = vmatprep.mubr.f32.mxu0 %v94
  %1536 = vmatmul.mubr.f32.gmra.mrb[0].mxu0 %v93
  %v1537 = vpop.f32.mrb[0].mxu0
  %v1538 = vadd.f32 %v993, %v1537
  %v1539 = vpop.f32.mrb[0].mxu0
  %1540 = vmatprep.mubr.f32.mxu0 %v99
  %1541 = vmatmul.mubr.f32.gmra.mrb[0].mxu0 %v98
  %v1542 = vpop.f32.mrb[0].mxu0
  %v1543 = vadd.f32 %v998, %v1542
  %v1544 = vpop.f32.mrb[0].mxu0
  %1545 = vmatprep.mubr.f32.mxu0 %v104
  %1546 = vmatmul.mubr.f32.gmra.mrb[0].mxu0 %v103
  %v1547 = vpop.f32.mrb[0].mxu0
  %v1548 = vadd.f32 %v1003, %v1547
  %v1549 = vpop.f32.mrb[0].mxu0
  %1550 = vmatprep.mubr.f32.mxu0 %v109
  %1551 = vmatmul.mubr.f32.gmra.mrb[0].mxu0 %v108
  %v1552 = vpop.f32.mrb[0].mxu0
  %v1553 = vadd.f32 %v1008, %v1552
  %v1554 = vpop.f32.mrb[0].mxu0
  %1555 = vmatprep.mubr.f32.mxu0 %v114
  %1556 = vmatmul.mubr.f32.gmra.mrb[0].mxu0 %v113
  %v1557 = vpop.f32.mrb[0].mxu0
  %v1558 = vadd.f32 %v1013, %v1557
  %v1559 = vpop.f32.mrb[0].mxu0
  %1560 = vmatprep.mubr.f32.mxu0 %v119
  %1561 = vmatmul.mubr.f32.gmra.mrb[0].mxu0 %v118
  %v1562 = vpop.f32.mrb[0].mxu0
  %v1563 = vadd.f32 %v1018, %v1562
  %v1564 = vpop.f32.mrb[0].mxu0
  %1565 = vmatprep.mubr.f32.mxu0 %v124
  %1566 = vmatmul.mubr.f32.gmra.mrb[0].mxu0 %v123
  %v1567 = vpop.f32.mrb[0].mxu0
  %v1568 = vadd.f32 %v1023, %v1567
  %v1569 = vpop.f32.mrb[0].mxu0
  %1570 = vmatprep.mubr.f32.mxu0 %v129
  %1571 = vmatmul.mubr.f32.gmra.mrb[0].mxu0 %v128
  %v1572 = vpop.f32.mrb[0].mxu0
  %v1573 = vadd.f32 %v1028, %v1572
  %v1574 = vpop.f32.mrb[0].mxu0
  %1575 = vmatprep.mubr.f32.mxu0 %v134
  %1576 = vmatmul.mubr.f32.gmra.mrb[0].mxu0 %v133
  %v1577 = vpop.f32.mrb[0].mxu0
  %v1578 = vadd.f32 %v1033, %v1577
  %v1579 = vpop.f32.mrb[0].mxu0
  %1580 = vmatprep.mubr.f32.mxu0 %v139
  %1581 = vmatmul.mubr.f32.gmra.mrb[0].mxu0 %v138
  %v1582 = vpop.f32.mrb[0].mxu0
  %v1583 = vadd.f32 %v1038, %v1582
  %v1584 = vpop.f32.mrb[0].mxu0
  %1585 = vmatprep.mubr.f32.mxu0 %v144
  %1586 = vmatmul.mubr.f32.gmra.mrb[0].mxu0 %v143
  %v1587 = vpop.f32.mrb[0].mxu0
  %v1588 = vadd.f32 %v1043, %v1587
  %v1589 = vpop.f32.mrb[0].mxu0
  %1590 = vmatprep.mubr.f32.mxu0 %v149
  %1591 = vmatmul.mubr.f32.gmra.mrb[0].mxu0 %v148
  %v1592 = vpop.f32.mrb[0].mxu0
  %v1593 = vadd.f32 %v1048, %v1592
  %v1594 = vpop.f32.mrb[0].mxu0
  %1595 = vmatprep.mubr.f32.mxu0 %v154
  %1596 = vmatmul.mubr.f32.gmra.mrb[0].mxu0 %v153
  %v1597 = vpop.f32.mrb[0].mxu0
  %v1598 = vadd.f32 %v1053, %v1597
  %v1599 = vpop.f32.mrb[0].mxu0
  %1600 = vmatprep.mubr.f32.mxu0 %v159
  %1601 = vmatmul.mubr.f32.gmra.mrb[0].mxu0 %v158
  %v1602 = vpop.f32.mrb[0].mxu0
  %v1603 = vadd.f32 %v1058, %v1602
  %v1604 = vpop.f32.mrb[0].mxu0
  %1605 = vmatprep.mubr.f32.mxu0 %v164
  %1606 = vmatmul.mubr.f32.gmra.mrb[0].mxu0 %v163
  %v1607 = vpop.f32.mrb[0].mxu0
  %v1608 = vadd.f32 %v1063, %v1607
  %v1609 = vpop.f32.mrb[0].mxu0
  %1610 = vmatprep.mubr.f32.mxu0 %v169
  %1611 = vmatmul.mubr.f32.gmra.mrb[0].mxu0 %v168
  %v1612 = vpop.f32.mrb[0].mxu0
  %v1613 = vadd.f32 %v1068, %v1612
  %v1614 = vpop.f32.mrb[0].mxu0
  %1615 = vmatprep.mubr.f32.mxu0 %v174
  %1616 = vmatmul.mubr.f32.gmra.mrb[0].mxu0 %v173
  %v1617 = vpop.f32.mrb[0].mxu0
  %v1618 = vadd.f32 %v1073, %v1617
  %v1619 = vpop.f32.mrb[0].mxu0
  %1620 = vmatprep.mubr.f32.mxu0 %v179
  %1621 = vmatmul.mubr.f32.gmra.mrb[0].mxu0 %v178
  %v1622 = vpop.f32.mrb[0].mxu0
  %v1623 = vadd.f32 %v1078, %v1622
  %v1624 = vpop.f32.mrb[0].mxu0
  %1625 = vmatprep.mubr.f32.mxu0 %v184
  %1626 = vmatmul.mubr.f32.gmra.mrb[0].mxu0 %v183
  %v1627 = vpop.f32.mrb[0].mxu0
  %v1628 = vadd.f32 %v1083, %v1627
  %v1629 = vpop.f32.mrb[0].mxu0
  %1630 = vmatprep.mubr.f32.mxu0 %v189
  %1631 = vmatmul.mubr.f32.gmra.mrb[0].mxu0 %v188
  %v1632 = vpop.f32.mrb[0].mxu0
  %v1633 = vadd.f32 %v1088, %v1632
  %v1634 = vpop.f32.mrb[0].mxu0
  %1635 = vmatprep.mubr.f32.mxu0 %v194
  %1636 = vmatmul.mubr.f32.gmra.mrb[0].mxu0 %v193
  %v1637 = vpop.f32.mrb[0].mxu0
  %v1638 = vadd.f32 %v1093, %v1637
  %v1639 = vpop.f32.mrb[0].mxu0
  %1640 = vmatprep.mubr.f32.mxu0 %v199
  %1641 = vmatmul.mubr.f32.gmra.mrb[0].mxu0 %v198
  %v1642 = vpop.f32.mrb[0].mxu0
  %v1643 = vadd.f32 %v1098, %v1642
  %v1644 = vpop.f32.mrb[0].mxu0
  %1645 = vmatprep.mubr.f32.mxu0 %v204
  %1646 = vmatmul.mubr.f32.gmra.mrb[0].mxu0 %v203
  %v1647 = vpop.f32.mrb[0].mxu0
  %v1648 = vadd.f32 %v1103, %v1647
  %v1649 = vpop.f32.mrb[0].mxu0
  %1650 = vmatprep.mubr.f32.mxu0 %v209
  %1651 = vmatmul.mubr.f32.gmra.mrb[0].mxu0 %v208
  %v1652 = vpop.f32.mrb[0].mxu0
  %v1653 = vadd.f32 %v1108, %v1652
  %v1654 = vpop.f32.mrb[0].mxu0
  %1655 = vmatprep.mubr.f32.mxu0 %v214
  %1656 = vmatmul.mubr.f32.gmra.mrb[0].mxu0 %v213
  %v1657 = vpop.f32.mrb[0].mxu0
  %v1658 = vadd.f32 %v1113, %v1657
  %v1659 = vpop.f32.mrb[0].mxu0
  %1660 = vmatprep.mubr.f32.mxu0 %v219
  %1661 = vmatmul.mubr.f32.gmra.mrb[0].mxu0 %v218
  %v1662 = vpop.f32.mrb[0].mxu0
  %v1663 = vadd.f32 %v1118, %v1662
  %v1664 = vpop.f32.mrb[0].mxu0
  %1665 = vmatprep.mubr.f32.mxu0 %v224
  %1666 = vmatmul.mubr.f32.gmra.mrb[0].mxu0 %v223
  %v1667 = vpop.f32.mrb[0].mxu0
  %v1668 = vadd.f32 %v1123, %v1667
  %v1669 = vpop.f32.mrb[0].mxu0
  %1670 = vmatprep.mubr.f32.mxu0 %v229
  %1671 = vmatmul.mubr.f32.gmra.mrb[0].mxu0 %v228
  %v1672 = vpop.f32.mrb[0].mxu0
  %v1673 = vadd.f32 %v1128, %v1672
  %v1674 = vpop.f32.mrb[0].mxu0
  %1675 = vmatprep.mubr.f32.mxu0 %v234
  %1676 = vmatmul.mubr.f32.gmra.mrb[0].mxu0 %v233
  %v1677 = vpop.f32.mrb[0].mxu0
  %v1678 = vadd.f32 %v1133, %v1677
  %v1679 = vpop.f32.mrb[0].mxu0
  %1680 = vmatprep.mubr.f32.mxu0 %v239
  %1681 = vmatmul.mubr.f32.gmra.mrb[0].mxu0 %v238
  %v1682 = vpop.f32.mrb[0].mxu0
  %v1683 = vadd.f32 %v1138, %v1682
  %v1684 = vpop.f32.mrb[0].mxu0
  %1685 = vmatprep.mubr.f32.mxu0 %v244
  %1686 = vmatmul.mubr.f32.gmra.mrb[0].mxu0 %v243
  %v1687 = vpop.f32.mrb[0].mxu0
  %v1688 = vadd.f32 %v1143, %v1687
  %v1689 = vpop.f32.mrb[0].mxu0
  %1690 = vmatprep.mubr.f32.mxu0 %v249
  %1691 = vmatmul.mubr.f32.gmra.mrb[0].mxu0 %v248
  %v1692 = vpop.f32.mrb[0].mxu0
  %v1693 = vadd.f32 %v1148, %v1692
  %v1694 = vpop.f32.mrb[0].mxu0
  %1695 = vmatprep.mubr.f32.mxu0 %v254
  %1696 = vmatmul.mubr.f32.gmra.mrb[0].mxu0 %v253
  %v1697 = vpop.f32.mrb[0].mxu0
  %v1698 = vadd.f32 %v1153, %v1697
  %v1699 = vpop.f32.mrb[0].mxu0
  %1700 = vmatprep.mubr.f32.mxu0 %v259
  %1701 = vmatmul.mubr.f32.gmra.mrb[0].mxu0 %v258
  %v1702 = vpop.f32.mrb[0].mxu0
  %v1703 = vadd.f32 %v1158, %v1702
  %v1704 = vpop.f32.mrb[0].mxu0
  %1705 = vmatprep.mubr.f32.mxu0 %v264
  %1706 = vmatmul.mubr.f32.gmra.mrb[0].mxu0 %v263
  %v1707 = vpop.f32.mrb[0].mxu0
  %v1708 = vadd.f32 %v1163, %v1707
  %v1709 = vpop.f32.mrb[0].mxu0
  %1710 = vmatprep.mubr.f32.mxu0 %v269
  %1711 = vmatmul.mubr.f32.gmra.mrb[0].mxu0 %v268
  %v1712 = vpop.f32.mrb[0].mxu0
  %v1713 = vadd.f32 %v1168, %v1712
  %v1714 = vpop.f32.mrb[0].mxu0
  %1715 = vmatprep.mubr.f32.mxu0 %v274
  %1716 = vmatmul.mubr.f32.gmra.mrb[0].mxu0 %v273
  %v1717 = vpop.f32.mrb[0].mxu0
  %v1718 = vadd.f32 %v1173, %v1717
  %v1719 = vpop.f32.mrb[0].mxu0
  %1720 = vmatprep.mubr.f32.mxu0 %v279
  %1721 = vmatmul.mubr.f32.gmra.mrb[0].mxu0 %v278
  %v1722 = vpop.f32.mrb[0].mxu0
  %v1723 = vadd.f32 %v1178, %v1722
  %v1724 = vpop.f32.mrb[0].mxu0
  %1725 = vmatprep.mubr.f32.mxu0 %v284
  %1726 = vmatmul.mubr.f32.gmra.mrb[0].mxu0 %v283
  %v1727 = vpop.f32.mrb[0].mxu0
  %v1728 = vadd.f32 %v1183, %v1727
  %v1729 = vpop.f32.mrb[0].mxu0
  %1730 = vmatprep.mubr.f32.mxu0 %v289
  %1731 = vmatmul.mubr.f32.gmra.mrb[0].mxu0 %v288
  %v1732 = vpop.f32.mrb[0].mxu0
  %v1733 = vadd.f32 %v1188, %v1732
  %v1734 = vpop.f32.mrb[0].mxu0
  %1735 = vmatprep.mubr.f32.mxu0 %v294
  %1736 = vmatmul.mubr.f32.gmra.mrb[0].mxu0 %v293
  %v1737 = vpop.f32.mrb[0].mxu0
  %v1738 = vadd.f32 %v1193, %v1737
  %v1739 = vpop.f32.mrb[0].mxu0
  %1740 = vmatprep.mubr.f32.mxu0 %v299
  %1741 = vmatmul.mubr.f32.gmra.mrb[0].mxu0 %v298
  %v1742 = vpop.f32.mrb[0].mxu0
  %v1743 = vadd.f32 %v1198, %v1742
  %v1744 = vpop.f32.mrb[0].mxu0
  %1745 = vmatprep.mubr.f32.mxu0 %v304
  %1746 = vmatmul.mubr.f32.gmra.mrb[0].mxu0 %v303
  %v1747 = vpop.f32.mrb[0].mxu0
  %v1748 = vadd.f32 %v1203, %v1747
  %v1749 = vpop.f32.mrb[0].mxu0
  %1750 = vmatprep.mubr.f32.mxu0 %v309
  %1751 = vmatmul.mubr.f32.gmra.mrb[0].mxu0 %v308
  %v1752 = vpop.f32.mrb[0].mxu0
  %v1753 = vadd.f32 %v1208, %v1752
  %v1754 = vpop.f32.mrb[0].mxu0
  %1755 = vmatprep.mubr.f32.mxu0 %v314
  %1756 = vmatmul.mubr.f32.gmra.mrb[0].mxu0 %v313
  %v1757 = vpop.f32.mrb[0].mxu0
  %v1758 = vadd.f32 %v1213, %v1757
  %v1759 = vpop.f32.mrb[0].mxu0
  %1760 = vmatprep.mubr.f32.mxu0 %v319
  %1761 = vmatmul.mubr.f32.gmra.mrb[0].mxu0 %v318
  %v1762 = vpop.f32.mrb[0].mxu0
  %v1763 = vadd.f32 %v1218, %v1762
  %v1764 = vpop.f32.mrb[0].mxu0
  %1765 = vmatprep.mubr.f32.mxu0 %v324
  %1766 = vmatmul.mubr.f32.gmra.mrb[0].mxu0 %v323
  %v1767 = vpop.f32.mrb[0].mxu0
  %v1768 = vadd.f32 %v1223, %v1767
  %v1769 = vpop.f32.mrb[0].mxu0
  %1770 = vmatprep.mubr.f32.mxu0 %v329
  %1771 = vmatmul.mubr.f32.gmra.mrb[0].mxu0 %v328
  %v1772 = vpop.f32.mrb[0].mxu0
  %v1773 = vadd.f32 %v1228, %v1772
  %v1774 = vpop.f32.mrb[0].mxu0
  %1775 = vmatprep.mubr.f32.mxu0 %v334
  %1776 = vmatmul.mubr.f32.gmra.mrb[0].mxu0 %v333
  %v1777 = vpop.f32.mrb[0].mxu0
  %v1778 = vadd.f32 %v1233, %v1777
  %v1779 = vpop.f32.mrb[0].mxu0
  %1780 = vmatprep.mubr.f32.mxu0 %v339
  %1781 = vmatmul.mubr.f32.gmra.mrb[0].mxu0 %v338
  %v1782 = vpop.f32.mrb[0].mxu0
  %v1783 = vadd.f32 %v1238, %v1782
  %v1784 = vpop.f32.mrb[0].mxu0
  %1785 = vmatprep.mubr.f32.mxu0 %v344
  %1786 = vmatmul.mubr.f32.gmra.mrb[0].mxu0 %v343
  %v1787 = vpop.f32.mrb[0].mxu0
  %v1788 = vadd.f32 %v1243, %v1787
  %v1789 = vpop.f32.mrb[0].mxu0
  %1790 = vmatprep.mubr.f32.mxu0 %v349
  %1791 = vmatmul.mubr.f32.gmra.mrb[0].mxu0 %v348
  %v1792 = vpop.f32.mrb[0].mxu0
  %v1793 = vadd.f32 %v1248, %v1792
  %v1794 = vpop.f32.mrb[0].mxu0
  %1795 = vmatprep.mubr.f32.mxu0 %v354
  %1796 = vmatmul.mubr.f32.gmra.mrb[0].mxu0 %v353
  %v1797 = vpop.f32.mrb[0].mxu0
  %v1798 = vadd.f32 %v1253, %v1797
  %v1799 = vpop.f32.mrb[0].mxu0
  %1800 = vmatprep.mubr.f32.mxu0 %v359
  %1801 = vmatmul.mubr.f32.gmra.mrb[0].mxu0 %v358
  %v1802 = vpop.f32.mrb[0].mxu0
  %v1803 = vadd.f32 %v1258, %v1802
  %v1804 = vpop.f32.mrb[0].mxu0
  %1805 = vmatprep.mubr.f32.mxu0 %v364
  %1806 = vmatmul.mubr.f32.gmra.mrb[0].mxu0 %v363
  %v1807 = vpop.f32.mrb[0].mxu0
  %v1808 = vadd.f32 %v1263, %v1807
  %v1809 = vpop.f32.mrb[0].mxu0
  %1810 = vmatprep.mubr.f32.mxu0 %v369
  %1811 = vmatmul.mubr.f32.gmra.mrb[0].mxu0 %v368
  %v1812 = vpop.f32.mrb[0].mxu0
  %v1813 = vadd.f32 %v1268, %v1812
  %v1814 = vpop.f32.mrb[0].mxu0
  %1815 = vmatprep.mubr.f32.mxu0 %v374
  %1816 = vmatmul.mubr.f32.gmra.mrb[0].mxu0 %v373
  %v1817 = vpop.f32.mrb[0].mxu0
  %v1818 = vadd.f32 %v1273, %v1817
  %v1819 = vpop.f32.mrb[0].mxu0
  %1820 = vmatprep.mubr.f32.mxu0 %v379
  %1821 = vmatmul.mubr.f32.gmra.mrb[0].mxu0 %v378
  %v1822 = vpop.f32.mrb[0].mxu0
  %v1823 = vadd.f32 %v1278, %v1822
  %v1824 = vpop.f32.mrb[0].mxu0
  %1825 = vmatprep.mubr.f32.mxu0 %v384
  %1826 = vmatmul.mubr.f32.gmra.mrb[0].mxu0 %v383
  %v1827 = vpop.f32.mrb[0].mxu0
  %v1828 = vadd.f32 %v1283, %v1827
  %v1829 = vpop.f32.mrb[0].mxu0
  %1830 = vmatprep.mubr.f32.mxu0 %v389
  %1831 = vmatmul.mubr.f32.gmra.mrb[0].mxu0 %v388
  %v1832 = vpop.f32.mrb[0].mxu0
  %v1833 = vadd.f32 %v1288, %v1832
  %v1834 = vpop.f32.mrb[0].mxu0
  %1835 = vmatprep.mubr.f32.mxu0 %v394
  %1836 = vmatmul.mubr.f32.gmra.mrb[0].mxu0 %v393
  %v1837 = vpop.f32.mrb[0].mxu0
  %v1838 = vadd.f32 %v1293, %v1837
  %v1839 = vpop.f32.mrb[0].mxu0
  %1840 = vmatprep.mubr.f32.mxu0 %v399
  %1841 = vmatmul.mubr.f32.gmra.mrb[0].mxu0 %v398
  %v1842 = vpop.f32.mrb[0].mxu0
  %v1843 = vadd.f32 %v1298, %v1842
  %v1844 = vpop.f32.mrb[0].mxu0
  %1845 = vmatprep.mubr.f32.mxu0 %v404
  %1846 = vmatmul.mubr.f32.gmra.mrb[0].mxu0 %v403
  %v1847 = vpop.f32.mrb[0].mxu0
  %v1848 = vadd.f32 %v1303, %v1847
  %v1849 = vpop.f32.mrb[0].mxu0
  %1850 = vmatprep.mubr.f32.mxu0 %v409
  %1851 = vmatmul.mubr.f32.gmra.mrb[0].mxu0 %v408
  %v1852 = vpop.f32.mrb[0].mxu0
  %v1853 = vadd.f32 %v1308, %v1852
  %v1854 = vpop.f32.mrb[0].mxu0
  %1855 = vmatprep.mubr.f32.mxu0 %v414
  %1856 = vmatmul.mubr.f32.gmra.mrb[0].mxu0 %v413
  %v1857 = vpop.f32.mrb[0].mxu0
  %v1858 = vadd.f32 %v1313, %v1857
  %v1859 = vpop.f32.mrb[0].mxu0
  %1860 = vmatprep.mubr.f32.mxu0 %v419
  %1861 = vmatmul.mubr.f32.gmra.mrb[0].mxu0 %v418
  %v1862 = vpop.f32.mrb[0].mxu0
  %v1863 = vadd.f32 %v1318, %v1862
  %v1864 = vpop.f32.mrb[0].mxu0
  %1865 = vmatprep.mubr.f32.mxu0 %v424
  %1866 = vmatmul.mubr.f32.gmra.mrb[0].mxu0 %v423
  %v1867 = vpop.f32.mrb[0].mxu0
  %v1868 = vadd.f32 %v1323, %v1867
  %v1869 = vpop.f32.mrb[0].mxu0
  %1870 = vmatprep.mubr.f32.mxu0 %v429
  %1871 = vmatmul.mubr.f32.gmra.mrb[0].mxu0 %v428
  %v1872 = vpop.f32.mrb[0].mxu0
  %v1873 = vadd.f32 %v1328, %v1872
  %v1874 = vpop.f32.mrb[0].mxu0
  %1875 = vmatprep.mubr.f32.mxu0 %v434
  %1876 = vmatmul.mubr.f32.gmra.mrb[0].mxu0 %v433
  %v1877 = vpop.f32.mrb[0].mxu0
  %v1878 = vadd.f32 %v1333, %v1877
  %v1879 = vpop.f32.mrb[0].mxu0
  %1880 = vmatprep.mubr.f32.mxu0 %v439
  %1881 = vmatmul.mubr.f32.gmra.mrb[0].mxu0 %v438
  %v1882 = vpop.f32.mrb[0].mxu0
  %v1883 = vadd.f32 %v1338, %v1882
  %v1884 = vpop.f32.mrb[0].mxu0
  %1885 = vmatprep.mubr.f32.mxu0 %v444
  %1886 = vmatmul.mubr.f32.gmra.mrb[0].mxu0 %v443
  %v1887 = vpop.f32.mrb[0].mxu0
  %v1888 = vadd.f32 %v1343, %v1887
  %v1889 = vpop.f32.mrb[0].mxu0
  %1890 = vmatprep.mubr.f32.mxu0 %v449
  %1891 = vmatmul.mubr.f32.gmra.mrb[0].mxu0 %v448
  %v1892 = vpop.f32.mrb[0].mxu0
  %v1893 = vadd.f32 %v1348, %v1892
  %v1894 = vpop.f32.mrb[0].mxu0
  %1895 = vmatprep.mubr.f32.mxu0 %v454
  %1896 = vmatmul.mubr.f32.gmra.mrb[0].mxu0 %v453
  %v1897 = vpop.f32.mrb[0].mxu0
  %v1898 = vadd.f32 %v1353, %v1897
  %v1899 = vpop.f32.mrb[0].mxu0
  %1900 = vmatprep.mubr.f32.mxu0 %v459
  %1901 = vmatmul.mubr.f32.gmra.mrb[0].mxu0 %v458
  %v1902 = vpop.f32.mrb[0].mxu0
  %v1903 = vadd.f32 %v1358, %v1902
  %v1904 = vpop.f32.mrb[0].mxu0
  %1905 = vmatprep.mubr.f32.mxu0 %v464
  %1906 = vmatmul.mubr.f32.gmra.mrb[0].mxu0 %v463
  %v1907 = vpop.f32.mrb[0].mxu0
  %v1908 = vadd.f32 %v1363, %v1907
  %v1909 = vpop.f32.mrb[0].mxu0
  %1910 = vmatprep.mubr.f32.mxu0 %v469
  %1911 = vmatmul.mubr.f32.gmra.mrb[0].mxu0 %v468
  %v1912 = vpop.f32.mrb[0].mxu0
  %v1913 = vadd.f32 %v1368, %v1912
  %v1914 = vpop.f32.mrb[0].mxu0
  %1915 = vmatprep.mubr.f32.mxu0 %v474
  %1916 = vmatmul.mubr.f32.gmra.mrb[0].mxu0 %v473
  %v1917 = vpop.f32.mrb[0].mxu0
  %v1918 = vadd.f32 %v1373, %v1917
  %v1919 = vpop.f32.mrb[0].mxu0
  %1920 = vmatprep.mubr.f32.mxu0 %v479
  %1921 = vmatmul.mubr.f32.gmra.mrb[0].mxu0 %v478
  %v1922 = vpop.f32.mrb[0].mxu0
  %v1923 = vadd.f32 %v1378, %v1922
  %v1924 = vpop.f32.mrb[0].mxu0
  %1925 = vmatprep.mubr.f32.mxu0 %v484
  %1926 = vmatmul.mubr.f32.gmra.mrb[0].mxu0 %v483
  %v1927 = vpop.f32.mrb[0].mxu0
  %v1928 = vadd.f32 %v1383, %v1927
  %v1929 = vpop.f32.mrb[0].mxu0
  %1930 = vmatprep.mubr.f32.mxu0 %v489
  %1931 = vmatmul.mubr.f32.gmra.mrb[0].mxu0 %v488
  %v1932 = vpop.f32.mrb[0].mxu0
  %v1933 = vadd.f32 %v1388, %v1932
  %v1934 = vpop.f32.mrb[0].mxu0
  %1935 = vmatprep.mubr.f32.mxu0 %v494
  %1936 = vmatmul.mubr.f32.gmra.mrb[0].mxu0 %v493
  %v1937 = vpop.f32.mrb[0].mxu0
  %v1938 = vadd.f32 %v1393, %v1937
  %v1939 = vpop.f32.mrb[0].mxu0
  %1940 = vdwg.mxu0
  %1941 = vmatprep.subr.mxu0 0.0
  %1942 = vmatpush1.msra.mxu0 %v560
  %1943 = vmatprep.subr.mxu0 0.0
  %1944 = vmatpush1.msra.mxu0 %v561
  %1945 = vmatprep.subr.mxu0 0.0
  %1946 = vmatpush1.msra.mxu0 0.0
  %1947 = vmatprep.subr.mxu0 0.0
  %1948 = vmatpush1.msra.mxu0 0.0
  %1949 = vmatprep.subr.mxu0 0.0
  %1950 = vmatpush1.msra.mxu0 0.0
  %1951 = vmatprep.subr.mxu0 0.0
  %1952 = vmatpush1.msra.mxu0 0.0
  %1953 = vmatprep.subr.mxu0 0.0
  %1954 = vmatpush1.msra.mxu0 0.0
  %1955 = vmatprep.subr.mxu0 0.0
  %1956 = vmatpush1.msra.mxu0 0.0
  %1957 = vmatprep.subr.mxu0 0.0
  %1958 = vmatpush1.msra.mxu0 0.0
  %1959 = vmatprep.subr.mxu0 0.0
  %1960 = vmatpush1.msra.mxu0 0.0
  %1961 = vmatprep.subr.mxu0 0.0
  %1962 = vmatpush1.msra.mxu0 0.0
  %1963 = vmatprep.subr.mxu0 0.0
  %1964 = vmatpush1.msra.mxu0 0.0
  %1965 = vmatprep.subr.mxu0 0.0
  %1966 = vmatpush1.msra.mxu0 0.0
  %1967 = vmatprep.subr.mxu0 0.0
  %1968 = vmatpush1.msra.mxu0 0.0
  %1969 = vmatprep.subr.mxu0 0.0
  %1970 = vmatpush1.msra.mxu0 0.0
  %1971 = vmatprep.subr.mxu0 0.0
  %1972 = vmatpush1.msra.mxu0 0.0
  %1973 = vmatprep.subr.mxu0 0.0
  %1974 = vmatpush1.msra.mxu0 0.0
  %1975 = vmatprep.subr.mxu0 0.0
  %1976 = vmatpush1.msra.mxu0 0.0
  %1977 = vmatprep.subr.mxu0 0.0
  %1978 = vmatpush1.msra.mxu0 0.0
  %1979 = vmatprep.subr.mxu0 0.0
  %1980 = vmatpush1.msra.mxu0 0.0
  %1981 = vmatprep.subr.mxu0 0.0
  %1982 = vmatpush1.msra.mxu0 0.0
  %1983 = vmatprep.subr.mxu0 0.0
  %1984 = vmatpush1.msra.mxu0 0.0
  %1985 = vmatprep.subr.mxu0 0.0
  %1986 = vmatpush1.msra.mxu0 0.0
  %1987 = vmatprep.subr.mxu0 0.0
  %1988 = vmatpush1.msra.mxu0 0.0
  %1989 = vmatprep.subr.mxu0 0.0
  %1990 = vmatpush1.msra.mxu0 0.0
  %1991 = vmatprep.subr.mxu0 0.0
  %1992 = vmatpush1.msra.mxu0 0.0
  %1993 = vmatprep.subr.mxu0 0.0
  %1994 = vmatpush1.msra.mxu0 0.0
  %1995 = vmatprep.subr.mxu0 0.0
  %1996 = vmatpush1.msra.mxu0 0.0
  %1997 = vmatprep.subr.mxu0 0.0
  %1998 = vmatpush1.msra.mxu0 0.0
  %1999 = vmatprep.subr.mxu0 0.0
  %2000 = vmatpush1.msra.mxu0 0.0
  %2001 = vmatprep.subr.mxu0 0.0
  %2002 = vmatpush1.msra.mxu0 0.0
  %2003 = vmatprep.subr.mxu0 0.0
  %2004 = vmatpush1.msra.mxu0 0.0
  %2005 = vmatprep.mubr.f32.mxu0 0.0
  %2006 = vmatmul.mubr.f32.gmra.mrb[0].mxu0 %v564
  %v2007 = vpop.f32.mrb[0].mxu0
  %v2008 = vadd.f32 %v1463, %v2007
  %v2009 = vpop.f32.mrb[0].mxu0
  %2010 = vmatprep.mubr.f32.mxu0 0.0
  %2011 = vmatmul.mubr.f32.gmra.mrb[0].mxu0 %v567
  %v2012 = vpop.f32.mrb[0].mxu0
  %v2013 = vadd.f32 %v1468, %v2012
  %v2014 = vpop.f32.mrb[0].mxu0
  %2015 = vmatprep.mubr.f32.mxu0 0.0
  %2016 = vmatmul.mubr.f32.gmra.mrb[0].mxu0 %v570
  %v2017 = vpop.f32.mrb[0].mxu0
  %v2018 = vadd.f32 %v1473, %v2017
  %v2019 = vpop.f32.mrb[0].mxu0
  %2020 = vmatprep.mubr.f32.mxu0 0.0
  %2021 = vmatmul.mubr.f32.gmra.mrb[0].mxu0 %v573
  %v2022 = vpop.f32.mrb[0].mxu0
  %v2023 = vadd.f32 %v1478, %v2022
  %v2024 = vpop.f32.mrb[0].mxu0
  %2025 = vmatprep.mubr.f32.mxu0 0.0
  %2026 = vmatmul.mubr.f32.gmra.mrb[0].mxu0 %v576
  %v2027 = vpop.f32.mrb[0].mxu0
  %v2028 = vadd.f32 %v1483, %v2027
  %v2029 = vpop.f32.mrb[0].mxu0
  %2030 = vmatprep.mubr.f32.mxu0 0.0
  %2031 = vmatmul.mubr.f32.gmra.mrb[0].mxu0 %v579
  %v2032 = vpop.f32.mrb[0].mxu0
  %v2033 = vadd.f32 %v1488, %v2032
  %v2034 = vpop.f32.mrb[0].mxu0
  %2035 = vmatprep.mubr.f32.mxu0 0.0
  %2036 = vmatmul.mubr.f32.gmra.mrb[0].mxu0 %v582
  %v2037 = vpop.f32.mrb[0].mxu0
  %v2038 = vadd.f32 %v1493, %v2037
  %v2039 = vpop.f32.mrb[0].mxu0
  %2040 = vmatprep.mubr.f32.mxu0 0.0
  %2041 = vmatmul.mubr.f32.gmra.mrb[0].mxu0 %v585
  %v2042 = vpop.f32.mrb[0].mxu0
  %v2043 = vadd.f32 %v1498, %v2042
  %v2044 = vpop.f32.mrb[0].mxu0
  %2045 = vmatprep.mubr.f32.mxu0 0.0
  %2046 = vmatmul.mubr.f32.gmra.mrb[0].mxu0 %v588
  %v2047 = vpop.f32.mrb[0].mxu0
  %v2048 = vadd.f32 %v1503, %v2047
  %v2049 = vpop.f32.mrb[0].mxu0
  %2050 = vmatprep.mubr.f32.mxu0 0.0
  %2051 = vmatmul.mubr.f32.gmra.mrb[0].mxu0 %v591
  %v2052 = vpop.f32.mrb[0].mxu0
  %v2053 = vadd.f32 %v1508, %v2052
  %v2054 = vpop.f32.mrb[0].mxu0
  %2055 = vmatprep.mubr.f32.mxu0 0.0
  %2056 = vmatmul.mubr.f32.gmra.mrb[0].mxu0 %v594
  %v2057 = vpop.f32.mrb[0].mxu0
  %v2058 = vadd.f32 %v1513, %v2057
  %v2059 = vpop.f32.mrb[0].mxu0
  %2060 = vmatprep.mubr.f32.mxu0 0.0
  %2061 = vmatmul.mubr.f32.gmra.mrb[0].mxu0 %v597
  %v2062 = vpop.f32.mrb[0].mxu0
  %v2063 = vadd.f32 %v1518, %v2062
  %v2064 = vpop.f32.mrb[0].mxu0
  %2065 = vmatprep.mubr.f32.mxu0 0.0
  %2066 = vmatmul.mubr.f32.gmra.mrb[0].mxu0 %v600
  %v2067 = vpop.f32.mrb[0].mxu0
  %v2068 = vadd.f32 %v1523, %v2067
  %v2069 = vpop.f32.mrb[0].mxu0
  %2070 = vmatprep.mubr.f32.mxu0 0.0
  %2071 = vmatmul.mubr.f32.gmra.mrb[0].mxu0 %v603
  %v2072 = vpop.f32.mrb[0].mxu0
  %v2073 = vadd.f32 %v1528, %v2072
  %v2074 = vpop.f32.mrb[0].mxu0
  %2075 = vmatprep.mubr.f32.mxu0 0.0
  %2076 = vmatmul.mubr.f32.gmra.mrb[0].mxu0 %v606
  %v2077 = vpop.f32.mrb[0].mxu0
  %v2078 = vadd.f32 %v1533, %v2077
  %v2079 = vpop.f32.mrb[0].mxu0
  %2080 = vmatprep.mubr.f32.mxu0 0.0
  %2081 = vmatmul.mubr.f32.gmra.mrb[0].mxu0 %v609
  %v2082 = vpop.f32.mrb[0].mxu0
  %v2083 = vadd.f32 %v1538, %v2082
  %v2084 = vpop.f32.mrb[0].mxu0
  %2085 = vmatprep.mubr.f32.mxu0 0.0
  %2086 = vmatmul.mubr.f32.gmra.mrb[0].mxu0 %v612
  %v2087 = vpop.f32.mrb[0].mxu0
  %v2088 = vadd.f32 %v1543, %v2087
  %v2089 = vpop.f32.mrb[0].mxu0
  %2090 = vmatprep.mubr.f32.mxu0 0.0
  %2091 = vmatmul.mubr.f32.gmra.mrb[0].mxu0 %v615
  %v2092 = vpop.f32.mrb[0].mxu0
  %v2093 = vadd.f32 %v1548, %v2092
  %v2094 = vpop.f32.mrb[0].mxu0
  %2095 = vmatprep.mubr.f32.mxu0 0.0
  %2096 = vmatmul.mubr.f32.gmra.mrb[0].mxu0 %v618
  %v2097 = vpop.f32.mrb[0].mxu0
  %v2098 = vadd.f32 %v1553, %v2097
  %v2099 = vpop.f32.mrb[0].mxu0
  %2100 = vmatprep.mubr.f32.mxu0 0.0
  %2101 = vmatmul.mubr.f32.gmra.mrb[0].mxu0 %v621
  %v2102 = vpop.f32.mrb[0].mxu0
  %v2103 = vadd.f32 %v1558, %v2102
  %v2104 = vpop.f32.mrb[0].mxu0
  %2105 = vmatprep.mubr.f32.mxu0 0.0
  %2106 = vmatmul.mubr.f32.gmra.mrb[0].mxu0 %v624
  %v2107 = vpop.f32.mrb[0].mxu0
  %v2108 = vadd.f32 %v1563, %v2107
  %v2109 = vpop.f32.mrb[0].mxu0
  %2110 = vmatprep.mubr.f32.mxu0 0.0
  %2111 = vmatmul.mubr.f32.gmra.mrb[0].mxu0 %v627
  %v2112 = vpop.f32.mrb[0].mxu0
  %v2113 = vadd.f32 %v1568, %v2112
  %v2114 = vpop.f32.mrb[0].mxu0
  %2115 = vmatprep.mubr.f32.mxu0 0.0
  %2116 = vmatmul.mubr.f32.gmra.mrb[0].mxu0 %v630
  %v2117 = vpop.f32.mrb[0].mxu0
  %v2118 = vadd.f32 %v1573, %v2117
  %v2119 = vpop.f32.mrb[0].mxu0
  %2120 = vmatprep.mubr.f32.mxu0 0.0
  %2121 = vmatmul.mubr.f32.gmra.mrb[0].mxu0 %v633
  %v2122 = vpop.f32.mrb[0].mxu0
  %v2123 = vadd.f32 %v1578, %v2122
  %v2124 = vpop.f32.mrb[0].mxu0
  %2125 = vmatprep.mubr.f32.mxu0 0.0
  %2126 = vmatmul.mubr.f32.gmra.mrb[0].mxu0 %v636
  %v2127 = vpop.f32.mrb[0].mxu0
  %v2128 = vadd.f32 %v1583, %v2127
  %v2129 = vpop.f32.mrb[0].mxu0
  %2130 = vmatprep.mubr.f32.mxu0 0.0
  %2131 = vmatmul.mubr.f32.gmra.mrb[0].mxu0 %v639
  %v2132 = vpop.f32.mrb[0].mxu0
  %v2133 = vadd.f32 %v1588, %v2132
  %v2134 = vpop.f32.mrb[0].mxu0
  %2135 = vmatprep.mubr.f32.mxu0 0.0
  %2136 = vmatmul.mubr.f32.gmra.mrb[0].mxu0 %v642
  %v2137 = vpop.f32.mrb[0].mxu0
  %v2138 = vadd.f32 %v1593, %v2137
  %v2139 = vpop.f32.mrb[0].mxu0
  %2140 = vmatprep.mubr.f32.mxu0 0.0
  %2141 = vmatmul.mubr.f32.gmra.mrb[0].mxu0 %v645
  %v2142 = vpop.f32.mrb[0].mxu0
  %v2143 = vadd.f32 %v1598, %v2142
  %v2144 = vpop.f32.mrb[0].mxu0
  %2145 = vmatprep.mubr.f32.mxu0 0.0
  %2146 = vmatmul.mubr.f32.gmra.mrb[0].mxu0 %v648
  %v2147 = vpop.f32.mrb[0].mxu0
  %v2148 = vadd.f32 %v1603, %v2147
  %v2149 = vpop.f32.mrb[0].mxu0
  %2150 = vmatprep.mubr.f32.mxu0 0.0
  %2151 = vmatmul.mubr.f32.gmra.mrb[0].mxu0 %v651
  %v2152 = vpop.f32.mrb[0].mxu0
  %v2153 = vadd.f32 %v1608, %v2152
  %v2154 = vpop.f32.mrb[0].mxu0
  %2155 = vmatprep.mubr.f32.mxu0 0.0
  %2156 = vmatmul.mubr.f32.gmra.mrb[0].mxu0 %v654
  %v2157 = vpop.f32.mrb[0].mxu0
  %v2158 = vadd.f32 %v1613, %v2157
  %v2159 = vpop.f32.mrb[0].mxu0
  %2160 = vmatprep.mubr.f32.mxu0 0.0
  %2161 = vmatmul.mubr.f32.gmra.mrb[0].mxu0 %v657
  %v2162 = vpop.f32.mrb[0].mxu0
  %v2163 = vadd.f32 %v1618, %v2162
  %v2164 = vpop.f32.mrb[0].mxu0
  %2165 = vmatprep.mubr.f32.mxu0 0.0
  %2166 = vmatmul.mubr.f32.gmra.mrb[0].mxu0 %v660
  %v2167 = vpop.f32.mrb[0].mxu0
  %v2168 = vadd.f32 %v1623, %v2167
  %v2169 = vpop.f32.mrb[0].mxu0
  %2170 = vmatprep.mubr.f32.mxu0 0.0
  %2171 = vmatmul.mubr.f32.gmra.mrb[0].mxu0 %v663
  %v2172 = vpop.f32.mrb[0].mxu0
  %v2173 = vadd.f32 %v1628, %v2172
  %v2174 = vpop.f32.mrb[0].mxu0
  %2175 = vmatprep.mubr.f32.mxu0 0.0
  %2176 = vmatmul.mubr.f32.gmra.mrb[0].mxu0 %v666
  %v2177 = vpop.f32.mrb[0].mxu0
  %v2178 = vadd.f32 %v1633, %v2177
  %v2179 = vpop.f32.mrb[0].mxu0
  %2180 = vmatprep.mubr.f32.mxu0 0.0
  %2181 = vmatmul.mubr.f32.gmra.mrb[0].mxu0 %v669
  %v2182 = vpop.f32.mrb[0].mxu0
  %v2183 = vadd.f32 %v1638, %v2182
  %v2184 = vpop.f32.mrb[0].mxu0
  %2185 = vmatprep.mubr.f32.mxu0 0.0
  %2186 = vmatmul.mubr.f32.gmra.mrb[0].mxu0 %v672
  %v2187 = vpop.f32.mrb[0].mxu0
  %v2188 = vadd.f32 %v1643, %v2187
  %v2189 = vpop.f32.mrb[0].mxu0
  %2190 = vmatprep.mubr.f32.mxu0 0.0
  %2191 = vmatmul.mubr.f32.gmra.mrb[0].mxu0 %v675
  %v2192 = vpop.f32.mrb[0].mxu0
  %v2193 = vadd.f32 %v1648, %v2192
  %v2194 = vpop.f32.mrb[0].mxu0
  %2195 = vmatprep.mubr.f32.mxu0 0.0
  %2196 = vmatmul.mubr.f32.gmra.mrb[0].mxu0 %v678
  %v2197 = vpop.f32.mrb[0].mxu0
  %v2198 = vadd.f32 %v1653, %v2197
  %v2199 = vpop.f32.mrb[0].mxu0
  %2200 = vmatprep.mubr.f32.mxu0 0.0
  %2201 = vmatmul.mubr.f32.gmra.mrb[0].mxu0 %v681
  %v2202 = vpop.f32.mrb[0].mxu0
  %v2203 = vadd.f32 %v1658, %v2202
  %v2204 = vpop.f32.mrb[0].mxu0
  %2205 = vmatprep.mubr.f32.mxu0 0.0
  %2206 = vmatmul.mubr.f32.gmra.mrb[0].mxu0 %v684
  %v2207 = vpop.f32.mrb[0].mxu0
  %v2208 = vadd.f32 %v1663, %v2207
  %v2209 = vpop.f32.mrb[0].mxu0
  %2210 = vmatprep.mubr.f32.mxu0 0.0
  %2211 = vmatmul.mubr.f32.gmra.mrb[0].mxu0 %v687
  %v2212 = vpop.f32.mrb[0].mxu0
  %v2213 = vadd.f32 %v1668, %v2212
  %v2214 = vpop.f32.mrb[0].mxu0
  %2215 = vmatprep.mubr.f32.mxu0 0.0
  %2216 = vmatmul.mubr.f32.gmra.mrb[0].mxu0 %v690
  %v2217 = vpop.f32.mrb[0].mxu0
  %v2218 = vadd.f32 %v1673, %v2217
  %v2219 = vpop.f32.mrb[0].mxu0
  %2220 = vmatprep.mubr.f32.mxu0 0.0
  %2221 = vmatmul.mubr.f32.gmra.mrb[0].mxu0 %v693
  %v2222 = vpop.f32.mrb[0].mxu0
  %v2223 = vadd.f32 %v1678, %v2222
  %v2224 = vpop.f32.mrb[0].mxu0
  %2225 = vmatprep.mubr.f32.mxu0 0.0
  %2226 = vmatmul.mubr.f32.gmra.mrb[0].mxu0 %v696
  %v2227 = vpop.f32.mrb[0].mxu0
  %v2228 = vadd.f32 %v1683, %v2227
  %v2229 = vpop.f32.mrb[0].mxu0
  %2230 = vmatprep.mubr.f32.mxu0 0.0
  %2231 = vmatmul.mubr.f32.gmra.mrb[0].mxu0 %v699
  %v2232 = vpop.f32.mrb[0].mxu0
  %v2233 = vadd.f32 %v1688, %v2232
  %v2234 = vpop.f32.mrb[0].mxu0
  %2235 = vmatprep.mubr.f32.mxu0 0.0
  %2236 = vmatmul.mubr.f32.gmra.mrb[0].mxu0 %v702
  %v2237 = vpop.f32.mrb[0].mxu0
  %v2238 = vadd.f32 %v1693, %v2237
  %v2239 = vpop.f32.mrb[0].mxu0
  %2240 = vmatprep.mubr.f32.mxu0 0.0
  %2241 = vmatmul.mubr.f32.gmra.mrb[0].mxu0 %v705
  %v2242 = vpop.f32.mrb[0].mxu0
  %v2243 = vadd.f32 %v1698, %v2242
  %v2244 = vpop.f32.mrb[0].mxu0
  %2245 = vmatprep.mubr.f32.mxu0 0.0
  %2246 = vmatmul.mubr.f32.gmra.mrb[0].mxu0 %v708
  %v2247 = vpop.f32.mrb[0].mxu0
  %v2248 = vadd.f32 %v1703, %v2247
  %v2249 = vpop.f32.mrb[0].mxu0
  %2250 = vmatprep.mubr.f32.mxu0 0.0
  %2251 = vmatmul.mubr.f32.gmra.mrb[0].mxu0 %v711
  %v2252 = vpop.f32.mrb[0].mxu0
  %v2253 = vadd.f32 %v1708, %v2252
  %v2254 = vpop.f32.mrb[0].mxu0
  %2255 = vmatprep.mubr.f32.mxu0 0.0
  %2256 = vmatmul.mubr.f32.gmra.mrb[0].mxu0 %v714
  %v2257 = vpop.f32.mrb[0].mxu0
  %v2258 = vadd.f32 %v1713, %v2257
  %v2259 = vpop.f32.mrb[0].mxu0
  %2260 = vmatprep.mubr.f32.mxu0 0.0
  %2261 = vmatmul.mubr.f32.gmra.mrb[0].mxu0 %v717
  %v2262 = vpop.f32.mrb[0].mxu0
  %v2263 = vadd.f32 %v1718, %v2262
  %v2264 = vpop.f32.mrb[0].mxu0
  %2265 = vmatprep.mubr.f32.mxu0 0.0
  %2266 = vmatmul.mubr.f32.gmra.mrb[0].mxu0 %v720
  %v2267 = vpop.f32.mrb[0].mxu0
  %v2268 = vadd.f32 %v1723, %v2267
  %v2269 = vpop.f32.mrb[0].mxu0
  %2270 = vmatprep.mubr.f32.mxu0 0.0
  %2271 = vmatmul.mubr.f32.gmra.mrb[0].mxu0 %v723
  %v2272 = vpop.f32.mrb[0].mxu0
  %v2273 = vadd.f32 %v1728, %v2272
  %v2274 = vpop.f32.mrb[0].mxu0
  %2275 = vmatprep.mubr.f32.mxu0 0.0
  %2276 = vmatmul.mubr.f32.gmra.mrb[0].mxu0 %v726
  %v2277 = vpop.f32.mrb[0].mxu0
  %v2278 = vadd.f32 %v1733, %v2277
  %v2279 = vpop.f32.mrb[0].mxu0
  %2280 = vmatprep.mubr.f32.mxu0 0.0
  %2281 = vmatmul.mubr.f32.gmra.mrb[0].mxu0 %v729
  %v2282 = vpop.f32.mrb[0].mxu0
  %v2283 = vadd.f32 %v1738, %v2282
  %v2284 = vpop.f32.mrb[0].mxu0
  %2285 = vmatprep.mubr.f32.mxu0 0.0
  %2286 = vmatmul.mubr.f32.gmra.mrb[0].mxu0 %v732
  %v2287 = vpop.f32.mrb[0].mxu0
  %v2288 = vadd.f32 %v1743, %v2287
  %v2289 = vpop.f32.mrb[0].mxu0
  %2290 = vmatprep.mubr.f32.mxu0 0.0
  %2291 = vmatmul.mubr.f32.gmra.mrb[0].mxu0 %v735
  %v2292 = vpop.f32.mrb[0].mxu0
  %v2293 = vadd.f32 %v1748, %v2292
  %v2294 = vpop.f32.mrb[0].mxu0
  %2295 = vmatprep.mubr.f32.mxu0 0.0
  %2296 = vmatmul.mubr.f32.gmra.mrb[0].mxu0 %v738
  %v2297 = vpop.f32.mrb[0].mxu0
  %v2298 = vadd.f32 %v1753, %v2297
  %v2299 = vpop.f32.mrb[0].mxu0
  %2300 = vmatprep.mubr.f32.mxu0 0.0
  %2301 = vmatmul.mubr.f32.gmra.mrb[0].mxu0 %v741
  %v2302 = vpop.f32.mrb[0].mxu0
  %v2303 = vadd.f32 %v1758, %v2302
  %v2304 = vpop.f32.mrb[0].mxu0
  %2305 = vmatprep.mubr.f32.mxu0 0.0
  %2306 = vmatmul.mubr.f32.gmra.mrb[0].mxu0 %v744
  %v2307 = vpop.f32.mrb[0].mxu0
  %v2308 = vadd.f32 %v1763, %v2307
  %v2309 = vpop.f32.mrb[0].mxu0
  %2310 = vmatprep.mubr.f32.mxu0 0.0
  %2311 = vmatmul.mubr.f32.gmra.mrb[0].mxu0 %v747
  %v2312 = vpop.f32.mrb[0].mxu0
  %v2313 = vadd.f32 %v1768, %v2312
  %v2314 = vpop.f32.mrb[0].mxu0
  %2315 = vmatprep.mubr.f32.mxu0 0.0
  %2316 = vmatmul.mubr.f32.gmra.mrb[0].mxu0 %v750
  %v2317 = vpop.f32.mrb[0].mxu0
  %v2318 = vadd.f32 %v1773, %v2317
  %v2319 = vpop.f32.mrb[0].mxu0
  %2320 = vmatprep.mubr.f32.mxu0 0.0
  %2321 = vmatmul.mubr.f32.gmra.mrb[0].mxu0 %v753
  %v2322 = vpop.f32.mrb[0].mxu0
  %v2323 = vadd.f32 %v1778, %v2322
  %v2324 = vpop.f32.mrb[0].mxu0
  %2325 = vmatprep.mubr.f32.mxu0 0.0
  %2326 = vmatmul.mubr.f32.gmra.mrb[0].mxu0 %v756
  %v2327 = vpop.f32.mrb[0].mxu0
  %v2328 = vadd.f32 %v1783, %v2327
  %v2329 = vpop.f32.mrb[0].mxu0
  %2330 = vmatprep.mubr.f32.mxu0 0.0
  %2331 = vmatmul.mubr.f32.gmra.mrb[0].mxu0 %v759
  %v2332 = vpop.f32.mrb[0].mxu0
  %v2333 = vadd.f32 %v1788, %v2332
  %v2334 = vpop.f32.mrb[0].mxu0
  %2335 = vmatprep.mubr.f32.mxu0 0.0
  %2336 = vmatmul.mubr.f32.gmra.mrb[0].mxu0 %v762
  %v2337 = vpop.f32.mrb[0].mxu0
  %v2338 = vadd.f32 %v1793, %v2337
  %v2339 = vpop.f32.mrb[0].mxu0
  %2340 = vmatprep.mubr.f32.mxu0 0.0
  %2341 = vmatmul.mubr.f32.gmra.mrb[0].mxu0 %v765
  %v2342 = vpop.f32.mrb[0].mxu0
  %v2343 = vadd.f32 %v1798, %v2342
  %v2344 = vpop.f32.mrb[0].mxu0
  %2345 = vmatprep.mubr.f32.mxu0 0.0
  %2346 = vmatmul.mubr.f32.gmra.mrb[0].mxu0 %v768
  %v2347 = vpop.f32.mrb[0].mxu0
  %v2348 = vadd.f32 %v1803, %v2347
  %v2349 = vpop.f32.mrb[0].mxu0
  %2350 = vmatprep.mubr.f32.mxu0 0.0
  %2351 = vmatmul.mubr.f32.gmra.mrb[0].mxu0 %v771
  %v2352 = vpop.f32.mrb[0].mxu0
  %v2353 = vadd.f32 %v1808, %v2352
  %v2354 = vpop.f32.mrb[0].mxu0
  %2355 = vmatprep.mubr.f32.mxu0 0.0
  %2356 = vmatmul.mubr.f32.gmra.mrb[0].mxu0 %v774
  %v2357 = vpop.f32.mrb[0].mxu0
  %v2358 = vadd.f32 %v1813, %v2357
  %v2359 = vpop.f32.mrb[0].mxu0
  %2360 = vmatprep.mubr.f32.mxu0 0.0
  %2361 = vmatmul.mubr.f32.gmra.mrb[0].mxu0 %v777
  %v2362 = vpop.f32.mrb[0].mxu0
  %v2363 = vadd.f32 %v1818, %v2362
  %v2364 = vpop.f32.mrb[0].mxu0
  %2365 = vmatprep.mubr.f32.mxu0 0.0
  %2366 = vmatmul.mubr.f32.gmra.mrb[0].mxu0 %v780
  %v2367 = vpop.f32.mrb[0].mxu0
  %v2368 = vadd.f32 %v1823, %v2367
  %v2369 = vpop.f32.mrb[0].mxu0
  %2370 = vmatprep.mubr.f32.mxu0 0.0
  %2371 = vmatmul.mubr.f32.gmra.mrb[0].mxu0 %v783
  %v2372 = vpop.f32.mrb[0].mxu0
  %v2373 = vadd.f32 %v1828, %v2372
  %v2374 = vpop.f32.mrb[0].mxu0
  %2375 = vmatprep.mubr.f32.mxu0 0.0
  %2376 = vmatmul.mubr.f32.gmra.mrb[0].mxu0 %v786
  %v2377 = vpop.f32.mrb[0].mxu0
  %v2378 = vadd.f32 %v1833, %v2377
  %v2379 = vpop.f32.mrb[0].mxu0
  %2380 = vmatprep.mubr.f32.mxu0 0.0
  %2381 = vmatmul.mubr.f32.gmra.mrb[0].mxu0 %v789
  %v2382 = vpop.f32.mrb[0].mxu0
  %v2383 = vadd.f32 %v1838, %v2382
  %v2384 = vpop.f32.mrb[0].mxu0
  %2385 = vmatprep.mubr.f32.mxu0 0.0
  %2386 = vmatmul.mubr.f32.gmra.mrb[0].mxu0 %v792
  %v2387 = vpop.f32.mrb[0].mxu0
  %v2388 = vadd.f32 %v1843, %v2387
  %v2389 = vpop.f32.mrb[0].mxu0
  %2390 = vmatprep.mubr.f32.mxu0 0.0
  %2391 = vmatmul.mubr.f32.gmra.mrb[0].mxu0 %v795
  %v2392 = vpop.f32.mrb[0].mxu0
  %v2393 = vadd.f32 %v1848, %v2392
  %v2394 = vpop.f32.mrb[0].mxu0
  %2395 = vmatprep.mubr.f32.mxu0 0.0
  %2396 = vmatmul.mubr.f32.gmra.mrb[0].mxu0 %v798
  %v2397 = vpop.f32.mrb[0].mxu0
  %v2398 = vadd.f32 %v1853, %v2397
  %v2399 = vpop.f32.mrb[0].mxu0
  %2400 = vmatprep.mubr.f32.mxu0 0.0
  %2401 = vmatmul.mubr.f32.gmra.mrb[0].mxu0 %v801
  %v2402 = vpop.f32.mrb[0].mxu0
  %v2403 = vadd.f32 %v1858, %v2402
  %v2404 = vpop.f32.mrb[0].mxu0
  %2405 = vmatprep.mubr.f32.mxu0 0.0
  %2406 = vmatmul.mubr.f32.gmra.mrb[0].mxu0 %v804
  %v2407 = vpop.f32.mrb[0].mxu0
  %v2408 = vadd.f32 %v1863, %v2407
  %v2409 = vpop.f32.mrb[0].mxu0
  %2410 = vmatprep.mubr.f32.mxu0 0.0
  %2411 = vmatmul.mubr.f32.gmra.mrb[0].mxu0 %v807
  %v2412 = vpop.f32.mrb[0].mxu0
  %v2413 = vadd.f32 %v1868, %v2412
  %v2414 = vpop.f32.mrb[0].mxu0
  %2415 = vmatprep.mubr.f32.mxu0 0.0
  %2416 = vmatmul.mubr.f32.gmra.mrb[0].mxu0 %v810
  %v2417 = vpop.f32.mrb[0].mxu0
  %v2418 = vadd.f32 %v1873, %v2417
  %v2419 = vpop.f32.mrb[0].mxu0
  %2420 = vmatprep.mubr.f32.mxu0 0.0
  %2421 = vmatmul.mubr.f32.gmra.mrb[0].mxu0 %v813
  %v2422 = vpop.f32.mrb[0].mxu0
  %v2423 = vadd.f32 %v1878, %v2422
  %v2424 = vpop.f32.mrb[0].mxu0
  %2425 = vmatprep.mubr.f32.mxu0 0.0
  %2426 = vmatmul.mubr.f32.gmra.mrb[0].mxu0 %v816
  %v2427 = vpop.f32.mrb[0].mxu0
  %v2428 = vadd.f32 %v1883, %v2427
  %v2429 = vpop.f32.mrb[0].mxu0
  %2430 = vmatprep.mubr.f32.mxu0 0.0
  %2431 = vmatmul.mubr.f32.gmra.mrb[0].mxu0 %v819
  %v2432 = vpop.f32.mrb[0].mxu0
  %v2433 = vadd.f32 %v1888, %v2432
  %v2434 = vpop.f32.mrb[0].mxu0
  %2435 = vmatprep.mubr.f32.mxu0 0.0
  %2436 = vmatmul.mubr.f32.gmra.mrb[0].mxu0 %v822
  %v2437 = vpop.f32.mrb[0].mxu0
  %v2438 = vadd.f32 %v1893, %v2437
  %v2439 = vpop.f32.mrb[0].mxu0
  %2440 = vmatprep.mubr.f32.mxu0 0.0
  %2441 = vmatmul.mubr.f32.gmra.mrb[0].mxu0 %v825
  %v2442 = vpop.f32.mrb[0].mxu0
  %v2443 = vadd.f32 %v1898, %v2442
  %v2444 = vpop.f32.mrb[0].mxu0
  %2445 = vmatprep.mubr.f32.mxu0 0.0
  %2446 = vmatmul.mubr.f32.gmra.mrb[0].mxu0 %v828
  %v2447 = vpop.f32.mrb[0].mxu0
  %v2448 = vadd.f32 %v1903, %v2447
  %v2449 = vpop.f32.mrb[0].mxu0
  %2450 = vmatprep.mubr.f32.mxu0 0.0
  %2451 = vmatmul.mubr.f32.gmra.mrb[0].mxu0 %v831
  %v2452 = vpop.f32.mrb[0].mxu0
  %v2453 = vadd.f32 %v1908, %v2452
  %v2454 = vpop.f32.mrb[0].mxu0
  %2455 = vmatprep.mubr.f32.mxu0 0.0
  %2456 = vmatmul.mubr.f32.gmra.mrb[0].mxu0 %v834
  %v2457 = vpop.f32.mrb[0].mxu0
  %v2458 = vadd.f32 %v1913, %v2457
  %v2459 = vpop.f32.mrb[0].mxu0
  %2460 = vmatprep.mubr.f32.mxu0 0.0
  %2461 = vmatmul.mubr.f32.gmra.mrb[0].mxu0 %v837
  %v2462 = vpop.f32.mrb[0].mxu0
  %v2463 = vadd.f32 %v1918, %v2462
  %v2464 = vpop.f32.mrb[0].mxu0
  %2465 = vmatprep.mubr.f32.mxu0 0.0
  %2466 = vmatmul.mubr.f32.gmra.mrb[0].mxu0 %v840
  %v2467 = vpop.f32.mrb[0].mxu0
  %v2468 = vadd.f32 %v1923, %v2467
  %v2469 = vpop.f32.mrb[0].mxu0
  %2470 = vmatprep.mubr.f32.mxu0 0.0
  %2471 = vmatmul.mubr.f32.gmra.mrb[0].mxu0 %v843
  %v2472 = vpop.f32.mrb[0].mxu0
  %v2473 = vadd.f32 %v1928, %v2472
  %v2474 = vpop.f32.mrb[0].mxu0
  %2475 = vmatprep.mubr.f32.mxu0 0.0
  %2476 = vmatmul.mubr.f32.gmra.mrb[0].mxu0 %v846
  %v2477 = vpop.f32.mrb[0].mxu0
  %v2478 = vadd.f32 %v1933, %v2477
  %v2479 = vpop.f32.mrb[0].mxu0
  %2480 = vmatprep.mubr.f32.mxu0 0.0
  %2481 = vmatmul.mubr.f32.gmra.mrb[0].mxu0 %v849
  %v2482 = vpop.f32.mrb[0].mxu0
  %v2483 = vadd.f32 %v1938, %v2482
  %v2484 = vpop.f32.mrb[0].mxu0
  %2485 = vdwg.mxu0
  %vm2486 = vcmask 15360
  %2487 = vst.msk [vmem:[#allocation2] sm:$0xff] %vm2486, %v2008
  %2488 = vst.msk [vmem:[#allocation2 + $0x8] sm:$0xff] %vm2486, %v2013
  %2489 = vst.msk [vmem:[#allocation2 + $0x10] sm:$0xff] %vm2486, %v2018
  %2490 = vst.msk [vmem:[#allocation2 + $0x18] sm:$0xff] %vm2486, %v2023
  %2491 = vst.msk [vmem:[#allocation2 + $0x20] sm:$0xff] %vm2486, %v2028
  %2492 = vst.msk [vmem:[#allocation2 + $0x28] sm:$0xff] %vm2486, %v2033
  %2493 = vst.msk [vmem:[#allocation2 + $0x30] sm:$0xff] %vm2486, %v2038
  %2494 = vst.msk [vmem:[#allocation2 + $0x38] sm:$0xff] %vm2486, %v2043
  %2495 = vst.msk [vmem:[#allocation2 + $0x40] sm:$0xff] %vm2486, %v2048
  %2496 = vst.msk [vmem:[#allocation2 + $0x48] sm:$0xff] %vm2486, %v2053
  %2497 = vst.msk [vmem:[#allocation2 + $0x50] sm:$0xff] %vm2486, %v2058
  %2498 = vst.msk [vmem:[#allocation2 + $0x58] sm:$0xff] %vm2486, %v2063
  %2499 = vst.msk [vmem:[#allocation2 + $0x60] sm:$0xff] %vm2486, %v2068
  %2500 = vst.msk [vmem:[#allocation2 + $0x68] sm:$0xff] %vm2486, %v2073
  %2501 = vst.msk [vmem:[#allocation2 + $0x70] sm:$0xff] %vm2486, %v2078
  %2502 = vst.msk [vmem:[#allocation2 + $0x78] sm:$0xff] %vm2486, %v2083
  %2503 = vst.msk [vmem:[#allocation2 + $0x80] sm:$0xff] %vm2486, %v2088
  %2504 = vst.msk [vmem:[#allocation2 + $0x88] sm:$0xff] %vm2486, %v2093
  %2505 = vst.msk [vmem:[#allocation2 + $0x90] sm:$0xff] %vm2486, %v2098
  %2506 = vst.msk [vmem:[#allocation2 + $0x98] sm:$0xff] %vm2486, %v2103
  %2507 = vst.msk [vmem:[#allocation2 + $0xa0] sm:$0xff] %vm2486, %v2108
  %2508 = vst.msk [vmem:[#allocation2 + $0xa8] sm:$0xff] %vm2486, %v2113
  %2509 = vst.msk [vmem:[#allocation2 + $0xb0] sm:$0xff] %vm2486, %v2118
  %2510 = vst.msk [vmem:[#allocation2 + $0xb8] sm:$0xff] %vm2486, %v2123
  %2511 = vst.msk [vmem:[#allocation2 + $0xc0] sm:$0xff] %vm2486, %v2128
  %2512 = vst.msk [vmem:[#allocation2 + $0xc8] sm:$0xff] %vm2486, %v2133
  %2513 = vst.msk [vmem:[#allocation2 + $0xd0] sm:$0xff] %vm2486, %v2138
  %2514 = vst.msk [vmem:[#allocation2 + $0xd8] sm:$0xff] %vm2486, %v2143
  %2515 = vst.msk [vmem:[#allocation2 + $0xe0] sm:$0xff] %vm2486, %v2148
  %2516 = vst.msk [vmem:[#allocation2 + $0xe8] sm:$0xff] %vm2486, %v2153
  %2517 = vst.msk [vmem:[#allocation2 + $0xf0] sm:$0xff] %vm2486, %v2158
  %2518 = vst.msk [vmem:[#allocation2 + $0xf8] sm:$0xff] %vm2486, %v2163
  %2519 = vst.msk [vmem:[#allocation2 + $0x100] sm:$0xff] %vm2486, %v2168
  %2520 = vst.msk [vmem:[#allocation2 + $0x108] sm:$0xff] %vm2486, %v2173
  %2521 = vst.msk [vmem:[#allocation2 + $0x110] sm:$0xff] %vm2486, %v2178
  %2522 = vst.msk [vmem:[#allocation2 + $0x118] sm:$0xff] %vm2486, %v2183
  %2523 = vst.msk [vmem:[#allocation2 + $0x120] sm:$0xff] %vm2486, %v2188
  %2524 = vst.msk [vmem:[#allocation2 + $0x128] sm:$0xff] %vm2486, %v2193
  %2525 = vst.msk [vmem:[#allocation2 + $0x130] sm:$0xff] %vm2486, %v2198
  %2526 = vst.msk [vmem:[#allocation2 + $0x138] sm:$0xff] %vm2486, %v2203
  %2527 = vst.msk [vmem:[#allocation2 + $0x140] sm:$0xff] %vm2486, %v2208
  %2528 = vst.msk [vmem:[#allocation2 + $0x148] sm:$0xff] %vm2486, %v2213
  %2529 = vst.msk [vmem:[#allocation2 + $0x150] sm:$0xff] %vm2486, %v2218
  %2530 = vst.msk [vmem:[#allocation2 + $0x158] sm:$0xff] %vm2486, %v2223
  %2531 = vst.msk [vmem:[#allocation2 + $0x160] sm:$0xff] %vm2486, %v2228
  %2532 = vst.msk [vmem:[#allocation2 + $0x168] sm:$0xff] %vm2486, %v2233
  %2533 = vst.msk [vmem:[#allocation2 + $0x170] sm:$0xff] %vm2486, %v2238
  %2534 = vst.msk [vmem:[#allocation2 + $0x178] sm:$0xff] %vm2486, %v2243
  %2535 = vst.msk [vmem:[#allocation2 + $0x180] sm:$0xff] %vm2486, %v2248
  %2536 = vst.msk [vmem:[#allocation2 + $0x188] sm:$0xff] %vm2486, %v2253
  %2537 = vst.msk [vmem:[#allocation2 + $0x190] sm:$0xff] %vm2486, %v2258
  %2538 = vst.msk [vmem:[#allocation2 + $0x198] sm:$0xff] %vm2486, %v2263
  %2539 = vst.msk [vmem:[#allocation2 + $0x1a0] sm:$0xff] %vm2486, %v2268
  %2540 = vst.msk [vmem:[#allocation2 + $0x1a8] sm:$0xff] %vm2486, %v2273
  %2541 = vst.msk [vmem:[#allocation2 + $0x1b0] sm:$0xff] %vm2486, %v2278
  %2542 = vst.msk [vmem:[#allocation2 + $0x1b8] sm:$0xff] %vm2486, %v2283
  %2543 = vst.msk [vmem:[#allocation2 + $0x1c0] sm:$0xff] %vm2486, %v2288
  %2544 = vst.msk [vmem:[#allocation2 + $0x1c8] sm:$0xff] %vm2486, %v2293
  %2545 = vst.msk [vmem:[#allocation2 + $0x1d0] sm:$0xff] %vm2486, %v2298
  %2546 = vst.msk [vmem:[#allocation2 + $0x1d8] sm:$0xff] %vm2486, %v2303
  %2547 = vst.msk [vmem:[#allocation2 + $0x1e0] sm:$0xff] %vm2486, %v2308
  %2548 = vst.msk [vmem:[#allocation2 + $0x1e8] sm:$0xff] %vm2486, %v2313
  %2549 = vst.msk [vmem:[#allocation2 + $0x1f0] sm:$0xff] %vm2486, %v2318
  %2550 = vst.msk [vmem:[#allocation2 + $0x1f8] sm:$0xff] %vm2486, %v2323
  %2551 = vst.msk [vmem:[#allocation2 + $0x200] sm:$0xff] %vm2486, %v2328
  %2552 = vst.msk [vmem:[#allocation2 + $0x208] sm:$0xff] %vm2486, %v2333
  %2553 = vst.msk [vmem:[#allocation2 + $0x210] sm:$0xff] %vm2486, %v2338
  %2554 = vst.msk [vmem:[#allocation2 + $0x218] sm:$0xff] %vm2486, %v2343
  %2555 = vst.msk [vmem:[#allocation2 + $0x220] sm:$0xff] %vm2486, %v2348
  %2556 = vst.msk [vmem:[#allocation2 + $0x228] sm:$0xff] %vm2486, %v2353
  %2557 = vst.msk [vmem:[#allocation2 + $0x230] sm:$0xff] %vm2486, %v2358
  %2558 = vst.msk [vmem:[#allocation2 + $0x238] sm:$0xff] %vm2486, %v2363
  %2559 = vst.msk [vmem:[#allocation2 + $0x240] sm:$0xff] %vm2486, %v2368
  %2560 = vst.msk [vmem:[#allocation2 + $0x248] sm:$0xff] %vm2486, %v2373
  %2561 = vst.msk [vmem:[#allocation2 + $0x250] sm:$0xff] %vm2486, %v2378
  %2562 = vst.msk [vmem:[#allocation2 + $0x258] sm:$0xff] %vm2486, %v2383
  %2563 = vst.msk [vmem:[#allocation2 + $0x260] sm:$0xff] %vm2486, %v2388
  %2564 = vst.msk [vmem:[#allocation2 + $0x268] sm:$0xff] %vm2486, %v2393
  %2565 = vst.msk [vmem:[#allocation2 + $0x270] sm:$0xff] %vm2486, %v2398
  %2566 = vst.msk [vmem:[#allocation2 + $0x278] sm:$0xff] %vm2486, %v2403
  %2567 = vst.msk [vmem:[#allocation2 + $0x280] sm:$0xff] %vm2486, %v2408
  %2568 = vst.msk [vmem:[#allocation2 + $0x288] sm:$0xff] %vm2486, %v2413
  %2569 = vst.msk [vmem:[#allocation2 + $0x290] sm:$0xff] %vm2486, %v2418
  %2570 = vst.msk [vmem:[#allocation2 + $0x298] sm:$0xff] %vm2486, %v2423
  %2571 = vst.msk [vmem:[#allocation2 + $0x2a0] sm:$0xff] %vm2486, %v2428
  %2572 = vst.msk [vmem:[#allocation2 + $0x2a8] sm:$0xff] %vm2486, %v2433
  %2573 = vst.msk [vmem:[#allocation2 + $0x2b0] sm:$0xff] %vm2486, %v2438
  %2574 = vst.msk [vmem:[#allocation2 + $0x2b8] sm:$0xff] %vm2486, %v2443
  %2575 = vst.msk [vmem:[#allocation2 + $0x2c0] sm:$0xff] %vm2486, %v2448
  %2576 = vst.msk [vmem:[#allocation2 + $0x2c8] sm:$0xff] %vm2486, %v2453
  %2577 = vst.msk [vmem:[#allocation2 + $0x2d0] sm:$0xff] %vm2486, %v2458
  %2578 = vst.msk [vmem:[#allocation2 + $0x2d8] sm:$0xff] %vm2486, %v2463
  %2579 = vst.msk [vmem:[#allocation2 + $0x2e0] sm:$0xff] %vm2486, %v2468
  %2580 = vst.msk [vmem:[#allocation2 + $0x2e8] sm:$0xff] %vm2486, %v2473
  %2581 = vst.msk [vmem:[#allocation2 + $0x2f0] sm:$0xff] %vm2486, %v2478
  %2582 = vst.msk [vmem:[#allocation2 + $0x2f8] sm:$0xff] %vm2486, %v2483
  %v2583 = vld [vmem:[#allocation2] sm:$0xff]
  %v2584 = vld [vmem:[#allocation2 + $0x8] sm:$0xff]
  %v2585 = vld [vmem:[#allocation2 + $0xe0] sm:$0xff]
  %v2586 = vld [vmem:[#allocation2 + $0xe8] sm:$0xff]
  %v2588 = vcombine.high %v2583, %v2583
  %v2590 = vunpack.c.l.s4 1966171168
  %v2591 = vunpack.c.0.s8 %v2590
  %v2592 = vlaneseq
  %v2593 = vshrl.u32 %v2592, 7
  %v2594 = vsub.s32 %v2591, %v2593
  %v2595 = vrot.slane %v2583, %v2594
  %v2597 = vunpack.c.l.s4 1966171168
  %v2598 = vunpack.c.0.s8 %v2597
  %v2599 = vlaneseq
  %v2600 = vshrl.u32 %v2599, 7
  %v2601 = vsub.s32 %v2598, %v2600
  %v2602 = vrot.slane %v2588, %v2601
  %v2603 = vcombine.high %v2595, %v2595
  %v2604 = vcombine.high %v2602, %v2602
  %v2606 = vunpack.c.l.s4 1966171168
  %v2607 = vunpack.c.0.s8 %v2606
  %v2608 = vlaneseq
  %v2609 = vshrl.u32 %v2608, 7
  %v2610 = vsub.s32 %v2607, %v2609
  %v2611 = vrot.slane %v2595, %v2610
  %v2613 = vunpack.c.l.s4 1966171168
  %v2614 = vunpack.c.0.s8 %v2613
  %v2615 = vlaneseq
  %v2616 = vshrl.u32 %v2615, 7
  %v2617 = vsub.s32 %v2614, %v2616
  %v2618 = vrot.slane %v2602, %v2617
  %v2620 = vunpack.c.l.s4 1966171168
  %v2621 = vunpack.c.0.s8 %v2620
  %v2622 = vlaneseq
  %v2623 = vshrl.u32 %v2622, 7
  %v2624 = vsub.s32 %v2621, %v2623
  %v2625 = vrot.slane %v2603, %v2624
  %v2627 = vunpack.c.l.s4 1966171168
  %v2628 = vunpack.c.0.s8 %v2627
  %v2629 = vlaneseq
  %v2630 = vshrl.u32 %v2629, 7
  %v2631 = vsub.s32 %v2628, %v2630
  %v2632 = vrot.slane %v2604, %v2631
  %v2633 = vcombine.high %v2611, %v2611
  %v2634 = vcombine.high %v2618, %v2618
  %v2635 = vcombine.high %v2625, %v2625
  %v2636 = vcombine.high %v2632, %v2632
  %v2637 = vlaneseq
  %v2638 = vshrl.u32 %v2637, 7
  %v2639 = vsub.s32 0, %v2638
  %v2640 = vrot.slane %v2611, %v2639
  %v2641 = vlaneseq
  %v2642 = vshrl.u32 %v2641, 7
  %v2643 = vsub.s32 0, %v2642
  %v2644 = vrot.slane %v2625, %v2643
  %v2645 = vlaneseq
  %v2646 = vshrl.u32 %v2645, 7
  %v2647 = vsub.s32 0, %v2646
  %v2648 = vrot.slane %v2633, %v2647
  %v2649 = vlaneseq
  %v2650 = vshrl.u32 %v2649, 7
  %v2651 = vsub.s32 0, %v2650
  %v2652 = vrot.slane %v2635, %v2651
  %v2653 = vlaneseq
  %v2654 = vshrl.u32 %v2653, 7
  %v2655 = vsub.s32 0, %v2654
  %v2656 = vrot.slane %v2618, %v2655
  %v2657 = vlaneseq
  %v2658 = vshrl.u32 %v2657, 7
  %v2659 = vsub.s32 0, %v2658
  %v2660 = vrot.slane %v2632, %v2659
  %v2661 = vlaneseq
  %v2662 = vshrl.u32 %v2661, 7
  %v2663 = vsub.s32 0, %v2662
  %v2664 = vrot.slane %v2634, %v2663
  %v2665 = vlaneseq
  %v2666 = vshrl.u32 %v2665, 7
  %v2667 = vsub.s32 0, %v2666
  %v2668 = vrot.slane %v2636, %v2667
  %v2677 = vmul.f32 %v2640, %v2585
  %v2678 = vmul.f32 %v2644, %v2585
  %v2679 = vmul.f32 %v2648, %v2585
  %v2680 = vmul.f32 %v2652, %v2585
  %v2681 = vmul.f32 %v2656, %v2585
  %v2682 = vmul.f32 %v2660, %v2585
  %v2683 = vmul.f32 %v2664, %v2585
  %v2684 = vmul.f32 %v2668, %v2585
  %v2685 = vadd.f32 %v2677, 0.0
  %v2686 = vadd.f32 %v2678, 0.0
  %v2687 = vadd.f32 %v2679, 0.0
  %v2688 = vadd.f32 %v2680, 0.0
  %v2689 = vadd.f32 %v2681, 0.0
  %v2690 = vadd.f32 %v2682, 0.0
  %v2691 = vadd.f32 %v2683, 0.0
  %v2692 = vadd.f32 %v2684, 0.0
  %v2694 = vcombine.high %v2584, %v2584
  %v2696 = vunpack.c.l.s4 1966171168
  %v2697 = vunpack.c.0.s8 %v2696
  %v2698 = vlaneseq
  %v2699 = vshrl.u32 %v2698, 7
  %v2700 = vsub.s32 %v2697, %v2699
  %v2701 = vrot.slane %v2584, %v2700
  %v2703 = vunpack.c.l.s4 1966171168
  %v2704 = vunpack.c.0.s8 %v2703
  %v2705 = vlaneseq
  %v2706 = vshrl.u32 %v2705, 7
  %v2707 = vsub.s32 %v2704, %v2706
  %v2708 = vrot.slane %v2694, %v2707
  %v2709 = vcombine.high %v2701, %v2701
  %v2710 = vcombine.high %v2708, %v2708
  %v2712 = vunpack.c.l.s4 1966171168
  %v2713 = vunpack.c.0.s8 %v2712
  %v2714 = vlaneseq
  %v2715 = vshrl.u32 %v2714, 7
  %v2716 = vsub.s32 %v2713, %v2715
  %v2717 = vrot.slane %v2701, %v2716
  %v2719 = vunpack.c.l.s4 1966171168
  %v2720 = vunpack.c.0.s8 %v2719
  %v2721 = vlaneseq
  %v2722 = vshrl.u32 %v2721, 7
  %v2723 = vsub.s32 %v2720, %v2722
  %v2724 = vrot.slane %v2708, %v2723
  %v2726 = vunpack.c.l.s4 1966171168
  %v2727 = vunpack.c.0.s8 %v2726
  %v2728 = vlaneseq
  %v2729 = vshrl.u32 %v2728, 7
  %v2730 = vsub.s32 %v2727, %v2729
  %v2731 = vrot.slane %v2709, %v2730
  %v2733 = vunpack.c.l.s4 1966171168
  %v2734 = vunpack.c.0.s8 %v2733
  %v2735 = vlaneseq
  %v2736 = vshrl.u32 %v2735, 7
  %v2737 = vsub.s32 %v2734, %v2736
  %v2738 = vrot.slane %v2710, %v2737
  %v2739 = vcombine.high %v2717, %v2717
  %v2740 = vcombine.high %v2724, %v2724
  %v2741 = vcombine.high %v2731, %v2731
  %v2742 = vcombine.high %v2738, %v2738
  %v2743 = vlaneseq
  %v2744 = vshrl.u32 %v2743, 7
  %v2745 = vsub.s32 0, %v2744
  %v2746 = vrot.slane %v2717, %v2745
  %v2747 = vlaneseq
  %v2748 = vshrl.u32 %v2747, 7
  %v2749 = vsub.s32 0, %v2748
  %v2750 = vrot.slane %v2731, %v2749
  %v2751 = vlaneseq
  %v2752 = vshrl.u32 %v2751, 7
  %v2753 = vsub.s32 0, %v2752
  %v2754 = vrot.slane %v2739, %v2753
  %v2755 = vlaneseq
  %v2756 = vshrl.u32 %v2755, 7
  %v2757 = vsub.s32 0, %v2756
  %v2758 = vrot.slane %v2741, %v2757
  %v2759 = vlaneseq
  %v2760 = vshrl.u32 %v2759, 7
  %v2761 = vsub.s32 0, %v2760
  %v2762 = vrot.slane %v2724, %v2761
  %v2763 = vlaneseq
  %v2764 = vshrl.u32 %v2763, 7
  %v2765 = vsub.s32 0, %v2764
  %v2766 = vrot.slane %v2738, %v2765
  %v2767 = vlaneseq
  %v2768 = vshrl.u32 %v2767, 7
  %v2769 = vsub.s32 0, %v2768
  %v2770 = vrot.slane %v2740, %v2769
  %v2771 = vlaneseq
  %v2772 = vshrl.u32 %v2771, 7
  %v2773 = vsub.s32 0, %v2772
  %v2774 = vrot.slane %v2742, %v2773
  %v2783 = vmul.f32 %v2746, %v2586
  %v2784 = vmul.f32 %v2750, %v2586
  %v2785 = vmul.f32 %v2754, %v2586
  %v2786 = vmul.f32 %v2758, %v2586
  %v2787 = vmul.f32 %v2762, %v2586
  %v2788 = vmul.f32 %v2766, %v2586
  %v2789 = vmul.f32 %v2770, %v2586
  %v2790 = vmul.f32 %v2774, %v2586
  %v2791 = vadd.f32 %v2783, 0.0
  %v2792 = vadd.f32 %v2784, 0.0
  %v2793 = vadd.f32 %v2785, 0.0
  %v2794 = vadd.f32 %v2786, 0.0
  %v2795 = vadd.f32 %v2787, 0.0
  %v2796 = vadd.f32 %v2788, 0.0
  %v2797 = vadd.f32 %v2789, 0.0
  %v2798 = vadd.f32 %v2790, 0.0
  %v2799 = vld [vmem:[#allocation2 + $0x10] sm:$0xff]
  %v2800 = vld [vmem:[#allocation2 + $0x18] sm:$0xff]
  %v2801 = vld [vmem:[#allocation2 + $0xf0] sm:$0xff]
  %v2802 = vld [vmem:[#allocation2 + $0xf8] sm:$0xff]
  %v2804 = vcombine.high %v2799, %v2799
  %v2806 = vunpack.c.l.s4 1966171168
  %v2807 = vunpack.c.0.s8 %v2806
  %v2808 = vlaneseq
  %v2809 = vshrl.u32 %v2808, 7
  %v2810 = vsub.s32 %v2807, %v2809
  %v2811 = vrot.slane %v2799, %v2810
  %v2813 = vunpack.c.l.s4 1966171168
  %v2814 = vunpack.c.0.s8 %v2813
  %v2815 = vlaneseq
  %v2816 = vshrl.u32 %v2815, 7
  %v2817 = vsub.s32 %v2814, %v2816
  %v2818 = vrot.slane %v2804, %v2817
  %v2819 = vcombine.high %v2811, %v2811
  %v2820 = vcombine.high %v2818, %v2818
  %v2822 = vunpack.c.l.s4 1966171168
  %v2823 = vunpack.c.0.s8 %v2822
  %v2824 = vlaneseq
  %v2825 = vshrl.u32 %v2824, 7
  %v2826 = vsub.s32 %v2823, %v2825
  %v2827 = vrot.slane %v2811, %v2826
  %v2829 = vunpack.c.l.s4 1966171168
  %v2830 = vunpack.c.0.s8 %v2829
  %v2831 = vlaneseq
  %v2832 = vshrl.u32 %v2831, 7
  %v2833 = vsub.s32 %v2830, %v2832
  %v2834 = vrot.slane %v2818, %v2833
  %v2836 = vunpack.c.l.s4 1966171168
  %v2837 = vunpack.c.0.s8 %v2836
  %v2838 = vlaneseq
  %v2839 = vshrl.u32 %v2838, 7
  %v2840 = vsub.s32 %v2837, %v2839
  %v2841 = vrot.slane %v2819, %v2840
  %v2843 = vunpack.c.l.s4 1966171168
  %v2844 = vunpack.c.0.s8 %v2843
  %v2845 = vlaneseq
  %v2846 = vshrl.u32 %v2845, 7
  %v2847 = vsub.s32 %v2844, %v2846
  %v2848 = vrot.slane %v2820, %v2847
  %v2849 = vcombine.high %v2827, %v2827
  %v2850 = vcombine.high %v2834, %v2834
  %v2851 = vcombine.high %v2841, %v2841
  %v2852 = vcombine.high %v2848, %v2848
  %v2853 = vlaneseq
  %v2854 = vshrl.u32 %v2853, 7
  %v2855 = vsub.s32 0, %v2854
  %v2856 = vrot.slane %v2827, %v2855
  %v2857 = vlaneseq
  %v2858 = vshrl.u32 %v2857, 7
  %v2859 = vsub.s32 0, %v2858
  %v2860 = vrot.slane %v2841, %v2859
  %v2861 = vlaneseq
  %v2862 = vshrl.u32 %v2861, 7
  %v2863 = vsub.s32 0, %v2862
  %v2864 = vrot.slane %v2849, %v2863
  %v2865 = vlaneseq
  %v2866 = vshrl.u32 %v2865, 7
  %v2867 = vsub.s32 0, %v2866
  %v2868 = vrot.slane %v2851, %v2867
  %v2869 = vlaneseq
  %v2870 = vshrl.u32 %v2869, 7
  %v2871 = vsub.s32 0, %v2870
  %v2872 = vrot.slane %v2834, %v2871
  %v2873 = vlaneseq
  %v2874 = vshrl.u32 %v2873, 7
  %v2875 = vsub.s32 0, %v2874
  %v2876 = vrot.slane %v2848, %v2875
  %v2877 = vlaneseq
  %v2878 = vshrl.u32 %v2877, 7
  %v2879 = vsub.s32 0, %v2878
  %v2880 = vrot.slane %v2850, %v2879
  %v2881 = vlaneseq
  %v2882 = vshrl.u32 %v2881, 7
  %v2883 = vsub.s32 0, %v2882
  %v2884 = vrot.slane %v2852, %v2883
  %v2893 = vmul.f32 %v2856, %v2801
  %v2894 = vmul.f32 %v2860, %v2801
  %v2895 = vmul.f32 %v2864, %v2801
  %v2896 = vmul.f32 %v2868, %v2801
  %v2897 = vmul.f32 %v2872, %v2801
  %v2898 = vmul.f32 %v2876, %v2801
  %v2899 = vmul.f32 %v2880, %v2801
  %v2900 = vmul.f32 %v2884, %v2801
  %v2901 = vadd.f32 %v2685, %v2893
  %v2902 = vadd.f32 %v2686, %v2894
  %v2903 = vadd.f32 %v2687, %v2895
  %v2904 = vadd.f32 %v2688, %v2896
  %v2905 = vadd.f32 %v2689, %v2897
  %v2906 = vadd.f32 %v2690, %v2898
  %v2907 = vadd.f32 %v2691, %v2899
  %v2908 = vadd.f32 %v2692, %v2900
  %v2910 = vcombine.high %v2800, %v2800
  %v2912 = vunpack.c.l.s4 1966171168
  %v2913 = vunpack.c.0.s8 %v2912
  %v2914 = vlaneseq
  %v2915 = vshrl.u32 %v2914, 7
  %v2916 = vsub.s32 %v2913, %v2915
  %v2917 = vrot.slane %v2800, %v2916
  %v2919 = vunpack.c.l.s4 1966171168
  %v2920 = vunpack.c.0.s8 %v2919
  %v2921 = vlaneseq
  %v2922 = vshrl.u32 %v2921, 7
  %v2923 = vsub.s32 %v2920, %v2922
  %v2924 = vrot.slane %v2910, %v2923
  %v2925 = vcombine.high %v2917, %v2917
  %v2926 = vcombine.high %v2924, %v2924
  %v2928 = vunpack.c.l.s4 1966171168
  %v2929 = vunpack.c.0.s8 %v2928
  %v2930 = vlaneseq
  %v2931 = vshrl.u32 %v2930, 7
  %v2932 = vsub.s32 %v2929, %v2931
  %v2933 = vrot.slane %v2917, %v2932
  %v2935 = vunpack.c.l.s4 1966171168
  %v2936 = vunpack.c.0.s8 %v2935
  %v2937 = vlaneseq
  %v2938 = vshrl.u32 %v2937, 7
  %v2939 = vsub.s32 %v2936, %v2938
  %v2940 = vrot.slane %v2924, %v2939
  %v2942 = vunpack.c.l.s4 1966171168
  %v2943 = vunpack.c.0.s8 %v2942
  %v2944 = vlaneseq
  %v2945 = vshrl.u32 %v2944, 7
  %v2946 = vsub.s32 %v2943, %v2945
  %v2947 = vrot.slane %v2925, %v2946
  %v2949 = vunpack.c.l.s4 1966171168
  %v2950 = vunpack.c.0.s8 %v2949
  %v2951 = vlaneseq
  %v2952 = vshrl.u32 %v2951, 7
  %v2953 = vsub.s32 %v2950, %v2952
  %v2954 = vrot.slane %v2926, %v2953
  %v2955 = vcombine.high %v2933, %v2933
  %v2956 = vcombine.high %v2940, %v2940
  %v2957 = vcombine.high %v2947, %v2947
  %v2958 = vcombine.high %v2954, %v2954
  %v2959 = vlaneseq
  %v2960 = vshrl.u32 %v2959, 7
  %v2961 = vsub.s32 0, %v2960
  %v2962 = vrot.slane %v2933, %v2961
  %v2963 = vlaneseq
  %v2964 = vshrl.u32 %v2963, 7
  %v2965 = vsub.s32 0, %v2964
  %v2966 = vrot.slane %v2947, %v2965
  %v2967 = vlaneseq
  %v2968 = vshrl.u32 %v2967, 7
  %v2969 = vsub.s32 0, %v2968
  %v2970 = vrot.slane %v2955, %v2969
  %v2971 = vlaneseq
  %v2972 = vshrl.u32 %v2971, 7
  %v2973 = vsub.s32 0, %v2972
  %v2974 = vrot.slane %v2957, %v2973
  %v2975 = vlaneseq
  %v2976 = vshrl.u32 %v2975, 7
  %v2977 = vsub.s32 0, %v2976
  %v2978 = vrot.slane %v2940, %v2977
  %v2979 = vlaneseq
  %v2980 = vshrl.u32 %v2979, 7
  %v2981 = vsub.s32 0, %v2980
  %v2982 = vrot.slane %v2954, %v2981
  %v2983 = vlaneseq
  %v2984 = vshrl.u32 %v2983, 7
  %v2985 = vsub.s32 0, %v2984
  %v2986 = vrot.slane %v2956, %v2985
  %v2987 = vlaneseq
  %v2988 = vshrl.u32 %v2987, 7
  %v2989 = vsub.s32 0, %v2988
  %v2990 = vrot.slane %v2958, %v2989
  %v2999 = vmul.f32 %v2962, %v2802
  %v3000 = vmul.f32 %v2966, %v2802
  %v3001 = vmul.f32 %v2970, %v2802
  %v3002 = vmul.f32 %v2974, %v2802
  %v3003 = vmul.f32 %v2978, %v2802
  %v3004 = vmul.f32 %v2982, %v2802
  %v3005 = vmul.f32 %v2986, %v2802
  %v3006 = vmul.f32 %v2990, %v2802
  %v3007 = vadd.f32 %v2791, %v2999
  %v3008 = vadd.f32 %v2792, %v3000
  %v3009 = vadd.f32 %v2793, %v3001
  %v3010 = vadd.f32 %v2794, %v3002
  %v3011 = vadd.f32 %v2795, %v3003
  %v3012 = vadd.f32 %v2796, %v3004
  %v3013 = vadd.f32 %v2797, %v3005
  %v3014 = vadd.f32 %v2798, %v3006
  %v3015 = vld [vmem:[#allocation2 + $0x20] sm:$0xff]
  %v3016 = vld [vmem:[#allocation2 + $0x28] sm:$0xff]
  %v3017 = vld [vmem:[#allocation2 + $0x100] sm:$0xff]
  %v3018 = vld [vmem:[#allocation2 + $0x108] sm:$0xff]
  %v3020 = vcombine.high %v3015, %v3015
  %v3022 = vunpack.c.l.s4 1966171168
  %v3023 = vunpack.c.0.s8 %v3022
  %v3024 = vlaneseq
  %v3025 = vshrl.u32 %v3024, 7
  %v3026 = vsub.s32 %v3023, %v3025
  %v3027 = vrot.slane %v3015, %v3026
  %v3029 = vunpack.c.l.s4 1966171168
  %v3030 = vunpack.c.0.s8 %v3029
  %v3031 = vlaneseq
  %v3032 = vshrl.u32 %v3031, 7
  %v3033 = vsub.s32 %v3030, %v3032
  %v3034 = vrot.slane %v3020, %v3033
  %v3035 = vcombine.high %v3027, %v3027
  %v3036 = vcombine.high %v3034, %v3034
  %v3038 = vunpack.c.l.s4 1966171168
  %v3039 = vunpack.c.0.s8 %v3038
  %v3040 = vlaneseq
  %v3041 = vshrl.u32 %v3040, 7
  %v3042 = vsub.s32 %v3039, %v3041
  %v3043 = vrot.slane %v3027, %v3042
  %v3045 = vunpack.c.l.s4 1966171168
  %v3046 = vunpack.c.0.s8 %v3045
  %v3047 = vlaneseq
  %v3048 = vshrl.u32 %v3047, 7
  %v3049 = vsub.s32 %v3046, %v3048
  %v3050 = vrot.slane %v3034, %v3049
  %v3052 = vunpack.c.l.s4 1966171168
  %v3053 = vunpack.c.0.s8 %v3052
  %v3054 = vlaneseq
  %v3055 = vshrl.u32 %v3054, 7
  %v3056 = vsub.s32 %v3053, %v3055
  %v3057 = vrot.slane %v3035, %v3056
  %v3059 = vunpack.c.l.s4 1966171168
  %v3060 = vunpack.c.0.s8 %v3059
  %v3061 = vlaneseq
  %v3062 = vshrl.u32 %v3061, 7
  %v3063 = vsub.s32 %v3060, %v3062
  %v3064 = vrot.slane %v3036, %v3063
  %v3065 = vcombine.high %v3043, %v3043
  %v3066 = vcombine.high %v3050, %v3050
  %v3067 = vcombine.high %v3057, %v3057
  %v3068 = vcombine.high %v3064, %v3064
  %v3069 = vlaneseq
  %v3070 = vshrl.u32 %v3069, 7
  %v3071 = vsub.s32 0, %v3070
  %v3072 = vrot.slane %v3043, %v3071
  %v3073 = vlaneseq
  %v3074 = vshrl.u32 %v3073, 7
  %v3075 = vsub.s32 0, %v3074
  %v3076 = vrot.slane %v3057, %v3075
  %v3077 = vlaneseq
  %v3078 = vshrl.u32 %v3077, 7
  %v3079 = vsub.s32 0, %v3078
  %v3080 = vrot.slane %v3065, %v3079
  %v3081 = vlaneseq
  %v3082 = vshrl.u32 %v3081, 7
  %v3083 = vsub.s32 0, %v3082
  %v3084 = vrot.slane %v3067, %v3083
  %v3085 = vlaneseq
  %v3086 = vshrl.u32 %v3085, 7
  %v3087 = vsub.s32 0, %v3086
  %v3088 = vrot.slane %v3050, %v3087
  %v3089 = vlaneseq
  %v3090 = vshrl.u32 %v3089, 7
  %v3091 = vsub.s32 0, %v3090
  %v3092 = vrot.slane %v3064, %v3091
  %v3093 = vlaneseq
  %v3094 = vshrl.u32 %v3093, 7
  %v3095 = vsub.s32 0, %v3094
  %v3096 = vrot.slane %v3066, %v3095
  %v3097 = vlaneseq
  %v3098 = vshrl.u32 %v3097, 7
  %v3099 = vsub.s32 0, %v3098
  %v3100 = vrot.slane %v3068, %v3099
  %v3109 = vmul.f32 %v3072, %v3017
  %v3110 = vmul.f32 %v3076, %v3017
  %v3111 = vmul.f32 %v3080, %v3017
  %v3112 = vmul.f32 %v3084, %v3017
  %v3113 = vmul.f32 %v3088, %v3017
  %v3114 = vmul.f32 %v3092, %v3017
  %v3115 = vmul.f32 %v3096, %v3017
  %v3116 = vmul.f32 %v3100, %v3017
  %v3117 = vadd.f32 %v2901, %v3109
  %v3118 = vadd.f32 %v2902, %v3110
  %v3119 = vadd.f32 %v2903, %v3111
  %v3120 = vadd.f32 %v2904, %v3112
  %v3121 = vadd.f32 %v2905, %v3113
  %v3122 = vadd.f32 %v2906, %v3114
  %v3123 = vadd.f32 %v2907, %v3115
  %v3124 = vadd.f32 %v2908, %v3116
  %v3126 = vcombine.high %v3016, %v3016
  %v3128 = vunpack.c.l.s4 1966171168
  %v3129 = vunpack.c.0.s8 %v3128
  %v3130 = vlaneseq
  %v3131 = vshrl.u32 %v3130, 7
  %v3132 = vsub.s32 %v3129, %v3131
  %v3133 = vrot.slane %v3016, %v3132
  %v3135 = vunpack.c.l.s4 1966171168
  %v3136 = vunpack.c.0.s8 %v3135
  %v3137 = vlaneseq
  %v3138 = vshrl.u32 %v3137, 7
  %v3139 = vsub.s32 %v3136, %v3138
  %v3140 = vrot.slane %v3126, %v3139
  %v3141 = vcombine.high %v3133, %v3133
  %v3142 = vcombine.high %v3140, %v3140
  %v3144 = vunpack.c.l.s4 1966171168
  %v3145 = vunpack.c.0.s8 %v3144
  %v3146 = vlaneseq
  %v3147 = vshrl.u32 %v3146, 7
  %v3148 = vsub.s32 %v3145, %v3147
  %v3149 = vrot.slane %v3133, %v3148
  %v3151 = vunpack.c.l.s4 1966171168
  %v3152 = vunpack.c.0.s8 %v3151
  %v3153 = vlaneseq
  %v3154 = vshrl.u32 %v3153, 7
  %v3155 = vsub.s32 %v3152, %v3154
  %v3156 = vrot.slane %v3140, %v3155
  %v3158 = vunpack.c.l.s4 1966171168
  %v3159 = vunpack.c.0.s8 %v3158
  %v3160 = vlaneseq
  %v3161 = vshrl.u32 %v3160, 7
  %v3162 = vsub.s32 %v3159, %v3161
  %v3163 = vrot.slane %v3141, %v3162
  %v3165 = vunpack.c.l.s4 1966171168
  %v3166 = vunpack.c.0.s8 %v3165
  %v3167 = vlaneseq
  %v3168 = vshrl.u32 %v3167, 7
  %v3169 = vsub.s32 %v3166, %v3168
  %v3170 = vrot.slane %v3142, %v3169
  %v3171 = vcombine.high %v3149, %v3149
  %v3172 = vcombine.high %v3156, %v3156
  %v3173 = vcombine.high %v3163, %v3163
  %v3174 = vcombine.high %v3170, %v3170
  %v3175 = vlaneseq
  %v3176 = vshrl.u32 %v3175, 7
  %v3177 = vsub.s32 0, %v3176
  %v3178 = vrot.slane %v3149, %v3177
  %v3179 = vlaneseq
  %v3180 = vshrl.u32 %v3179, 7
  %v3181 = vsub.s32 0, %v3180
  %v3182 = vrot.slane %v3163, %v3181
  %v3183 = vlaneseq
  %v3184 = vshrl.u32 %v3183, 7
  %v3185 = vsub.s32 0, %v3184
  %v3186 = vrot.slane %v3171, %v3185
  %v3187 = vlaneseq
  %v3188 = vshrl.u32 %v3187, 7
  %v3189 = vsub.s32 0, %v3188
  %v3190 = vrot.slane %v3173, %v3189
  %v3191 = vlaneseq
  %v3192 = vshrl.u32 %v3191, 7
  %v3193 = vsub.s32 0, %v3192
  %v3194 = vrot.slane %v3156, %v3193
  %v3195 = vlaneseq
  %v3196 = vshrl.u32 %v3195, 7
  %v3197 = vsub.s32 0, %v3196
  %v3198 = vrot.slane %v3170, %v3197
  %v3199 = vlaneseq
  %v3200 = vshrl.u32 %v3199, 7
  %v3201 = vsub.s32 0, %v3200
  %v3202 = vrot.slane %v3172, %v3201
  %v3203 = vlaneseq
  %v3204 = vshrl.u32 %v3203, 7
  %v3205 = vsub.s32 0, %v3204
  %v3206 = vrot.slane %v3174, %v3205
  %v3215 = vmul.f32 %v3178, %v3018
  %v3216 = vmul.f32 %v3182, %v3018
  %v3217 = vmul.f32 %v3186, %v3018
  %v3218 = vmul.f32 %v3190, %v3018
  %v3219 = vmul.f32 %v3194, %v3018
  %v3220 = vmul.f32 %v3198, %v3018
  %v3221 = vmul.f32 %v3202, %v3018
  %v3222 = vmul.f32 %v3206, %v3018
  %v3223 = vadd.f32 %v3007, %v3215
  %v3224 = vadd.f32 %v3008, %v3216
  %v3225 = vadd.f32 %v3009, %v3217
  %v3226 = vadd.f32 %v3010, %v3218
  %v3227 = vadd.f32 %v3011, %v3219
  %v3228 = vadd.f32 %v3012, %v3220
  %v3229 = vadd.f32 %v3013, %v3221
  %v3230 = vadd.f32 %v3014, %v3222
  %v3231 = vld [vmem:[#allocation2 + $0x30] sm:$0xff]
  %v3232 = vld [vmem:[#allocation2 + $0x38] sm:$0xff]
  %v3233 = vld [vmem:[#allocation2 + $0x110] sm:$0xff]
  %v3234 = vld [vmem:[#allocation2 + $0x118] sm:$0xff]
  %v3236 = vcombine.high %v3231, %v3231
  %v3238 = vunpack.c.l.s4 1966171168
  %v3239 = vunpack.c.0.s8 %v3238
  %v3240 = vlaneseq
  %v3241 = vshrl.u32 %v3240, 7
  %v3242 = vsub.s32 %v3239, %v3241
  %v3243 = vrot.slane %v3231, %v3242
  %v3245 = vunpack.c.l.s4 1966171168
  %v3246 = vunpack.c.0.s8 %v3245
  %v3247 = vlaneseq
  %v3248 = vshrl.u32 %v3247, 7
  %v3249 = vsub.s32 %v3246, %v3248
  %v3250 = vrot.slane %v3236, %v3249
  %v3251 = vcombine.high %v3243, %v3243
  %v3252 = vcombine.high %v3250, %v3250
  %v3254 = vunpack.c.l.s4 1966171168
  %v3255 = vunpack.c.0.s8 %v3254
  %v3256 = vlaneseq
  %v3257 = vshrl.u32 %v3256, 7
  %v3258 = vsub.s32 %v3255, %v3257
  %v3259 = vrot.slane %v3243, %v3258
  %v3261 = vunpack.c.l.s4 1966171168
  %v3262 = vunpack.c.0.s8 %v3261
  %v3263 = vlaneseq
  %v3264 = vshrl.u32 %v3263, 7
  %v3265 = vsub.s32 %v3262, %v3264
  %v3266 = vrot.slane %v3250, %v3265
  %v3268 = vunpack.c.l.s4 1966171168
  %v3269 = vunpack.c.0.s8 %v3268
  %v3270 = vlaneseq
  %v3271 = vshrl.u32 %v3270, 7
  %v3272 = vsub.s32 %v3269, %v3271
  %v3273 = vrot.slane %v3251, %v3272
  %v3275 = vunpack.c.l.s4 1966171168
  %v3276 = vunpack.c.0.s8 %v3275
  %v3277 = vlaneseq
  %v3278 = vshrl.u32 %v3277, 7
  %v3279 = vsub.s32 %v3276, %v3278
  %v3280 = vrot.slane %v3252, %v3279
  %v3281 = vcombine.high %v3259, %v3259
  %v3282 = vcombine.high %v3266, %v3266
  %v3283 = vcombine.high %v3273, %v3273
  %v3284 = vcombine.high %v3280, %v3280
  %v3285 = vlaneseq
  %v3286 = vshrl.u32 %v3285, 7
  %v3287 = vsub.s32 0, %v3286
  %v3288 = vrot.slane %v3259, %v3287
  %v3289 = vlaneseq
  %v3290 = vshrl.u32 %v3289, 7
  %v3291 = vsub.s32 0, %v3290
  %v3292 = vrot.slane %v3273, %v3291
  %v3293 = vlaneseq
  %v3294 = vshrl.u32 %v3293, 7
  %v3295 = vsub.s32 0, %v3294
  %v3296 = vrot.slane %v3281, %v3295
  %v3297 = vlaneseq
  %v3298 = vshrl.u32 %v3297, 7
  %v3299 = vsub.s32 0, %v3298
  %v3300 = vrot.slane %v3283, %v3299
  %v3301 = vlaneseq
  %v3302 = vshrl.u32 %v3301, 7
  %v3303 = vsub.s32 0, %v3302
  %v3304 = vrot.slane %v3266, %v3303
  %v3305 = vlaneseq
  %v3306 = vshrl.u32 %v3305, 7
  %v3307 = vsub.s32 0, %v3306
  %v3308 = vrot.slane %v3280, %v3307
  %v3309 = vlaneseq
  %v3310 = vshrl.u32 %v3309, 7
  %v3311 = vsub.s32 0, %v3310
  %v3312 = vrot.slane %v3282, %v3311
  %v3313 = vlaneseq
  %v3314 = vshrl.u32 %v3313, 7
  %v3315 = vsub.s32 0, %v3314
  %v3316 = vrot.slane %v3284, %v3315
  %v3325 = vmul.f32 %v3288, %v3233
  %v3326 = vmul.f32 %v3292, %v3233
  %v3327 = vmul.f32 %v3296, %v3233
  %v3328 = vmul.f32 %v3300, %v3233
  %v3329 = vmul.f32 %v3304, %v3233
  %v3330 = vmul.f32 %v3308, %v3233
  %v3331 = vmul.f32 %v3312, %v3233
  %v3332 = vmul.f32 %v3316, %v3233
  %v3333 = vadd.f32 %v3117, %v3325
  %v3334 = vadd.f32 %v3118, %v3326
  %v3335 = vadd.f32 %v3119, %v3327
  %v3336 = vadd.f32 %v3120, %v3328
  %v3337 = vadd.f32 %v3121, %v3329
  %v3338 = vadd.f32 %v3122, %v3330
  %v3339 = vadd.f32 %v3123, %v3331
  %v3340 = vadd.f32 %v3124, %v3332
  %v3342 = vcombine.high %v3232, %v3232
  %v3344 = vunpack.c.l.s4 1966171168
  %v3345 = vunpack.c.0.s8 %v3344
  %v3346 = vlaneseq
  %v3347 = vshrl.u32 %v3346, 7
  %v3348 = vsub.s32 %v3345, %v3347
  %v3349 = vrot.slane %v3232, %v3348
  %v3351 = vunpack.c.l.s4 1966171168
  %v3352 = vunpack.c.0.s8 %v3351
  %v3353 = vlaneseq
  %v3354 = vshrl.u32 %v3353, 7
  %v3355 = vsub.s32 %v3352, %v3354
  %v3356 = vrot.slane %v3342, %v3355
  %v3357 = vcombine.high %v3349, %v3349
  %v3358 = vcombine.high %v3356, %v3356
  %v3360 = vunpack.c.l.s4 1966171168
  %v3361 = vunpack.c.0.s8 %v3360
  %v3362 = vlaneseq
  %v3363 = vshrl.u32 %v3362, 7
  %v3364 = vsub.s32 %v3361, %v3363
  %v3365 = vrot.slane %v3349, %v3364
  %v3367 = vunpack.c.l.s4 1966171168
  %v3368 = vunpack.c.0.s8 %v3367
  %v3369 = vlaneseq
  %v3370 = vshrl.u32 %v3369, 7
  %v3371 = vsub.s32 %v3368, %v3370
  %v3372 = vrot.slane %v3356, %v3371
  %v3374 = vunpack.c.l.s4 1966171168
  %v3375 = vunpack.c.0.s8 %v3374
  %v3376 = vlaneseq
  %v3377 = vshrl.u32 %v3376, 7
  %v3378 = vsub.s32 %v3375, %v3377
  %v3379 = vrot.slane %v3357, %v3378
  %v3381 = vunpack.c.l.s4 1966171168
  %v3382 = vunpack.c.0.s8 %v3381
  %v3383 = vlaneseq
  %v3384 = vshrl.u32 %v3383, 7
  %v3385 = vsub.s32 %v3382, %v3384
  %v3386 = vrot.slane %v3358, %v3385
  %v3387 = vcombine.high %v3365, %v3365
  %v3388 = vcombine.high %v3372, %v3372
  %v3389 = vcombine.high %v3379, %v3379
  %v3390 = vcombine.high %v3386, %v3386
  %v3391 = vlaneseq
  %v3392 = vshrl.u32 %v3391, 7
  %v3393 = vsub.s32 0, %v3392
  %v3394 = vrot.slane %v3365, %v3393
  %v3395 = vlaneseq
  %v3396 = vshrl.u32 %v3395, 7
  %v3397 = vsub.s32 0, %v3396
  %v3398 = vrot.slane %v3379, %v3397
  %v3399 = vlaneseq
  %v3400 = vshrl.u32 %v3399, 7
  %v3401 = vsub.s32 0, %v3400
  %v3402 = vrot.slane %v3387, %v3401
  %v3403 = vlaneseq
  %v3404 = vshrl.u32 %v3403, 7
  %v3405 = vsub.s32 0, %v3404
  %v3406 = vrot.slane %v3389, %v3405
  %v3407 = vlaneseq
  %v3408 = vshrl.u32 %v3407, 7
  %v3409 = vsub.s32 0, %v3408
  %v3410 = vrot.slane %v3372, %v3409
  %v3411 = vlaneseq
  %v3412 = vshrl.u32 %v3411, 7
  %v3413 = vsub.s32 0, %v3412
  %v3414 = vrot.slane %v3386, %v3413
  %v3415 = vlaneseq
  %v3416 = vshrl.u32 %v3415, 7
  %v3417 = vsub.s32 0, %v3416
  %v3418 = vrot.slane %v3388, %v3417
  %v3419 = vlaneseq
  %v3420 = vshrl.u32 %v3419, 7
  %v3421 = vsub.s32 0, %v3420
  %v3422 = vrot.slane %v3390, %v3421
  %v3431 = vmul.f32 %v3394, %v3234
  %v3432 = vmul.f32 %v3398, %v3234
  %v3433 = vmul.f32 %v3402, %v3234
  %v3434 = vmul.f32 %v3406, %v3234
  %v3435 = vmul.f32 %v3410, %v3234
  %v3436 = vmul.f32 %v3414, %v3234
  %v3437 = vmul.f32 %v3418, %v3234
  %v3438 = vmul.f32 %v3422, %v3234
  %v3439 = vadd.f32 %v3223, %v3431
  %v3440 = vadd.f32 %v3224, %v3432
  %v3441 = vadd.f32 %v3225, %v3433
  %v3442 = vadd.f32 %v3226, %v3434
  %v3443 = vadd.f32 %v3227, %v3435
  %v3444 = vadd.f32 %v3228, %v3436
  %v3445 = vadd.f32 %v3229, %v3437
  %v3446 = vadd.f32 %v3230, %v3438
  %v3447 = vld [vmem:[#allocation2 + $0x40] sm:$0xff]
  %v3448 = vld [vmem:[#allocation2 + $0x48] sm:$0xff]
  %v3449 = vld [vmem:[#allocation2 + $0x120] sm:$0xff]
  %v3450 = vld [vmem:[#allocation2 + $0x128] sm:$0xff]
  %v3452 = vcombine.high %v3447, %v3447
  %v3454 = vunpack.c.l.s4 1966171168
  %v3455 = vunpack.c.0.s8 %v3454
  %v3456 = vlaneseq
  %v3457 = vshrl.u32 %v3456, 7
  %v3458 = vsub.s32 %v3455, %v3457
  %v3459 = vrot.slane %v3447, %v3458
  %v3461 = vunpack.c.l.s4 1966171168
  %v3462 = vunpack.c.0.s8 %v3461
  %v3463 = vlaneseq
  %v3464 = vshrl.u32 %v3463, 7
  %v3465 = vsub.s32 %v3462, %v3464
  %v3466 = vrot.slane %v3452, %v3465
  %v3467 = vcombine.high %v3459, %v3459
  %v3468 = vcombine.high %v3466, %v3466
  %v3470 = vunpack.c.l.s4 1966171168
  %v3471 = vunpack.c.0.s8 %v3470
  %v3472 = vlaneseq
  %v3473 = vshrl.u32 %v3472, 7
  %v3474 = vsub.s32 %v3471, %v3473
  %v3475 = vrot.slane %v3459, %v3474
  %v3477 = vunpack.c.l.s4 1966171168
  %v3478 = vunpack.c.0.s8 %v3477
  %v3479 = vlaneseq
  %v3480 = vshrl.u32 %v3479, 7
  %v3481 = vsub.s32 %v3478, %v3480
  %v3482 = vrot.slane %v3466, %v3481
  %v3484 = vunpack.c.l.s4 1966171168
  %v3485 = vunpack.c.0.s8 %v3484
  %v3486 = vlaneseq
  %v3487 = vshrl.u32 %v3486, 7
  %v3488 = vsub.s32 %v3485, %v3487
  %v3489 = vrot.slane %v3467, %v3488
  %v3491 = vunpack.c.l.s4 1966171168
  %v3492 = vunpack.c.0.s8 %v3491
  %v3493 = vlaneseq
  %v3494 = vshrl.u32 %v3493, 7
  %v3495 = vsub.s32 %v3492, %v3494
  %v3496 = vrot.slane %v3468, %v3495
  %v3497 = vcombine.high %v3475, %v3475
  %v3498 = vcombine.high %v3482, %v3482
  %v3499 = vcombine.high %v3489, %v3489
  %v3500 = vcombine.high %v3496, %v3496
  %v3501 = vlaneseq
  %v3502 = vshrl.u32 %v3501, 7
  %v3503 = vsub.s32 0, %v3502
  %v3504 = vrot.slane %v3475, %v3503
  %v3505 = vlaneseq
  %v3506 = vshrl.u32 %v3505, 7
  %v3507 = vsub.s32 0, %v3506
  %v3508 = vrot.slane %v3489, %v3507
  %v3509 = vlaneseq
  %v3510 = vshrl.u32 %v3509, 7
  %v3511 = vsub.s32 0, %v3510
  %v3512 = vrot.slane %v3497, %v3511
  %v3513 = vlaneseq
  %v3514 = vshrl.u32 %v3513, 7
  %v3515 = vsub.s32 0, %v3514
  %v3516 = vrot.slane %v3499, %v3515
  %v3517 = vlaneseq
  %v3518 = vshrl.u32 %v3517, 7
  %v3519 = vsub.s32 0, %v3518
  %v3520 = vrot.slane %v3482, %v3519
  %v3521 = vlaneseq
  %v3522 = vshrl.u32 %v3521, 7
  %v3523 = vsub.s32 0, %v3522
  %v3524 = vrot.slane %v3496, %v3523
  %v3525 = vlaneseq
  %v3526 = vshrl.u32 %v3525, 7
  %v3527 = vsub.s32 0, %v3526
  %v3528 = vrot.slane %v3498, %v3527
  %v3529 = vlaneseq
  %v3530 = vshrl.u32 %v3529, 7
  %v3531 = vsub.s32 0, %v3530
  %v3532 = vrot.slane %v3500, %v3531
  %v3541 = vmul.f32 %v3504, %v3449
  %v3542 = vmul.f32 %v3508, %v3449
  %v3543 = vmul.f32 %v3512, %v3449
  %v3544 = vmul.f32 %v3516, %v3449
  %v3545 = vmul.f32 %v3520, %v3449
  %v3546 = vmul.f32 %v3524, %v3449
  %v3547 = vmul.f32 %v3528, %v3449
  %v3548 = vmul.f32 %v3532, %v3449
  %v3549 = vadd.f32 %v3333, %v3541
  %v3550 = vadd.f32 %v3334, %v3542
  %v3551 = vadd.f32 %v3335, %v3543
  %v3552 = vadd.f32 %v3336, %v3544
  %v3553 = vadd.f32 %v3337, %v3545
  %v3554 = vadd.f32 %v3338, %v3546
  %v3555 = vadd.f32 %v3339, %v3547
  %v3556 = vadd.f32 %v3340, %v3548
  %v3558 = vcombine.high %v3448, %v3448
  %v3560 = vunpack.c.l.s4 1966171168
  %v3561 = vunpack.c.0.s8 %v3560
  %v3562 = vlaneseq
  %v3563 = vshrl.u32 %v3562, 7
  %v3564 = vsub.s32 %v3561, %v3563
  %v3565 = vrot.slane %v3448, %v3564
  %v3567 = vunpack.c.l.s4 1966171168
  %v3568 = vunpack.c.0.s8 %v3567
  %v3569 = vlaneseq
  %v3570 = vshrl.u32 %v3569, 7
  %v3571 = vsub.s32 %v3568, %v3570
  %v3572 = vrot.slane %v3558, %v3571
  %v3573 = vcombine.high %v3565, %v3565
  %v3574 = vcombine.high %v3572, %v3572
  %v3576 = vunpack.c.l.s4 1966171168
  %v3577 = vunpack.c.0.s8 %v3576
  %v3578 = vlaneseq
  %v3579 = vshrl.u32 %v3578, 7
  %v3580 = vsub.s32 %v3577, %v3579
  %v3581 = vrot.slane %v3565, %v3580
  %v3583 = vunpack.c.l.s4 1966171168
  %v3584 = vunpack.c.0.s8 %v3583
  %v3585 = vlaneseq
  %v3586 = vshrl.u32 %v3585, 7
  %v3587 = vsub.s32 %v3584, %v3586
  %v3588 = vrot.slane %v3572, %v3587
  %v3590 = vunpack.c.l.s4 1966171168
  %v3591 = vunpack.c.0.s8 %v3590
  %v3592 = vlaneseq
  %v3593 = vshrl.u32 %v3592, 7
  %v3594 = vsub.s32 %v3591, %v3593
  %v3595 = vrot.slane %v3573, %v3594
  %v3597 = vunpack.c.l.s4 1966171168
  %v3598 = vunpack.c.0.s8 %v3597
  %v3599 = vlaneseq
  %v3600 = vshrl.u32 %v3599, 7
  %v3601 = vsub.s32 %v3598, %v3600
  %v3602 = vrot.slane %v3574, %v3601
  %v3603 = vcombine.high %v3581, %v3581
  %v3604 = vcombine.high %v3588, %v3588
  %v3605 = vcombine.high %v3595, %v3595
  %v3606 = vcombine.high %v3602, %v3602
  %v3607 = vlaneseq
  %v3608 = vshrl.u32 %v3607, 7
  %v3609 = vsub.s32 0, %v3608
  %v3610 = vrot.slane %v3581, %v3609
  %v3611 = vlaneseq
  %v3612 = vshrl.u32 %v3611, 7
  %v3613 = vsub.s32 0, %v3612
  %v3614 = vrot.slane %v3595, %v3613
  %v3615 = vlaneseq
  %v3616 = vshrl.u32 %v3615, 7
  %v3617 = vsub.s32 0, %v3616
  %v3618 = vrot.slane %v3603, %v3617
  %v3619 = vlaneseq
  %v3620 = vshrl.u32 %v3619, 7
  %v3621 = vsub.s32 0, %v3620
  %v3622 = vrot.slane %v3605, %v3621
  %v3623 = vlaneseq
  %v3624 = vshrl.u32 %v3623, 7
  %v3625 = vsub.s32 0, %v3624
  %v3626 = vrot.slane %v3588, %v3625
  %v3627 = vlaneseq
  %v3628 = vshrl.u32 %v3627, 7
  %v3629 = vsub.s32 0, %v3628
  %v3630 = vrot.slane %v3602, %v3629
  %v3631 = vlaneseq
  %v3632 = vshrl.u32 %v3631, 7
  %v3633 = vsub.s32 0, %v3632
  %v3634 = vrot.slane %v3604, %v3633
  %v3635 = vlaneseq
  %v3636 = vshrl.u32 %v3635, 7
  %v3637 = vsub.s32 0, %v3636
  %v3638 = vrot.slane %v3606, %v3637
  %v3647 = vmul.f32 %v3610, %v3450
  %v3648 = vmul.f32 %v3614, %v3450
  %v3649 = vmul.f32 %v3618, %v3450
  %v3650 = vmul.f32 %v3622, %v3450
  %v3651 = vmul.f32 %v3626, %v3450
  %v3652 = vmul.f32 %v3630, %v3450
  %v3653 = vmul.f32 %v3634, %v3450
  %v3654 = vmul.f32 %v3638, %v3450
  %v3655 = vadd.f32 %v3439, %v3647
  %v3656 = vadd.f32 %v3440, %v3648
  %v3657 = vadd.f32 %v3441, %v3649
  %v3658 = vadd.f32 %v3442, %v3650
  %v3659 = vadd.f32 %v3443, %v3651
  %v3660 = vadd.f32 %v3444, %v3652
  %v3661 = vadd.f32 %v3445, %v3653
  %v3662 = vadd.f32 %v3446, %v3654
  %v3663 = vld [vmem:[#allocation2 + $0x50] sm:$0xff]
  %v3664 = vld [vmem:[#allocation2 + $0x58] sm:$0xff]
  %v3665 = vld [vmem:[#allocation2 + $0x130] sm:$0xff]
  %v3666 = vld [vmem:[#allocation2 + $0x138] sm:$0xff]
  %v3668 = vcombine.high %v3663, %v3663
  %v3670 = vunpack.c.l.s4 1966171168
  %v3671 = vunpack.c.0.s8 %v3670
  %v3672 = vlaneseq
  %v3673 = vshrl.u32 %v3672, 7
  %v3674 = vsub.s32 %v3671, %v3673
  %v3675 = vrot.slane %v3663, %v3674
  %v3677 = vunpack.c.l.s4 1966171168
  %v3678 = vunpack.c.0.s8 %v3677
  %v3679 = vlaneseq
  %v3680 = vshrl.u32 %v3679, 7
  %v3681 = vsub.s32 %v3678, %v3680
  %v3682 = vrot.slane %v3668, %v3681
  %v3683 = vcombine.high %v3675, %v3675
  %v3684 = vcombine.high %v3682, %v3682
  %v3686 = vunpack.c.l.s4 1966171168
  %v3687 = vunpack.c.0.s8 %v3686
  %v3688 = vlaneseq
  %v3689 = vshrl.u32 %v3688, 7
  %v3690 = vsub.s32 %v3687, %v3689
  %v3691 = vrot.slane %v3675, %v3690
  %v3693 = vunpack.c.l.s4 1966171168
  %v3694 = vunpack.c.0.s8 %v3693
  %v3695 = vlaneseq
  %v3696 = vshrl.u32 %v3695, 7
  %v3697 = vsub.s32 %v3694, %v3696
  %v3698 = vrot.slane %v3682, %v3697
  %v3700 = vunpack.c.l.s4 1966171168
  %v3701 = vunpack.c.0.s8 %v3700
  %v3702 = vlaneseq
  %v3703 = vshrl.u32 %v3702, 7
  %v3704 = vsub.s32 %v3701, %v3703
  %v3705 = vrot.slane %v3683, %v3704
  %v3707 = vunpack.c.l.s4 1966171168
  %v3708 = vunpack.c.0.s8 %v3707
  %v3709 = vlaneseq
  %v3710 = vshrl.u32 %v3709, 7
  %v3711 = vsub.s32 %v3708, %v3710
  %v3712 = vrot.slane %v3684, %v3711
  %v3713 = vcombine.high %v3691, %v3691
  %v3714 = vcombine.high %v3698, %v3698
  %v3715 = vcombine.high %v3705, %v3705
  %v3716 = vcombine.high %v3712, %v3712
  %v3717 = vlaneseq
  %v3718 = vshrl.u32 %v3717, 7
  %v3719 = vsub.s32 0, %v3718
  %v3720 = vrot.slane %v3691, %v3719
  %v3721 = vlaneseq
  %v3722 = vshrl.u32 %v3721, 7
  %v3723 = vsub.s32 0, %v3722
  %v3724 = vrot.slane %v3705, %v3723
  %v3725 = vlaneseq
  %v3726 = vshrl.u32 %v3725, 7
  %v3727 = vsub.s32 0, %v3726
  %v3728 = vrot.slane %v3713, %v3727
  %v3729 = vlaneseq
  %v3730 = vshrl.u32 %v3729, 7
  %v3731 = vsub.s32 0, %v3730
  %v3732 = vrot.slane %v3715, %v3731
  %v3733 = vlaneseq
  %v3734 = vshrl.u32 %v3733, 7
  %v3735 = vsub.s32 0, %v3734
  %v3736 = vrot.slane %v3698, %v3735
  %v3737 = vlaneseq
  %v3738 = vshrl.u32 %v3737, 7
  %v3739 = vsub.s32 0, %v3738
  %v3740 = vrot.slane %v3712, %v3739
  %v3741 = vlaneseq
  %v3742 = vshrl.u32 %v3741, 7
  %v3743 = vsub.s32 0, %v3742
  %v3744 = vrot.slane %v3714, %v3743
  %v3745 = vlaneseq
  %v3746 = vshrl.u32 %v3745, 7
  %v3747 = vsub.s32 0, %v3746
  %v3748 = vrot.slane %v3716, %v3747
  %v3757 = vmul.f32 %v3720, %v3665
  %v3758 = vmul.f32 %v3724, %v3665
  %v3759 = vmul.f32 %v3728, %v3665
  %v3760 = vmul.f32 %v3732, %v3665
  %v3761 = vmul.f32 %v3736, %v3665
  %v3762 = vmul.f32 %v3740, %v3665
  %v3763 = vmul.f32 %v3744, %v3665
  %v3764 = vmul.f32 %v3748, %v3665
  %v3765 = vadd.f32 %v3549, %v3757
  %v3766 = vadd.f32 %v3550, %v3758
  %v3767 = vadd.f32 %v3551, %v3759
  %v3768 = vadd.f32 %v3552, %v3760
  %v3769 = vadd.f32 %v3553, %v3761
  %v3770 = vadd.f32 %v3554, %v3762
  %v3771 = vadd.f32 %v3555, %v3763
  %v3772 = vadd.f32 %v3556, %v3764
  %v3774 = vcombine.high %v3664, %v3664
  %v3776 = vunpack.c.l.s4 1966171168
  %v3777 = vunpack.c.0.s8 %v3776
  %v3778 = vlaneseq
  %v3779 = vshrl.u32 %v3778, 7
  %v3780 = vsub.s32 %v3777, %v3779
  %v3781 = vrot.slane %v3664, %v3780
  %v3783 = vunpack.c.l.s4 1966171168
  %v3784 = vunpack.c.0.s8 %v3783
  %v3785 = vlaneseq
  %v3786 = vshrl.u32 %v3785, 7
  %v3787 = vsub.s32 %v3784, %v3786
  %v3788 = vrot.slane %v3774, %v3787
  %v3789 = vcombine.high %v3781, %v3781
  %v3790 = vcombine.high %v3788, %v3788
  %v3792 = vunpack.c.l.s4 1966171168
  %v3793 = vunpack.c.0.s8 %v3792
  %v3794 = vlaneseq
  %v3795 = vshrl.u32 %v3794, 7
  %v3796 = vsub.s32 %v3793, %v3795
  %v3797 = vrot.slane %v3781, %v3796
  %v3799 = vunpack.c.l.s4 1966171168
  %v3800 = vunpack.c.0.s8 %v3799
  %v3801 = vlaneseq
  %v3802 = vshrl.u32 %v3801, 7
  %v3803 = vsub.s32 %v3800, %v3802
  %v3804 = vrot.slane %v3788, %v3803
  %v3806 = vunpack.c.l.s4 1966171168
  %v3807 = vunpack.c.0.s8 %v3806
  %v3808 = vlaneseq
  %v3809 = vshrl.u32 %v3808, 7
  %v3810 = vsub.s32 %v3807, %v3809
  %v3811 = vrot.slane %v3789, %v3810
  %v3813 = vunpack.c.l.s4 1966171168
  %v3814 = vunpack.c.0.s8 %v3813
  %v3815 = vlaneseq
  %v3816 = vshrl.u32 %v3815, 7
  %v3817 = vsub.s32 %v3814, %v3816
  %v3818 = vrot.slane %v3790, %v3817
  %v3819 = vcombine.high %v3797, %v3797
  %v3820 = vcombine.high %v3804, %v3804
  %v3821 = vcombine.high %v3811, %v3811
  %v3822 = vcombine.high %v3818, %v3818
  %v3823 = vlaneseq
  %v3824 = vshrl.u32 %v3823, 7
  %v3825 = vsub.s32 0, %v3824
  %v3826 = vrot.slane %v3797, %v3825
  %v3827 = vlaneseq
  %v3828 = vshrl.u32 %v3827, 7
  %v3829 = vsub.s32 0, %v3828
  %v3830 = vrot.slane %v3811, %v3829
  %v3831 = vlaneseq
  %v3832 = vshrl.u32 %v3831, 7
  %v3833 = vsub.s32 0, %v3832
  %v3834 = vrot.slane %v3819, %v3833
  %v3835 = vlaneseq
  %v3836 = vshrl.u32 %v3835, 7
  %v3837 = vsub.s32 0, %v3836
  %v3838 = vrot.slane %v3821, %v3837
  %v3839 = vlaneseq
  %v3840 = vshrl.u32 %v3839, 7
  %v3841 = vsub.s32 0, %v3840
  %v3842 = vrot.slane %v3804, %v3841
  %v3843 = vlaneseq
  %v3844 = vshrl.u32 %v3843, 7
  %v3845 = vsub.s32 0, %v3844
  %v3846 = vrot.slane %v3818, %v3845
  %v3847 = vlaneseq
  %v3848 = vshrl.u32 %v3847, 7
  %v3849 = vsub.s32 0, %v3848
  %v3850 = vrot.slane %v3820, %v3849
  %v3851 = vlaneseq
  %v3852 = vshrl.u32 %v3851, 7
  %v3853 = vsub.s32 0, %v3852
  %v3854 = vrot.slane %v3822, %v3853
  %v3863 = vmul.f32 %v3826, %v3666
  %v3864 = vmul.f32 %v3830, %v3666
  %v3865 = vmul.f32 %v3834, %v3666
  %v3866 = vmul.f32 %v3838, %v3666
  %v3867 = vmul.f32 %v3842, %v3666
  %v3868 = vmul.f32 %v3846, %v3666
  %v3869 = vmul.f32 %v3850, %v3666
  %v3870 = vmul.f32 %v3854, %v3666
  %v3871 = vadd.f32 %v3655, %v3863
  %v3872 = vadd.f32 %v3656, %v3864
  %v3873 = vadd.f32 %v3657, %v3865
  %v3874 = vadd.f32 %v3658, %v3866
  %v3875 = vadd.f32 %v3659, %v3867
  %v3876 = vadd.f32 %v3660, %v3868
  %v3877 = vadd.f32 %v3661, %v3869
  %v3878 = vadd.f32 %v3662, %v3870
  %v3879 = vld [vmem:[#allocation2 + $0x60] sm:$0xff]
  %v3880 = vld [vmem:[#allocation2 + $0x68] sm:$0xff]
  %v3881 = vld [vmem:[#allocation2 + $0x140] sm:$0xff]
  %v3882 = vld [vmem:[#allocation2 + $0x148] sm:$0xff]
  %v3884 = vcombine.high %v3879, %v3879
  %v3886 = vunpack.c.l.s4 1966171168
  %v3887 = vunpack.c.0.s8 %v3886
  %v3888 = vlaneseq
  %v3889 = vshrl.u32 %v3888, 7
  %v3890 = vsub.s32 %v3887, %v3889
  %v3891 = vrot.slane %v3879, %v3890
  %v3893 = vunpack.c.l.s4 1966171168
  %v3894 = vunpack.c.0.s8 %v3893
  %v3895 = vlaneseq
  %v3896 = vshrl.u32 %v3895, 7
  %v3897 = vsub.s32 %v3894, %v3896
  %v3898 = vrot.slane %v3884, %v3897
  %v3899 = vcombine.high %v3891, %v3891
  %v3900 = vcombine.high %v3898, %v3898
  %v3902 = vunpack.c.l.s4 1966171168
  %v3903 = vunpack.c.0.s8 %v3902
  %v3904 = vlaneseq
  %v3905 = vshrl.u32 %v3904, 7
  %v3906 = vsub.s32 %v3903, %v3905
  %v3907 = vrot.slane %v3891, %v3906
  %v3909 = vunpack.c.l.s4 1966171168
  %v3910 = vunpack.c.0.s8 %v3909
  %v3911 = vlaneseq
  %v3912 = vshrl.u32 %v3911, 7
  %v3913 = vsub.s32 %v3910, %v3912
  %v3914 = vrot.slane %v3898, %v3913
  %v3916 = vunpack.c.l.s4 1966171168
  %v3917 = vunpack.c.0.s8 %v3916
  %v3918 = vlaneseq
  %v3919 = vshrl.u32 %v3918, 7
  %v3920 = vsub.s32 %v3917, %v3919
  %v3921 = vrot.slane %v3899, %v3920
  %v3923 = vunpack.c.l.s4 1966171168
  %v3924 = vunpack.c.0.s8 %v3923
  %v3925 = vlaneseq
  %v3926 = vshrl.u32 %v3925, 7
  %v3927 = vsub.s32 %v3924, %v3926
  %v3928 = vrot.slane %v3900, %v3927
  %v3929 = vcombine.high %v3907, %v3907
  %v3930 = vcombine.high %v3914, %v3914
  %v3931 = vcombine.high %v3921, %v3921
  %v3932 = vcombine.high %v3928, %v3928
  %v3933 = vlaneseq
  %v3934 = vshrl.u32 %v3933, 7
  %v3935 = vsub.s32 0, %v3934
  %v3936 = vrot.slane %v3907, %v3935
  %v3937 = vlaneseq
  %v3938 = vshrl.u32 %v3937, 7
  %v3939 = vsub.s32 0, %v3938
  %v3940 = vrot.slane %v3921, %v3939
  %v3941 = vlaneseq
  %v3942 = vshrl.u32 %v3941, 7
  %v3943 = vsub.s32 0, %v3942
  %v3944 = vrot.slane %v3929, %v3943
  %v3945 = vlaneseq
  %v3946 = vshrl.u32 %v3945, 7
  %v3947 = vsub.s32 0, %v3946
  %v3948 = vrot.slane %v3931, %v3947
  %v3949 = vlaneseq
  %v3950 = vshrl.u32 %v3949, 7
  %v3951 = vsub.s32 0, %v3950
  %v3952 = vrot.slane %v3914, %v3951
  %v3953 = vlaneseq
  %v3954 = vshrl.u32 %v3953, 7
  %v3955 = vsub.s32 0, %v3954
  %v3956 = vrot.slane %v3928, %v3955
  %v3957 = vlaneseq
  %v3958 = vshrl.u32 %v3957, 7
  %v3959 = vsub.s32 0, %v3958
  %v3960 = vrot.slane %v3930, %v3959
  %v3961 = vlaneseq
  %v3962 = vshrl.u32 %v3961, 7
  %v3963 = vsub.s32 0, %v3962
  %v3964 = vrot.slane %v3932, %v3963
  %v3973 = vmul.f32 %v3936, %v3881
  %v3974 = vmul.f32 %v3940, %v3881
  %v3975 = vmul.f32 %v3944, %v3881
  %v3976 = vmul.f32 %v3948, %v3881
  %v3977 = vmul.f32 %v3952, %v3881
  %v3978 = vmul.f32 %v3956, %v3881
  %v3979 = vmul.f32 %v3960, %v3881
  %v3980 = vmul.f32 %v3964, %v3881
  %v3981 = vadd.f32 %v3765, %v3973
  %v3982 = vadd.f32 %v3766, %v3974
  %v3983 = vadd.f32 %v3767, %v3975
  %v3984 = vadd.f32 %v3768, %v3976
  %v3985 = vadd.f32 %v3769, %v3977
  %v3986 = vadd.f32 %v3770, %v3978
  %v3987 = vadd.f32 %v3771, %v3979
  %v3988 = vadd.f32 %v3772, %v3980
  %v3990 = vcombine.high %v3880, %v3880
  %v3992 = vunpack.c.l.s4 1966171168
  %v3993 = vunpack.c.0.s8 %v3992
  %v3994 = vlaneseq
  %v3995 = vshrl.u32 %v3994, 7
  %v3996 = vsub.s32 %v3993, %v3995
  %v3997 = vrot.slane %v3880, %v3996
  %v3999 = vunpack.c.l.s4 1966171168
  %v4000 = vunpack.c.0.s8 %v3999
  %v4001 = vlaneseq
  %v4002 = vshrl.u32 %v4001, 7
  %v4003 = vsub.s32 %v4000, %v4002
  %v4004 = vrot.slane %v3990, %v4003
  %v4005 = vcombine.high %v3997, %v3997
  %v4006 = vcombine.high %v4004, %v4004
  %v4008 = vunpack.c.l.s4 1966171168
  %v4009 = vunpack.c.0.s8 %v4008
  %v4010 = vlaneseq
  %v4011 = vshrl.u32 %v4010, 7
  %v4012 = vsub.s32 %v4009, %v4011
  %v4013 = vrot.slane %v3997, %v4012
  %v4015 = vunpack.c.l.s4 1966171168
  %v4016 = vunpack.c.0.s8 %v4015
  %v4017 = vlaneseq
  %v4018 = vshrl.u32 %v4017, 7
  %v4019 = vsub.s32 %v4016, %v4018
  %v4020 = vrot.slane %v4004, %v4019
  %v4022 = vunpack.c.l.s4 1966171168
  %v4023 = vunpack.c.0.s8 %v4022
  %v4024 = vlaneseq
  %v4025 = vshrl.u32 %v4024, 7
  %v4026 = vsub.s32 %v4023, %v4025
  %v4027 = vrot.slane %v4005, %v4026
  %v4029 = vunpack.c.l.s4 1966171168
  %v4030 = vunpack.c.0.s8 %v4029
  %v4031 = vlaneseq
  %v4032 = vshrl.u32 %v4031, 7
  %v4033 = vsub.s32 %v4030, %v4032
  %v4034 = vrot.slane %v4006, %v4033
  %v4035 = vcombine.high %v4013, %v4013
  %v4036 = vcombine.high %v4020, %v4020
  %v4037 = vcombine.high %v4027, %v4027
  %v4038 = vcombine.high %v4034, %v4034
  %v4039 = vlaneseq
  %v4040 = vshrl.u32 %v4039, 7
  %v4041 = vsub.s32 0, %v4040
  %v4042 = vrot.slane %v4013, %v4041
  %v4043 = vlaneseq
  %v4044 = vshrl.u32 %v4043, 7
  %v4045 = vsub.s32 0, %v4044
  %v4046 = vrot.slane %v4027, %v4045
  %v4047 = vlaneseq
  %v4048 = vshrl.u32 %v4047, 7
  %v4049 = vsub.s32 0, %v4048
  %v4050 = vrot.slane %v4035, %v4049
  %v4051 = vlaneseq
  %v4052 = vshrl.u32 %v4051, 7
  %v4053 = vsub.s32 0, %v4052
  %v4054 = vrot.slane %v4037, %v4053
  %v4055 = vlaneseq
  %v4056 = vshrl.u32 %v4055, 7
  %v4057 = vsub.s32 0, %v4056
  %v4058 = vrot.slane %v4020, %v4057
  %v4059 = vlaneseq
  %v4060 = vshrl.u32 %v4059, 7
  %v4061 = vsub.s32 0, %v4060
  %v4062 = vrot.slane %v4034, %v4061
  %v4063 = vlaneseq
  %v4064 = vshrl.u32 %v4063, 7
  %v4065 = vsub.s32 0, %v4064
  %v4066 = vrot.slane %v4036, %v4065
  %v4067 = vlaneseq
  %v4068 = vshrl.u32 %v4067, 7
  %v4069 = vsub.s32 0, %v4068
  %v4070 = vrot.slane %v4038, %v4069
  %v4079 = vmul.f32 %v4042, %v3882
  %v4080 = vmul.f32 %v4046, %v3882
  %v4081 = vmul.f32 %v4050, %v3882
  %v4082 = vmul.f32 %v4054, %v3882
  %v4083 = vmul.f32 %v4058, %v3882
  %v4084 = vmul.f32 %v4062, %v3882
  %v4085 = vmul.f32 %v4066, %v3882
  %v4086 = vmul.f32 %v4070, %v3882
  %v4087 = vadd.f32 %v3871, %v4079
  %v4088 = vadd.f32 %v3872, %v4080
  %v4089 = vadd.f32 %v3873, %v4081
  %v4090 = vadd.f32 %v3874, %v4082
  %v4091 = vadd.f32 %v3875, %v4083
  %v4092 = vadd.f32 %v3876, %v4084
  %v4093 = vadd.f32 %v3877, %v4085
  %v4094 = vadd.f32 %v3878, %v4086
  %v4095 = vld [vmem:[#allocation2 + $0x70] sm:$0xff]
  %v4096 = vld [vmem:[#allocation2 + $0x78] sm:$0xff]
  %v4097 = vld [vmem:[#allocation2 + $0x150] sm:$0xff]
  %v4098 = vld [vmem:[#allocation2 + $0x158] sm:$0xff]
  %v4100 = vcombine.high %v4095, %v4095
  %v4102 = vunpack.c.l.s4 1966171168
  %v4103 = vunpack.c.0.s8 %v4102
  %v4104 = vlaneseq
  %v4105 = vshrl.u32 %v4104, 7
  %v4106 = vsub.s32 %v4103, %v4105
  %v4107 = vrot.slane %v4095, %v4106
  %v4109 = vunpack.c.l.s4 1966171168
  %v4110 = vunpack.c.0.s8 %v4109
  %v4111 = vlaneseq
  %v4112 = vshrl.u32 %v4111, 7
  %v4113 = vsub.s32 %v4110, %v4112
  %v4114 = vrot.slane %v4100, %v4113
  %v4115 = vcombine.high %v4107, %v4107
  %v4116 = vcombine.high %v4114, %v4114
  %v4118 = vunpack.c.l.s4 1966171168
  %v4119 = vunpack.c.0.s8 %v4118
  %v4120 = vlaneseq
  %v4121 = vshrl.u32 %v4120, 7
  %v4122 = vsub.s32 %v4119, %v4121
  %v4123 = vrot.slane %v4107, %v4122
  %v4125 = vunpack.c.l.s4 1966171168
  %v4126 = vunpack.c.0.s8 %v4125
  %v4127 = vlaneseq
  %v4128 = vshrl.u32 %v4127, 7
  %v4129 = vsub.s32 %v4126, %v4128
  %v4130 = vrot.slane %v4114, %v4129
  %v4132 = vunpack.c.l.s4 1966171168
  %v4133 = vunpack.c.0.s8 %v4132
  %v4134 = vlaneseq
  %v4135 = vshrl.u32 %v4134, 7
  %v4136 = vsub.s32 %v4133, %v4135
  %v4137 = vrot.slane %v4115, %v4136
  %v4139 = vunpack.c.l.s4 1966171168
  %v4140 = vunpack.c.0.s8 %v4139
  %v4141 = vlaneseq
  %v4142 = vshrl.u32 %v4141, 7
  %v4143 = vsub.s32 %v4140, %v4142
  %v4144 = vrot.slane %v4116, %v4143
  %v4145 = vcombine.high %v4123, %v4123
  %v4146 = vcombine.high %v4130, %v4130
  %v4147 = vcombine.high %v4137, %v4137
  %v4148 = vcombine.high %v4144, %v4144
  %v4149 = vlaneseq
  %v4150 = vshrl.u32 %v4149, 7
  %v4151 = vsub.s32 0, %v4150
  %v4152 = vrot.slane %v4123, %v4151
  %v4153 = vlaneseq
  %v4154 = vshrl.u32 %v4153, 7
  %v4155 = vsub.s32 0, %v4154
  %v4156 = vrot.slane %v4137, %v4155
  %v4157 = vlaneseq
  %v4158 = vshrl.u32 %v4157, 7
  %v4159 = vsub.s32 0, %v4158
  %v4160 = vrot.slane %v4145, %v4159
  %v4161 = vlaneseq
  %v4162 = vshrl.u32 %v4161, 7
  %v4163 = vsub.s32 0, %v4162
  %v4164 = vrot.slane %v4147, %v4163
  %v4165 = vlaneseq
  %v4166 = vshrl.u32 %v4165, 7
  %v4167 = vsub.s32 0, %v4166
  %v4168 = vrot.slane %v4130, %v4167
  %v4169 = vlaneseq
  %v4170 = vshrl.u32 %v4169, 7
  %v4171 = vsub.s32 0, %v4170
  %v4172 = vrot.slane %v4144, %v4171
  %v4173 = vlaneseq
  %v4174 = vshrl.u32 %v4173, 7
  %v4175 = vsub.s32 0, %v4174
  %v4176 = vrot.slane %v4146, %v4175
  %v4177 = vlaneseq
  %v4178 = vshrl.u32 %v4177, 7
  %v4179 = vsub.s32 0, %v4178
  %v4180 = vrot.slane %v4148, %v4179
  %v4189 = vmul.f32 %v4152, %v4097
  %v4190 = vmul.f32 %v4156, %v4097
  %v4191 = vmul.f32 %v4160, %v4097
  %v4192 = vmul.f32 %v4164, %v4097
  %v4193 = vmul.f32 %v4168, %v4097
  %v4194 = vmul.f32 %v4172, %v4097
  %v4195 = vmul.f32 %v4176, %v4097
  %v4196 = vmul.f32 %v4180, %v4097
  %v4197 = vadd.f32 %v3981, %v4189
  %v4198 = vadd.f32 %v3982, %v4190
  %v4199 = vadd.f32 %v3983, %v4191
  %v4200 = vadd.f32 %v3984, %v4192
  %v4201 = vadd.f32 %v3985, %v4193
  %v4202 = vadd.f32 %v3986, %v4194
  %v4203 = vadd.f32 %v3987, %v4195
  %v4204 = vadd.f32 %v3988, %v4196
  %v4206 = vcombine.high %v4096, %v4096
  %v4208 = vunpack.c.l.s4 1966171168
  %v4209 = vunpack.c.0.s8 %v4208
  %v4210 = vlaneseq
  %v4211 = vshrl.u32 %v4210, 7
  %v4212 = vsub.s32 %v4209, %v4211
  %v4213 = vrot.slane %v4096, %v4212
  %v4215 = vunpack.c.l.s4 1966171168
  %v4216 = vunpack.c.0.s8 %v4215
  %v4217 = vlaneseq
  %v4218 = vshrl.u32 %v4217, 7
  %v4219 = vsub.s32 %v4216, %v4218
  %v4220 = vrot.slane %v4206, %v4219
  %v4221 = vcombine.high %v4213, %v4213
  %v4222 = vcombine.high %v4220, %v4220
  %v4224 = vunpack.c.l.s4 1966171168
  %v4225 = vunpack.c.0.s8 %v4224
  %v4226 = vlaneseq
  %v4227 = vshrl.u32 %v4226, 7
  %v4228 = vsub.s32 %v4225, %v4227
  %v4229 = vrot.slane %v4213, %v4228
  %v4231 = vunpack.c.l.s4 1966171168
  %v4232 = vunpack.c.0.s8 %v4231
  %v4233 = vlaneseq
  %v4234 = vshrl.u32 %v4233, 7
  %v4235 = vsub.s32 %v4232, %v4234
  %v4236 = vrot.slane %v4220, %v4235
  %v4238 = vunpack.c.l.s4 1966171168
  %v4239 = vunpack.c.0.s8 %v4238
  %v4240 = vlaneseq
  %v4241 = vshrl.u32 %v4240, 7
  %v4242 = vsub.s32 %v4239, %v4241
  %v4243 = vrot.slane %v4221, %v4242
  %v4245 = vunpack.c.l.s4 1966171168
  %v4246 = vunpack.c.0.s8 %v4245
  %v4247 = vlaneseq
  %v4248 = vshrl.u32 %v4247, 7
  %v4249 = vsub.s32 %v4246, %v4248
  %v4250 = vrot.slane %v4222, %v4249
  %v4251 = vcombine.high %v4229, %v4229
  %v4252 = vcombine.high %v4236, %v4236
  %v4253 = vcombine.high %v4243, %v4243
  %v4254 = vcombine.high %v4250, %v4250
  %v4255 = vlaneseq
  %v4256 = vshrl.u32 %v4255, 7
  %v4257 = vsub.s32 0, %v4256
  %v4258 = vrot.slane %v4229, %v4257
  %v4259 = vlaneseq
  %v4260 = vshrl.u32 %v4259, 7
  %v4261 = vsub.s32 0, %v4260
  %v4262 = vrot.slane %v4243, %v4261
  %v4263 = vlaneseq
  %v4264 = vshrl.u32 %v4263, 7
  %v4265 = vsub.s32 0, %v4264
  %v4266 = vrot.slane %v4251, %v4265
  %v4267 = vlaneseq
  %v4268 = vshrl.u32 %v4267, 7
  %v4269 = vsub.s32 0, %v4268
  %v4270 = vrot.slane %v4253, %v4269
  %v4271 = vlaneseq
  %v4272 = vshrl.u32 %v4271, 7
  %v4273 = vsub.s32 0, %v4272
  %v4274 = vrot.slane %v4236, %v4273
  %v4275 = vlaneseq
  %v4276 = vshrl.u32 %v4275, 7
  %v4277 = vsub.s32 0, %v4276
  %v4278 = vrot.slane %v4250, %v4277
  %v4279 = vlaneseq
  %v4280 = vshrl.u32 %v4279, 7
  %v4281 = vsub.s32 0, %v4280
  %v4282 = vrot.slane %v4252, %v4281
  %v4283 = vlaneseq
  %v4284 = vshrl.u32 %v4283, 7
  %v4285 = vsub.s32 0, %v4284
  %v4286 = vrot.slane %v4254, %v4285
  %v4295 = vmul.f32 %v4258, %v4098
  %v4296 = vmul.f32 %v4262, %v4098
  %v4297 = vmul.f32 %v4266, %v4098
  %v4298 = vmul.f32 %v4270, %v4098
  %v4299 = vmul.f32 %v4274, %v4098
  %v4300 = vmul.f32 %v4278, %v4098
  %v4301 = vmul.f32 %v4282, %v4098
  %v4302 = vmul.f32 %v4286, %v4098
  %v4303 = vadd.f32 %v4087, %v4295
  %v4304 = vadd.f32 %v4088, %v4296
  %v4305 = vadd.f32 %v4089, %v4297
  %v4306 = vadd.f32 %v4090, %v4298
  %v4307 = vadd.f32 %v4091, %v4299
  %v4308 = vadd.f32 %v4092, %v4300
  %v4309 = vadd.f32 %v4093, %v4301
  %v4310 = vadd.f32 %v4094, %v4302
  %v4311 = vld [vmem:[#allocation2 + $0x80] sm:$0xff]
  %v4312 = vld [vmem:[#allocation2 + $0x88] sm:$0xff]
  %v4313 = vld [vmem:[#allocation2 + $0x160] sm:$0xff]
  %v4314 = vld [vmem:[#allocation2 + $0x168] sm:$0xff]
  %v4316 = vcombine.high %v4311, %v4311
  %v4318 = vunpack.c.l.s4 1966171168
  %v4319 = vunpack.c.0.s8 %v4318
  %v4320 = vlaneseq
  %v4321 = vshrl.u32 %v4320, 7
  %v4322 = vsub.s32 %v4319, %v4321
  %v4323 = vrot.slane %v4311, %v4322
  %v4325 = vunpack.c.l.s4 1966171168
  %v4326 = vunpack.c.0.s8 %v4325
  %v4327 = vlaneseq
  %v4328 = vshrl.u32 %v4327, 7
  %v4329 = vsub.s32 %v4326, %v4328
  %v4330 = vrot.slane %v4316, %v4329
  %v4331 = vcombine.high %v4323, %v4323
  %v4332 = vcombine.high %v4330, %v4330
  %v4334 = vunpack.c.l.s4 1966171168
  %v4335 = vunpack.c.0.s8 %v4334
  %v4336 = vlaneseq
  %v4337 = vshrl.u32 %v4336, 7
  %v4338 = vsub.s32 %v4335, %v4337
  %v4339 = vrot.slane %v4323, %v4338
  %v4341 = vunpack.c.l.s4 1966171168
  %v4342 = vunpack.c.0.s8 %v4341
  %v4343 = vlaneseq
  %v4344 = vshrl.u32 %v4343, 7
  %v4345 = vsub.s32 %v4342, %v4344
  %v4346 = vrot.slane %v4330, %v4345
  %v4348 = vunpack.c.l.s4 1966171168
  %v4349 = vunpack.c.0.s8 %v4348
  %v4350 = vlaneseq
  %v4351 = vshrl.u32 %v4350, 7
  %v4352 = vsub.s32 %v4349, %v4351
  %v4353 = vrot.slane %v4331, %v4352
  %v4355 = vunpack.c.l.s4 1966171168
  %v4356 = vunpack.c.0.s8 %v4355
  %v4357 = vlaneseq
  %v4358 = vshrl.u32 %v4357, 7
  %v4359 = vsub.s32 %v4356, %v4358
  %v4360 = vrot.slane %v4332, %v4359
  %v4361 = vcombine.high %v4339, %v4339
  %v4362 = vcombine.high %v4346, %v4346
  %v4363 = vcombine.high %v4353, %v4353
  %v4364 = vcombine.high %v4360, %v4360
  %v4365 = vlaneseq
  %v4366 = vshrl.u32 %v4365, 7
  %v4367 = vsub.s32 0, %v4366
  %v4368 = vrot.slane %v4339, %v4367
  %v4369 = vlaneseq
  %v4370 = vshrl.u32 %v4369, 7
  %v4371 = vsub.s32 0, %v4370
  %v4372 = vrot.slane %v4353, %v4371
  %v4373 = vlaneseq
  %v4374 = vshrl.u32 %v4373, 7
  %v4375 = vsub.s32 0, %v4374
  %v4376 = vrot.slane %v4361, %v4375
  %v4377 = vlaneseq
  %v4378 = vshrl.u32 %v4377, 7
  %v4379 = vsub.s32 0, %v4378
  %v4380 = vrot.slane %v4363, %v4379
  %v4381 = vlaneseq
  %v4382 = vshrl.u32 %v4381, 7
  %v4383 = vsub.s32 0, %v4382
  %v4384 = vrot.slane %v4346, %v4383
  %v4385 = vlaneseq
  %v4386 = vshrl.u32 %v4385, 7
  %v4387 = vsub.s32 0, %v4386
  %v4388 = vrot.slane %v4360, %v4387
  %v4389 = vlaneseq
  %v4390 = vshrl.u32 %v4389, 7
  %v4391 = vsub.s32 0, %v4390
  %v4392 = vrot.slane %v4362, %v4391
  %v4393 = vlaneseq
  %v4394 = vshrl.u32 %v4393, 7
  %v4395 = vsub.s32 0, %v4394
  %v4396 = vrot.slane %v4364, %v4395
  %v4405 = vmul.f32 %v4368, %v4313
  %v4406 = vmul.f32 %v4372, %v4313
  %v4407 = vmul.f32 %v4376, %v4313
  %v4408 = vmul.f32 %v4380, %v4313
  %v4409 = vmul.f32 %v4384, %v4313
  %v4410 = vmul.f32 %v4388, %v4313
  %v4411 = vmul.f32 %v4392, %v4313
  %v4412 = vmul.f32 %v4396, %v4313
  %v4413 = vadd.f32 %v4197, %v4405
  %v4414 = vadd.f32 %v4198, %v4406
  %v4415 = vadd.f32 %v4199, %v4407
  %v4416 = vadd.f32 %v4200, %v4408
  %v4417 = vadd.f32 %v4201, %v4409
  %v4418 = vadd.f32 %v4202, %v4410
  %v4419 = vadd.f32 %v4203, %v4411
  %v4420 = vadd.f32 %v4204, %v4412
  %v4422 = vcombine.high %v4312, %v4312
  %v4424 = vunpack.c.l.s4 1966171168
  %v4425 = vunpack.c.0.s8 %v4424
  %v4426 = vlaneseq
  %v4427 = vshrl.u32 %v4426, 7
  %v4428 = vsub.s32 %v4425, %v4427
  %v4429 = vrot.slane %v4312, %v4428
  %v4431 = vunpack.c.l.s4 1966171168
  %v4432 = vunpack.c.0.s8 %v4431
  %v4433 = vlaneseq
  %v4434 = vshrl.u32 %v4433, 7
  %v4435 = vsub.s32 %v4432, %v4434
  %v4436 = vrot.slane %v4422, %v4435
  %v4437 = vcombine.high %v4429, %v4429
  %v4438 = vcombine.high %v4436, %v4436
  %v4440 = vunpack.c.l.s4 1966171168
  %v4441 = vunpack.c.0.s8 %v4440
  %v4442 = vlaneseq
  %v4443 = vshrl.u32 %v4442, 7
  %v4444 = vsub.s32 %v4441, %v4443
  %v4445 = vrot.slane %v4429, %v4444
  %v4447 = vunpack.c.l.s4 1966171168
  %v4448 = vunpack.c.0.s8 %v4447
  %v4449 = vlaneseq
  %v4450 = vshrl.u32 %v4449, 7
  %v4451 = vsub.s32 %v4448, %v4450
  %v4452 = vrot.slane %v4436, %v4451
  %v4454 = vunpack.c.l.s4 1966171168
  %v4455 = vunpack.c.0.s8 %v4454
  %v4456 = vlaneseq
  %v4457 = vshrl.u32 %v4456, 7
  %v4458 = vsub.s32 %v4455, %v4457
  %v4459 = vrot.slane %v4437, %v4458
  %v4461 = vunpack.c.l.s4 1966171168
  %v4462 = vunpack.c.0.s8 %v4461
  %v4463 = vlaneseq
  %v4464 = vshrl.u32 %v4463, 7
  %v4465 = vsub.s32 %v4462, %v4464
  %v4466 = vrot.slane %v4438, %v4465
  %v4467 = vcombine.high %v4445, %v4445
  %v4468 = vcombine.high %v4452, %v4452
  %v4469 = vcombine.high %v4459, %v4459
  %v4470 = vcombine.high %v4466, %v4466
  %v4471 = vlaneseq
  %v4472 = vshrl.u32 %v4471, 7
  %v4473 = vsub.s32 0, %v4472
  %v4474 = vrot.slane %v4445, %v4473
  %v4475 = vlaneseq
  %v4476 = vshrl.u32 %v4475, 7
  %v4477 = vsub.s32 0, %v4476
  %v4478 = vrot.slane %v4459, %v4477
  %v4479 = vlaneseq
  %v4480 = vshrl.u32 %v4479, 7
  %v4481 = vsub.s32 0, %v4480
  %v4482 = vrot.slane %v4467, %v4481
  %v4483 = vlaneseq
  %v4484 = vshrl.u32 %v4483, 7
  %v4485 = vsub.s32 0, %v4484
  %v4486 = vrot.slane %v4469, %v4485
  %v4487 = vlaneseq
  %v4488 = vshrl.u32 %v4487, 7
  %v4489 = vsub.s32 0, %v4488
  %v4490 = vrot.slane %v4452, %v4489
  %v4491 = vlaneseq
  %v4492 = vshrl.u32 %v4491, 7
  %v4493 = vsub.s32 0, %v4492
  %v4494 = vrot.slane %v4466, %v4493
  %v4495 = vlaneseq
  %v4496 = vshrl.u32 %v4495, 7
  %v4497 = vsub.s32 0, %v4496
  %v4498 = vrot.slane %v4468, %v4497
  %v4499 = vlaneseq
  %v4500 = vshrl.u32 %v4499, 7
  %v4501 = vsub.s32 0, %v4500
  %v4502 = vrot.slane %v4470, %v4501
  %v4511 = vmul.f32 %v4474, %v4314
  %v4512 = vmul.f32 %v4478, %v4314
  %v4513 = vmul.f32 %v4482, %v4314
  %v4514 = vmul.f32 %v4486, %v4314
  %v4515 = vmul.f32 %v4490, %v4314
  %v4516 = vmul.f32 %v4494, %v4314
  %v4517 = vmul.f32 %v4498, %v4314
  %v4518 = vmul.f32 %v4502, %v4314
  %v4519 = vadd.f32 %v4303, %v4511
  %v4520 = vadd.f32 %v4304, %v4512
  %v4521 = vadd.f32 %v4305, %v4513
  %v4522 = vadd.f32 %v4306, %v4514
  %v4523 = vadd.f32 %v4307, %v4515
  %v4524 = vadd.f32 %v4308, %v4516
  %v4525 = vadd.f32 %v4309, %v4517
  %v4526 = vadd.f32 %v4310, %v4518
  %v4527 = vld [vmem:[#allocation2 + $0x90] sm:$0xff]
  %v4528 = vld [vmem:[#allocation2 + $0x98] sm:$0xff]
  %v4529 = vld [vmem:[#allocation2 + $0x170] sm:$0xff]
  %v4530 = vld [vmem:[#allocation2 + $0x178] sm:$0xff]
  %v4532 = vcombine.high %v4527, %v4527
  %v4534 = vunpack.c.l.s4 1966171168
  %v4535 = vunpack.c.0.s8 %v4534
  %v4536 = vlaneseq
  %v4537 = vshrl.u32 %v4536, 7
  %v4538 = vsub.s32 %v4535, %v4537
  %v4539 = vrot.slane %v4527, %v4538
  %v4541 = vunpack.c.l.s4 1966171168
  %v4542 = vunpack.c.0.s8 %v4541
  %v4543 = vlaneseq
  %v4544 = vshrl.u32 %v4543, 7
  %v4545 = vsub.s32 %v4542, %v4544
  %v4546 = vrot.slane %v4532, %v4545
  %v4547 = vcombine.high %v4539, %v4539
  %v4548 = vcombine.high %v4546, %v4546
  %v4550 = vunpack.c.l.s4 1966171168
  %v4551 = vunpack.c.0.s8 %v4550
  %v4552 = vlaneseq
  %v4553 = vshrl.u32 %v4552, 7
  %v4554 = vsub.s32 %v4551, %v4553
  %v4555 = vrot.slane %v4539, %v4554
  %v4557 = vunpack.c.l.s4 1966171168
  %v4558 = vunpack.c.0.s8 %v4557
  %v4559 = vlaneseq
  %v4560 = vshrl.u32 %v4559, 7
  %v4561 = vsub.s32 %v4558, %v4560
  %v4562 = vrot.slane %v4546, %v4561
  %v4564 = vunpack.c.l.s4 1966171168
  %v4565 = vunpack.c.0.s8 %v4564
  %v4566 = vlaneseq
  %v4567 = vshrl.u32 %v4566, 7
  %v4568 = vsub.s32 %v4565, %v4567
  %v4569 = vrot.slane %v4547, %v4568
  %v4571 = vunpack.c.l.s4 1966171168
  %v4572 = vunpack.c.0.s8 %v4571
  %v4573 = vlaneseq
  %v4574 = vshrl.u32 %v4573, 7
  %v4575 = vsub.s32 %v4572, %v4574
  %v4576 = vrot.slane %v4548, %v4575
  %v4577 = vcombine.high %v4555, %v4555
  %v4578 = vcombine.high %v4562, %v4562
  %v4579 = vcombine.high %v4569, %v4569
  %v4580 = vcombine.high %v4576, %v4576
  %v4581 = vlaneseq
  %v4582 = vshrl.u32 %v4581, 7
  %v4583 = vsub.s32 0, %v4582
  %v4584 = vrot.slane %v4555, %v4583
  %v4585 = vlaneseq
  %v4586 = vshrl.u32 %v4585, 7
  %v4587 = vsub.s32 0, %v4586
  %v4588 = vrot.slane %v4569, %v4587
  %v4589 = vlaneseq
  %v4590 = vshrl.u32 %v4589, 7
  %v4591 = vsub.s32 0, %v4590
  %v4592 = vrot.slane %v4577, %v4591
  %v4593 = vlaneseq
  %v4594 = vshrl.u32 %v4593, 7
  %v4595 = vsub.s32 0, %v4594
  %v4596 = vrot.slane %v4579, %v4595
  %v4597 = vlaneseq
  %v4598 = vshrl.u32 %v4597, 7
  %v4599 = vsub.s32 0, %v4598
  %v4600 = vrot.slane %v4562, %v4599
  %v4601 = vlaneseq
  %v4602 = vshrl.u32 %v4601, 7
  %v4603 = vsub.s32 0, %v4602
  %v4604 = vrot.slane %v4576, %v4603
  %v4605 = vlaneseq
  %v4606 = vshrl.u32 %v4605, 7
  %v4607 = vsub.s32 0, %v4606
  %v4608 = vrot.slane %v4578, %v4607
  %v4609 = vlaneseq
  %v4610 = vshrl.u32 %v4609, 7
  %v4611 = vsub.s32 0, %v4610
  %v4612 = vrot.slane %v4580, %v4611
  %v4621 = vmul.f32 %v4584, %v4529
  %v4622 = vmul.f32 %v4588, %v4529
  %v4623 = vmul.f32 %v4592, %v4529
  %v4624 = vmul.f32 %v4596, %v4529
  %v4625 = vmul.f32 %v4600, %v4529
  %v4626 = vmul.f32 %v4604, %v4529
  %v4627 = vmul.f32 %v4608, %v4529
  %v4628 = vmul.f32 %v4612, %v4529
  %v4629 = vadd.f32 %v4413, %v4621
  %v4630 = vadd.f32 %v4414, %v4622
  %v4631 = vadd.f32 %v4415, %v4623
  %v4632 = vadd.f32 %v4416, %v4624
  %v4633 = vadd.f32 %v4417, %v4625
  %v4634 = vadd.f32 %v4418, %v4626
  %v4635 = vadd.f32 %v4419, %v4627
  %v4636 = vadd.f32 %v4420, %v4628
  %v4638 = vcombine.high %v4528, %v4528
  %v4640 = vunpack.c.l.s4 1966171168
  %v4641 = vunpack.c.0.s8 %v4640
  %v4642 = vlaneseq
  %v4643 = vshrl.u32 %v4642, 7
  %v4644 = vsub.s32 %v4641, %v4643
  %v4645 = vrot.slane %v4528, %v4644
  %v4647 = vunpack.c.l.s4 1966171168
  %v4648 = vunpack.c.0.s8 %v4647
  %v4649 = vlaneseq
  %v4650 = vshrl.u32 %v4649, 7
  %v4651 = vsub.s32 %v4648, %v4650
  %v4652 = vrot.slane %v4638, %v4651
  %v4653 = vcombine.high %v4645, %v4645
  %v4654 = vcombine.high %v4652, %v4652
  %v4656 = vunpack.c.l.s4 1966171168
  %v4657 = vunpack.c.0.s8 %v4656
  %v4658 = vlaneseq
  %v4659 = vshrl.u32 %v4658, 7
  %v4660 = vsub.s32 %v4657, %v4659
  %v4661 = vrot.slane %v4645, %v4660
  %v4663 = vunpack.c.l.s4 1966171168
  %v4664 = vunpack.c.0.s8 %v4663
  %v4665 = vlaneseq
  %v4666 = vshrl.u32 %v4665, 7
  %v4667 = vsub.s32 %v4664, %v4666
  %v4668 = vrot.slane %v4652, %v4667
  %v4670 = vunpack.c.l.s4 1966171168
  %v4671 = vunpack.c.0.s8 %v4670
  %v4672 = vlaneseq
  %v4673 = vshrl.u32 %v4672, 7
  %v4674 = vsub.s32 %v4671, %v4673
  %v4675 = vrot.slane %v4653, %v4674
  %v4677 = vunpack.c.l.s4 1966171168
  %v4678 = vunpack.c.0.s8 %v4677
  %v4679 = vlaneseq
  %v4680 = vshrl.u32 %v4679, 7
  %v4681 = vsub.s32 %v4678, %v4680
  %v4682 = vrot.slane %v4654, %v4681
  %v4683 = vcombine.high %v4661, %v4661
  %v4684 = vcombine.high %v4668, %v4668
  %v4685 = vcombine.high %v4675, %v4675
  %v4686 = vcombine.high %v4682, %v4682
  %v4687 = vlaneseq
  %v4688 = vshrl.u32 %v4687, 7
  %v4689 = vsub.s32 0, %v4688
  %v4690 = vrot.slane %v4661, %v4689
  %v4691 = vlaneseq
  %v4692 = vshrl.u32 %v4691, 7
  %v4693 = vsub.s32 0, %v4692
  %v4694 = vrot.slane %v4675, %v4693
  %v4695 = vlaneseq
  %v4696 = vshrl.u32 %v4695, 7
  %v4697 = vsub.s32 0, %v4696
  %v4698 = vrot.slane %v4683, %v4697
  %v4699 = vlaneseq
  %v4700 = vshrl.u32 %v4699, 7
  %v4701 = vsub.s32 0, %v4700
  %v4702 = vrot.slane %v4685, %v4701
  %v4703 = vlaneseq
  %v4704 = vshrl.u32 %v4703, 7
  %v4705 = vsub.s32 0, %v4704
  %v4706 = vrot.slane %v4668, %v4705
  %v4707 = vlaneseq
  %v4708 = vshrl.u32 %v4707, 7
  %v4709 = vsub.s32 0, %v4708
  %v4710 = vrot.slane %v4682, %v4709
  %v4711 = vlaneseq
  %v4712 = vshrl.u32 %v4711, 7
  %v4713 = vsub.s32 0, %v4712
  %v4714 = vrot.slane %v4684, %v4713
  %v4715 = vlaneseq
  %v4716 = vshrl.u32 %v4715, 7
  %v4717 = vsub.s32 0, %v4716
  %v4718 = vrot.slane %v4686, %v4717
  %v4727 = vmul.f32 %v4690, %v4530
  %v4728 = vmul.f32 %v4694, %v4530
  %v4729 = vmul.f32 %v4698, %v4530
  %v4730 = vmul.f32 %v4702, %v4530
  %v4731 = vmul.f32 %v4706, %v4530
  %v4732 = vmul.f32 %v4710, %v4530
  %v4733 = vmul.f32 %v4714, %v4530
  %v4734 = vmul.f32 %v4718, %v4530
  %v4735 = vadd.f32 %v4519, %v4727
  %v4736 = vadd.f32 %v4520, %v4728
  %v4737 = vadd.f32 %v4521, %v4729
  %v4738 = vadd.f32 %v4522, %v4730
  %v4739 = vadd.f32 %v4523, %v4731
  %v4740 = vadd.f32 %v4524, %v4732
  %v4741 = vadd.f32 %v4525, %v4733
  %v4742 = vadd.f32 %v4526, %v4734
  %v4743 = vld [vmem:[#allocation2 + $0xa0] sm:$0xff]
  %v4744 = vld [vmem:[#allocation2 + $0xa8] sm:$0xff]
  %v4745 = vld [vmem:[#allocation2 + $0x180] sm:$0xff]
  %v4746 = vld [vmem:[#allocation2 + $0x188] sm:$0xff]
  %v4748 = vcombine.high %v4743, %v4743
  %v4750 = vunpack.c.l.s4 1966171168
  %v4751 = vunpack.c.0.s8 %v4750
  %v4752 = vlaneseq
  %v4753 = vshrl.u32 %v4752, 7
  %v4754 = vsub.s32 %v4751, %v4753
  %v4755 = vrot.slane %v4743, %v4754
  %v4757 = vunpack.c.l.s4 1966171168
  %v4758 = vunpack.c.0.s8 %v4757
  %v4759 = vlaneseq
  %v4760 = vshrl.u32 %v4759, 7
  %v4761 = vsub.s32 %v4758, %v4760
  %v4762 = vrot.slane %v4748, %v4761
  %v4763 = vcombine.high %v4755, %v4755
  %v4764 = vcombine.high %v4762, %v4762
  %v4766 = vunpack.c.l.s4 1966171168
  %v4767 = vunpack.c.0.s8 %v4766
  %v4768 = vlaneseq
  %v4769 = vshrl.u32 %v4768, 7
  %v4770 = vsub.s32 %v4767, %v4769
  %v4771 = vrot.slane %v4755, %v4770
  %v4773 = vunpack.c.l.s4 1966171168
  %v4774 = vunpack.c.0.s8 %v4773
  %v4775 = vlaneseq
  %v4776 = vshrl.u32 %v4775, 7
  %v4777 = vsub.s32 %v4774, %v4776
  %v4778 = vrot.slane %v4762, %v4777
  %v4780 = vunpack.c.l.s4 1966171168
  %v4781 = vunpack.c.0.s8 %v4780
  %v4782 = vlaneseq
  %v4783 = vshrl.u32 %v4782, 7
  %v4784 = vsub.s32 %v4781, %v4783
  %v4785 = vrot.slane %v4763, %v4784
  %v4787 = vunpack.c.l.s4 1966171168
  %v4788 = vunpack.c.0.s8 %v4787
  %v4789 = vlaneseq
  %v4790 = vshrl.u32 %v4789, 7
  %v4791 = vsub.s32 %v4788, %v4790
  %v4792 = vrot.slane %v4764, %v4791
  %v4793 = vcombine.high %v4771, %v4771
  %v4794 = vcombine.high %v4778, %v4778
  %v4795 = vcombine.high %v4785, %v4785
  %v4796 = vcombine.high %v4792, %v4792
  %v4797 = vlaneseq
  %v4798 = vshrl.u32 %v4797, 7
  %v4799 = vsub.s32 0, %v4798
  %v4800 = vrot.slane %v4771, %v4799
  %v4801 = vlaneseq
  %v4802 = vshrl.u32 %v4801, 7
  %v4803 = vsub.s32 0, %v4802
  %v4804 = vrot.slane %v4785, %v4803
  %v4805 = vlaneseq
  %v4806 = vshrl.u32 %v4805, 7
  %v4807 = vsub.s32 0, %v4806
  %v4808 = vrot.slane %v4793, %v4807
  %v4809 = vlaneseq
  %v4810 = vshrl.u32 %v4809, 7
  %v4811 = vsub.s32 0, %v4810
  %v4812 = vrot.slane %v4795, %v4811
  %v4813 = vlaneseq
  %v4814 = vshrl.u32 %v4813, 7
  %v4815 = vsub.s32 0, %v4814
  %v4816 = vrot.slane %v4778, %v4815
  %v4817 = vlaneseq
  %v4818 = vshrl.u32 %v4817, 7
  %v4819 = vsub.s32 0, %v4818
  %v4820 = vrot.slane %v4792, %v4819
  %v4821 = vlaneseq
  %v4822 = vshrl.u32 %v4821, 7
  %v4823 = vsub.s32 0, %v4822
  %v4824 = vrot.slane %v4794, %v4823
  %v4825 = vlaneseq
  %v4826 = vshrl.u32 %v4825, 7
  %v4827 = vsub.s32 0, %v4826
  %v4828 = vrot.slane %v4796, %v4827
  %v4837 = vmul.f32 %v4800, %v4745
  %v4838 = vmul.f32 %v4804, %v4745
  %v4839 = vmul.f32 %v4808, %v4745
  %v4840 = vmul.f32 %v4812, %v4745
  %v4841 = vmul.f32 %v4816, %v4745
  %v4842 = vmul.f32 %v4820, %v4745
  %v4843 = vmul.f32 %v4824, %v4745
  %v4844 = vmul.f32 %v4828, %v4745
  %v4845 = vadd.f32 %v4629, %v4837
  %v4846 = vadd.f32 %v4630, %v4838
  %v4847 = vadd.f32 %v4631, %v4839
  %v4848 = vadd.f32 %v4632, %v4840
  %v4849 = vadd.f32 %v4633, %v4841
  %v4850 = vadd.f32 %v4634, %v4842
  %v4851 = vadd.f32 %v4635, %v4843
  %v4852 = vadd.f32 %v4636, %v4844
  %v4854 = vcombine.high %v4744, %v4744
  %v4856 = vunpack.c.l.s4 1966171168
  %v4857 = vunpack.c.0.s8 %v4856
  %v4858 = vlaneseq
  %v4859 = vshrl.u32 %v4858, 7
  %v4860 = vsub.s32 %v4857, %v4859
  %v4861 = vrot.slane %v4744, %v4860
  %v4863 = vunpack.c.l.s4 1966171168
  %v4864 = vunpack.c.0.s8 %v4863
  %v4865 = vlaneseq
  %v4866 = vshrl.u32 %v4865, 7
  %v4867 = vsub.s32 %v4864, %v4866
  %v4868 = vrot.slane %v4854, %v4867
  %v4869 = vcombine.high %v4861, %v4861
  %v4870 = vcombine.high %v4868, %v4868
  %v4872 = vunpack.c.l.s4 1966171168
  %v4873 = vunpack.c.0.s8 %v4872
  %v4874 = vlaneseq
  %v4875 = vshrl.u32 %v4874, 7
  %v4876 = vsub.s32 %v4873, %v4875
  %v4877 = vrot.slane %v4861, %v4876
  %v4879 = vunpack.c.l.s4 1966171168
  %v4880 = vunpack.c.0.s8 %v4879
  %v4881 = vlaneseq
  %v4882 = vshrl.u32 %v4881, 7
  %v4883 = vsub.s32 %v4880, %v4882
  %v4884 = vrot.slane %v4868, %v4883
  %v4886 = vunpack.c.l.s4 1966171168
  %v4887 = vunpack.c.0.s8 %v4886
  %v4888 = vlaneseq
  %v4889 = vshrl.u32 %v4888, 7
  %v4890 = vsub.s32 %v4887, %v4889
  %v4891 = vrot.slane %v4869, %v4890
  %v4893 = vunpack.c.l.s4 1966171168
  %v4894 = vunpack.c.0.s8 %v4893
  %v4895 = vlaneseq
  %v4896 = vshrl.u32 %v4895, 7
  %v4897 = vsub.s32 %v4894, %v4896
  %v4898 = vrot.slane %v4870, %v4897
  %v4899 = vcombine.high %v4877, %v4877
  %v4900 = vcombine.high %v4884, %v4884
  %v4901 = vcombine.high %v4891, %v4891
  %v4902 = vcombine.high %v4898, %v4898
  %v4903 = vlaneseq
  %v4904 = vshrl.u32 %v4903, 7
  %v4905 = vsub.s32 0, %v4904
  %v4906 = vrot.slane %v4877, %v4905
  %v4907 = vlaneseq
  %v4908 = vshrl.u32 %v4907, 7
  %v4909 = vsub.s32 0, %v4908
  %v4910 = vrot.slane %v4891, %v4909
  %v4911 = vlaneseq
  %v4912 = vshrl.u32 %v4911, 7
  %v4913 = vsub.s32 0, %v4912
  %v4914 = vrot.slane %v4899, %v4913
  %v4915 = vlaneseq
  %v4916 = vshrl.u32 %v4915, 7
  %v4917 = vsub.s32 0, %v4916
  %v4918 = vrot.slane %v4901, %v4917
  %v4919 = vlaneseq
  %v4920 = vshrl.u32 %v4919, 7
  %v4921 = vsub.s32 0, %v4920
  %v4922 = vrot.slane %v4884, %v4921
  %v4923 = vlaneseq
  %v4924 = vshrl.u32 %v4923, 7
  %v4925 = vsub.s32 0, %v4924
  %v4926 = vrot.slane %v4898, %v4925
  %v4927 = vlaneseq
  %v4928 = vshrl.u32 %v4927, 7
  %v4929 = vsub.s32 0, %v4928
  %v4930 = vrot.slane %v4900, %v4929
  %v4931 = vlaneseq
  %v4932 = vshrl.u32 %v4931, 7
  %v4933 = vsub.s32 0, %v4932
  %v4934 = vrot.slane %v4902, %v4933
  %v4943 = vmul.f32 %v4906, %v4746
  %v4944 = vmul.f32 %v4910, %v4746
  %v4945 = vmul.f32 %v4914, %v4746
  %v4946 = vmul.f32 %v4918, %v4746
  %v4947 = vmul.f32 %v4922, %v4746
  %v4948 = vmul.f32 %v4926, %v4746
  %v4949 = vmul.f32 %v4930, %v4746
  %v4950 = vmul.f32 %v4934, %v4746
  %v4951 = vadd.f32 %v4735, %v4943
  %v4952 = vadd.f32 %v4736, %v4944
  %v4953 = vadd.f32 %v4737, %v4945
  %v4954 = vadd.f32 %v4738, %v4946
  %v4955 = vadd.f32 %v4739, %v4947
  %v4956 = vadd.f32 %v4740, %v4948
  %v4957 = vadd.f32 %v4741, %v4949
  %v4958 = vadd.f32 %v4742, %v4950
  %v4959 = vld [vmem:[#allocation2 + $0xb0] sm:$0xff]
  %v4960 = vld [vmem:[#allocation2 + $0xb8] sm:$0xff]
  %v4961 = vld [vmem:[#allocation2 + $0x190] sm:$0xff]
  %v4962 = vld [vmem:[#allocation2 + $0x198] sm:$0xff]
  %v4964 = vcombine.high %v4959, %v4959
  %v4966 = vunpack.c.l.s4 1966171168
  %v4967 = vunpack.c.0.s8 %v4966
  %v4968 = vlaneseq
  %v4969 = vshrl.u32 %v4968, 7
  %v4970 = vsub.s32 %v4967, %v4969
  %v4971 = vrot.slane %v4959, %v4970
  %v4973 = vunpack.c.l.s4 1966171168
  %v4974 = vunpack.c.0.s8 %v4973
  %v4975 = vlaneseq
  %v4976 = vshrl.u32 %v4975, 7
  %v4977 = vsub.s32 %v4974, %v4976
  %v4978 = vrot.slane %v4964, %v4977
  %v4979 = vcombine.high %v4971, %v4971
  %v4980 = vcombine.high %v4978, %v4978
  %v4982 = vunpack.c.l.s4 1966171168
  %v4983 = vunpack.c.0.s8 %v4982
  %v4984 = vlaneseq
  %v4985 = vshrl.u32 %v4984, 7
  %v4986 = vsub.s32 %v4983, %v4985
  %v4987 = vrot.slane %v4971, %v4986
  %v4989 = vunpack.c.l.s4 1966171168
  %v4990 = vunpack.c.0.s8 %v4989
  %v4991 = vlaneseq
  %v4992 = vshrl.u32 %v4991, 7
  %v4993 = vsub.s32 %v4990, %v4992
  %v4994 = vrot.slane %v4978, %v4993
  %v4996 = vunpack.c.l.s4 1966171168
  %v4997 = vunpack.c.0.s8 %v4996
  %v4998 = vlaneseq
  %v4999 = vshrl.u32 %v4998, 7
  %v5000 = vsub.s32 %v4997, %v4999
  %v5001 = vrot.slane %v4979, %v5000
  %v5003 = vunpack.c.l.s4 1966171168
  %v5004 = vunpack.c.0.s8 %v5003
  %v5005 = vlaneseq
  %v5006 = vshrl.u32 %v5005, 7
  %v5007 = vsub.s32 %v5004, %v5006
  %v5008 = vrot.slane %v4980, %v5007
  %v5009 = vcombine.high %v4987, %v4987
  %v5010 = vcombine.high %v4994, %v4994
  %v5011 = vcombine.high %v5001, %v5001
  %v5012 = vcombine.high %v5008, %v5008
  %v5013 = vlaneseq
  %v5014 = vshrl.u32 %v5013, 7
  %v5015 = vsub.s32 0, %v5014
  %v5016 = vrot.slane %v4987, %v5015
  %v5017 = vlaneseq
  %v5018 = vshrl.u32 %v5017, 7
  %v5019 = vsub.s32 0, %v5018
  %v5020 = vrot.slane %v5001, %v5019
  %v5021 = vlaneseq
  %v5022 = vshrl.u32 %v5021, 7
  %v5023 = vsub.s32 0, %v5022
  %v5024 = vrot.slane %v5009, %v5023
  %v5025 = vlaneseq
  %v5026 = vshrl.u32 %v5025, 7
  %v5027 = vsub.s32 0, %v5026
  %v5028 = vrot.slane %v5011, %v5027
  %v5029 = vlaneseq
  %v5030 = vshrl.u32 %v5029, 7
  %v5031 = vsub.s32 0, %v5030
  %v5032 = vrot.slane %v4994, %v5031
  %v5033 = vlaneseq
  %v5034 = vshrl.u32 %v5033, 7
  %v5035 = vsub.s32 0, %v5034
  %v5036 = vrot.slane %v5008, %v5035
  %v5037 = vlaneseq
  %v5038 = vshrl.u32 %v5037, 7
  %v5039 = vsub.s32 0, %v5038
  %v5040 = vrot.slane %v5010, %v5039
  %v5041 = vlaneseq
  %v5042 = vshrl.u32 %v5041, 7
  %v5043 = vsub.s32 0, %v5042
  %v5044 = vrot.slane %v5012, %v5043
  %v5053 = vmul.f32 %v5016, %v4961
  %v5054 = vmul.f32 %v5020, %v4961
  %v5055 = vmul.f32 %v5024, %v4961
  %v5056 = vmul.f32 %v5028, %v4961
  %v5057 = vmul.f32 %v5032, %v4961
  %v5058 = vmul.f32 %v5036, %v4961
  %v5059 = vmul.f32 %v5040, %v4961
  %v5060 = vmul.f32 %v5044, %v4961
  %v5061 = vadd.f32 %v4845, %v5053
  %v5062 = vadd.f32 %v4846, %v5054
  %v5063 = vadd.f32 %v4847, %v5055
  %v5064 = vadd.f32 %v4848, %v5056
  %v5065 = vadd.f32 %v4849, %v5057
  %v5066 = vadd.f32 %v4850, %v5058
  %v5067 = vadd.f32 %v4851, %v5059
  %v5068 = vadd.f32 %v4852, %v5060
  %v5070 = vcombine.high %v4960, %v4960
  %v5072 = vunpack.c.l.s4 1966171168
  %v5073 = vunpack.c.0.s8 %v5072
  %v5074 = vlaneseq
  %v5075 = vshrl.u32 %v5074, 7
  %v5076 = vsub.s32 %v5073, %v5075
  %v5077 = vrot.slane %v4960, %v5076
  %v5079 = vunpack.c.l.s4 1966171168
  %v5080 = vunpack.c.0.s8 %v5079
  %v5081 = vlaneseq
  %v5082 = vshrl.u32 %v5081, 7
  %v5083 = vsub.s32 %v5080, %v5082
  %v5084 = vrot.slane %v5070, %v5083
  %v5085 = vcombine.high %v5077, %v5077
  %v5086 = vcombine.high %v5084, %v5084
  %v5088 = vunpack.c.l.s4 1966171168
  %v5089 = vunpack.c.0.s8 %v5088
  %v5090 = vlaneseq
  %v5091 = vshrl.u32 %v5090, 7
  %v5092 = vsub.s32 %v5089, %v5091
  %v5093 = vrot.slane %v5077, %v5092
  %v5095 = vunpack.c.l.s4 1966171168
  %v5096 = vunpack.c.0.s8 %v5095
  %v5097 = vlaneseq
  %v5098 = vshrl.u32 %v5097, 7
  %v5099 = vsub.s32 %v5096, %v5098
  %v5100 = vrot.slane %v5084, %v5099
  %v5102 = vunpack.c.l.s4 1966171168
  %v5103 = vunpack.c.0.s8 %v5102
  %v5104 = vlaneseq
  %v5105 = vshrl.u32 %v5104, 7
  %v5106 = vsub.s32 %v5103, %v5105
  %v5107 = vrot.slane %v5085, %v5106
  %v5109 = vunpack.c.l.s4 1966171168
  %v5110 = vunpack.c.0.s8 %v5109
  %v5111 = vlaneseq
  %v5112 = vshrl.u32 %v5111, 7
  %v5113 = vsub.s32 %v5110, %v5112
  %v5114 = vrot.slane %v5086, %v5113
  %v5115 = vcombine.high %v5093, %v5093
  %v5116 = vcombine.high %v5100, %v5100
  %v5117 = vcombine.high %v5107, %v5107
  %v5118 = vcombine.high %v5114, %v5114
  %v5119 = vlaneseq
  %v5120 = vshrl.u32 %v5119, 7
  %v5121 = vsub.s32 0, %v5120
  %v5122 = vrot.slane %v5093, %v5121
  %v5123 = vlaneseq
  %v5124 = vshrl.u32 %v5123, 7
  %v5125 = vsub.s32 0, %v5124
  %v5126 = vrot.slane %v5107, %v5125
  %v5127 = vlaneseq
  %v5128 = vshrl.u32 %v5127, 7
  %v5129 = vsub.s32 0, %v5128
  %v5130 = vrot.slane %v5115, %v5129
  %v5131 = vlaneseq
  %v5132 = vshrl.u32 %v5131, 7
  %v5133 = vsub.s32 0, %v5132
  %v5134 = vrot.slane %v5117, %v5133
  %v5135 = vlaneseq
  %v5136 = vshrl.u32 %v5135, 7
  %v5137 = vsub.s32 0, %v5136
  %v5138 = vrot.slane %v5100, %v5137
  %v5139 = vlaneseq
  %v5140 = vshrl.u32 %v5139, 7
  %v5141 = vsub.s32 0, %v5140
  %v5142 = vrot.slane %v5114, %v5141
  %v5143 = vlaneseq
  %v5144 = vshrl.u32 %v5143, 7
  %v5145 = vsub.s32 0, %v5144
  %v5146 = vrot.slane %v5116, %v5145
  %v5147 = vlaneseq
  %v5148 = vshrl.u32 %v5147, 7
  %v5149 = vsub.s32 0, %v5148
  %v5150 = vrot.slane %v5118, %v5149
  %v5159 = vmul.f32 %v5122, %v4962
  %v5160 = vmul.f32 %v5126, %v4962
  %v5161 = vmul.f32 %v5130, %v4962
  %v5162 = vmul.f32 %v5134, %v4962
  %v5163 = vmul.f32 %v5138, %v4962
  %v5164 = vmul.f32 %v5142, %v4962
  %v5165 = vmul.f32 %v5146, %v4962
  %v5166 = vmul.f32 %v5150, %v4962
  %v5167 = vadd.f32 %v4951, %v5159
  %v5168 = vadd.f32 %v4952, %v5160
  %v5169 = vadd.f32 %v4953, %v5161
  %v5170 = vadd.f32 %v4954, %v5162
  %v5171 = vadd.f32 %v4955, %v5163
  %v5172 = vadd.f32 %v4956, %v5164
  %v5173 = vadd.f32 %v4957, %v5165
  %v5174 = vadd.f32 %v4958, %v5166
  %v5175 = vld [vmem:[#allocation2 + $0xc0] sm:$0xff]
  %v5176 = vld [vmem:[#allocation2 + $0xc8] sm:$0xff]
  %v5177 = vld [vmem:[#allocation2 + $0x1a0] sm:$0xff]
  %v5178 = vld [vmem:[#allocation2 + $0x1a8] sm:$0xff]
  %v5180 = vcombine.high %v5175, %v5175
  %v5182 = vunpack.c.l.s4 1966171168
  %v5183 = vunpack.c.0.s8 %v5182
  %v5184 = vlaneseq
  %v5185 = vshrl.u32 %v5184, 7
  %v5186 = vsub.s32 %v5183, %v5185
  %v5187 = vrot.slane %v5175, %v5186
  %v5189 = vunpack.c.l.s4 1966171168
  %v5190 = vunpack.c.0.s8 %v5189
  %v5191 = vlaneseq
  %v5192 = vshrl.u32 %v5191, 7
  %v5193 = vsub.s32 %v5190, %v5192
  %v5194 = vrot.slane %v5180, %v5193
  %v5195 = vcombine.high %v5187, %v5187
  %v5196 = vcombine.high %v5194, %v5194
  %v5198 = vunpack.c.l.s4 1966171168
  %v5199 = vunpack.c.0.s8 %v5198
  %v5200 = vlaneseq
  %v5201 = vshrl.u32 %v5200, 7
  %v5202 = vsub.s32 %v5199, %v5201
  %v5203 = vrot.slane %v5187, %v5202
  %v5205 = vunpack.c.l.s4 1966171168
  %v5206 = vunpack.c.0.s8 %v5205
  %v5207 = vlaneseq
  %v5208 = vshrl.u32 %v5207, 7
  %v5209 = vsub.s32 %v5206, %v5208
  %v5210 = vrot.slane %v5194, %v5209
  %v5212 = vunpack.c.l.s4 1966171168
  %v5213 = vunpack.c.0.s8 %v5212
  %v5214 = vlaneseq
  %v5215 = vshrl.u32 %v5214, 7
  %v5216 = vsub.s32 %v5213, %v5215
  %v5217 = vrot.slane %v5195, %v5216
  %v5219 = vunpack.c.l.s4 1966171168
  %v5220 = vunpack.c.0.s8 %v5219
  %v5221 = vlaneseq
  %v5222 = vshrl.u32 %v5221, 7
  %v5223 = vsub.s32 %v5220, %v5222
  %v5224 = vrot.slane %v5196, %v5223
  %v5225 = vcombine.high %v5203, %v5203
  %v5226 = vcombine.high %v5210, %v5210
  %v5227 = vcombine.high %v5217, %v5217
  %v5228 = vcombine.high %v5224, %v5224
  %v5229 = vlaneseq
  %v5230 = vshrl.u32 %v5229, 7
  %v5231 = vsub.s32 0, %v5230
  %v5232 = vrot.slane %v5203, %v5231
  %v5233 = vlaneseq
  %v5234 = vshrl.u32 %v5233, 7
  %v5235 = vsub.s32 0, %v5234
  %v5236 = vrot.slane %v5217, %v5235
  %v5237 = vlaneseq
  %v5238 = vshrl.u32 %v5237, 7
  %v5239 = vsub.s32 0, %v5238
  %v5240 = vrot.slane %v5225, %v5239
  %v5241 = vlaneseq
  %v5242 = vshrl.u32 %v5241, 7
  %v5243 = vsub.s32 0, %v5242
  %v5244 = vrot.slane %v5227, %v5243
  %v5245 = vlaneseq
  %v5246 = vshrl.u32 %v5245, 7
  %v5247 = vsub.s32 0, %v5246
  %v5248 = vrot.slane %v5210, %v5247
  %v5249 = vlaneseq
  %v5250 = vshrl.u32 %v5249, 7
  %v5251 = vsub.s32 0, %v5250
  %v5252 = vrot.slane %v5224, %v5251
  %v5253 = vlaneseq
  %v5254 = vshrl.u32 %v5253, 7
  %v5255 = vsub.s32 0, %v5254
  %v5256 = vrot.slane %v5226, %v5255
  %v5257 = vlaneseq
  %v5258 = vshrl.u32 %v5257, 7
  %v5259 = vsub.s32 0, %v5258
  %v5260 = vrot.slane %v5228, %v5259
  %v5269 = vmul.f32 %v5232, %v5177
  %v5270 = vmul.f32 %v5236, %v5177
  %v5271 = vmul.f32 %v5240, %v5177
  %v5272 = vmul.f32 %v5244, %v5177
  %v5273 = vmul.f32 %v5248, %v5177
  %v5274 = vmul.f32 %v5252, %v5177
  %v5275 = vmul.f32 %v5256, %v5177
  %v5276 = vmul.f32 %v5260, %v5177
  %v5277 = vadd.f32 %v5061, %v5269
  %v5278 = vadd.f32 %v5062, %v5270
  %v5279 = vadd.f32 %v5063, %v5271
  %v5280 = vadd.f32 %v5064, %v5272
  %v5281 = vadd.f32 %v5065, %v5273
  %v5282 = vadd.f32 %v5066, %v5274
  %v5283 = vadd.f32 %v5067, %v5275
  %v5284 = vadd.f32 %v5068, %v5276
  %v5286 = vcombine.high %v5176, %v5176
  %v5288 = vunpack.c.l.s4 1966171168
  %v5289 = vunpack.c.0.s8 %v5288
  %v5290 = vlaneseq
  %v5291 = vshrl.u32 %v5290, 7
  %v5292 = vsub.s32 %v5289, %v5291
  %v5293 = vrot.slane %v5176, %v5292
  %v5295 = vunpack.c.l.s4 1966171168
  %v5296 = vunpack.c.0.s8 %v5295
  %v5297 = vlaneseq
  %v5298 = vshrl.u32 %v5297, 7
  %v5299 = vsub.s32 %v5296, %v5298
  %v5300 = vrot.slane %v5286, %v5299
  %v5301 = vcombine.high %v5293, %v5293
  %v5302 = vcombine.high %v5300, %v5300
  %v5304 = vunpack.c.l.s4 1966171168
  %v5305 = vunpack.c.0.s8 %v5304
  %v5306 = vlaneseq
  %v5307 = vshrl.u32 %v5306, 7
  %v5308 = vsub.s32 %v5305, %v5307
  %v5309 = vrot.slane %v5293, %v5308
  %v5311 = vunpack.c.l.s4 1966171168
  %v5312 = vunpack.c.0.s8 %v5311
  %v5313 = vlaneseq
  %v5314 = vshrl.u32 %v5313, 7
  %v5315 = vsub.s32 %v5312, %v5314
  %v5316 = vrot.slane %v5300, %v5315
  %v5318 = vunpack.c.l.s4 1966171168
  %v5319 = vunpack.c.0.s8 %v5318
  %v5320 = vlaneseq
  %v5321 = vshrl.u32 %v5320, 7
  %v5322 = vsub.s32 %v5319, %v5321
  %v5323 = vrot.slane %v5301, %v5322
  %v5325 = vunpack.c.l.s4 1966171168
  %v5326 = vunpack.c.0.s8 %v5325
  %v5327 = vlaneseq
  %v5328 = vshrl.u32 %v5327, 7
  %v5329 = vsub.s32 %v5326, %v5328
  %v5330 = vrot.slane %v5302, %v5329
  %v5331 = vcombine.high %v5309, %v5309
  %v5332 = vcombine.high %v5316, %v5316
  %v5333 = vcombine.high %v5323, %v5323
  %v5334 = vcombine.high %v5330, %v5330
  %v5335 = vlaneseq
  %v5336 = vshrl.u32 %v5335, 7
  %v5337 = vsub.s32 0, %v5336
  %v5338 = vrot.slane %v5309, %v5337
  %v5339 = vlaneseq
  %v5340 = vshrl.u32 %v5339, 7
  %v5341 = vsub.s32 0, %v5340
  %v5342 = vrot.slane %v5323, %v5341
  %v5343 = vlaneseq
  %v5344 = vshrl.u32 %v5343, 7
  %v5345 = vsub.s32 0, %v5344
  %v5346 = vrot.slane %v5331, %v5345
  %v5347 = vlaneseq
  %v5348 = vshrl.u32 %v5347, 7
  %v5349 = vsub.s32 0, %v5348
  %v5350 = vrot.slane %v5333, %v5349
  %v5351 = vlaneseq
  %v5352 = vshrl.u32 %v5351, 7
  %v5353 = vsub.s32 0, %v5352
  %v5354 = vrot.slane %v5316, %v5353
  %v5355 = vlaneseq
  %v5356 = vshrl.u32 %v5355, 7
  %v5357 = vsub.s32 0, %v5356
  %v5358 = vrot.slane %v5330, %v5357
  %v5359 = vlaneseq
  %v5360 = vshrl.u32 %v5359, 7
  %v5361 = vsub.s32 0, %v5360
  %v5362 = vrot.slane %v5332, %v5361
  %v5363 = vlaneseq
  %v5364 = vshrl.u32 %v5363, 7
  %v5365 = vsub.s32 0, %v5364
  %v5366 = vrot.slane %v5334, %v5365
  %v5375 = vmul.f32 %v5338, %v5178
  %v5376 = vmul.f32 %v5342, %v5178
  %v5377 = vmul.f32 %v5346, %v5178
  %v5378 = vmul.f32 %v5350, %v5178
  %v5379 = vmul.f32 %v5354, %v5178
  %v5380 = vmul.f32 %v5358, %v5178
  %v5381 = vmul.f32 %v5362, %v5178
  %v5382 = vmul.f32 %v5366, %v5178
  %v5383 = vadd.f32 %v5167, %v5375
  %v5384 = vadd.f32 %v5168, %v5376
  %v5385 = vadd.f32 %v5169, %v5377
  %v5386 = vadd.f32 %v5170, %v5378
  %v5387 = vadd.f32 %v5171, %v5379
  %v5388 = vadd.f32 %v5172, %v5380
  %v5389 = vadd.f32 %v5173, %v5381
  %v5390 = vadd.f32 %v5174, %v5382
  %v5391 = vld [vmem:[#allocation2 + $0xd0] sm:$0xff]
  %v5392 = vld [vmem:[#allocation2 + $0xd8] sm:$0xff]
  %v5393 = vld [vmem:[#allocation2 + $0x1b0] sm:$0xff]
  %v5394 = vld [vmem:[#allocation2 + $0x1b8] sm:$0xff]
  %v5396 = vcombine.high %v5391, %v5391
  %v5398 = vunpack.c.l.s4 1966171168
  %v5399 = vunpack.c.0.s8 %v5398
  %v5400 = vlaneseq
  %v5401 = vshrl.u32 %v5400, 7
  %v5402 = vsub.s32 %v5399, %v5401
  %v5403 = vrot.slane %v5391, %v5402
  %v5405 = vunpack.c.l.s4 1966171168
  %v5406 = vunpack.c.0.s8 %v5405
  %v5407 = vlaneseq
  %v5408 = vshrl.u32 %v5407, 7
  %v5409 = vsub.s32 %v5406, %v5408
  %v5410 = vrot.slane %v5396, %v5409
  %v5411 = vcombine.high %v5403, %v5403
  %v5412 = vcombine.high %v5410, %v5410
  %v5414 = vunpack.c.l.s4 1966171168
  %v5415 = vunpack.c.0.s8 %v5414
  %v5416 = vlaneseq
  %v5417 = vshrl.u32 %v5416, 7
  %v5418 = vsub.s32 %v5415, %v5417
  %v5419 = vrot.slane %v5403, %v5418
  %v5421 = vunpack.c.l.s4 1966171168
  %v5422 = vunpack.c.0.s8 %v5421
  %v5423 = vlaneseq
  %v5424 = vshrl.u32 %v5423, 7
  %v5425 = vsub.s32 %v5422, %v5424
  %v5426 = vrot.slane %v5410, %v5425
  %v5428 = vunpack.c.l.s4 1966171168
  %v5429 = vunpack.c.0.s8 %v5428
  %v5430 = vlaneseq
  %v5431 = vshrl.u32 %v5430, 7
  %v5432 = vsub.s32 %v5429, %v5431
  %v5433 = vrot.slane %v5411, %v5432
  %v5435 = vunpack.c.l.s4 1966171168
  %v5436 = vunpack.c.0.s8 %v5435
  %v5437 = vlaneseq
  %v5438 = vshrl.u32 %v5437, 7
  %v5439 = vsub.s32 %v5436, %v5438
  %v5440 = vrot.slane %v5412, %v5439
  %v5441 = vcombine.high %v5419, %v5419
  %v5442 = vcombine.high %v5426, %v5426
  %v5443 = vcombine.high %v5433, %v5433
  %v5444 = vcombine.high %v5440, %v5440
  %v5445 = vlaneseq
  %v5446 = vshrl.u32 %v5445, 7
  %v5447 = vsub.s32 0, %v5446
  %v5448 = vrot.slane %v5419, %v5447
  %v5449 = vlaneseq
  %v5450 = vshrl.u32 %v5449, 7
  %v5451 = vsub.s32 0, %v5450
  %v5452 = vrot.slane %v5433, %v5451
  %v5453 = vlaneseq
  %v5454 = vshrl.u32 %v5453, 7
  %v5455 = vsub.s32 0, %v5454
  %v5456 = vrot.slane %v5441, %v5455
  %v5457 = vlaneseq
  %v5458 = vshrl.u32 %v5457, 7
  %v5459 = vsub.s32 0, %v5458
  %v5460 = vrot.slane %v5443, %v5459
  %v5461 = vlaneseq
  %v5462 = vshrl.u32 %v5461, 7
  %v5463 = vsub.s32 0, %v5462
  %v5464 = vrot.slane %v5426, %v5463
  %v5465 = vlaneseq
  %v5466 = vshrl.u32 %v5465, 7
  %v5467 = vsub.s32 0, %v5466
  %v5468 = vrot.slane %v5440, %v5467
  %v5469 = vlaneseq
  %v5470 = vshrl.u32 %v5469, 7
  %v5471 = vsub.s32 0, %v5470
  %v5472 = vrot.slane %v5442, %v5471
  %v5473 = vlaneseq
  %v5474 = vshrl.u32 %v5473, 7
  %v5475 = vsub.s32 0, %v5474
  %v5476 = vrot.slane %v5444, %v5475
  %v5485 = vmul.f32 %v5448, %v5393
  %v5486 = vmul.f32 %v5452, %v5393
  %v5487 = vmul.f32 %v5456, %v5393
  %v5488 = vmul.f32 %v5460, %v5393
  %v5489 = vmul.f32 %v5464, %v5393
  %v5490 = vmul.f32 %v5468, %v5393
  %v5491 = vmul.f32 %v5472, %v5393
  %v5492 = vmul.f32 %v5476, %v5393
  %v5493 = vadd.f32 %v5277, %v5485
  %v5494 = vadd.f32 %v5278, %v5486
  %v5495 = vadd.f32 %v5279, %v5487
  %v5496 = vadd.f32 %v5280, %v5488
  %v5497 = vadd.f32 %v5281, %v5489
  %v5498 = vadd.f32 %v5282, %v5490
  %v5499 = vadd.f32 %v5283, %v5491
  %v5500 = vadd.f32 %v5284, %v5492
  %v5502 = vcombine.high %v5392, %v5392
  %v5504 = vunpack.c.l.s4 1966171168
  %v5505 = vunpack.c.0.s8 %v5504
  %v5506 = vlaneseq
  %v5507 = vshrl.u32 %v5506, 7
  %v5508 = vsub.s32 %v5505, %v5507
  %v5509 = vrot.slane %v5392, %v5508
  %v5511 = vunpack.c.l.s4 1966171168
  %v5512 = vunpack.c.0.s8 %v5511
  %v5513 = vlaneseq
  %v5514 = vshrl.u32 %v5513, 7
  %v5515 = vsub.s32 %v5512, %v5514
  %v5516 = vrot.slane %v5502, %v5515
  %v5517 = vcombine.high %v5509, %v5509
  %v5518 = vcombine.high %v5516, %v5516
  %v5520 = vunpack.c.l.s4 1966171168
  %v5521 = vunpack.c.0.s8 %v5520
  %v5522 = vlaneseq
  %v5523 = vshrl.u32 %v5522, 7
  %v5524 = vsub.s32 %v5521, %v5523
  %v5525 = vrot.slane %v5509, %v5524
  %v5527 = vunpack.c.l.s4 1966171168
  %v5528 = vunpack.c.0.s8 %v5527
  %v5529 = vlaneseq
  %v5530 = vshrl.u32 %v5529, 7
  %v5531 = vsub.s32 %v5528, %v5530
  %v5532 = vrot.slane %v5516, %v5531
  %v5534 = vunpack.c.l.s4 1966171168
  %v5535 = vunpack.c.0.s8 %v5534
  %v5536 = vlaneseq
  %v5537 = vshrl.u32 %v5536, 7
  %v5538 = vsub.s32 %v5535, %v5537
  %v5539 = vrot.slane %v5517, %v5538
  %v5541 = vunpack.c.l.s4 1966171168
  %v5542 = vunpack.c.0.s8 %v5541
  %v5543 = vlaneseq
  %v5544 = vshrl.u32 %v5543, 7
  %v5545 = vsub.s32 %v5542, %v5544
  %v5546 = vrot.slane %v5518, %v5545
  %v5547 = vcombine.high %v5525, %v5525
  %v5548 = vcombine.high %v5532, %v5532
  %v5549 = vcombine.high %v5539, %v5539
  %v5550 = vcombine.high %v5546, %v5546
  %v5551 = vlaneseq
  %v5552 = vshrl.u32 %v5551, 7
  %v5553 = vsub.s32 0, %v5552
  %v5554 = vrot.slane %v5525, %v5553
  %v5555 = vlaneseq
  %v5556 = vshrl.u32 %v5555, 7
  %v5557 = vsub.s32 0, %v5556
  %v5558 = vrot.slane %v5539, %v5557
  %v5559 = vlaneseq
  %v5560 = vshrl.u32 %v5559, 7
  %v5561 = vsub.s32 0, %v5560
  %v5562 = vrot.slane %v5547, %v5561
  %v5563 = vlaneseq
  %v5564 = vshrl.u32 %v5563, 7
  %v5565 = vsub.s32 0, %v5564
  %v5566 = vrot.slane %v5549, %v5565
  %v5567 = vlaneseq
  %v5568 = vshrl.u32 %v5567, 7
  %v5569 = vsub.s32 0, %v5568
  %v5570 = vrot.slane %v5532, %v5569
  %v5571 = vlaneseq
  %v5572 = vshrl.u32 %v5571, 7
  %v5573 = vsub.s32 0, %v5572
  %v5574 = vrot.slane %v5546, %v5573
  %v5575 = vlaneseq
  %v5576 = vshrl.u32 %v5575, 7
  %v5577 = vsub.s32 0, %v5576
  %v5578 = vrot.slane %v5548, %v5577
  %v5579 = vlaneseq
  %v5580 = vshrl.u32 %v5579, 7
  %v5581 = vsub.s32 0, %v5580
  %v5582 = vrot.slane %v5550, %v5581
  %v5591 = vmul.f32 %v5554, %v5394
  %v5592 = vmul.f32 %v5558, %v5394
  %v5593 = vmul.f32 %v5562, %v5394
  %v5594 = vmul.f32 %v5566, %v5394
  %v5595 = vmul.f32 %v5570, %v5394
  %v5596 = vmul.f32 %v5574, %v5394
  %v5597 = vmul.f32 %v5578, %v5394
  %v5598 = vmul.f32 %v5582, %v5394
  %v5599 = vadd.f32 %v5383, %v5591
  %v5600 = vadd.f32 %v5384, %v5592
  %v5601 = vadd.f32 %v5385, %v5593
  %v5602 = vadd.f32 %v5386, %v5594
  %v5603 = vadd.f32 %v5387, %v5595
  %v5604 = vadd.f32 %v5388, %v5596
  %v5605 = vadd.f32 %v5389, %v5597
  %v5606 = vadd.f32 %v5390, %v5598
  %v5615 = vrot.slane %v5493, 1
  %v5616 = vrot.slane %v5494, 1
  %v5617 = vrot.slane %v5495, 1
  %v5618 = vrot.slane %v5496, 1
  %v5619 = vrot.slane %v5497, 1
  %v5620 = vrot.slane %v5498, 1
  %v5621 = vrot.slane %v5499, 1
  %v5622 = vrot.slane %v5500, 1
  %v5631 = vmax.f32 %v5493, %v5615
  %v5632 = vmax.f32 %v5494, %v5616
  %v5633 = vmax.f32 %v5495, %v5617
  %v5634 = vmax.f32 %v5496, %v5618
  %v5635 = vmax.f32 %v5497, %v5619
  %v5636 = vmax.f32 %v5498, %v5620
  %v5637 = vmax.f32 %v5499, %v5621
  %v5638 = vmax.f32 %v5500, %v5622
  %v5639 = vrot.slane %v5493, 2
  %v5640 = vrot.slane %v5494, 2
  %v5641 = vrot.slane %v5495, 2
  %v5642 = vrot.slane %v5496, 2
  %v5643 = vrot.slane %v5497, 2
  %v5644 = vrot.slane %v5498, 2
  %v5645 = vrot.slane %v5499, 2
  %v5646 = vrot.slane %v5500, 2
  %v5655 = vmax.f32 %v5631, %v5639
  %v5656 = vmax.f32 %v5632, %v5640
  %v5657 = vmax.f32 %v5633, %v5641
  %v5658 = vmax.f32 %v5634, %v5642
  %v5659 = vmax.f32 %v5635, %v5643
  %v5660 = vmax.f32 %v5636, %v5644
  %v5661 = vmax.f32 %v5637, %v5645
  %v5662 = vmax.f32 %v5638, %v5646
  %v5663 = vrot.slane %v5493, 3
  %v5664 = vrot.slane %v5494, 3
  %v5665 = vrot.slane %v5495, 3
  %v5666 = vrot.slane %v5496, 3
  %v5667 = vrot.slane %v5497, 3
  %v5668 = vrot.slane %v5498, 3
  %v5669 = vrot.slane %v5499, 3
  %v5670 = vrot.slane %v5500, 3
  %v5679 = vmax.f32 %v5655, %v5663
  %v5680 = vmax.f32 %v5656, %v5664
  %v5681 = vmax.f32 %v5657, %v5665
  %v5682 = vmax.f32 %v5658, %v5666
  %v5683 = vmax.f32 %v5659, %v5667
  %v5684 = vmax.f32 %v5660, %v5668
  %v5685 = vmax.f32 %v5661, %v5669
  %v5686 = vmax.f32 %v5662, %v5670
  %v5687 = vrot.slane %v5493, 4
  %v5688 = vrot.slane %v5494, 4
  %v5689 = vrot.slane %v5495, 4
  %v5690 = vrot.slane %v5496, 4
  %v5691 = vrot.slane %v5497, 4
  %v5692 = vrot.slane %v5498, 4
  %v5693 = vrot.slane %v5499, 4
  %v5694 = vrot.slane %v5500, 4
  %v5703 = vmax.f32 %v5679, %v5687
  %v5704 = vmax.f32 %v5680, %v5688
  %v5705 = vmax.f32 %v5681, %v5689
  %v5706 = vmax.f32 %v5682, %v5690
  %v5707 = vmax.f32 %v5683, %v5691
  %v5708 = vmax.f32 %v5684, %v5692
  %v5709 = vmax.f32 %v5685, %v5693
  %v5710 = vmax.f32 %v5686, %v5694
  %v5711 = vrot.slane %v5493, 5
  %v5712 = vrot.slane %v5494, 5
  %v5713 = vrot.slane %v5495, 5
  %v5714 = vrot.slane %v5496, 5
  %v5715 = vrot.slane %v5497, 5
  %v5716 = vrot.slane %v5498, 5
  %v5717 = vrot.slane %v5499, 5
  %v5718 = vrot.slane %v5500, 5
  %v5727 = vmax.f32 %v5703, %v5711
  %v5728 = vmax.f32 %v5704, %v5712
  %v5729 = vmax.f32 %v5705, %v5713
  %v5730 = vmax.f32 %v5706, %v5714
  %v5731 = vmax.f32 %v5707, %v5715
  %v5732 = vmax.f32 %v5708, %v5716
  %v5733 = vmax.f32 %v5709, %v5717
  %v5734 = vmax.f32 %v5710, %v5718
  %v5735 = vrot.slane %v5493, 6
  %v5736 = vrot.slane %v5494, 6
  %v5737 = vrot.slane %v5495, 6
  %v5738 = vrot.slane %v5496, 6
  %v5739 = vrot.slane %v5497, 6
  %v5740 = vrot.slane %v5498, 6
  %v5741 = vrot.slane %v5499, 6
  %v5742 = vrot.slane %v5500, 6
  %v5751 = vmax.f32 %v5727, %v5735
  %v5752 = vmax.f32 %v5728, %v5736
  %v5753 = vmax.f32 %v5729, %v5737
  %v5754 = vmax.f32 %v5730, %v5738
  %v5755 = vmax.f32 %v5731, %v5739
  %v5756 = vmax.f32 %v5732, %v5740
  %v5757 = vmax.f32 %v5733, %v5741
  %v5758 = vmax.f32 %v5734, %v5742
  %v5759 = vrot.slane %v5493, 7
  %v5760 = vrot.slane %v5494, 7
  %v5761 = vrot.slane %v5495, 7
  %v5762 = vrot.slane %v5496, 7
  %v5763 = vrot.slane %v5497, 7
  %v5764 = vrot.slane %v5498, 7
  %v5765 = vrot.slane %v5499, 7
  %v5766 = vrot.slane %v5500, 7
  %v5775 = vmax.f32 %v5751, %v5759
  %v5776 = vmax.f32 %v5752, %v5760
  %v5777 = vmax.f32 %v5753, %v5761
  %v5778 = vmax.f32 %v5754, %v5762
  %v5779 = vmax.f32 %v5755, %v5763
  %v5780 = vmax.f32 %v5756, %v5764
  %v5781 = vmax.f32 %v5757, %v5765
  %v5782 = vmax.f32 %v5758, %v5766
  %v5783 = vlaneseq
  %v5784 = vshrl.u32 %v5783, 7
  %v5785 = vsub.s32 0, %v5784
  %v5786 = vrot.slane %v5775, %v5785
  %v5787 = vlaneseq
  %v5788 = vshrl.u32 %v5787, 7
  %v5789 = vsub.s32 0, %v5788
  %v5790 = vrot.slane %v5776, %v5789
  %v5791 = vlaneseq
  %v5792 = vshrl.u32 %v5791, 7
  %v5793 = vsub.s32 0, %v5792
  %v5794 = vrot.slane %v5777, %v5793
  %v5795 = vlaneseq
  %v5796 = vshrl.u32 %v5795, 7
  %v5797 = vsub.s32 0, %v5796
  %v5798 = vrot.slane %v5778, %v5797
  %v5799 = vlaneseq
  %v5800 = vshrl.u32 %v5799, 7
  %v5801 = vsub.s32 0, %v5800
  %v5802 = vrot.slane %v5779, %v5801
  %v5803 = vlaneseq
  %v5804 = vshrl.u32 %v5803, 7
  %v5805 = vsub.s32 0, %v5804
  %v5806 = vrot.slane %v5780, %v5805
  %v5807 = vlaneseq
  %v5808 = vshrl.u32 %v5807, 7
  %v5809 = vsub.s32 0, %v5808
  %v5810 = vrot.slane %v5781, %v5809
  %v5811 = vlaneseq
  %v5812 = vshrl.u32 %v5811, 7
  %v5813 = vsub.s32 0, %v5812
  %v5814 = vrot.slane %v5782, %v5813
  %v5815 = vsub.f32 %v5493, %v5786
  %v5816 = vsub.f32 %v5494, %v5790
  %v5817 = vsub.f32 %v5495, %v5794
  %v5818 = vsub.f32 %v5496, %v5798
  %v5819 = vsub.f32 %v5497, %v5802
  %v5820 = vsub.f32 %v5498, %v5806
  %v5821 = vsub.f32 %v5499, %v5810
  %v5822 = vsub.f32 %v5500, %v5814
  %v5823 = vmul.f32 %v5815, 1.442695
  %v5824 = vpow.pop %v5823
  %v5825 = vmul.f32 %v5816, 1.442695
  %v5826 = vpow.pop %v5825
  %v5827 = vmul.f32 %v5817, 1.442695
  %v5828 = vpow.pop %v5827
  %v5829 = vmul.f32 %v5818, 1.442695
  %v5830 = vpow.pop %v5829
  %v5831 = vmul.f32 %v5819, 1.442695
  %v5832 = vpow.pop %v5831
  %v5833 = vmul.f32 %v5820, 1.442695
  %v5834 = vpow.pop %v5833
  %v5835 = vmul.f32 %v5821, 1.442695
  %v5836 = vpow.pop %v5835
  %v5837 = vmul.f32 %v5822, 1.442695
  %v5838 = vpow.pop %v5837
  %v5847 = vrot.slane %v5824, 1
  %v5848 = vrot.slane %v5826, 1
  %v5849 = vrot.slane %v5828, 1
  %v5850 = vrot.slane %v5830, 1
  %v5851 = vrot.slane %v5832, 1
  %v5852 = vrot.slane %v5834, 1
  %v5853 = vrot.slane %v5836, 1
  %v5854 = vrot.slane %v5838, 1
  %v5863 = vadd.f32 %v5824, %v5847
  %v5864 = vadd.f32 %v5826, %v5848
  %v5865 = vadd.f32 %v5828, %v5849
  %v5866 = vadd.f32 %v5830, %v5850
  %v5867 = vadd.f32 %v5832, %v5851
  %v5868 = vadd.f32 %v5834, %v5852
  %v5869 = vadd.f32 %v5836, %v5853
  %v5870 = vadd.f32 %v5838, %v5854
  %v5871 = vrot.slane %v5824, 2
  %v5872 = vrot.slane %v5826, 2
  %v5873 = vrot.slane %v5828, 2
  %v5874 = vrot.slane %v5830, 2
  %v5875 = vrot.slane %v5832, 2
  %v5876 = vrot.slane %v5834, 2
  %v5877 = vrot.slane %v5836, 2
  %v5878 = vrot.slane %v5838, 2
  %v5887 = vadd.f32 %v5863, %v5871
  %v5888 = vadd.f32 %v5864, %v5872
  %v5889 = vadd.f32 %v5865, %v5873
  %v5890 = vadd.f32 %v5866, %v5874
  %v5891 = vadd.f32 %v5867, %v5875
  %v5892 = vadd.f32 %v5868, %v5876
  %v5893 = vadd.f32 %v5869, %v5877
  %v5894 = vadd.f32 %v5870, %v5878
  %v5895 = vrot.slane %v5824, 3
  %v5896 = vrot.slane %v5826, 3
  %v5897 = vrot.slane %v5828, 3
  %v5898 = vrot.slane %v5830, 3
  %v5899 = vrot.slane %v5832, 3
  %v5900 = vrot.slane %v5834, 3
  %v5901 = vrot.slane %v5836, 3
  %v5902 = vrot.slane %v5838, 3
  %v5911 = vadd.f32 %v5887, %v5895
  %v5912 = vadd.f32 %v5888, %v5896
  %v5913 = vadd.f32 %v5889, %v5897
  %v5914 = vadd.f32 %v5890, %v5898
  %v5915 = vadd.f32 %v5891, %v5899
  %v5916 = vadd.f32 %v5892, %v5900
  %v5917 = vadd.f32 %v5893, %v5901
  %v5918 = vadd.f32 %v5894, %v5902
  %v5919 = vrot.slane %v5824, 4
  %v5920 = vrot.slane %v5826, 4
  %v5921 = vrot.slane %v5828, 4
  %v5922 = vrot.slane %v5830, 4
  %v5923 = vrot.slane %v5832, 4
  %v5924 = vrot.slane %v5834, 4
  %v5925 = vrot.slane %v5836, 4
  %v5926 = vrot.slane %v5838, 4
  %v5935 = vadd.f32 %v5911, %v5919
  %v5936 = vadd.f32 %v5912, %v5920
  %v5937 = vadd.f32 %v5913, %v5921
  %v5938 = vadd.f32 %v5914, %v5922
  %v5939 = vadd.f32 %v5915, %v5923
  %v5940 = vadd.f32 %v5916, %v5924
  %v5941 = vadd.f32 %v5917, %v5925
  %v5942 = vadd.f32 %v5918, %v5926
  %v5943 = vrot.slane %v5824, 5
  %v5944 = vrot.slane %v5826, 5
  %v5945 = vrot.slane %v5828, 5
  %v5946 = vrot.slane %v5830, 5
  %v5947 = vrot.slane %v5832, 5
  %v5948 = vrot.slane %v5834, 5
  %v5949 = vrot.slane %v5836, 5
  %v5950 = vrot.slane %v5838, 5
  %v5959 = vadd.f32 %v5935, %v5943
  %v5960 = vadd.f32 %v5936, %v5944
  %v5961 = vadd.f32 %v5937, %v5945
  %v5962 = vadd.f32 %v5938, %v5946
  %v5963 = vadd.f32 %v5939, %v5947
  %v5964 = vadd.f32 %v5940, %v5948
  %v5965 = vadd.f32 %v5941, %v5949
  %v5966 = vadd.f32 %v5942, %v5950
  %v5967 = vrot.slane %v5824, 6
  %v5968 = vrot.slane %v5826, 6
  %v5969 = vrot.slane %v5828, 6
  %v5970 = vrot.slane %v5830, 6
  %v5971 = vrot.slane %v5832, 6
  %v5972 = vrot.slane %v5834, 6
  %v5973 = vrot.slane %v5836, 6
  %v5974 = vrot.slane %v5838, 6
  %v5983 = vadd.f32 %v5959, %v5967
  %v5984 = vadd.f32 %v5960, %v5968
  %v5985 = vadd.f32 %v5961, %v5969
  %v5986 = vadd.f32 %v5962, %v5970
  %v5987 = vadd.f32 %v5963, %v5971
  %v5988 = vadd.f32 %v5964, %v5972
  %v5989 = vadd.f32 %v5965, %v5973
  %v5990 = vadd.f32 %v5966, %v5974
  %v5991 = vrot.slane %v5824, 7
  %v5992 = vrot.slane %v5826, 7
  %v5993 = vrot.slane %v5828, 7
  %v5994 = vrot.slane %v5830, 7
  %v5995 = vrot.slane %v5832, 7
  %v5996 = vrot.slane %v5834, 7
  %v5997 = vrot.slane %v5836, 7
  %v5998 = vrot.slane %v5838, 7
  %v6007 = vadd.f32 %v5983, %v5991
  %v6008 = vadd.f32 %v5984, %v5992
  %v6009 = vadd.f32 %v5985, %v5993
  %v6010 = vadd.f32 %v5986, %v5994
  %v6011 = vadd.f32 %v5987, %v5995
  %v6012 = vadd.f32 %v5988, %v5996
  %v6013 = vadd.f32 %v5989, %v5997
  %v6014 = vadd.f32 %v5990, %v5998
  %v6015 = vlaneseq
  %v6016 = vshrl.u32 %v6015, 7
  %v6017 = vsub.s32 0, %v6016
  %v6018 = vrot.slane %v6007, %v6017
  %v6019 = vlaneseq
  %v6020 = vshrl.u32 %v6019, 7
  %v6021 = vsub.s32 0, %v6020
  %v6022 = vrot.slane %v6008, %v6021
  %v6023 = vlaneseq
  %v6024 = vshrl.u32 %v6023, 7
  %v6025 = vsub.s32 0, %v6024
  %v6026 = vrot.slane %v6009, %v6025
  %v6027 = vlaneseq
  %v6028 = vshrl.u32 %v6027, 7
  %v6029 = vsub.s32 0, %v6028
  %v6030 = vrot.slane %v6010, %v6029
  %v6031 = vlaneseq
  %v6032 = vshrl.u32 %v6031, 7
  %v6033 = vsub.s32 0, %v6032
  %v6034 = vrot.slane %v6011, %v6033
  %v6035 = vlaneseq
  %v6036 = vshrl.u32 %v6035, 7
  %v6037 = vsub.s32 0, %v6036
  %v6038 = vrot.slane %v6012, %v6037
  %v6039 = vlaneseq
  %v6040 = vshrl.u32 %v6039, 7
  %v6041 = vsub.s32 0, %v6040
  %v6042 = vrot.slane %v6013, %v6041
  %v6043 = vlaneseq
  %v6044 = vshrl.u32 %v6043, 7
  %v6045 = vsub.s32 0, %v6044
  %v6046 = vrot.slane %v6014, %v6045
  %v6047 = vrcp.pop %v6018
  %v6048 = vmul.f32 %v5824, %v6047
  %v6049 = vrcp.pop %v6022
  %v6050 = vmul.f32 %v5826, %v6049
  %v6051 = vrcp.pop %v6026
  %v6052 = vmul.f32 %v5828, %v6051
  %v6053 = vrcp.pop %v6030
  %v6054 = vmul.f32 %v5830, %v6053
  %v6055 = vrcp.pop %v6034
  %v6056 = vmul.f32 %v5832, %v6055
  %v6057 = vrcp.pop %v6038
  %v6058 = vmul.f32 %v5834, %v6057
  %v6059 = vrcp.pop %v6042
  %v6060 = vmul.f32 %v5836, %v6059
  %v6061 = vrcp.pop %v6046
  %v6062 = vmul.f32 %v5838, %v6061
  %v6071 = vrot.slane %v5599, 1
  %v6072 = vrot.slane %v5600, 1
  %v6073 = vrot.slane %v5601, 1
  %v6074 = vrot.slane %v5602, 1
  %v6075 = vrot.slane %v5603, 1
  %v6076 = vrot.slane %v5604, 1
  %v6077 = vrot.slane %v5605, 1
  %v6078 = vrot.slane %v5606, 1
  %v6087 = vmax.f32 %v5599, %v6071
  %v6088 = vmax.f32 %v5600, %v6072
  %v6089 = vmax.f32 %v5601, %v6073
  %v6090 = vmax.f32 %v5602, %v6074
  %v6091 = vmax.f32 %v5603, %v6075
  %v6092 = vmax.f32 %v5604, %v6076
  %v6093 = vmax.f32 %v5605, %v6077
  %v6094 = vmax.f32 %v5606, %v6078
  %v6095 = vrot.slane %v5599, 2
  %v6096 = vrot.slane %v5600, 2
  %v6097 = vrot.slane %v5601, 2
  %v6098 = vrot.slane %v5602, 2
  %v6099 = vrot.slane %v5603, 2
  %v6100 = vrot.slane %v5604, 2
  %v6101 = vrot.slane %v5605, 2
  %v6102 = vrot.slane %v5606, 2
  %v6111 = vmax.f32 %v6087, %v6095
  %v6112 = vmax.f32 %v6088, %v6096
  %v6113 = vmax.f32 %v6089, %v6097
  %v6114 = vmax.f32 %v6090, %v6098
  %v6115 = vmax.f32 %v6091, %v6099
  %v6116 = vmax.f32 %v6092, %v6100
  %v6117 = vmax.f32 %v6093, %v6101
  %v6118 = vmax.f32 %v6094, %v6102
  %v6119 = vrot.slane %v5599, 3
  %v6120 = vrot.slane %v5600, 3
  %v6121 = vrot.slane %v5601, 3
  %v6122 = vrot.slane %v5602, 3
  %v6123 = vrot.slane %v5603, 3
  %v6124 = vrot.slane %v5604, 3
  %v6125 = vrot.slane %v5605, 3
  %v6126 = vrot.slane %v5606, 3
  %v6135 = vmax.f32 %v6111, %v6119
  %v6136 = vmax.f32 %v6112, %v6120
  %v6137 = vmax.f32 %v6113, %v6121
  %v6138 = vmax.f32 %v6114, %v6122
  %v6139 = vmax.f32 %v6115, %v6123
  %v6140 = vmax.f32 %v6116, %v6124
  %v6141 = vmax.f32 %v6117, %v6125
  %v6142 = vmax.f32 %v6118, %v6126
  %v6143 = vrot.slane %v5599, 4
  %v6144 = vrot.slane %v5600, 4
  %v6145 = vrot.slane %v5601, 4
  %v6146 = vrot.slane %v5602, 4
  %v6147 = vrot.slane %v5603, 4
  %v6148 = vrot.slane %v5604, 4
  %v6149 = vrot.slane %v5605, 4
  %v6150 = vrot.slane %v5606, 4
  %v6159 = vmax.f32 %v6135, %v6143
  %v6160 = vmax.f32 %v6136, %v6144
  %v6161 = vmax.f32 %v6137, %v6145
  %v6162 = vmax.f32 %v6138, %v6146
  %v6163 = vmax.f32 %v6139, %v6147
  %v6164 = vmax.f32 %v6140, %v6148
  %v6165 = vmax.f32 %v6141, %v6149
  %v6166 = vmax.f32 %v6142, %v6150
  %v6167 = vrot.slane %v5599, 5
  %v6168 = vrot.slane %v5600, 5
  %v6169 = vrot.slane %v5601, 5
  %v6170 = vrot.slane %v5602, 5
  %v6171 = vrot.slane %v5603, 5
  %v6172 = vrot.slane %v5604, 5
  %v6173 = vrot.slane %v5605, 5
  %v6174 = vrot.slane %v5606, 5
  %v6183 = vmax.f32 %v6159, %v6167
  %v6184 = vmax.f32 %v6160, %v6168
  %v6185 = vmax.f32 %v6161, %v6169
  %v6186 = vmax.f32 %v6162, %v6170
  %v6187 = vmax.f32 %v6163, %v6171
  %v6188 = vmax.f32 %v6164, %v6172
  %v6189 = vmax.f32 %v6165, %v6173
  %v6190 = vmax.f32 %v6166, %v6174
  %v6191 = vrot.slane %v5599, 6
  %v6192 = vrot.slane %v5600, 6
  %v6193 = vrot.slane %v5601, 6
  %v6194 = vrot.slane %v5602, 6
  %v6195 = vrot.slane %v5603, 6
  %v6196 = vrot.slane %v5604, 6
  %v6197 = vrot.slane %v5605, 6
  %v6198 = vrot.slane %v5606, 6
  %v6207 = vmax.f32 %v6183, %v6191
  %v6208 = vmax.f32 %v6184, %v6192
  %v6209 = vmax.f32 %v6185, %v6193
  %v6210 = vmax.f32 %v6186, %v6194
  %v6211 = vmax.f32 %v6187, %v6195
  %v6212 = vmax.f32 %v6188, %v6196
  %v6213 = vmax.f32 %v6189, %v6197
  %v6214 = vmax.f32 %v6190, %v6198
  %v6215 = vrot.slane %v5599, 7
  %v6216 = vrot.slane %v5600, 7
  %v6217 = vrot.slane %v5601, 7
  %v6218 = vrot.slane %v5602, 7
  %v6219 = vrot.slane %v5603, 7
  %v6220 = vrot.slane %v5604, 7
  %v6221 = vrot.slane %v5605, 7
  %v6222 = vrot.slane %v5606, 7
  %v6231 = vmax.f32 %v6207, %v6215
  %v6232 = vmax.f32 %v6208, %v6216
  %v6233 = vmax.f32 %v6209, %v6217
  %v6234 = vmax.f32 %v6210, %v6218
  %v6235 = vmax.f32 %v6211, %v6219
  %v6236 = vmax.f32 %v6212, %v6220
  %v6237 = vmax.f32 %v6213, %v6221
  %v6238 = vmax.f32 %v6214, %v6222
  %v6239 = vlaneseq
  %v6240 = vshrl.u32 %v6239, 7
  %v6241 = vsub.s32 0, %v6240
  %v6242 = vrot.slane %v6231, %v6241
  %v6243 = vlaneseq
  %v6244 = vshrl.u32 %v6243, 7
  %v6245 = vsub.s32 0, %v6244
  %v6246 = vrot.slane %v6232, %v6245
  %v6247 = vlaneseq
  %v6248 = vshrl.u32 %v6247, 7
  %v6249 = vsub.s32 0, %v6248
  %v6250 = vrot.slane %v6233, %v6249
  %v6251 = vlaneseq
  %v6252 = vshrl.u32 %v6251, 7
  %v6253 = vsub.s32 0, %v6252
  %v6254 = vrot.slane %v6234, %v6253
  %v6255 = vlaneseq
  %v6256 = vshrl.u32 %v6255, 7
  %v6257 = vsub.s32 0, %v6256
  %v6258 = vrot.slane %v6235, %v6257
  %v6259 = vlaneseq
  %v6260 = vshrl.u32 %v6259, 7
  %v6261 = vsub.s32 0, %v6260
  %v6262 = vrot.slane %v6236, %v6261
  %v6263 = vlaneseq
  %v6264 = vshrl.u32 %v6263, 7
  %v6265 = vsub.s32 0, %v6264
  %v6266 = vrot.slane %v6237, %v6265
  %v6267 = vlaneseq
  %v6268 = vshrl.u32 %v6267, 7
  %v6269 = vsub.s32 0, %v6268
  %v6270 = vrot.slane %v6238, %v6269
  %v6271 = vsub.f32 %v5599, %v6242
  %v6272 = vsub.f32 %v5600, %v6246
  %v6273 = vsub.f32 %v5601, %v6250
  %v6274 = vsub.f32 %v5602, %v6254
  %v6275 = vsub.f32 %v5603, %v6258
  %v6276 = vsub.f32 %v5604, %v6262
  %v6277 = vsub.f32 %v5605, %v6266
  %v6278 = vsub.f32 %v5606, %v6270
  %v6279 = vmul.f32 %v6271, 1.442695
  %v6280 = vpow.pop %v6279
  %v6281 = vmul.f32 %v6272, 1.442695
  %v6282 = vpow.pop %v6281
  %v6283 = vmul.f32 %v6273, 1.442695
  %v6284 = vpow.pop %v6283
  %v6285 = vmul.f32 %v6274, 1.442695
  %v6286 = vpow.pop %v6285
  %v6287 = vmul.f32 %v6275, 1.442695
  %v6288 = vpow.pop %v6287
  %v6289 = vmul.f32 %v6276, 1.442695
  %v6290 = vpow.pop %v6289
  %v6291 = vmul.f32 %v6277, 1.442695
  %v6292 = vpow.pop %v6291
  %v6293 = vmul.f32 %v6278, 1.442695
  %v6294 = vpow.pop %v6293
  %v6303 = vrot.slane %v6280, 1
  %v6304 = vrot.slane %v6282, 1
  %v6305 = vrot.slane %v6284, 1
  %v6306 = vrot.slane %v6286, 1
  %v6307 = vrot.slane %v6288, 1
  %v6308 = vrot.slane %v6290, 1
  %v6309 = vrot.slane %v6292, 1
  %v6310 = vrot.slane %v6294, 1
  %v6319 = vadd.f32 %v6280, %v6303
  %v6320 = vadd.f32 %v6282, %v6304
  %v6321 = vadd.f32 %v6284, %v6305
  %v6322 = vadd.f32 %v6286, %v6306
  %v6323 = vadd.f32 %v6288, %v6307
  %v6324 = vadd.f32 %v6290, %v6308
  %v6325 = vadd.f32 %v6292, %v6309
  %v6326 = vadd.f32 %v6294, %v6310
  %v6327 = vrot.slane %v6280, 2
  %v6328 = vrot.slane %v6282, 2
  %v6329 = vrot.slane %v6284, 2
  %v6330 = vrot.slane %v6286, 2
  %v6331 = vrot.slane %v6288, 2
  %v6332 = vrot.slane %v6290, 2
  %v6333 = vrot.slane %v6292, 2
  %v6334 = vrot.slane %v6294, 2
  %v6343 = vadd.f32 %v6319, %v6327
  %v6344 = vadd.f32 %v6320, %v6328
  %v6345 = vadd.f32 %v6321, %v6329
  %v6346 = vadd.f32 %v6322, %v6330
  %v6347 = vadd.f32 %v6323, %v6331
  %v6348 = vadd.f32 %v6324, %v6332
  %v6349 = vadd.f32 %v6325, %v6333
  %v6350 = vadd.f32 %v6326, %v6334
  %v6351 = vrot.slane %v6280, 3
  %v6352 = vrot.slane %v6282, 3
  %v6353 = vrot.slane %v6284, 3
  %v6354 = vrot.slane %v6286, 3
  %v6355 = vrot.slane %v6288, 3
  %v6356 = vrot.slane %v6290, 3
  %v6357 = vrot.slane %v6292, 3
  %v6358 = vrot.slane %v6294, 3
  %v6367 = vadd.f32 %v6343, %v6351
  %v6368 = vadd.f32 %v6344, %v6352
  %v6369 = vadd.f32 %v6345, %v6353
  %v6370 = vadd.f32 %v6346, %v6354
  %v6371 = vadd.f32 %v6347, %v6355
  %v6372 = vadd.f32 %v6348, %v6356
  %v6373 = vadd.f32 %v6349, %v6357
  %v6374 = vadd.f32 %v6350, %v6358
  %v6375 = vrot.slane %v6280, 4
  %v6376 = vrot.slane %v6282, 4
  %v6377 = vrot.slane %v6284, 4
  %v6378 = vrot.slane %v6286, 4
  %v6379 = vrot.slane %v6288, 4
  %v6380 = vrot.slane %v6290, 4
  %v6381 = vrot.slane %v6292, 4
  %v6382 = vrot.slane %v6294, 4
  %v6391 = vadd.f32 %v6367, %v6375
  %v6392 = vadd.f32 %v6368, %v6376
  %v6393 = vadd.f32 %v6369, %v6377
  %v6394 = vadd.f32 %v6370, %v6378
  %v6395 = vadd.f32 %v6371, %v6379
  %v6396 = vadd.f32 %v6372, %v6380
  %v6397 = vadd.f32 %v6373, %v6381
  %v6398 = vadd.f32 %v6374, %v6382
  %v6399 = vrot.slane %v6280, 5
  %v6400 = vrot.slane %v6282, 5
  %v6401 = vrot.slane %v6284, 5
  %v6402 = vrot.slane %v6286, 5
  %v6403 = vrot.slane %v6288, 5
  %v6404 = vrot.slane %v6290, 5
  %v6405 = vrot.slane %v6292, 5
  %v6406 = vrot.slane %v6294, 5
  %v6415 = vadd.f32 %v6391, %v6399
  %v6416 = vadd.f32 %v6392, %v6400
  %v6417 = vadd.f32 %v6393, %v6401
  %v6418 = vadd.f32 %v6394, %v6402
  %v6419 = vadd.f32 %v6395, %v6403
  %v6420 = vadd.f32 %v6396, %v6404
  %v6421 = vadd.f32 %v6397, %v6405
  %v6422 = vadd.f32 %v6398, %v6406
  %v6423 = vrot.slane %v6280, 6
  %v6424 = vrot.slane %v6282, 6
  %v6425 = vrot.slane %v6284, 6
  %v6426 = vrot.slane %v6286, 6
  %v6427 = vrot.slane %v6288, 6
  %v6428 = vrot.slane %v6290, 6
  %v6429 = vrot.slane %v6292, 6
  %v6430 = vrot.slane %v6294, 6
  %v6439 = vadd.f32 %v6415, %v6423
  %v6440 = vadd.f32 %v6416, %v6424
  %v6441 = vadd.f32 %v6417, %v6425
  %v6442 = vadd.f32 %v6418, %v6426
  %v6443 = vadd.f32 %v6419, %v6427
  %v6444 = vadd.f32 %v6420, %v6428
  %v6445 = vadd.f32 %v6421, %v6429
  %v6446 = vadd.f32 %v6422, %v6430
  %v6447 = vrot.slane %v6280, 7
  %v6448 = vrot.slane %v6282, 7
  %v6449 = vrot.slane %v6284, 7
  %v6450 = vrot.slane %v6286, 7
  %v6451 = vrot.slane %v6288, 7
  %v6452 = vrot.slane %v6290, 7
  %v6453 = vrot.slane %v6292, 7
  %v6454 = vrot.slane %v6294, 7
  %v6463 = vadd.f32 %v6439, %v6447
  %v6464 = vadd.f32 %v6440, %v6448
  %v6465 = vadd.f32 %v6441, %v6449
  %v6466 = vadd.f32 %v6442, %v6450
  %v6467 = vadd.f32 %v6443, %v6451
  %v6468 = vadd.f32 %v6444, %v6452
  %v6469 = vadd.f32 %v6445, %v6453
  %v6470 = vadd.f32 %v6446, %v6454
  %v6471 = vlaneseq
  %v6472 = vshrl.u32 %v6471, 7
  %v6473 = vsub.s32 0, %v6472
  %v6474 = vrot.slane %v6463, %v6473
  %v6475 = vlaneseq
  %v6476 = vshrl.u32 %v6475, 7
  %v6477 = vsub.s32 0, %v6476
  %v6478 = vrot.slane %v6464, %v6477
  %v6479 = vlaneseq
  %v6480 = vshrl.u32 %v6479, 7
  %v6481 = vsub.s32 0, %v6480
  %v6482 = vrot.slane %v6465, %v6481
  %v6483 = vlaneseq
  %v6484 = vshrl.u32 %v6483, 7
  %v6485 = vsub.s32 0, %v6484
  %v6486 = vrot.slane %v6466, %v6485
  %v6487 = vlaneseq
  %v6488 = vshrl.u32 %v6487, 7
  %v6489 = vsub.s32 0, %v6488
  %v6490 = vrot.slane %v6467, %v6489
  %v6491 = vlaneseq
  %v6492 = vshrl.u32 %v6491, 7
  %v6493 = vsub.s32 0, %v6492
  %v6494 = vrot.slane %v6468, %v6493
  %v6495 = vlaneseq
  %v6496 = vshrl.u32 %v6495, 7
  %v6497 = vsub.s32 0, %v6496
  %v6498 = vrot.slane %v6469, %v6497
  %v6499 = vlaneseq
  %v6500 = vshrl.u32 %v6499, 7
  %v6501 = vsub.s32 0, %v6500
  %v6502 = vrot.slane %v6470, %v6501
  %v6503 = vrcp.pop %v6474
  %v6504 = vmul.f32 %v6280, %v6503
  %v6505 = vrcp.pop %v6478
  %v6506 = vmul.f32 %v6282, %v6505
  %v6507 = vrcp.pop %v6482
  %v6508 = vmul.f32 %v6284, %v6507
  %v6509 = vrcp.pop %v6486
  %v6510 = vmul.f32 %v6286, %v6509
  %v6511 = vrcp.pop %v6490
  %v6512 = vmul.f32 %v6288, %v6511
  %v6513 = vrcp.pop %v6494
  %v6514 = vmul.f32 %v6290, %v6513
  %v6515 = vrcp.pop %v6498
  %v6516 = vmul.f32 %v6292, %v6515
  %v6517 = vrcp.pop %v6502
  %v6518 = vmul.f32 %v6294, %v6517
  %6519 = vst.msk [vmem:[%s4] sm:$0xff] %vm2486, %v6048
  %6520 = vst.msk [vmem:[%s4 + $0x8] sm:$0xff] %vm2486, %v6050
  %6521 = vst.msk [vmem:[%s4 + $0x10] sm:$0xff] %vm2486, %v6052
  %6522 = vst.msk [vmem:[%s4 + $0x18] sm:$0xff] %vm2486, %v6054
  %6523 = vst.msk [vmem:[%s4 + $0x20] sm:$0xff] %vm2486, %v6056
  %6524 = vst.msk [vmem:[%s4 + $0x28] sm:$0xff] %vm2486, %v6058
  %6525 = vst.msk [vmem:[%s4 + $0x30] sm:$0xff] %vm2486, %v6060
  %6526 = vst.msk [vmem:[%s4 + $0x38] sm:$0xff] %vm2486, %v6062
  %s6527 = scalar_lea.vmem %s4, 64
  %6528 = vst.msk [vmem:[%s6527] sm:$0xff] %vm2486, %v6504
  %6529 = vst.msk [vmem:[%s6527 + $0x8] sm:$0xff] %vm2486, %v6506
  %6530 = vst.msk [vmem:[%s6527 + $0x10] sm:$0xff] %vm2486, %v6508
  %6531 = vst.msk [vmem:[%s6527 + $0x18] sm:$0xff] %vm2486, %v6510
  %6532 = vst.msk [vmem:[%s6527 + $0x20] sm:$0xff] %vm2486, %v6512
  %6533 = vst.msk [vmem:[%s6527 + $0x28] sm:$0xff] %vm2486, %v6514
  %6534 = vst.msk [vmem:[%s6527 + $0x30] sm:$0xff] %vm2486, %v6516
  %6535 = vst.msk [vmem:[%s6527 + $0x38] sm:$0xff] %vm2486, %v6518
  %v6536 = vld [vmem:[#allocation2 + $0x1c0] sm:$0xff]
  %v6537 = vld [vmem:[#allocation2 + $0x1c8] sm:$0xff]
  %v6538 = vld [vmem:[#allocation2 + $0x1d0] sm:$0xf]
  %v6539 = vld [vmem:[#allocation2 + $0x260] sm:$0xff]
  %v6540 = vld [vmem:[#allocation2 + $0x268] sm:$0xff]
  %v6541 = vld [vmem:[#allocation2 + $0x270] sm:$0xf]
  %v6542 = vlaneseq
  %v6543 = vshrl.u32 %v6542, 7
  %v6544 = vsub.s32 0, %v6543
  %v6545 = vrot.slane %v6048, %v6544
  %v6546 = vlaneseq
  %v6547 = vshrl.u32 %v6546, 7
  %v6548 = vsub.s32 0, %v6547
  %v6549 = vrot.slane %v6050, %v6548
  %v6550 = vlaneseq
  %v6551 = vshrl.u32 %v6550, 7
  %v6552 = vsub.s32 0, %v6551
  %v6553 = vrot.slane %v6052, %v6552
  %v6554 = vlaneseq
  %v6555 = vshrl.u32 %v6554, 7
  %v6556 = vsub.s32 0, %v6555
  %v6557 = vrot.slane %v6054, %v6556
  %v6558 = vlaneseq
  %v6559 = vshrl.u32 %v6558, 7
  %v6560 = vsub.s32 0, %v6559
  %v6561 = vrot.slane %v6056, %v6560
  %v6562 = vlaneseq
  %v6563 = vshrl.u32 %v6562, 7
  %v6564 = vsub.s32 0, %v6563
  %v6565 = vrot.slane %v6058, %v6564
  %v6566 = vlaneseq
  %v6567 = vshrl.u32 %v6566, 7
  %v6568 = vsub.s32 0, %v6567
  %v6569 = vrot.slane %v6060, %v6568
  %v6570 = vlaneseq
  %v6571 = vshrl.u32 %v6570, 7
  %v6572 = vsub.s32 0, %v6571
  %v6573 = vrot.slane %v6062, %v6572
  %v6574 = vmul.f32 %v6545, %v6536
  %v6575 = vmul.f32 %v6545, %v6537
  %v6576 = vmul.f32 %v6545, %v6538
  %v6577 = vmul.f32 %v6549, %v6536
  %v6578 = vmul.f32 %v6549, %v6537
  %v6579 = vmul.f32 %v6549, %v6538
  %v6580 = vmul.f32 %v6553, %v6536
  %v6581 = vmul.f32 %v6553, %v6537
  %v6582 = vmul.f32 %v6553, %v6538
  %v6583 = vmul.f32 %v6557, %v6536
  %v6584 = vmul.f32 %v6557, %v6537
  %v6585 = vmul.f32 %v6557, %v6538
  %v6586 = vmul.f32 %v6561, %v6536
  %v6587 = vmul.f32 %v6561, %v6537
  %v6588 = vmul.f32 %v6561, %v6538
  %v6589 = vmul.f32 %v6565, %v6536
  %v6590 = vmul.f32 %v6565, %v6537
  %v6591 = vmul.f32 %v6565, %v6538
  %v6592 = vmul.f32 %v6569, %v6536
  %v6593 = vmul.f32 %v6569, %v6537
  %v6594 = vmul.f32 %v6569, %v6538
  %v6595 = vmul.f32 %v6573, %v6536
  %v6596 = vmul.f32 %v6573, %v6537
  %v6597 = vmul.f32 %v6573, %v6538
  %v6598 = vadd.f32 %v6574, 0.0
  %v6599 = vadd.f32 %v6575, 0.0
  %v6600 = vadd.f32 %v6576, 0.0
  %v6601 = vadd.f32 %v6577, 0.0
  %v6602 = vadd.f32 %v6578, 0.0
  %v6603 = vadd.f32 %v6579, 0.0
  %v6604 = vadd.f32 %v6580, 0.0
  %v6605 = vadd.f32 %v6581, 0.0
  %v6606 = vadd.f32 %v6582, 0.0
  %v6607 = vadd.f32 %v6583, 0.0
  %v6608 = vadd.f32 %v6584, 0.0
  %v6609 = vadd.f32 %v6585, 0.0
  %v6610 = vadd.f32 %v6586, 0.0
  %v6611 = vadd.f32 %v6587, 0.0
  %v6612 = vadd.f32 %v6588, 0.0
  %v6613 = vadd.f32 %v6589, 0.0
  %v6614 = vadd.f32 %v6590, 0.0
  %v6615 = vadd.f32 %v6591, 0.0
  %v6616 = vadd.f32 %v6592, 0.0
  %v6617 = vadd.f32 %v6593, 0.0
  %v6618 = vadd.f32 %v6594, 0.0
  %v6619 = vadd.f32 %v6595, 0.0
  %v6620 = vadd.f32 %v6596, 0.0
  %v6621 = vadd.f32 %v6597, 0.0
  %v6622 = vlaneseq
  %v6623 = vshrl.u32 %v6622, 7
  %v6624 = vsub.s32 0, %v6623
  %v6625 = vrot.slane %v6504, %v6624
  %v6626 = vlaneseq
  %v6627 = vshrl.u32 %v6626, 7
  %v6628 = vsub.s32 0, %v6627
  %v6629 = vrot.slane %v6506, %v6628
  %v6630 = vlaneseq
  %v6631 = vshrl.u32 %v6630, 7
  %v6632 = vsub.s32 0, %v6631
  %v6633 = vrot.slane %v6508, %v6632
  %v6634 = vlaneseq
  %v6635 = vshrl.u32 %v6634, 7
  %v6636 = vsub.s32 0, %v6635
  %v6637 = vrot.slane %v6510, %v6636
  %v6638 = vlaneseq
  %v6639 = vshrl.u32 %v6638, 7
  %v6640 = vsub.s32 0, %v6639
  %v6641 = vrot.slane %v6512, %v6640
  %v6642 = vlaneseq
  %v6643 = vshrl.u32 %v6642, 7
  %v6644 = vsub.s32 0, %v6643
  %v6645 = vrot.slane %v6514, %v6644
  %v6646 = vlaneseq
  %v6647 = vshrl.u32 %v6646, 7
  %v6648 = vsub.s32 0, %v6647
  %v6649 = vrot.slane %v6516, %v6648
  %v6650 = vlaneseq
  %v6651 = vshrl.u32 %v6650, 7
  %v6652 = vsub.s32 0, %v6651
  %v6653 = vrot.slane %v6518, %v6652
  %v6654 = vmul.f32 %v6625, %v6539
  %v6655 = vmul.f32 %v6625, %v6540
  %v6656 = vmul.f32 %v6625, %v6541
  %v6657 = vmul.f32 %v6629, %v6539
  %v6658 = vmul.f32 %v6629, %v6540
  %v6659 = vmul.f32 %v6629, %v6541
  %v6660 = vmul.f32 %v6633, %v6539
  %v6661 = vmul.f32 %v6633, %v6540
  %v6662 = vmul.f32 %v6633, %v6541
  %v6663 = vmul.f32 %v6637, %v6539
  %v6664 = vmul.f32 %v6637, %v6540
  %v6665 = vmul.f32 %v6637, %v6541
  %v6666 = vmul.f32 %v6641, %v6539
  %v6667 = vmul.f32 %v6641, %v6540
  %v6668 = vmul.f32 %v6641, %v6541
  %v6669 = vmul.f32 %v6645, %v6539
  %v6670 = vmul.f32 %v6645, %v6540
  %v6671 = vmul.f32 %v6645, %v6541
  %v6672 = vmul.f32 %v6649, %v6539
  %v6673 = vmul.f32 %v6649, %v6540
  %v6674 = vmul.f32 %v6649, %v6541
  %v6675 = vmul.f32 %v6653, %v6539
  %v6676 = vmul.f32 %v6653, %v6540
  %v6677 = vmul.f32 %v6653, %v6541
  %v6678 = vadd.f32 %v6654, 0.0
  %v6679 = vadd.f32 %v6655, 0.0
  %v6680 = vadd.f32 %v6656, 0.0
  %v6681 = vadd.f32 %v6657, 0.0
  %v6682 = vadd.f32 %v6658, 0.0
  %v6683 = vadd.f32 %v6659, 0.0
  %v6684 = vadd.f32 %v6660, 0.0
  %v6685 = vadd.f32 %v6661, 0.0
  %v6686 = vadd.f32 %v6662, 0.0
  %v6687 = vadd.f32 %v6663, 0.0
  %v6688 = vadd.f32 %v6664, 0.0
  %v6689 = vadd.f32 %v6665, 0.0
  %v6690 = vadd.f32 %v6666, 0.0
  %v6691 = vadd.f32 %v6667, 0.0
  %v6692 = vadd.f32 %v6668, 0.0
  %v6693 = vadd.f32 %v6669, 0.0
  %v6694 = vadd.f32 %v6670, 0.0
  %v6695 = vadd.f32 %v6671, 0.0
  %v6696 = vadd.f32 %v6672, 0.0
  %v6697 = vadd.f32 %v6673, 0.0
  %v6698 = vadd.f32 %v6674, 0.0
  %v6699 = vadd.f32 %v6675, 0.0
  %v6700 = vadd.f32 %v6676, 0.0
  %v6701 = vadd.f32 %v6677, 0.0
  %v6702 = vld [vmem:[#allocation2 + $0x1d4] sm:$0xff]
  %v6703 = vld [vmem:[#allocation2 + $0x1dc] sm:$0xff]
  %v6704 = vld [vmem:[#allocation2 + $0x1e4] sm:$0xf]
  %v6705 = vld [vmem:[#allocation2 + $0x274] sm:$0xff]
  %v6706 = vld [vmem:[#allocation2 + $0x27c] sm:$0xff]
  %v6707 = vld [vmem:[#allocation2 + $0x284] sm:$0xf]
  %v6708 = vlaneseq
  %v6709 = vshrl.u32 %v6708, 7
  %v6710 = vsub.s32 1, %v6709
  %v6711 = vrot.slane %v6048, %v6710
  %v6712 = vlaneseq
  %v6713 = vshrl.u32 %v6712, 7
  %v6714 = vsub.s32 1, %v6713
  %v6715 = vrot.slane %v6050, %v6714
  %v6716 = vlaneseq
  %v6717 = vshrl.u32 %v6716, 7
  %v6718 = vsub.s32 1, %v6717
  %v6719 = vrot.slane %v6052, %v6718
  %v6720 = vlaneseq
  %v6721 = vshrl.u32 %v6720, 7
  %v6722 = vsub.s32 1, %v6721
  %v6723 = vrot.slane %v6054, %v6722
  %v6724 = vlaneseq
  %v6725 = vshrl.u32 %v6724, 7
  %v6726 = vsub.s32 1, %v6725
  %v6727 = vrot.slane %v6056, %v6726
  %v6728 = vlaneseq
  %v6729 = vshrl.u32 %v6728, 7
  %v6730 = vsub.s32 1, %v6729
  %v6731 = vrot.slane %v6058, %v6730
  %v6732 = vlaneseq
  %v6733 = vshrl.u32 %v6732, 7
  %v6734 = vsub.s32 1, %v6733
  %v6735 = vrot.slane %v6060, %v6734
  %v6736 = vlaneseq
  %v6737 = vshrl.u32 %v6736, 7
  %v6738 = vsub.s32 1, %v6737
  %v6739 = vrot.slane %v6062, %v6738
  %v6740 = vmul.f32 %v6711, %v6702
  %v6741 = vmul.f32 %v6711, %v6703
  %v6742 = vmul.f32 %v6711, %v6704
  %v6743 = vmul.f32 %v6715, %v6702
  %v6744 = vmul.f32 %v6715, %v6703
  %v6745 = vmul.f32 %v6715, %v6704
  %v6746 = vmul.f32 %v6719, %v6702
  %v6747 = vmul.f32 %v6719, %v6703
  %v6748 = vmul.f32 %v6719, %v6704
  %v6749 = vmul.f32 %v6723, %v6702
  %v6750 = vmul.f32 %v6723, %v6703
  %v6751 = vmul.f32 %v6723, %v6704
  %v6752 = vmul.f32 %v6727, %v6702
  %v6753 = vmul.f32 %v6727, %v6703
  %v6754 = vmul.f32 %v6727, %v6704
  %v6755 = vmul.f32 %v6731, %v6702
  %v6756 = vmul.f32 %v6731, %v6703
  %v6757 = vmul.f32 %v6731, %v6704
  %v6758 = vmul.f32 %v6735, %v6702
  %v6759 = vmul.f32 %v6735, %v6703
  %v6760 = vmul.f32 %v6735, %v6704
  %v6761 = vmul.f32 %v6739, %v6702
  %v6762 = vmul.f32 %v6739, %v6703
  %v6763 = vmul.f32 %v6739, %v6704
  %v6764 = vadd.f32 %v6598, %v6740
  %v6765 = vadd.f32 %v6599, %v6741
  %v6766 = vadd.f32 %v6600, %v6742
  %v6767 = vadd.f32 %v6601, %v6743
  %v6768 = vadd.f32 %v6602, %v6744
  %v6769 = vadd.f32 %v6603, %v6745
  %v6770 = vadd.f32 %v6604, %v6746
  %v6771 = vadd.f32 %v6605, %v6747
  %v6772 = vadd.f32 %v6606, %v6748
  %v6773 = vadd.f32 %v6607, %v6749
  %v6774 = vadd.f32 %v6608, %v6750
  %v6775 = vadd.f32 %v6609, %v6751
  %v6776 = vadd.f32 %v6610, %v6752
  %v6777 = vadd.f32 %v6611, %v6753
  %v6778 = vadd.f32 %v6612, %v6754
  %v6779 = vadd.f32 %v6613, %v6755
  %v6780 = vadd.f32 %v6614, %v6756
  %v6781 = vadd.f32 %v6615, %v6757
  %v6782 = vadd.f32 %v6616, %v6758
  %v6783 = vadd.f32 %v6617, %v6759
  %v6784 = vadd.f32 %v6618, %v6760
  %v6785 = vadd.f32 %v6619, %v6761
  %v6786 = vadd.f32 %v6620, %v6762
  %v6787 = vadd.f32 %v6621, %v6763
  %v6788 = vlaneseq
  %v6789 = vshrl.u32 %v6788, 7
  %v6790 = vsub.s32 1, %v6789
  %v6791 = vrot.slane %v6504, %v6790
  %v6792 = vlaneseq
  %v6793 = vshrl.u32 %v6792, 7
  %v6794 = vsub.s32 1, %v6793
  %v6795 = vrot.slane %v6506, %v6794
  %v6796 = vlaneseq
  %v6797 = vshrl.u32 %v6796, 7
  %v6798 = vsub.s32 1, %v6797
  %v6799 = vrot.slane %v6508, %v6798
  %v6800 = vlaneseq
  %v6801 = vshrl.u32 %v6800, 7
  %v6802 = vsub.s32 1, %v6801
  %v6803 = vrot.slane %v6510, %v6802
  %v6804 = vlaneseq
  %v6805 = vshrl.u32 %v6804, 7
  %v6806 = vsub.s32 1, %v6805
  %v6807 = vrot.slane %v6512, %v6806
  %v6808 = vlaneseq
  %v6809 = vshrl.u32 %v6808, 7
  %v6810 = vsub.s32 1, %v6809
  %v6811 = vrot.slane %v6514, %v6810
  %v6812 = vlaneseq
  %v6813 = vshrl.u32 %v6812, 7
  %v6814 = vsub.s32 1, %v6813
  %v6815 = vrot.slane %v6516, %v6814
  %v6816 = vlaneseq
  %v6817 = vshrl.u32 %v6816, 7
  %v6818 = vsub.s32 1, %v6817
  %v6819 = vrot.slane %v6518, %v6818
  %v6820 = vmul.f32 %v6791, %v6705
  %v6821 = vmul.f32 %v6791, %v6706
  %v6822 = vmul.f32 %v6791, %v6707
  %v6823 = vmul.f32 %v6795, %v6705
  %v6824 = vmul.f32 %v6795, %v6706
  %v6825 = vmul.f32 %v6795, %v6707
  %v6826 = vmul.f32 %v6799, %v6705
  %v6827 = vmul.f32 %v6799, %v6706
  %v6828 = vmul.f32 %v6799, %v6707
  %v6829 = vmul.f32 %v6803, %v6705
  %v6830 = vmul.f32 %v6803, %v6706
  %v6831 = vmul.f32 %v6803, %v6707
  %v6832 = vmul.f32 %v6807, %v6705
  %v6833 = vmul.f32 %v6807, %v6706
  %v6834 = vmul.f32 %v6807, %v6707
  %v6835 = vmul.f32 %v6811, %v6705
  %v6836 = vmul.f32 %v6811, %v6706
  %v6837 = vmul.f32 %v6811, %v6707
  %v6838 = vmul.f32 %v6815, %v6705
  %v6839 = vmul.f32 %v6815, %v6706
  %v6840 = vmul.f32 %v6815, %v6707
  %v6841 = vmul.f32 %v6819, %v6705
  %v6842 = vmul.f32 %v6819, %v6706
  %v6843 = vmul.f32 %v6819, %v6707
  %v6844 = vadd.f32 %v6678, %v6820
  %v6845 = vadd.f32 %v6679, %v6821
  %v6846 = vadd.f32 %v6680, %v6822
  %v6847 = vadd.f32 %v6681, %v6823
  %v6848 = vadd.f32 %v6682, %v6824
  %v6849 = vadd.f32 %v6683, %v6825
  %v6850 = vadd.f32 %v6684, %v6826
  %v6851 = vadd.f32 %v6685, %v6827
  %v6852 = vadd.f32 %v6686, %v6828
  %v6853 = vadd.f32 %v6687, %v6829
  %v6854 = vadd.f32 %v6688, %v6830
  %v6855 = vadd.f32 %v6689, %v6831
  %v6856 = vadd.f32 %v6690, %v6832
  %v6857 = vadd.f32 %v6691, %v6833
  %v6858 = vadd.f32 %v6692, %v6834
  %v6859 = vadd.f32 %v6693, %v6835
  %v6860 = vadd.f32 %v6694, %v6836
  %v6861 = vadd.f32 %v6695, %v6837
  %v6862 = vadd.f32 %v6696, %v6838
  %v6863 = vadd.f32 %v6697, %v6839
  %v6864 = vadd.f32 %v6698, %v6840
  %v6865 = vadd.f32 %v6699, %v6841
  %v6866 = vadd.f32 %v6700, %v6842
  %v6867 = vadd.f32 %v6701, %v6843
  %v6868 = vld [vmem:[#allocation2 + $0x1e8] sm:$0xff]
  %v6869 = vld [vmem:[#allocation2 + $0x1f0] sm:$0xff]
  %v6870 = vld [vmem:[#allocation2 + $0x1f8] sm:$0xf]
  %v6871 = vld [vmem:[#allocation2 + $0x288] sm:$0xff]
  %v6872 = vld [vmem:[#allocation2 + $0x290] sm:$0xff]
  %v6873 = vld [vmem:[#allocation2 + $0x298] sm:$0xf]
  %v6874 = vlaneseq
  %v6875 = vshrl.u32 %v6874, 7
  %v6876 = vsub.s32 2, %v6875
  %v6877 = vrot.slane %v6048, %v6876
  %v6878 = vlaneseq
  %v6879 = vshrl.u32 %v6878, 7
  %v6880 = vsub.s32 2, %v6879
  %v6881 = vrot.slane %v6050, %v6880
  %v6882 = vlaneseq
  %v6883 = vshrl.u32 %v6882, 7
  %v6884 = vsub.s32 2, %v6883
  %v6885 = vrot.slane %v6052, %v6884
  %v6886 = vlaneseq
  %v6887 = vshrl.u32 %v6886, 7
  %v6888 = vsub.s32 2, %v6887
  %v6889 = vrot.slane %v6054, %v6888
  %v6890 = vlaneseq
  %v6891 = vshrl.u32 %v6890, 7
  %v6892 = vsub.s32 2, %v6891
  %v6893 = vrot.slane %v6056, %v6892
  %v6894 = vlaneseq
  %v6895 = vshrl.u32 %v6894, 7
  %v6896 = vsub.s32 2, %v6895
  %v6897 = vrot.slane %v6058, %v6896
  %v6898 = vlaneseq
  %v6899 = vshrl.u32 %v6898, 7
  %v6900 = vsub.s32 2, %v6899
  %v6901 = vrot.slane %v6060, %v6900
  %v6902 = vlaneseq
  %v6903 = vshrl.u32 %v6902, 7
  %v6904 = vsub.s32 2, %v6903
  %v6905 = vrot.slane %v6062, %v6904
  %v6906 = vmul.f32 %v6877, %v6868
  %v6907 = vmul.f32 %v6877, %v6869
  %v6908 = vmul.f32 %v6877, %v6870
  %v6909 = vmul.f32 %v6881, %v6868
  %v6910 = vmul.f32 %v6881, %v6869
  %v6911 = vmul.f32 %v6881, %v6870
  %v6912 = vmul.f32 %v6885, %v6868
  %v6913 = vmul.f32 %v6885, %v6869
  %v6914 = vmul.f32 %v6885, %v6870
  %v6915 = vmul.f32 %v6889, %v6868
  %v6916 = vmul.f32 %v6889, %v6869
  %v6917 = vmul.f32 %v6889, %v6870
  %v6918 = vmul.f32 %v6893, %v6868
  %v6919 = vmul.f32 %v6893, %v6869
  %v6920 = vmul.f32 %v6893, %v6870
  %v6921 = vmul.f32 %v6897, %v6868
  %v6922 = vmul.f32 %v6897, %v6869
  %v6923 = vmul.f32 %v6897, %v6870
  %v6924 = vmul.f32 %v6901, %v6868
  %v6925 = vmul.f32 %v6901, %v6869
  %v6926 = vmul.f32 %v6901, %v6870
  %v6927 = vmul.f32 %v6905, %v6868
  %v6928 = vmul.f32 %v6905, %v6869
  %v6929 = vmul.f32 %v6905, %v6870
  %v6930 = vadd.f32 %v6764, %v6906
  %v6931 = vadd.f32 %v6765, %v6907
  %v6932 = vadd.f32 %v6766, %v6908
  %v6933 = vadd.f32 %v6767, %v6909
  %v6934 = vadd.f32 %v6768, %v6910
  %v6935 = vadd.f32 %v6769, %v6911
  %v6936 = vadd.f32 %v6770, %v6912
  %v6937 = vadd.f32 %v6771, %v6913
  %v6938 = vadd.f32 %v6772, %v6914
  %v6939 = vadd.f32 %v6773, %v6915
  %v6940 = vadd.f32 %v6774, %v6916
  %v6941 = vadd.f32 %v6775, %v6917
  %v6942 = vadd.f32 %v6776, %v6918
  %v6943 = vadd.f32 %v6777, %v6919
  %v6944 = vadd.f32 %v6778, %v6920
  %v6945 = vadd.f32 %v6779, %v6921
  %v6946 = vadd.f32 %v6780, %v6922
  %v6947 = vadd.f32 %v6781, %v6923
  %v6948 = vadd.f32 %v6782, %v6924
  %v6949 = vadd.f32 %v6783, %v6925
  %v6950 = vadd.f32 %v6784, %v6926
  %v6951 = vadd.f32 %v6785, %v6927
  %v6952 = vadd.f32 %v6786, %v6928
  %v6953 = vadd.f32 %v6787, %v6929
  %v6954 = vlaneseq
  %v6955 = vshrl.u32 %v6954, 7
  %v6956 = vsub.s32 2, %v6955
  %v6957 = vrot.slane %v6504, %v6956
  %v6958 = vlaneseq
  %v6959 = vshrl.u32 %v6958, 7
  %v6960 = vsub.s32 2, %v6959
  %v6961 = vrot.slane %v6506, %v6960
  %v6962 = vlaneseq
  %v6963 = vshrl.u32 %v6962, 7
  %v6964 = vsub.s32 2, %v6963
  %v6965 = vrot.slane %v6508, %v6964
  %v6966 = vlaneseq
  %v6967 = vshrl.u32 %v6966, 7
  %v6968 = vsub.s32 2, %v6967
  %v6969 = vrot.slane %v6510, %v6968
  %v6970 = vlaneseq
  %v6971 = vshrl.u32 %v6970, 7
  %v6972 = vsub.s32 2, %v6971
  %v6973 = vrot.slane %v6512, %v6972
  %v6974 = vlaneseq
  %v6975 = vshrl.u32 %v6974, 7
  %v6976 = vsub.s32 2, %v6975
  %v6977 = vrot.slane %v6514, %v6976
  %v6978 = vlaneseq
  %v6979 = vshrl.u32 %v6978, 7
  %v6980 = vsub.s32 2, %v6979
  %v6981 = vrot.slane %v6516, %v6980
  %v6982 = vlaneseq
  %v6983 = vshrl.u32 %v6982, 7
  %v6984 = vsub.s32 2, %v6983
  %v6985 = vrot.slane %v6518, %v6984
  %v6986 = vmul.f32 %v6957, %v6871
  %v6987 = vmul.f32 %v6957, %v6872
  %v6988 = vmul.f32 %v6957, %v6873
  %v6989 = vmul.f32 %v6961, %v6871
  %v6990 = vmul.f32 %v6961, %v6872
  %v6991 = vmul.f32 %v6961, %v6873
  %v6992 = vmul.f32 %v6965, %v6871
  %v6993 = vmul.f32 %v6965, %v6872
  %v6994 = vmul.f32 %v6965, %v6873
  %v6995 = vmul.f32 %v6969, %v6871
  %v6996 = vmul.f32 %v6969, %v6872
  %v6997 = vmul.f32 %v6969, %v6873
  %v6998 = vmul.f32 %v6973, %v6871
  %v6999 = vmul.f32 %v6973, %v6872
  %v7000 = vmul.f32 %v6973, %v6873
  %v7001 = vmul.f32 %v6977, %v6871
  %v7002 = vmul.f32 %v6977, %v6872
  %v7003 = vmul.f32 %v6977, %v6873
  %v7004 = vmul.f32 %v6981, %v6871
  %v7005 = vmul.f32 %v6981, %v6872
  %v7006 = vmul.f32 %v6981, %v6873
  %v7007 = vmul.f32 %v6985, %v6871
  %v7008 = vmul.f32 %v6985, %v6872
  %v7009 = vmul.f32 %v6985, %v6873
  %v7010 = vadd.f32 %v6844, %v6986
  %v7011 = vadd.f32 %v6845, %v6987
  %v7012 = vadd.f32 %v6846, %v6988
  %v7013 = vadd.f32 %v6847, %v6989
  %v7014 = vadd.f32 %v6848, %v6990
  %v7015 = vadd.f32 %v6849, %v6991
  %v7016 = vadd.f32 %v6850, %v6992
  %v7017 = vadd.f32 %v6851, %v6993
  %v7018 = vadd.f32 %v6852, %v6994
  %v7019 = vadd.f32 %v6853, %v6995
  %v7020 = vadd.f32 %v6854, %v6996
  %v7021 = vadd.f32 %v6855, %v6997
  %v7022 = vadd.f32 %v6856, %v6998
  %v7023 = vadd.f32 %v6857, %v6999
  %v7024 = vadd.f32 %v6858, %v7000
  %v7025 = vadd.f32 %v6859, %v7001
  %v7026 = vadd.f32 %v6860, %v7002
  %v7027 = vadd.f32 %v6861, %v7003
  %v7028 = vadd.f32 %v6862, %v7004
  %v7029 = vadd.f32 %v6863, %v7005
  %v7030 = vadd.f32 %v6864, %v7006
  %v7031 = vadd.f32 %v6865, %v7007
  %v7032 = vadd.f32 %v6866, %v7008
  %v7033 = vadd.f32 %v6867, %v7009
  %v7034 = vld [vmem:[#allocation2 + $0x1fc] sm:$0xff]
  %v7035 = vld [vmem:[#allocation2 + $0x204] sm:$0xff]
  %v7036 = vld [vmem:[#allocation2 + $0x20c] sm:$0xf]
  %v7037 = vld [vmem:[#allocation2 + $0x29c] sm:$0xff]
  %v7038 = vld [vmem:[#allocation2 + $0x2a4] sm:$0xff]
  %v7039 = vld [vmem:[#allocation2 + $0x2ac] sm:$0xf]
  %v7040 = vlaneseq
  %v7041 = vshrl.u32 %v7040, 7
  %v7042 = vsub.s32 3, %v7041
  %v7043 = vrot.slane %v6048, %v7042
  %v7044 = vlaneseq
  %v7045 = vshrl.u32 %v7044, 7
  %v7046 = vsub.s32 3, %v7045
  %v7047 = vrot.slane %v6050, %v7046
  %v7048 = vlaneseq
  %v7049 = vshrl.u32 %v7048, 7
  %v7050 = vsub.s32 3, %v7049
  %v7051 = vrot.slane %v6052, %v7050
  %v7052 = vlaneseq
  %v7053 = vshrl.u32 %v7052, 7
  %v7054 = vsub.s32 3, %v7053
  %v7055 = vrot.slane %v6054, %v7054
  %v7056 = vlaneseq
  %v7057 = vshrl.u32 %v7056, 7
  %v7058 = vsub.s32 3, %v7057
  %v7059 = vrot.slane %v6056, %v7058
  %v7060 = vlaneseq
  %v7061 = vshrl.u32 %v7060, 7
  %v7062 = vsub.s32 3, %v7061
  %v7063 = vrot.slane %v6058, %v7062
  %v7064 = vlaneseq
  %v7065 = vshrl.u32 %v7064, 7
  %v7066 = vsub.s32 3, %v7065
  %v7067 = vrot.slane %v6060, %v7066
  %v7068 = vlaneseq
  %v7069 = vshrl.u32 %v7068, 7
  %v7070 = vsub.s32 3, %v7069
  %v7071 = vrot.slane %v6062, %v7070
  %v7072 = vmul.f32 %v7043, %v7034
  %v7073 = vmul.f32 %v7043, %v7035
  %v7074 = vmul.f32 %v7043, %v7036
  %v7075 = vmul.f32 %v7047, %v7034
  %v7076 = vmul.f32 %v7047, %v7035
  %v7077 = vmul.f32 %v7047, %v7036
  %v7078 = vmul.f32 %v7051, %v7034
  %v7079 = vmul.f32 %v7051, %v7035
  %v7080 = vmul.f32 %v7051, %v7036
  %v7081 = vmul.f32 %v7055, %v7034
  %v7082 = vmul.f32 %v7055, %v7035
  %v7083 = vmul.f32 %v7055, %v7036
  %v7084 = vmul.f32 %v7059, %v7034
  %v7085 = vmul.f32 %v7059, %v7035
  %v7086 = vmul.f32 %v7059, %v7036
  %v7087 = vmul.f32 %v7063, %v7034
  %v7088 = vmul.f32 %v7063, %v7035
  %v7089 = vmul.f32 %v7063, %v7036
  %v7090 = vmul.f32 %v7067, %v7034
  %v7091 = vmul.f32 %v7067, %v7035
  %v7092 = vmul.f32 %v7067, %v7036
  %v7093 = vmul.f32 %v7071, %v7034
  %v7094 = vmul.f32 %v7071, %v7035
  %v7095 = vmul.f32 %v7071, %v7036
  %v7096 = vadd.f32 %v6930, %v7072
  %v7097 = vadd.f32 %v6931, %v7073
  %v7098 = vadd.f32 %v6932, %v7074
  %v7099 = vadd.f32 %v6933, %v7075
  %v7100 = vadd.f32 %v6934, %v7076
  %v7101 = vadd.f32 %v6935, %v7077
  %v7102 = vadd.f32 %v6936, %v7078
  %v7103 = vadd.f32 %v6937, %v7079
  %v7104 = vadd.f32 %v6938, %v7080
  %v7105 = vadd.f32 %v6939, %v7081
  %v7106 = vadd.f32 %v6940, %v7082
  %v7107 = vadd.f32 %v6941, %v7083
  %v7108 = vadd.f32 %v6942, %v7084
  %v7109 = vadd.f32 %v6943, %v7085
  %v7110 = vadd.f32 %v6944, %v7086
  %v7111 = vadd.f32 %v6945, %v7087
  %v7112 = vadd.f32 %v6946, %v7088
  %v7113 = vadd.f32 %v6947, %v7089
  %v7114 = vadd.f32 %v6948, %v7090
  %v7115 = vadd.f32 %v6949, %v7091
  %v7116 = vadd.f32 %v6950, %v7092
  %v7117 = vadd.f32 %v6951, %v7093
  %v7118 = vadd.f32 %v6952, %v7094
  %v7119 = vadd.f32 %v6953, %v7095
  %v7120 = vlaneseq
  %v7121 = vshrl.u32 %v7120, 7
  %v7122 = vsub.s32 3, %v7121
  %v7123 = vrot.slane %v6504, %v7122
  %v7124 = vlaneseq
  %v7125 = vshrl.u32 %v7124, 7
  %v7126 = vsub.s32 3, %v7125
  %v7127 = vrot.slane %v6506, %v7126
  %v7128 = vlaneseq
  %v7129 = vshrl.u32 %v7128, 7
  %v7130 = vsub.s32 3, %v7129
  %v7131 = vrot.slane %v6508, %v7130
  %v7132 = vlaneseq
  %v7133 = vshrl.u32 %v7132, 7
  %v7134 = vsub.s32 3, %v7133
  %v7135 = vrot.slane %v6510, %v7134
  %v7136 = vlaneseq
  %v7137 = vshrl.u32 %v7136, 7
  %v7138 = vsub.s32 3, %v7137
  %v7139 = vrot.slane %v6512, %v7138
  %v7140 = vlaneseq
  %v7141 = vshrl.u32 %v7140, 7
  %v7142 = vsub.s32 3, %v7141
  %v7143 = vrot.slane %v6514, %v7142
  %v7144 = vlaneseq
  %v7145 = vshrl.u32 %v7144, 7
  %v7146 = vsub.s32 3, %v7145
  %v7147 = vrot.slane %v6516, %v7146
  %v7148 = vlaneseq
  %v7149 = vshrl.u32 %v7148, 7
  %v7150 = vsub.s32 3, %v7149
  %v7151 = vrot.slane %v6518, %v7150
  %v7152 = vmul.f32 %v7123, %v7037
  %v7153 = vmul.f32 %v7123, %v7038
  %v7154 = vmul.f32 %v7123, %v7039
  %v7155 = vmul.f32 %v7127, %v7037
  %v7156 = vmul.f32 %v7127, %v7038
  %v7157 = vmul.f32 %v7127, %v7039
  %v7158 = vmul.f32 %v7131, %v7037
  %v7159 = vmul.f32 %v7131, %v7038
  %v7160 = vmul.f32 %v7131, %v7039
  %v7161 = vmul.f32 %v7135, %v7037
  %v7162 = vmul.f32 %v7135, %v7038
  %v7163 = vmul.f32 %v7135, %v7039
  %v7164 = vmul.f32 %v7139, %v7037
  %v7165 = vmul.f32 %v7139, %v7038
  %v7166 = vmul.f32 %v7139, %v7039
  %v7167 = vmul.f32 %v7143, %v7037
  %v7168 = vmul.f32 %v7143, %v7038
  %v7169 = vmul.f32 %v7143, %v7039
  %v7170 = vmul.f32 %v7147, %v7037
  %v7171 = vmul.f32 %v7147, %v7038
  %v7172 = vmul.f32 %v7147, %v7039
  %v7173 = vmul.f32 %v7151, %v7037
  %v7174 = vmul.f32 %v7151, %v7038
  %v7175 = vmul.f32 %v7151, %v7039
  %v7176 = vadd.f32 %v7010, %v7152
  %v7177 = vadd.f32 %v7011, %v7153
  %v7178 = vadd.f32 %v7012, %v7154
  %v7179 = vadd.f32 %v7013, %v7155
  %v7180 = vadd.f32 %v7014, %v7156
  %v7181 = vadd.f32 %v7015, %v7157
  %v7182 = vadd.f32 %v7016, %v7158
  %v7183 = vadd.f32 %v7017, %v7159
  %v7184 = vadd.f32 %v7018, %v7160
  %v7185 = vadd.f32 %v7019, %v7161
  %v7186 = vadd.f32 %v7020, %v7162
  %v7187 = vadd.f32 %v7021, %v7163
  %v7188 = vadd.f32 %v7022, %v7164
  %v7189 = vadd.f32 %v7023, %v7165
  %v7190 = vadd.f32 %v7024, %v7166
  %v7191 = vadd.f32 %v7025, %v7167
  %v7192 = vadd.f32 %v7026, %v7168
  %v7193 = vadd.f32 %v7027, %v7169
  %v7194 = vadd.f32 %v7028, %v7170
  %v7195 = vadd.f32 %v7029, %v7171
  %v7196 = vadd.f32 %v7030, %v7172
  %v7197 = vadd.f32 %v7031, %v7173
  %v7198 = vadd.f32 %v7032, %v7174
  %v7199 = vadd.f32 %v7033, %v7175
  %v7200 = vld [vmem:[#allocation2 + $0x210] sm:$0xff]
  %v7201 = vld [vmem:[#allocation2 + $0x218] sm:$0xff]
  %v7202 = vld [vmem:[#allocation2 + $0x220] sm:$0xf]
  %v7203 = vld [vmem:[#allocation2 + $0x2b0] sm:$0xff]
  %v7204 = vld [vmem:[#allocation2 + $0x2b8] sm:$0xff]
  %v7205 = vld [vmem:[#allocation2 + $0x2c0] sm:$0xf]
  %v7206 = vlaneseq
  %v7207 = vshrl.u32 %v7206, 7
  %v7208 = vsub.s32 4, %v7207
  %v7209 = vrot.slane %v6048, %v7208
  %v7210 = vlaneseq
  %v7211 = vshrl.u32 %v7210, 7
  %v7212 = vsub.s32 4, %v7211
  %v7213 = vrot.slane %v6050, %v7212
  %v7214 = vlaneseq
  %v7215 = vshrl.u32 %v7214, 7
  %v7216 = vsub.s32 4, %v7215
  %v7217 = vrot.slane %v6052, %v7216
  %v7218 = vlaneseq
  %v7219 = vshrl.u32 %v7218, 7
  %v7220 = vsub.s32 4, %v7219
  %v7221 = vrot.slane %v6054, %v7220
  %v7222 = vlaneseq
  %v7223 = vshrl.u32 %v7222, 7
  %v7224 = vsub.s32 4, %v7223
  %v7225 = vrot.slane %v6056, %v7224
  %v7226 = vlaneseq
  %v7227 = vshrl.u32 %v7226, 7
  %v7228 = vsub.s32 4, %v7227
  %v7229 = vrot.slane %v6058, %v7228
  %v7230 = vlaneseq
  %v7231 = vshrl.u32 %v7230, 7
  %v7232 = vsub.s32 4, %v7231
  %v7233 = vrot.slane %v6060, %v7232
  %v7234 = vlaneseq
  %v7235 = vshrl.u32 %v7234, 7
  %v7236 = vsub.s32 4, %v7235
  %v7237 = vrot.slane %v6062, %v7236
  %v7238 = vmul.f32 %v7209, %v7200
  %v7239 = vmul.f32 %v7209, %v7201
  %v7240 = vmul.f32 %v7209, %v7202
  %v7241 = vmul.f32 %v7213, %v7200
  %v7242 = vmul.f32 %v7213, %v7201
  %v7243 = vmul.f32 %v7213, %v7202
  %v7244 = vmul.f32 %v7217, %v7200
  %v7245 = vmul.f32 %v7217, %v7201
  %v7246 = vmul.f32 %v7217, %v7202
  %v7247 = vmul.f32 %v7221, %v7200
  %v7248 = vmul.f32 %v7221, %v7201
  %v7249 = vmul.f32 %v7221, %v7202
  %v7250 = vmul.f32 %v7225, %v7200
  %v7251 = vmul.f32 %v7225, %v7201
  %v7252 = vmul.f32 %v7225, %v7202
  %v7253 = vmul.f32 %v7229, %v7200
  %v7254 = vmul.f32 %v7229, %v7201
  %v7255 = vmul.f32 %v7229, %v7202
  %v7256 = vmul.f32 %v7233, %v7200
  %v7257 = vmul.f32 %v7233, %v7201
  %v7258 = vmul.f32 %v7233, %v7202
  %v7259 = vmul.f32 %v7237, %v7200
  %v7260 = vmul.f32 %v7237, %v7201
  %v7261 = vmul.f32 %v7237, %v7202
  %v7262 = vadd.f32 %v7096, %v7238
  %v7263 = vadd.f32 %v7097, %v7239
  %v7264 = vadd.f32 %v7098, %v7240
  %v7265 = vadd.f32 %v7099, %v7241
  %v7266 = vadd.f32 %v7100, %v7242
  %v7267 = vadd.f32 %v7101, %v7243
  %v7268 = vadd.f32 %v7102, %v7244
  %v7269 = vadd.f32 %v7103, %v7245
  %v7270 = vadd.f32 %v7104, %v7246
  %v7271 = vadd.f32 %v7105, %v7247
  %v7272 = vadd.f32 %v7106, %v7248
  %v7273 = vadd.f32 %v7107, %v7249
  %v7274 = vadd.f32 %v7108, %v7250
  %v7275 = vadd.f32 %v7109, %v7251
  %v7276 = vadd.f32 %v7110, %v7252
  %v7277 = vadd.f32 %v7111, %v7253
  %v7278 = vadd.f32 %v7112, %v7254
  %v7279 = vadd.f32 %v7113, %v7255
  %v7280 = vadd.f32 %v7114, %v7256
  %v7281 = vadd.f32 %v7115, %v7257
  %v7282 = vadd.f32 %v7116, %v7258
  %v7283 = vadd.f32 %v7117, %v7259
  %v7284 = vadd.f32 %v7118, %v7260
  %v7285 = vadd.f32 %v7119, %v7261
  %v7286 = vlaneseq
  %v7287 = vshrl.u32 %v7286, 7
  %v7288 = vsub.s32 4, %v7287
  %v7289 = vrot.slane %v6504, %v7288
  %v7290 = vlaneseq
  %v7291 = vshrl.u32 %v7290, 7
  %v7292 = vsub.s32 4, %v7291
  %v7293 = vrot.slane %v6506, %v7292
  %v7294 = vlaneseq
  %v7295 = vshrl.u32 %v7294, 7
  %v7296 = vsub.s32 4, %v7295
  %v7297 = vrot.slane %v6508, %v7296
  %v7298 = vlaneseq
  %v7299 = vshrl.u32 %v7298, 7
  %v7300 = vsub.s32 4, %v7299
  %v7301 = vrot.slane %v6510, %v7300
  %v7302 = vlaneseq
  %v7303 = vshrl.u32 %v7302, 7
  %v7304 = vsub.s32 4, %v7303
  %v7305 = vrot.slane %v6512, %v7304
  %v7306 = vlaneseq
  %v7307 = vshrl.u32 %v7306, 7
  %v7308 = vsub.s32 4, %v7307
  %v7309 = vrot.slane %v6514, %v7308
  %v7310 = vlaneseq
  %v7311 = vshrl.u32 %v7310, 7
  %v7312 = vsub.s32 4, %v7311
  %v7313 = vrot.slane %v6516, %v7312
  %v7314 = vlaneseq
  %v7315 = vshrl.u32 %v7314, 7
  %v7316 = vsub.s32 4, %v7315
  %v7317 = vrot.slane %v6518, %v7316
  %v7318 = vmul.f32 %v7289, %v7203
  %v7319 = vmul.f32 %v7289, %v7204
  %v7320 = vmul.f32 %v7289, %v7205
  %v7321 = vmul.f32 %v7293, %v7203
  %v7322 = vmul.f32 %v7293, %v7204
  %v7323 = vmul.f32 %v7293, %v7205
  %v7324 = vmul.f32 %v7297, %v7203
  %v7325 = vmul.f32 %v7297, %v7204
  %v7326 = vmul.f32 %v7297, %v7205
  %v7327 = vmul.f32 %v7301, %v7203
  %v7328 = vmul.f32 %v7301, %v7204
  %v7329 = vmul.f32 %v7301, %v7205
  %v7330 = vmul.f32 %v7305, %v7203
  %v7331 = vmul.f32 %v7305, %v7204
  %v7332 = vmul.f32 %v7305, %v7205
  %v7333 = vmul.f32 %v7309, %v7203
  %v7334 = vmul.f32 %v7309, %v7204
  %v7335 = vmul.f32 %v7309, %v7205
  %v7336 = vmul.f32 %v7313, %v7203
  %v7337 = vmul.f32 %v7313, %v7204
  %v7338 = vmul.f32 %v7313, %v7205
  %v7339 = vmul.f32 %v7317, %v7203
  %v7340 = vmul.f32 %v7317, %v7204
  %v7341 = vmul.f32 %v7317, %v7205
  %v7342 = vadd.f32 %v7176, %v7318
  %v7343 = vadd.f32 %v7177, %v7319
  %v7344 = vadd.f32 %v7178, %v7320
  %v7345 = vadd.f32 %v7179, %v7321
  %v7346 = vadd.f32 %v7180, %v7322
  %v7347 = vadd.f32 %v7181, %v7323
  %v7348 = vadd.f32 %v7182, %v7324
  %v7349 = vadd.f32 %v7183, %v7325
  %v7350 = vadd.f32 %v7184, %v7326
  %v7351 = vadd.f32 %v7185, %v7327
  %v7352 = vadd.f32 %v7186, %v7328
  %v7353 = vadd.f32 %v7187, %v7329
  %v7354 = vadd.f32 %v7188, %v7330
  %v7355 = vadd.f32 %v7189, %v7331
  %v7356 = vadd.f32 %v7190, %v7332
  %v7357 = vadd.f32 %v7191, %v7333
  %v7358 = vadd.f32 %v7192, %v7334
  %v7359 = vadd.f32 %v7193, %v7335
  %v7360 = vadd.f32 %v7194, %v7336
  %v7361 = vadd.f32 %v7195, %v7337
  %v7362 = vadd.f32 %v7196, %v7338
  %v7363 = vadd.f32 %v7197, %v7339
  %v7364 = vadd.f32 %v7198, %v7340
  %v7365 = vadd.f32 %v7199, %v7341
  %v7366 = vld [vmem:[#allocation2 + $0x224] sm:$0xff]
  %v7367 = vld [vmem:[#allocation2 + $0x22c] sm:$0xff]
  %v7368 = vld [vmem:[#allocation2 + $0x234] sm:$0xf]
  %v7369 = vld [vmem:[#allocation2 + $0x2c4] sm:$0xff]
  %v7370 = vld [vmem:[#allocation2 + $0x2cc] sm:$0xff]
  %v7371 = vld [vmem:[#allocation2 + $0x2d4] sm:$0xf]
  %v7372 = vlaneseq
  %v7373 = vshrl.u32 %v7372, 7
  %v7374 = vsub.s32 5, %v7373
  %v7375 = vrot.slane %v6048, %v7374
  %v7376 = vlaneseq
  %v7377 = vshrl.u32 %v7376, 7
  %v7378 = vsub.s32 5, %v7377
  %v7379 = vrot.slane %v6050, %v7378
  %v7380 = vlaneseq
  %v7381 = vshrl.u32 %v7380, 7
  %v7382 = vsub.s32 5, %v7381
  %v7383 = vrot.slane %v6052, %v7382
  %v7384 = vlaneseq
  %v7385 = vshrl.u32 %v7384, 7
  %v7386 = vsub.s32 5, %v7385
  %v7387 = vrot.slane %v6054, %v7386
  %v7388 = vlaneseq
  %v7389 = vshrl.u32 %v7388, 7
  %v7390 = vsub.s32 5, %v7389
  %v7391 = vrot.slane %v6056, %v7390
  %v7392 = vlaneseq
  %v7393 = vshrl.u32 %v7392, 7
  %v7394 = vsub.s32 5, %v7393
  %v7395 = vrot.slane %v6058, %v7394
  %v7396 = vlaneseq
  %v7397 = vshrl.u32 %v7396, 7
  %v7398 = vsub.s32 5, %v7397
  %v7399 = vrot.slane %v6060, %v7398
  %v7400 = vlaneseq
  %v7401 = vshrl.u32 %v7400, 7
  %v7402 = vsub.s32 5, %v7401
  %v7403 = vrot.slane %v6062, %v7402
  %v7404 = vmul.f32 %v7375, %v7366
  %v7405 = vmul.f32 %v7375, %v7367
  %v7406 = vmul.f32 %v7375, %v7368
  %v7407 = vmul.f32 %v7379, %v7366
  %v7408 = vmul.f32 %v7379, %v7367
  %v7409 = vmul.f32 %v7379, %v7368
  %v7410 = vmul.f32 %v7383, %v7366
  %v7411 = vmul.f32 %v7383, %v7367
  %v7412 = vmul.f32 %v7383, %v7368
  %v7413 = vmul.f32 %v7387, %v7366
  %v7414 = vmul.f32 %v7387, %v7367
  %v7415 = vmul.f32 %v7387, %v7368
  %v7416 = vmul.f32 %v7391, %v7366
  %v7417 = vmul.f32 %v7391, %v7367
  %v7418 = vmul.f32 %v7391, %v7368
  %v7419 = vmul.f32 %v7395, %v7366
  %v7420 = vmul.f32 %v7395, %v7367
  %v7421 = vmul.f32 %v7395, %v7368
  %v7422 = vmul.f32 %v7399, %v7366
  %v7423 = vmul.f32 %v7399, %v7367
  %v7424 = vmul.f32 %v7399, %v7368
  %v7425 = vmul.f32 %v7403, %v7366
  %v7426 = vmul.f32 %v7403, %v7367
  %v7427 = vmul.f32 %v7403, %v7368
  %v7428 = vadd.f32 %v7262, %v7404
  %v7429 = vadd.f32 %v7263, %v7405
  %v7430 = vadd.f32 %v7264, %v7406
  %v7431 = vadd.f32 %v7265, %v7407
  %v7432 = vadd.f32 %v7266, %v7408
  %v7433 = vadd.f32 %v7267, %v7409
  %v7434 = vadd.f32 %v7268, %v7410
  %v7435 = vadd.f32 %v7269, %v7411
  %v7436 = vadd.f32 %v7270, %v7412
  %v7437 = vadd.f32 %v7271, %v7413
  %v7438 = vadd.f32 %v7272, %v7414
  %v7439 = vadd.f32 %v7273, %v7415
  %v7440 = vadd.f32 %v7274, %v7416
  %v7441 = vadd.f32 %v7275, %v7417
  %v7442 = vadd.f32 %v7276, %v7418
  %v7443 = vadd.f32 %v7277, %v7419
  %v7444 = vadd.f32 %v7278, %v7420
  %v7445 = vadd.f32 %v7279, %v7421
  %v7446 = vadd.f32 %v7280, %v7422
  %v7447 = vadd.f32 %v7281, %v7423
  %v7448 = vadd.f32 %v7282, %v7424
  %v7449 = vadd.f32 %v7283, %v7425
  %v7450 = vadd.f32 %v7284, %v7426
  %v7451 = vadd.f32 %v7285, %v7427
  %v7452 = vlaneseq
  %v7453 = vshrl.u32 %v7452, 7
  %v7454 = vsub.s32 5, %v7453
  %v7455 = vrot.slane %v6504, %v7454
  %v7456 = vlaneseq
  %v7457 = vshrl.u32 %v7456, 7
  %v7458 = vsub.s32 5, %v7457
  %v7459 = vrot.slane %v6506, %v7458
  %v7460 = vlaneseq
  %v7461 = vshrl.u32 %v7460, 7
  %v7462 = vsub.s32 5, %v7461
  %v7463 = vrot.slane %v6508, %v7462
  %v7464 = vlaneseq
  %v7465 = vshrl.u32 %v7464, 7
  %v7466 = vsub.s32 5, %v7465
  %v7467 = vrot.slane %v6510, %v7466
  %v7468 = vlaneseq
  %v7469 = vshrl.u32 %v7468, 7
  %v7470 = vsub.s32 5, %v7469
  %v7471 = vrot.slane %v6512, %v7470
  %v7472 = vlaneseq
  %v7473 = vshrl.u32 %v7472, 7
  %v7474 = vsub.s32 5, %v7473
  %v7475 = vrot.slane %v6514, %v7474
  %v7476 = vlaneseq
  %v7477 = vshrl.u32 %v7476, 7
  %v7478 = vsub.s32 5, %v7477
  %v7479 = vrot.slane %v6516, %v7478
  %v7480 = vlaneseq
  %v7481 = vshrl.u32 %v7480, 7
  %v7482 = vsub.s32 5, %v7481
  %v7483 = vrot.slane %v6518, %v7482
  %v7484 = vmul.f32 %v7455, %v7369
  %v7485 = vmul.f32 %v7455, %v7370
  %v7486 = vmul.f32 %v7455, %v7371
  %v7487 = vmul.f32 %v7459, %v7369
  %v7488 = vmul.f32 %v7459, %v7370
  %v7489 = vmul.f32 %v7459, %v7371
  %v7490 = vmul.f32 %v7463, %v7369
  %v7491 = vmul.f32 %v7463, %v7370
  %v7492 = vmul.f32 %v7463, %v7371
  %v7493 = vmul.f32 %v7467, %v7369
  %v7494 = vmul.f32 %v7467, %v7370
  %v7495 = vmul.f32 %v7467, %v7371
  %v7496 = vmul.f32 %v7471, %v7369
  %v7497 = vmul.f32 %v7471, %v7370
  %v7498 = vmul.f32 %v7471, %v7371
  %v7499 = vmul.f32 %v7475, %v7369
  %v7500 = vmul.f32 %v7475, %v7370
  %v7501 = vmul.f32 %v7475, %v7371
  %v7502 = vmul.f32 %v7479, %v7369
  %v7503 = vmul.f32 %v7479, %v7370
  %v7504 = vmul.f32 %v7479, %v7371
  %v7505 = vmul.f32 %v7483, %v7369
  %v7506 = vmul.f32 %v7483, %v7370
  %v7507 = vmul.f32 %v7483, %v7371
  %v7508 = vadd.f32 %v7342, %v7484
  %v7509 = vadd.f32 %v7343, %v7485
  %v7510 = vadd.f32 %v7344, %v7486
  %v7511 = vadd.f32 %v7345, %v7487
  %v7512 = vadd.f32 %v7346, %v7488
  %v7513 = vadd.f32 %v7347, %v7489
  %v7514 = vadd.f32 %v7348, %v7490
  %v7515 = vadd.f32 %v7349, %v7491
  %v7516 = vadd.f32 %v7350, %v7492
  %v7517 = vadd.f32 %v7351, %v7493
  %v7518 = vadd.f32 %v7352, %v7494
  %v7519 = vadd.f32 %v7353, %v7495
  %v7520 = vadd.f32 %v7354, %v7496
  %v7521 = vadd.f32 %v7355, %v7497
  %v7522 = vadd.f32 %v7356, %v7498
  %v7523 = vadd.f32 %v7357, %v7499
  %v7524 = vadd.f32 %v7358, %v7500
  %v7525 = vadd.f32 %v7359, %v7501
  %v7526 = vadd.f32 %v7360, %v7502
  %v7527 = vadd.f32 %v7361, %v7503
  %v7528 = vadd.f32 %v7362, %v7504
  %v7529 = vadd.f32 %v7363, %v7505
  %v7530 = vadd.f32 %v7364, %v7506
  %v7531 = vadd.f32 %v7365, %v7507
  %v7532 = vld [vmem:[#allocation2 + $0x238] sm:$0xff]
  %v7533 = vld [vmem:[#allocation2 + $0x240] sm:$0xff]
  %v7534 = vld [vmem:[#allocation2 + $0x248] sm:$0xf]
  %v7535 = vld [vmem:[#allocation2 + $0x2d8] sm:$0xff]
  %v7536 = vld [vmem:[#allocation2 + $0x2e0] sm:$0xff]
  %v7537 = vld [vmem:[#allocation2 + $0x2e8] sm:$0xf]
  %v7538 = vlaneseq
  %v7539 = vshrl.u32 %v7538, 7
  %v7540 = vsub.s32 6, %v7539
  %v7541 = vrot.slane %v6048, %v7540
  %v7542 = vlaneseq
  %v7543 = vshrl.u32 %v7542, 7
  %v7544 = vsub.s32 6, %v7543
  %v7545 = vrot.slane %v6050, %v7544
  %v7546 = vlaneseq
  %v7547 = vshrl.u32 %v7546, 7
  %v7548 = vsub.s32 6, %v7547
  %v7549 = vrot.slane %v6052, %v7548
  %v7550 = vlaneseq
  %v7551 = vshrl.u32 %v7550, 7
  %v7552 = vsub.s32 6, %v7551
  %v7553 = vrot.slane %v6054, %v7552
  %v7554 = vlaneseq
  %v7555 = vshrl.u32 %v7554, 7
  %v7556 = vsub.s32 6, %v7555
  %v7557 = vrot.slane %v6056, %v7556
  %v7558 = vlaneseq
  %v7559 = vshrl.u32 %v7558, 7
  %v7560 = vsub.s32 6, %v7559
  %v7561 = vrot.slane %v6058, %v7560
  %v7562 = vlaneseq
  %v7563 = vshrl.u32 %v7562, 7
  %v7564 = vsub.s32 6, %v7563
  %v7565 = vrot.slane %v6060, %v7564
  %v7566 = vlaneseq
  %v7567 = vshrl.u32 %v7566, 7
  %v7568 = vsub.s32 6, %v7567
  %v7569 = vrot.slane %v6062, %v7568
  %v7570 = vmul.f32 %v7541, %v7532
  %v7571 = vmul.f32 %v7541, %v7533
  %v7572 = vmul.f32 %v7541, %v7534
  %v7573 = vmul.f32 %v7545, %v7532
  %v7574 = vmul.f32 %v7545, %v7533
  %v7575 = vmul.f32 %v7545, %v7534
  %v7576 = vmul.f32 %v7549, %v7532
  %v7577 = vmul.f32 %v7549, %v7533
  %v7578 = vmul.f32 %v7549, %v7534
  %v7579 = vmul.f32 %v7553, %v7532
  %v7580 = vmul.f32 %v7553, %v7533
  %v7581 = vmul.f32 %v7553, %v7534
  %v7582 = vmul.f32 %v7557, %v7532
  %v7583 = vmul.f32 %v7557, %v7533
  %v7584 = vmul.f32 %v7557, %v7534
  %v7585 = vmul.f32 %v7561, %v7532
  %v7586 = vmul.f32 %v7561, %v7533
  %v7587 = vmul.f32 %v7561, %v7534
  %v7588 = vmul.f32 %v7565, %v7532
  %v7589 = vmul.f32 %v7565, %v7533
  %v7590 = vmul.f32 %v7565, %v7534
  %v7591 = vmul.f32 %v7569, %v7532
  %v7592 = vmul.f32 %v7569, %v7533
  %v7593 = vmul.f32 %v7569, %v7534
  %v7594 = vadd.f32 %v7428, %v7570
  %v7595 = vadd.f32 %v7429, %v7571
  %v7596 = vadd.f32 %v7430, %v7572
  %v7597 = vadd.f32 %v7431, %v7573
  %v7598 = vadd.f32 %v7432, %v7574
  %v7599 = vadd.f32 %v7433, %v7575
  %v7600 = vadd.f32 %v7434, %v7576
  %v7601 = vadd.f32 %v7435, %v7577
  %v7602 = vadd.f32 %v7436, %v7578
  %v7603 = vadd.f32 %v7437, %v7579
  %v7604 = vadd.f32 %v7438, %v7580
  %v7605 = vadd.f32 %v7439, %v7581
  %v7606 = vadd.f32 %v7440, %v7582
  %v7607 = vadd.f32 %v7441, %v7583
  %v7608 = vadd.f32 %v7442, %v7584
  %v7609 = vadd.f32 %v7443, %v7585
  %v7610 = vadd.f32 %v7444, %v7586
  %v7611 = vadd.f32 %v7445, %v7587
  %v7612 = vadd.f32 %v7446, %v7588
  %v7613 = vadd.f32 %v7447, %v7589
  %v7614 = vadd.f32 %v7448, %v7590
  %v7615 = vadd.f32 %v7449, %v7591
  %v7616 = vadd.f32 %v7450, %v7592
  %v7617 = vadd.f32 %v7451, %v7593
  %v7618 = vlaneseq
  %v7619 = vshrl.u32 %v7618, 7
  %v7620 = vsub.s32 6, %v7619
  %v7621 = vrot.slane %v6504, %v7620
  %v7622 = vlaneseq
  %v7623 = vshrl.u32 %v7622, 7
  %v7624 = vsub.s32 6, %v7623
  %v7625 = vrot.slane %v6506, %v7624
  %v7626 = vlaneseq
  %v7627 = vshrl.u32 %v7626, 7
  %v7628 = vsub.s32 6, %v7627
  %v7629 = vrot.slane %v6508, %v7628
  %v7630 = vlaneseq
  %v7631 = vshrl.u32 %v7630, 7
  %v7632 = vsub.s32 6, %v7631
  %v7633 = vrot.slane %v6510, %v7632
  %v7634 = vlaneseq
  %v7635 = vshrl.u32 %v7634, 7
  %v7636 = vsub.s32 6, %v7635
  %v7637 = vrot.slane %v6512, %v7636
  %v7638 = vlaneseq
  %v7639 = vshrl.u32 %v7638, 7
  %v7640 = vsub.s32 6, %v7639
  %v7641 = vrot.slane %v6514, %v7640
  %v7642 = vlaneseq
  %v7643 = vshrl.u32 %v7642, 7
  %v7644 = vsub.s32 6, %v7643
  %v7645 = vrot.slane %v6516, %v7644
  %v7646 = vlaneseq
  %v7647 = vshrl.u32 %v7646, 7
  %v7648 = vsub.s32 6, %v7647
  %v7649 = vrot.slane %v6518, %v7648
  %v7650 = vmul.f32 %v7621, %v7535
  %v7651 = vmul.f32 %v7621, %v7536
  %v7652 = vmul.f32 %v7621, %v7537
  %v7653 = vmul.f32 %v7625, %v7535
  %v7654 = vmul.f32 %v7625, %v7536
  %v7655 = vmul.f32 %v7625, %v7537
  %v7656 = vmul.f32 %v7629, %v7535
  %v7657 = vmul.f32 %v7629, %v7536
  %v7658 = vmul.f32 %v7629, %v7537
  %v7659 = vmul.f32 %v7633, %v7535
  %v7660 = vmul.f32 %v7633, %v7536
  %v7661 = vmul.f32 %v7633, %v7537
  %v7662 = vmul.f32 %v7637, %v7535
  %v7663 = vmul.f32 %v7637, %v7536
  %v7664 = vmul.f32 %v7637, %v7537
  %v7665 = vmul.f32 %v7641, %v7535
  %v7666 = vmul.f32 %v7641, %v7536
  %v7667 = vmul.f32 %v7641, %v7537
  %v7668 = vmul.f32 %v7645, %v7535
  %v7669 = vmul.f32 %v7645, %v7536
  %v7670 = vmul.f32 %v7645, %v7537
  %v7671 = vmul.f32 %v7649, %v7535
  %v7672 = vmul.f32 %v7649, %v7536
  %v7673 = vmul.f32 %v7649, %v7537
  %v7674 = vadd.f32 %v7508, %v7650
  %v7675 = vadd.f32 %v7509, %v7651
  %v7676 = vadd.f32 %v7510, %v7652
  %v7677 = vadd.f32 %v7511, %v7653
  %v7678 = vadd.f32 %v7512, %v7654
  %v7679 = vadd.f32 %v7513, %v7655
  %v7680 = vadd.f32 %v7514, %v7656
  %v7681 = vadd.f32 %v7515, %v7657
  %v7682 = vadd.f32 %v7516, %v7658
  %v7683 = vadd.f32 %v7517, %v7659
  %v7684 = vadd.f32 %v7518, %v7660
  %v7685 = vadd.f32 %v7519, %v7661
  %v7686 = vadd.f32 %v7520, %v7662
  %v7687 = vadd.f32 %v7521, %v7663
  %v7688 = vadd.f32 %v7522, %v7664
  %v7689 = vadd.f32 %v7523, %v7665
  %v7690 = vadd.f32 %v7524, %v7666
  %v7691 = vadd.f32 %v7525, %v7667
  %v7692 = vadd.f32 %v7526, %v7668
  %v7693 = vadd.f32 %v7527, %v7669
  %v7694 = vadd.f32 %v7528, %v7670
  %v7695 = vadd.f32 %v7529, %v7671
  %v7696 = vadd.f32 %v7530, %v7672
  %v7697 = vadd.f32 %v7531, %v7673
  %v7698 = vld [vmem:[#allocation2 + $0x24c] sm:$0xff]
  %v7699 = vld [vmem:[#allocation2 + $0x254] sm:$0xff]
  %v7700 = vld [vmem:[#allocation2 + $0x25c] sm:$0xf]
  %v7701 = vld [vmem:[#allocation2 + $0x2ec] sm:$0xff]
  %v7702 = vld [vmem:[#allocation2 + $0x2f4] sm:$0xff]
  %v7703 = vld [vmem:[#allocation2 + $0x2fc] sm:$0xf]
  %v7704 = vlaneseq
  %v7705 = vshrl.u32 %v7704, 7
  %v7706 = vsub.s32 7, %v7705
  %v7707 = vrot.slane %v6048, %v7706
  %v7708 = vlaneseq
  %v7709 = vshrl.u32 %v7708, 7
  %v7710 = vsub.s32 7, %v7709
  %v7711 = vrot.slane %v6050, %v7710
  %v7712 = vlaneseq
  %v7713 = vshrl.u32 %v7712, 7
  %v7714 = vsub.s32 7, %v7713
  %v7715 = vrot.slane %v6052, %v7714
  %v7716 = vlaneseq
  %v7717 = vshrl.u32 %v7716, 7
  %v7718 = vsub.s32 7, %v7717
  %v7719 = vrot.slane %v6054, %v7718
  %v7720 = vlaneseq
  %v7721 = vshrl.u32 %v7720, 7
  %v7722 = vsub.s32 7, %v7721
  %v7723 = vrot.slane %v6056, %v7722
  %v7724 = vlaneseq
  %v7725 = vshrl.u32 %v7724, 7
  %v7726 = vsub.s32 7, %v7725
  %v7727 = vrot.slane %v6058, %v7726
  %v7728 = vlaneseq
  %v7729 = vshrl.u32 %v7728, 7
  %v7730 = vsub.s32 7, %v7729
  %v7731 = vrot.slane %v6060, %v7730
  %v7732 = vlaneseq
  %v7733 = vshrl.u32 %v7732, 7
  %v7734 = vsub.s32 7, %v7733
  %v7735 = vrot.slane %v6062, %v7734
  %v7736 = vmul.f32 %v7707, %v7698
  %v7737 = vmul.f32 %v7707, %v7699
  %v7738 = vmul.f32 %v7707, %v7700
  %v7739 = vmul.f32 %v7711, %v7698
  %v7740 = vmul.f32 %v7711, %v7699
  %v7741 = vmul.f32 %v7711, %v7700
  %v7742 = vmul.f32 %v7715, %v7698
  %v7743 = vmul.f32 %v7715, %v7699
  %v7744 = vmul.f32 %v7715, %v7700
  %v7745 = vmul.f32 %v7719, %v7698
  %v7746 = vmul.f32 %v7719, %v7699
  %v7747 = vmul.f32 %v7719, %v7700
  %v7748 = vmul.f32 %v7723, %v7698
  %v7749 = vmul.f32 %v7723, %v7699
  %v7750 = vmul.f32 %v7723, %v7700
  %v7751 = vmul.f32 %v7727, %v7698
  %v7752 = vmul.f32 %v7727, %v7699
  %v7753 = vmul.f32 %v7727, %v7700
  %v7754 = vmul.f32 %v7731, %v7698
  %v7755 = vmul.f32 %v7731, %v7699
  %v7756 = vmul.f32 %v7731, %v7700
  %v7757 = vmul.f32 %v7735, %v7698
  %v7758 = vmul.f32 %v7735, %v7699
  %v7759 = vmul.f32 %v7735, %v7700
  %v7760 = vadd.f32 %v7594, %v7736
  %v7761 = vadd.f32 %v7595, %v7737
  %v7762 = vadd.f32 %v7596, %v7738
  %v7763 = vadd.f32 %v7597, %v7739
  %v7764 = vadd.f32 %v7598, %v7740
  %v7765 = vadd.f32 %v7599, %v7741
  %v7766 = vadd.f32 %v7600, %v7742
  %v7767 = vadd.f32 %v7601, %v7743
  %v7768 = vadd.f32 %v7602, %v7744
  %v7769 = vadd.f32 %v7603, %v7745
  %v7770 = vadd.f32 %v7604, %v7746
  %v7771 = vadd.f32 %v7605, %v7747
  %v7772 = vadd.f32 %v7606, %v7748
  %v7773 = vadd.f32 %v7607, %v7749
  %v7774 = vadd.f32 %v7608, %v7750
  %v7775 = vadd.f32 %v7609, %v7751
  %v7776 = vadd.f32 %v7610, %v7752
  %v7777 = vadd.f32 %v7611, %v7753
  %v7778 = vadd.f32 %v7612, %v7754
  %v7779 = vadd.f32 %v7613, %v7755
  %v7780 = vadd.f32 %v7614, %v7756
  %v7781 = vadd.f32 %v7615, %v7757
  %v7782 = vadd.f32 %v7616, %v7758
  %v7783 = vadd.f32 %v7617, %v7759
  %v7784 = vlaneseq
  %v7785 = vshrl.u32 %v7784, 7
  %v7786 = vsub.s32 7, %v7785
  %v7787 = vrot.slane %v6504, %v7786
  %v7788 = vlaneseq
  %v7789 = vshrl.u32 %v7788, 7
  %v7790 = vsub.s32 7, %v7789
  %v7791 = vrot.slane %v6506, %v7790
  %v7792 = vlaneseq
  %v7793 = vshrl.u32 %v7792, 7
  %v7794 = vsub.s32 7, %v7793
  %v7795 = vrot.slane %v6508, %v7794
  %v7796 = vlaneseq
  %v7797 = vshrl.u32 %v7796, 7
  %v7798 = vsub.s32 7, %v7797
  %v7799 = vrot.slane %v6510, %v7798
  %v7800 = vlaneseq
  %v7801 = vshrl.u32 %v7800, 7
  %v7802 = vsub.s32 7, %v7801
  %v7803 = vrot.slane %v6512, %v7802
  %v7804 = vlaneseq
  %v7805 = vshrl.u32 %v7804, 7
  %v7806 = vsub.s32 7, %v7805
  %v7807 = vrot.slane %v6514, %v7806
  %v7808 = vlaneseq
  %v7809 = vshrl.u32 %v7808, 7
  %v7810 = vsub.s32 7, %v7809
  %v7811 = vrot.slane %v6516, %v7810
  %v7812 = vlaneseq
  %v7813 = vshrl.u32 %v7812, 7
  %v7814 = vsub.s32 7, %v7813
  %v7815 = vrot.slane %v6518, %v7814
  %v7816 = vmul.f32 %v7787, %v7701
  %v7817 = vmul.f32 %v7787, %v7702
  %v7818 = vmul.f32 %v7787, %v7703
  %v7819 = vmul.f32 %v7791, %v7701
  %v7820 = vmul.f32 %v7791, %v7702
  %v7821 = vmul.f32 %v7791, %v7703
  %v7822 = vmul.f32 %v7795, %v7701
  %v7823 = vmul.f32 %v7795, %v7702
  %v7824 = vmul.f32 %v7795, %v7703
  %v7825 = vmul.f32 %v7799, %v7701
  %v7826 = vmul.f32 %v7799, %v7702
  %v7827 = vmul.f32 %v7799, %v7703
  %v7828 = vmul.f32 %v7803, %v7701
  %v7829 = vmul.f32 %v7803, %v7702
  %v7830 = vmul.f32 %v7803, %v7703
  %v7831 = vmul.f32 %v7807, %v7701
  %v7832 = vmul.f32 %v7807, %v7702
  %v7833 = vmul.f32 %v7807, %v7703
  %v7834 = vmul.f32 %v7811, %v7701
  %v7835 = vmul.f32 %v7811, %v7702
  %v7836 = vmul.f32 %v7811, %v7703
  %v7837 = vmul.f32 %v7815, %v7701
  %v7838 = vmul.f32 %v7815, %v7702
  %v7839 = vmul.f32 %v7815, %v7703
  %v7840 = vadd.f32 %v7674, %v7816
  %v7841 = vadd.f32 %v7675, %v7817
  %v7842 = vadd.f32 %v7676, %v7818
  %v7843 = vadd.f32 %v7677, %v7819
  %v7844 = vadd.f32 %v7678, %v7820
  %v7845 = vadd.f32 %v7679, %v7821
  %v7846 = vadd.f32 %v7680, %v7822
  %v7847 = vadd.f32 %v7681, %v7823
  %v7848 = vadd.f32 %v7682, %v7824
  %v7849 = vadd.f32 %v7683, %v7825
  %v7850 = vadd.f32 %v7684, %v7826
  %v7851 = vadd.f32 %v7685, %v7827
  %v7852 = vadd.f32 %v7686, %v7828
  %v7853 = vadd.f32 %v7687, %v7829
  %v7854 = vadd.f32 %v7688, %v7830
  %v7855 = vadd.f32 %v7689, %v7831
  %v7856 = vadd.f32 %v7690, %v7832
  %v7857 = vadd.f32 %v7691, %v7833
  %v7858 = vadd.f32 %v7692, %v7834
  %v7859 = vadd.f32 %v7693, %v7835
  %v7860 = vadd.f32 %v7694, %v7836
  %v7861 = vadd.f32 %v7695, %v7837
  %v7862 = vadd.f32 %v7696, %v7838
  %v7863 = vadd.f32 %v7697, %v7839
  %7864 = vst.msk [vmem:[#allocation3] sm:$0xff] %vm2486, %v7760
  %7865 = vst.msk [vmem:[#allocation3 + $0x8] sm:$0xff] %vm2486, %v7761
  %vm7866 = vcmask 11264
  %7867 = vst.msk [vmem:[#allocation3 + $0x10] sm:$0xf] %vm7866, %v7762
  %7868 = vst.msk [vmem:[#allocation3 + $0xa0] sm:$0xff] %vm2486, %v7840
  %7869 = vst.msk [vmem:[#allocation3 + $0xa8] sm:$0xff] %vm2486, %v7841
  %7870 = vst.msk [vmem:[#allocation3 + $0xb0] sm:$0xf] %vm7866, %v7842
  %7871 = vst.msk [vmem:[#allocation3 + $0x14] sm:$0xff] %vm2486, %v7763
  %7872 = vst.msk [vmem:[#allocation3 + $0x1c] sm:$0xff] %vm2486, %v7764
  %7873 = vst.msk [vmem:[#allocation3 + $0x24] sm:$0xf] %vm7866, %v7765
  %7874 = vst.msk [vmem:[#allocation3 + $0xb4] sm:$0xff] %vm2486, %v7843
  %7875 = vst.msk [vmem:[#allocation3 + $0xbc] sm:$0xff] %vm2486, %v7844
  %7876 = vst.msk [vmem:[#allocation3 + $0xc4] sm:$0xf] %vm7866, %v7845
  %7877 = vst.msk [vmem:[#allocation3 + $0x28] sm:$0xff] %vm2486, %v7766
  %7878 = vst.msk [vmem:[#allocation3 + $0x30] sm:$0xff] %vm2486, %v7767
  %7879 = vst.msk [vmem:[#allocation3 + $0x38] sm:$0xf] %vm7866, %v7768
  %7880 = vst.msk [vmem:[#allocation3 + $0xc8] sm:$0xff] %vm2486, %v7846
  %7881 = vst.msk [vmem:[#allocation3 + $0xd0] sm:$0xff] %vm2486, %v7847
  %7882 = vst.msk [vmem:[#allocation3 + $0xd8] sm:$0xf] %vm7866, %v7848
  %7883 = vst.msk [vmem:[#allocation3 + $0x3c] sm:$0xff] %vm2486, %v7769
  %7884 = vst.msk [vmem:[#allocation3 + $0x44] sm:$0xff] %vm2486, %v7770
  %7885 = vst.msk [vmem:[#allocation3 + $0x4c] sm:$0xf] %vm7866, %v7771
  %7886 = vst.msk [vmem:[#allocation3 + $0xdc] sm:$0xff] %vm2486, %v7849
  %7887 = vst.msk [vmem:[#allocation3 + $0xe4] sm:$0xff] %vm2486, %v7850
  %7888 = vst.msk [vmem:[#allocation3 + $0xec] sm:$0xf] %vm7866, %v7851
  %7889 = vst.msk [vmem:[#allocation3 + $0x50] sm:$0xff] %vm2486, %v7772
  %7890 = vst.msk [vmem:[#allocation3 + $0x58] sm:$0xff] %vm2486, %v7773
  %7891 = vst.msk [vmem:[#allocation3 + $0x60] sm:$0xf] %vm7866, %v7774
  %7892 = vst.msk [vmem:[#allocation3 + $0xf0] sm:$0xff] %vm2486, %v7852
  %7893 = vst.msk [vmem:[#allocation3 + $0xf8] sm:$0xff] %vm2486, %v7853
  %7894 = vst.msk [vmem:[#allocation3 + $0x100] sm:$0xf] %vm7866, %v7854
  %7895 = vst.msk [vmem:[#allocation3 + $0x64] sm:$0xff] %vm2486, %v7775
  %7896 = vst.msk [vmem:[#allocation3 + $0x6c] sm:$0xff] %vm2486, %v7776
  %7897 = vst.msk [vmem:[#allocation3 + $0x74] sm:$0xf] %vm7866, %v7777
  %7898 = vst.msk [vmem:[#allocation3 + $0x104] sm:$0xff] %vm2486, %v7855
  %7899 = vst.msk [vmem:[#allocation3 + $0x10c] sm:$0xff] %vm2486, %v7856
  %7900 = vst.msk [vmem:[#allocation3 + $0x114] sm:$0xf] %vm7866, %v7857
  %7901 = vst.msk [vmem:[#allocation3 + $0x78] sm:$0xff] %vm2486, %v7778
  %7902 = vst.msk [vmem:[#allocation3 + $0x80] sm:$0xff] %vm2486, %v7779
  %7903 = vst.msk [vmem:[#allocation3 + $0x88] sm:$0xf] %vm7866, %v7780
  %7904 = vst.msk [vmem:[#allocation3 + $0x118] sm:$0xff] %vm2486, %v7858
  %7905 = vst.msk [vmem:[#allocation3 + $0x120] sm:$0xff] %vm2486, %v7859
  %7906 = vst.msk [vmem:[#allocation3 + $0x128] sm:$0xf] %vm7866, %v7860
  %7907 = vst.msk [vmem:[#allocation3 + $0x8c] sm:$0xff] %vm2486, %v7781
  %7908 = vst.msk [vmem:[#allocation3 + $0x94] sm:$0xff] %vm2486, %v7782
  %7909 = vst.msk [vmem:[#allocation3 + $0x9c] sm:$0xf] %vm7866, %v7783
  %7910 = vst.msk [vmem:[#allocation3 + $0x12c] sm:$0xff] %vm2486, %v7861
  %7911 = vst.msk [vmem:[#allocation3 + $0x134] sm:$0xff] %vm2486, %v7862
  %7912 = vst.msk [vmem:[#allocation3 + $0x13c] sm:$0xf] %vm7866, %v7863
  %v7913 = vld [vmem:[%s2] sm:$0xff]
  %v7914 = vld [vmem:[%s2 + $0x8] sm:$0xff]
  %v7915 = vld [vmem:[%s2 + $0x10] sm:$0xff]
  %v7916 = vld [vmem:[%s2 + $0x18] sm:$0xff]
  %v7917 = vld [vmem:[%s2 + $0x20] sm:$0xff]
  %v7918 = vld [vmem:[%s2 + $0x28] sm:$0xff]
  %v7919 = vld [vmem:[%s2 + $0x30] sm:$0xff]
  %v7920 = vld [vmem:[%s2 + $0x38] sm:$0xff]
  %v7921 = vld [vmem:[%s2 + $0x40] sm:$0xff]
  %v7922 = vld [vmem:[%s2 + $0x48] sm:$0xff]
  %v7923 = vld [vmem:[%s2 + $0x50] sm:$0xff]
  %v7924 = vld [vmem:[%s2 + $0x58] sm:$0xff]
  %v7925 = vld [vmem:[%s2 + $0x60] sm:$0xff]
  %v7926 = vld [vmem:[%s2 + $0x68] sm:$0xff]
  %v7927 = vld [vmem:[%s2 + $0x70] sm:$0xff]
  %v7928 = vld [vmem:[%s2 + $0x78] sm:$0xff]
  %v7929 = vld [vmem:[%s2 + $0x80] sm:$0xff]
  %v7930 = vld [vmem:[%s2 + $0x88] sm:$0xff]
  %v7931 = vld [vmem:[%s2 + $0x90] sm:$0xff]
  %v7932 = vld [vmem:[%s2 + $0x98] sm:$0xff]
  %v7933 = vld [vmem:[%s2 + $0xa0] sm:$0xff]
  %v7934 = vld [vmem:[%s2 + $0xa8] sm:$0xff]
  %v7935 = vld [vmem:[%s2 + $0xb0] sm:$0xff]
  %v7936 = vld [vmem:[%s2 + $0xb8] sm:$0xff]
  %v7937 = vld [vmem:[%s2 + $0xc0] sm:$0xff]
  %v7938 = vld [vmem:[%s2 + $0xc8] sm:$0xff]
  %v7939 = vld [vmem:[%s2 + $0xd0] sm:$0xff]
  %v7940 = vld [vmem:[%s2 + $0xd8] sm:$0xff]
  %v7941 = vld [vmem:[%s2 + $0xe0] sm:$0xff]
  %v7942 = vld [vmem:[%s2 + $0xe8] sm:$0xff]
  %v7943 = vld [vmem:[%s2 + $0xf0] sm:$0xff]
  %v7944 = vld [vmem:[%s2 + $0xf8] sm:$0xff]
  %v7945 = vld [vmem:[%s2 + $0x100] sm:$0xff]
  %v7946 = vld [vmem:[%s2 + $0x108] sm:$0xff]
  %v7947 = vld [vmem:[%s2 + $0x110] sm:$0xff]
  %v7948 = vld [vmem:[%s2 + $0x118] sm:$0xff]
  %v7949 = vld [vmem:[%s2 + $0x120] sm:$0xff]
  %v7950 = vld [vmem:[%s2 + $0x128] sm:$0xff]
  %v7951 = vld [vmem:[%s2 + $0x130] sm:$0xff]
  %v7952 = vld [vmem:[%s2 + $0x138] sm:$0xff]
  %v7953 = vld [vmem:[%s2 + $0x140] sm:$0xff]
  %v7954 = vld [vmem:[%s2 + $0x148] sm:$0xff]
  %v7955 = vld [vmem:[%s2 + $0x150] sm:$0xff]
  %v7956 = vld [vmem:[%s2 + $0x158] sm:$0xff]
  %v7957 = vld [vmem:[%s2 + $0x160] sm:$0xff]
  %v7958 = vld [vmem:[%s2 + $0x168] sm:$0xff]
  %v7959 = vld [vmem:[%s2 + $0x170] sm:$0xff]
  %v7960 = vld [vmem:[%s2 + $0x178] sm:$0xff]
  %v7961 = vld [vmem:[%s2 + $0x180] sm:$0xff]
  %v7962 = vld [vmem:[%s2 + $0x188] sm:$0xff]
  %v7963 = vld [vmem:[%s2 + $0x190] sm:$0xff]
  %v7964 = vld [vmem:[%s2 + $0x198] sm:$0xff]
  %v7965 = vld [vmem:[%s2 + $0x1a0] sm:$0xff]
  %v7966 = vld [vmem:[%s2 + $0x1a8] sm:$0xff]
  %v7967 = vld [vmem:[%s2 + $0x1b0] sm:$0xff]
  %v7968 = vld [vmem:[%s2 + $0x1b8] sm:$0xff]
  %v7969 = vld [vmem:[%s2 + $0x1c0] sm:$0xff]
  %v7970 = vld [vmem:[%s2 + $0x1c8] sm:$0xff]
  %v7971 = vld [vmem:[%s2 + $0x1d0] sm:$0xff]
  %v7972 = vld [vmem:[%s2 + $0x1d8] sm:$0xff]
  %v7973 = vld [vmem:[%s2 + $0x1e0] sm:$0xff]
  %v7974 = vld [vmem:[%s2 + $0x1e8] sm:$0xff]
  %v7975 = vld [vmem:[%s2 + $0x1f0] sm:$0xff]
  %v7976 = vld [vmem:[%s2 + $0x1f8] sm:$0xff]
  %v7977 = vld [vmem:[%s2 + $0x200] sm:$0xff]
  %v7978 = vld [vmem:[%s2 + $0x208] sm:$0xff]
  %v7979 = vld [vmem:[%s2 + $0x210] sm:$0xff]
  %v7980 = vld [vmem:[%s2 + $0x218] sm:$0xff]
  %v7981 = vld [vmem:[%s2 + $0x220] sm:$0xff]
  %v7982 = vld [vmem:[%s2 + $0x228] sm:$0xff]
  %v7983 = vld [vmem:[%s2 + $0x230] sm:$0xff]
  %v7984 = vld [vmem:[%s2 + $0x238] sm:$0xff]
  %v7985 = vld [vmem:[%s2 + $0x240] sm:$0xff]
  %v7986 = vld [vmem:[%s2 + $0x248] sm:$0xff]
  %v7987 = vld [vmem:[%s2 + $0x250] sm:$0xff]
  %v7988 = vld [vmem:[%s2 + $0x258] sm:$0xff]
  %v7989 = vld [vmem:[%s2 + $0x260] sm:$0xff]
  %v7990 = vld [vmem:[%s2 + $0x268] sm:$0xff]
  %v7991 = vld [vmem:[%s2 + $0x270] sm:$0xff]
  %v7992 = vld [vmem:[%s2 + $0x278] sm:$0xff]
  %v7993 = vld [vmem:[%s2 + $0x280] sm:$0xff]
  %v7994 = vld [vmem:[%s2 + $0x288] sm:$0xff]
  %v7995 = vld [vmem:[%s2 + $0x290] sm:$0xff]
  %v7996 = vld [vmem:[%s2 + $0x298] sm:$0xff]
  %v7997 = vld [vmem:[%s2 + $0x2a0] sm:$0xff]
  %v7998 = vld [vmem:[%s2 + $0x2a8] sm:$0xff]
  %v7999 = vld [vmem:[%s2 + $0x2b0] sm:$0xff]
  %v8000 = vld [vmem:[%s2 + $0x2b8] sm:$0xff]
  %v8001 = vld [vmem:[%s2 + $0x2c0] sm:$0xff]
  %v8002 = vld [vmem:[%s2 + $0x2c8] sm:$0xff]
  %v8003 = vld [vmem:[%s2 + $0x2d0] sm:$0xff]
  %v8004 = vld [vmem:[%s2 + $0x2d8] sm:$0xff]
  %v8005 = vld [vmem:[%s2 + $0x2e0] sm:$0xff]
  %v8006 = vld [vmem:[%s2 + $0x2e8] sm:$0xff]
  %v8007 = vld [vmem:[%s2 + $0x2f0] sm:$0xff]
  %v8008 = vld [vmem:[%s2 + $0x2f8] sm:$0xff]
  %v8009 = vld [vmem:[%s2 + $0x300] sm:$0xff]
  %v8010 = vld [vmem:[%s2 + $0x308] sm:$0xff]
  %v8011 = vld [vmem:[%s2 + $0x310] sm:$0xff]
  %v8012 = vld [vmem:[%s2 + $0x318] sm:$0xff]
  %v8013 = vld [vmem:[%s2 + $0x320] sm:$0xff]
  %v8014 = vld [vmem:[%s2 + $0x328] sm:$0xff]
  %v8015 = vld [vmem:[%s2 + $0x330] sm:$0xff]
  %v8016 = vld [vmem:[%s2 + $0x338] sm:$0xff]
  %v8017 = vld [vmem:[%s2 + $0x340] sm:$0xff]
  %v8018 = vld [vmem:[%s2 + $0x348] sm:$0xff]
  %v8019 = vld [vmem:[%s2 + $0x350] sm:$0xff]
  %v8020 = vld [vmem:[%s2 + $0x358] sm:$0xff]
  %v8021 = vld [vmem:[%s2 + $0x360] sm:$0xff]
  %v8022 = vld [vmem:[%s2 + $0x368] sm:$0xff]
  %v8023 = vld [vmem:[%s2 + $0x370] sm:$0xff]
  %v8024 = vld [vmem:[%s2 + $0x378] sm:$0xff]
  %v8025 = vld [vmem:[%s2 + $0x380] sm:$0xff]
  %v8026 = vld [vmem:[%s2 + $0x388] sm:$0xff]
  %v8027 = vld [vmem:[%s2 + $0x390] sm:$0xff]
  %v8028 = vld [vmem:[%s2 + $0x398] sm:$0xff]
  %v8029 = vld [vmem:[%s2 + $0x3a0] sm:$0xff]
  %v8030 = vld [vmem:[%s2 + $0x3a8] sm:$0xff]
  %v8031 = vld [vmem:[%s2 + $0x3b0] sm:$0xff]
  %v8032 = vld [vmem:[%s2 + $0x3b8] sm:$0xff]
  %v8033 = vld [vmem:[#allocation3] sm:$0xff]
  %v8034 = vld [vmem:[#allocation3 + $0x8] sm:$0xff]
  %v8035 = vld [vmem:[#allocation3 + $0x10] sm:$0xff]
  %v8036 = vld [vmem:[#allocation3 + $0x18] sm:$0xff]
  %v8037 = vld [vmem:[#allocation3 + $0x20] sm:$0xff]
  %v8038 = vld [vmem:[#allocation3 + $0x28] sm:$0xff]
  %v8039 = vld [vmem:[#allocation3 + $0x30] sm:$0xff]
  %v8040 = vld [vmem:[#allocation3 + $0x38] sm:$0xff]
  %v8041 = vld [vmem:[#allocation3 + $0x40] sm:$0xff]
  %v8042 = vld [vmem:[#allocation3 + $0x48] sm:$0xff]
  %v8043 = vld [vmem:[#allocation3 + $0x50] sm:$0xff]
  %v8044 = vld [vmem:[#allocation3 + $0x58] sm:$0xff]
  %v8045 = vld [vmem:[#allocation3 + $0x60] sm:$0xff]
  %v8046 = vld [vmem:[#allocation3 + $0x68] sm:$0xff]
  %v8047 = vld [vmem:[#allocation3 + $0x70] sm:$0xff]
  %v8048 = vld [vmem:[#allocation3 + $0x78] sm:$0xff]
  %v8049 = vld [vmem:[#allocation3 + $0x80] sm:$0xff]
  %v8050 = vld [vmem:[#allocation3 + $0x88] sm:$0xff]
  %v8051 = vld [vmem:[#allocation3 + $0x90] sm:$0xff]
  %v8052 = vld [vmem:[#allocation3 + $0x98] sm:$0xff]
  %v8053 = vld [vmem:[#allocation3 + $0xa0] sm:$0xff]
  %v8054 = vld [vmem:[#allocation3 + $0xa8] sm:$0xff]
  %v8055 = vld [vmem:[#allocation3 + $0xb0] sm:$0xff]
  %v8056 = vld [vmem:[#allocation3 + $0xb8] sm:$0xff]
  %v8057 = vld [vmem:[#allocation3 + $0xc0] sm:$0xff]
  %v8058 = vld [vmem:[#allocation3 + $0xc8] sm:$0xff]
  %v8059 = vld [vmem:[#allocation3 + $0xd0] sm:$0xff]
  %v8060 = vld [vmem:[#allocation3 + $0xd8] sm:$0xff]
  %v8061 = vld [vmem:[#allocation3 + $0xe0] sm:$0xff]
  %v8062 = vld [vmem:[#allocation3 + $0xe8] sm:$0xff]
  %v8063 = vld [vmem:[#allocation3 + $0xf0] sm:$0xff]
  %v8064 = vld [vmem:[#allocation3 + $0xf8] sm:$0xff]
  %v8065 = vld [vmem:[#allocation3 + $0x100] sm:$0xff]
  %v8066 = vld [vmem:[#allocation3 + $0x108] sm:$0xff]
  %v8067 = vld [vmem:[#allocation3 + $0x110] sm:$0xff]
  %v8068 = vld [vmem:[#allocation3 + $0x118] sm:$0xff]
  %v8069 = vld [vmem:[#allocation3 + $0x120] sm:$0xff]
  %v8070 = vld [vmem:[#allocation3 + $0x128] sm:$0xff]
  %v8071 = vld [vmem:[#allocation3 + $0x130] sm:$0xff]
  %v8072 = vld [vmem:[#allocation3 + $0x138] sm:$0xff]
  %vm8073 = vcmask 523264
  %v8075 = vsel %vm8073, %v7915, 0
  %v8078 = vsel %vm8073, %v7918, 0
  %v8081 = vsel %vm8073, %v7921, 0
  %v8084 = vsel %vm8073, %v7924, 0
  %v8087 = vsel %vm8073, %v7927, 0
  %v8090 = vsel %vm8073, %v7930, 0
  %v8093 = vsel %vm8073, %v7933, 0
  %v8096 = vsel %vm8073, %v7936, 0
  %v8099 = vsel %vm8073, %v7939, 0
  %v8102 = vsel %vm8073, %v7942, 0
  %v8105 = vsel %vm8073, %v7945, 0
  %v8108 = vsel %vm8073, %v7948, 0
  %v8111 = vsel %vm8073, %v7951, 0
  %v8114 = vsel %vm8073, %v7954, 0
  %v8117 = vsel %vm8073, %v7957, 0
  %v8120 = vsel %vm8073, %v7960, 0
  %v8123 = vsel %vm8073, %v7963, 0
  %v8126 = vsel %vm8073, %v7966, 0
  %v8129 = vsel %vm8073, %v7969, 0
  %v8132 = vsel %vm8073, %v7972, 0
  %v8135 = vsel %vm8073, %v7975, 0
  %v8138 = vsel %vm8073, %v7978, 0
  %v8141 = vsel %vm8073, %v7981, 0
  %v8144 = vsel %vm8073, %v7984, 0
  %v8147 = vsel %vm8073, %v7987, 0
  %v8150 = vsel %vm8073, %v7990, 0
  %v8153 = vsel %vm8073, %v7993, 0
  %v8156 = vsel %vm8073, %v7996, 0
  %v8159 = vsel %vm8073, %v7999, 0
  %v8162 = vsel %vm8073, %v8002, 0
  %v8165 = vsel %vm8073, %v8005, 0
  %v8168 = vsel %vm8073, %v8008, 0
  %v8171 = vsel %vm8073, %v8011, 0
  %v8174 = vsel %vm8073, %v8014, 0
  %v8177 = vsel %vm8073, %v8017, 0
  %v8180 = vsel %vm8073, %v8020, 0
  %v8183 = vsel %vm8073, %v8023, 0
  %v8186 = vsel %vm8073, %v8026, 0
  %v8189 = vsel %vm8073, %v8029, 0
  %v8192 = vsel %vm8073, %v8032, 0
  %8194 = vmatprep.subr.mxu0 0.0
  %8195 = vmatpush1.msra.mxu0 %v8033
  %8196 = vmatprep.subr.mxu0 0.0
  %8197 = vmatpush1.msra.mxu0 %v8034
  %8198 = vmatprep.subr.mxu0 0.0
  %8199 = vmatpush1.msra.mxu0 %v8035
  %8200 = vmatprep.subr.mxu0 0.0
  %8201 = vmatpush1.msra.mxu0 %v8036
  %8202 = vmatprep.subr.mxu0 0.0
  %8203 = vmatpush1.msra.mxu0 %v8037
  %8204 = vmatprep.subr.mxu0 0.0
  %8205 = vmatpush1.msra.mxu0 %v8038
  %8206 = vmatprep.subr.mxu0 0.0
  %8207 = vmatpush1.msra.mxu0 %v8039
  %8208 = vmatprep.subr.mxu0 0.0
  %8209 = vmatpush1.msra.mxu0 %v8040
  %8210 = vmatprep.subr.mxu0 0.0
  %8211 = vmatpush1.msra.mxu0 %v8041
  %8212 = vmatprep.subr.mxu0 0.0
  %8213 = vmatpush1.msra.mxu0 %v8042
  %8214 = vmatprep.subr.mxu0 0.0
  %8215 = vmatpush1.msra.mxu0 %v8043
  %8216 = vmatprep.subr.mxu0 0.0
  %8217 = vmatpush1.msra.mxu0 %v8044
  %8218 = vmatprep.subr.mxu0 0.0
  %8219 = vmatpush1.msra.mxu0 %v8045
  %8220 = vmatprep.subr.mxu0 0.0
  %8221 = vmatpush1.msra.mxu0 %v8046
  %8222 = vmatprep.subr.mxu0 0.0
  %8223 = vmatpush1.msra.mxu0 %v8047
  %8224 = vmatprep.subr.mxu0 0.0
  %8225 = vmatpush1.msra.mxu0 %v8048
  %8226 = vmatprep.subr.mxu0 0.0
  %8227 = vmatpush1.msra.mxu0 %v8049
  %8228 = vmatprep.subr.mxu0 0.0
  %8229 = vmatpush1.msra.mxu0 %v8050
  %8230 = vmatprep.subr.mxu0 0.0
  %8231 = vmatpush1.msra.mxu0 %v8051
  %8232 = vmatprep.subr.mxu0 0.0
  %8233 = vmatpush1.msra.mxu0 %v8052
  %8234 = vmatprep.subr.mxu0 0.0
  %8235 = vmatpush1.msra.mxu0 %v8053
  %8236 = vmatprep.subr.mxu0 0.0
  %8237 = vmatpush1.msra.mxu0 %v8054
  %8238 = vmatprep.subr.mxu0 0.0
  %8239 = vmatpush1.msra.mxu0 %v8055
  %8240 = vmatprep.subr.mxu0 0.0
  %8241 = vmatpush1.msra.mxu0 %v8056
  %8242 = vmatprep.subr.mxu0 0.0
  %8243 = vmatpush1.msra.mxu0 %v8057
  %8244 = vmatprep.subr.mxu0 0.0
  %8245 = vmatpush1.msra.mxu0 %v8058
  %8246 = vmatprep.subr.mxu0 0.0
  %8247 = vmatpush1.msra.mxu0 %v8059
  %8248 = vmatprep.subr.mxu0 0.0
  %8249 = vmatpush1.msra.mxu0 %v8060
  %8250 = vmatprep.subr.mxu0 0.0
  %8251 = vmatpush1.msra.mxu0 %v8061
  %8252 = vmatprep.subr.mxu0 0.0
  %8253 = vmatpush1.msra.mxu0 %v8062
  %8254 = vmatprep.subr.mxu0 0.0
  %8255 = vmatpush1.msra.mxu0 %v8063
  %8256 = vmatprep.subr.mxu0 0.0
  %8257 = vmatpush1.msra.mxu0 %v8064
  %8258 = vmatprep.mubr.f32.mxu0 %v7914
  %8259 = vmatmul.mubr.f32.gmra.mrb[0].mxu0 %v7913
  %v8260 = vpop.f32.mrb[0].mxu0
  %v8261 = vadd.f32 0.0, %v8260
  %v8262 = vpop.f32.mrb[0].mxu0
  %8263 = vmatprep.mubr.f32.mxu0 %v7917
  %8264 = vmatmul.mubr.f32.gmra.mrb[0].mxu0 %v7916
  %v8265 = vpop.f32.mrb[0].mxu0
  %v8266 = vadd.f32 0.0, %v8265
  %v8267 = vpop.f32.mrb[0].mxu0
  %8268 = vmatprep.mubr.f32.mxu0 %v7920
  %8269 = vmatmul.mubr.f32.gmra.mrb[0].mxu0 %v7919
  %v8270 = vpop.f32.mrb[0].mxu0
  %v8271 = vadd.f32 0.0, %v8270
  %v8272 = vpop.f32.mrb[0].mxu0
  %8273 = vmatprep.mubr.f32.mxu0 %v7923
  %8274 = vmatmul.mubr.f32.gmra.mrb[0].mxu0 %v7922
  %v8275 = vpop.f32.mrb[0].mxu0
  %v8276 = vadd.f32 0.0, %v8275
  %v8277 = vpop.f32.mrb[0].mxu0
  %8278 = vmatprep.mubr.f32.mxu0 %v7926
  %8279 = vmatmul.mubr.f32.gmra.mrb[0].mxu0 %v7925
  %v8280 = vpop.f32.mrb[0].mxu0
  %v8281 = vadd.f32 0.0, %v8280
  %v8282 = vpop.f32.mrb[0].mxu0
  %8283 = vmatprep.mubr.f32.mxu0 %v7929
  %8284 = vmatmul.mubr.f32.gmra.mrb[0].mxu0 %v7928
  %v8285 = vpop.f32.mrb[0].mxu0
  %v8286 = vadd.f32 0.0, %v8285
  %v8287 = vpop.f32.mrb[0].mxu0
  %8288 = vmatprep.mubr.f32.mxu0 %v7932
  %8289 = vmatmul.mubr.f32.gmra.mrb[0].mxu0 %v7931
  %v8290 = vpop.f32.mrb[0].mxu0
  %v8291 = vadd.f32 0.0, %v8290
  %v8292 = vpop.f32.mrb[0].mxu0
  %8293 = vmatprep.mubr.f32.mxu0 %v7935
  %8294 = vmatmul.mubr.f32.gmra.mrb[0].mxu0 %v7934
  %v8295 = vpop.f32.mrb[0].mxu0
  %v8296 = vadd.f32 0.0, %v8295
  %v8297 = vpop.f32.mrb[0].mxu0
  %8298 = vmatprep.mubr.f32.mxu0 %v7938
  %8299 = vmatmul.mubr.f32.gmra.mrb[0].mxu0 %v7937
  %v8300 = vpop.f32.mrb[0].mxu0
  %v8301 = vadd.f32 0.0, %v8300
  %v8302 = vpop.f32.mrb[0].mxu0
  %8303 = vmatprep.mubr.f32.mxu0 %v7941
  %8304 = vmatmul.mubr.f32.gmra.mrb[0].mxu0 %v7940
  %v8305 = vpop.f32.mrb[0].mxu0
  %v8306 = vadd.f32 0.0, %v8305
  %v8307 = vpop.f32.mrb[0].mxu0
  %8308 = vmatprep.mubr.f32.mxu0 %v7944
  %8309 = vmatmul.mubr.f32.gmra.mrb[0].mxu0 %v7943
  %v8310 = vpop.f32.mrb[0].mxu0
  %v8311 = vadd.f32 0.0, %v8310
  %v8312 = vpop.f32.mrb[0].mxu0
  %8313 = vmatprep.mubr.f32.mxu0 %v7947
  %8314 = vmatmul.mubr.f32.gmra.mrb[0].mxu0 %v7946
  %v8315 = vpop.f32.mrb[0].mxu0
  %v8316 = vadd.f32 0.0, %v8315
  %v8317 = vpop.f32.mrb[0].mxu0
  %8318 = vmatprep.mubr.f32.mxu0 %v7950
  %8319 = vmatmul.mubr.f32.gmra.mrb[0].mxu0 %v7949
  %v8320 = vpop.f32.mrb[0].mxu0
  %v8321 = vadd.f32 0.0, %v8320
  %v8322 = vpop.f32.mrb[0].mxu0
  %8323 = vmatprep.mubr.f32.mxu0 %v7953
  %8324 = vmatmul.mubr.f32.gmra.mrb[0].mxu0 %v7952
  %v8325 = vpop.f32.mrb[0].mxu0
  %v8326 = vadd.f32 0.0, %v8325
  %v8327 = vpop.f32.mrb[0].mxu0
  %8328 = vmatprep.mubr.f32.mxu0 %v7956
  %8329 = vmatmul.mubr.f32.gmra.mrb[0].mxu0 %v7955
  %v8330 = vpop.f32.mrb[0].mxu0
  %v8331 = vadd.f32 0.0, %v8330
  %v8332 = vpop.f32.mrb[0].mxu0
  %8333 = vmatprep.mubr.f32.mxu0 %v7959
  %8334 = vmatmul.mubr.f32.gmra.mrb[0].mxu0 %v7958
  %v8335 = vpop.f32.mrb[0].mxu0
  %v8336 = vadd.f32 0.0, %v8335
  %v8337 = vpop.f32.mrb[0].mxu0
  %8338 = vmatprep.mubr.f32.mxu0 %v7962
  %8339 = vmatmul.mubr.f32.gmra.mrb[0].mxu0 %v7961
  %v8340 = vpop.f32.mrb[0].mxu0
  %v8341 = vadd.f32 0.0, %v8340
  %v8342 = vpop.f32.mrb[0].mxu0
  %8343 = vmatprep.mubr.f32.mxu0 %v7965
  %8344 = vmatmul.mubr.f32.gmra.mrb[0].mxu0 %v7964
  %v8345 = vpop.f32.mrb[0].mxu0
  %v8346 = vadd.f32 0.0, %v8345
  %v8347 = vpop.f32.mrb[0].mxu0
  %8348 = vmatprep.mubr.f32.mxu0 %v7968
  %8349 = vmatmul.mubr.f32.gmra.mrb[0].mxu0 %v7967
  %v8350 = vpop.f32.mrb[0].mxu0
  %v8351 = vadd.f32 0.0, %v8350
  %v8352 = vpop.f32.mrb[0].mxu0
  %8353 = vmatprep.mubr.f32.mxu0 %v7971
  %8354 = vmatmul.mubr.f32.gmra.mrb[0].mxu0 %v7970
  %v8355 = vpop.f32.mrb[0].mxu0
  %v8356 = vadd.f32 0.0, %v8355
  %v8357 = vpop.f32.mrb[0].mxu0
  %8358 = vmatprep.mubr.f32.mxu0 %v7974
  %8359 = vmatmul.mubr.f32.gmra.mrb[0].mxu0 %v7973
  %v8360 = vpop.f32.mrb[0].mxu0
  %v8361 = vadd.f32 0.0, %v8360
  %v8362 = vpop.f32.mrb[0].mxu0
  %8363 = vmatprep.mubr.f32.mxu0 %v7977
  %8364 = vmatmul.mubr.f32.gmra.mrb[0].mxu0 %v7976
  %v8365 = vpop.f32.mrb[0].mxu0
  %v8366 = vadd.f32 0.0, %v8365
  %v8367 = vpop.f32.mrb[0].mxu0
  %8368 = vmatprep.mubr.f32.mxu0 %v7980
  %8369 = vmatmul.mubr.f32.gmra.mrb[0].mxu0 %v7979
  %v8370 = vpop.f32.mrb[0].mxu0
  %v8371 = vadd.f32 0.0, %v8370
  %v8372 = vpop.f32.mrb[0].mxu0
  %8373 = vmatprep.mubr.f32.mxu0 %v7983
  %8374 = vmatmul.mubr.f32.gmra.mrb[0].mxu0 %v7982
  %v8375 = vpop.f32.mrb[0].mxu0
  %v8376 = vadd.f32 0.0, %v8375
  %v8377 = vpop.f32.mrb[0].mxu0
  %8378 = vmatprep.mubr.f32.mxu0 %v7986
  %8379 = vmatmul.mubr.f32.gmra.mrb[0].mxu0 %v7985
  %v8380 = vpop.f32.mrb[0].mxu0
  %v8381 = vadd.f32 0.0, %v8380
  %v8382 = vpop.f32.mrb[0].mxu0
  %8383 = vmatprep.mubr.f32.mxu0 %v7989
  %8384 = vmatmul.mubr.f32.gmra.mrb[0].mxu0 %v7988
  %v8385 = vpop.f32.mrb[0].mxu0
  %v8386 = vadd.f32 0.0, %v8385
  %v8387 = vpop.f32.mrb[0].mxu0
  %8388 = vmatprep.mubr.f32.mxu0 %v7992
  %8389 = vmatmul.mubr.f32.gmra.mrb[0].mxu0 %v7991
  %v8390 = vpop.f32.mrb[0].mxu0
  %v8391 = vadd.f32 0.0, %v8390
  %v8392 = vpop.f32.mrb[0].mxu0
  %8393 = vmatprep.mubr.f32.mxu0 %v7995
  %8394 = vmatmul.mubr.f32.gmra.mrb[0].mxu0 %v7994
  %v8395 = vpop.f32.mrb[0].mxu0
  %v8396 = vadd.f32 0.0, %v8395
  %v8397 = vpop.f32.mrb[0].mxu0
  %8398 = vmatprep.mubr.f32.mxu0 %v7998
  %8399 = vmatmul.mubr.f32.gmra.mrb[0].mxu0 %v7997
  %v8400 = vpop.f32.mrb[0].mxu0
  %v8401 = vadd.f32 0.0, %v8400
  %v8402 = vpop.f32.mrb[0].mxu0
  %8403 = vmatprep.mubr.f32.mxu0 %v8001
  %8404 = vmatmul.mubr.f32.gmra.mrb[0].mxu0 %v8000
  %v8405 = vpop.f32.mrb[0].mxu0
  %v8406 = vadd.f32 0.0, %v8405
  %v8407 = vpop.f32.mrb[0].mxu0
  %8408 = vmatprep.mubr.f32.mxu0 %v8004
  %8409 = vmatmul.mubr.f32.gmra.mrb[0].mxu0 %v8003
  %v8410 = vpop.f32.mrb[0].mxu0
  %v8411 = vadd.f32 0.0, %v8410
  %v8412 = vpop.f32.mrb[0].mxu0
  %8413 = vmatprep.mubr.f32.mxu0 %v8007
  %8414 = vmatmul.mubr.f32.gmra.mrb[0].mxu0 %v8006
  %v8415 = vpop.f32.mrb[0].mxu0
  %v8416 = vadd.f32 0.0, %v8415
  %v8417 = vpop.f32.mrb[0].mxu0
  %8418 = vmatprep.mubr.f32.mxu0 %v8010
  %8419 = vmatmul.mubr.f32.gmra.mrb[0].mxu0 %v8009
  %v8420 = vpop.f32.mrb[0].mxu0
  %v8421 = vadd.f32 0.0, %v8420
  %v8422 = vpop.f32.mrb[0].mxu0
  %8423 = vmatprep.mubr.f32.mxu0 %v8013
  %8424 = vmatmul.mubr.f32.gmra.mrb[0].mxu0 %v8012
  %v8425 = vpop.f32.mrb[0].mxu0
  %v8426 = vadd.f32 0.0, %v8425
  %v8427 = vpop.f32.mrb[0].mxu0
  %8428 = vmatprep.mubr.f32.mxu0 %v8016
  %8429 = vmatmul.mubr.f32.gmra.mrb[0].mxu0 %v8015
  %v8430 = vpop.f32.mrb[0].mxu0
  %v8431 = vadd.f32 0.0, %v8430
  %v8432 = vpop.f32.mrb[0].mxu0
  %8433 = vmatprep.mubr.f32.mxu0 %v8019
  %8434 = vmatmul.mubr.f32.gmra.mrb[0].mxu0 %v8018
  %v8435 = vpop.f32.mrb[0].mxu0
  %v8436 = vadd.f32 0.0, %v8435
  %v8437 = vpop.f32.mrb[0].mxu0
  %8438 = vmatprep.mubr.f32.mxu0 %v8022
  %8439 = vmatmul.mubr.f32.gmra.mrb[0].mxu0 %v8021
  %v8440 = vpop.f32.mrb[0].mxu0
  %v8441 = vadd.f32 0.0, %v8440
  %v8442 = vpop.f32.mrb[0].mxu0
  %8443 = vmatprep.mubr.f32.mxu0 %v8025
  %8444 = vmatmul.mubr.f32.gmra.mrb[0].mxu0 %v8024
  %v8445 = vpop.f32.mrb[0].mxu0
  %v8446 = vadd.f32 0.0, %v8445
  %v8447 = vpop.f32.mrb[0].mxu0
  %8448 = vmatprep.mubr.f32.mxu0 %v8028
  %8449 = vmatmul.mubr.f32.gmra.mrb[0].mxu0 %v8027
  %v8450 = vpop.f32.mrb[0].mxu0
  %v8451 = vadd.f32 0.0, %v8450
  %v8452 = vpop.f32.mrb[0].mxu0
  %8453 = vmatprep.mubr.f32.mxu0 %v8031
  %8454 = vmatmul.mubr.f32.gmra.mrb[0].mxu0 %v8030
  %v8455 = vpop.f32.mrb[0].mxu0
  %v8456 = vadd.f32 0.0, %v8455
  %v8457 = vpop.f32.mrb[0].mxu0
  %8458 = vdwg.mxu0
  %8459 = vmatprep.subr.mxu0 0.0
  %8460 = vmatpush1.msra.mxu0 %v8065
  %8461 = vmatprep.subr.mxu0 0.0
  %8462 = vmatpush1.msra.mxu0 %v8066
  %8463 = vmatprep.subr.mxu0 0.0
  %8464 = vmatpush1.msra.mxu0 %v8067
  %8465 = vmatprep.subr.mxu0 0.0
  %8466 = vmatpush1.msra.mxu0 %v8068
  %8467 = vmatprep.subr.mxu0 0.0
  %8468 = vmatpush1.msra.mxu0 %v8069
  %8469 = vmatprep.subr.mxu0 0.0
  %8470 = vmatpush1.msra.mxu0 %v8070
  %8471 = vmatprep.subr.mxu0 0.0
  %8472 = vmatpush1.msra.mxu0 %v8071
  %8473 = vmatprep.subr.mxu0 0.0
  %8474 = vmatpush1.msra.mxu0 %v8072
  %8475 = vmatprep.subr.mxu0 0.0
  %8476 = vmatpush1.msra.mxu0 0.0
  %8477 = vmatprep.subr.mxu0 0.0
  %8478 = vmatpush1.msra.mxu0 0.0
  %8479 = vmatprep.subr.mxu0 0.0
  %8480 = vmatpush1.msra.mxu0 0.0
  %8481 = vmatprep.subr.mxu0 0.0
  %8482 = vmatpush1.msra.mxu0 0.0
  %8483 = vmatprep.subr.mxu0 0.0
  %8484 = vmatpush1.msra.mxu0 0.0
  %8485 = vmatprep.subr.mxu0 0.0
  %8486 = vmatpush1.msra.mxu0 0.0
  %8487 = vmatprep.subr.mxu0 0.0
  %8488 = vmatpush1.msra.mxu0 0.0
  %8489 = vmatprep.subr.mxu0 0.0
  %8490 = vmatpush1.msra.mxu0 0.0
  %8491 = vmatprep.subr.mxu0 0.0
  %8492 = vmatpush1.msra.mxu0 0.0
  %8493 = vmatprep.subr.mxu0 0.0
  %8494 = vmatpush1.msra.mxu0 0.0
  %8495 = vmatprep.subr.mxu0 0.0
  %8496 = vmatpush1.msra.mxu0 0.0
  %8497 = vmatprep.subr.mxu0 0.0
  %8498 = vmatpush1.msra.mxu0 0.0
  %8499 = vmatprep.subr.mxu0 0.0
  %8500 = vmatpush1.msra.mxu0 0.0
  %8501 = vmatprep.subr.mxu0 0.0
  %8502 = vmatpush1.msra.mxu0 0.0
  %8503 = vmatprep.subr.mxu0 0.0
  %8504 = vmatpush1.msra.mxu0 0.0
  %8505 = vmatprep.subr.mxu0 0.0
  %8506 = vmatpush1.msra.mxu0 0.0
  %8507 = vmatprep.subr.mxu0 0.0
  %8508 = vmatpush1.msra.mxu0 0.0
  %8509 = vmatprep.subr.mxu0 0.0
  %8510 = vmatpush1.msra.mxu0 0.0
  %8511 = vmatprep.subr.mxu0 0.0
  %8512 = vmatpush1.msra.mxu0 0.0
  %8513 = vmatprep.subr.mxu0 0.0
  %8514 = vmatpush1.msra.mxu0 0.0
  %8515 = vmatprep.subr.mxu0 0.0
  %8516 = vmatpush1.msra.mxu0 0.0
  %8517 = vmatprep.subr.mxu0 0.0
  %8518 = vmatpush1.msra.mxu0 0.0
  %8519 = vmatprep.subr.mxu0 0.0
  %8520 = vmatpush1.msra.mxu0 0.0
  %8521 = vmatprep.subr.mxu0 0.0
  %8522 = vmatpush1.msra.mxu0 0.0
  %8523 = vmatprep.mubr.f32.mxu0 0.0
  %8524 = vmatmul.mubr.f32.gmra.mrb[0].mxu0 %v8075
  %v8525 = vpop.f32.mrb[0].mxu0
  %v8526 = vadd.f32 %v8261, %v8525
  %v8527 = vpop.f32.mrb[0].mxu0
  %8528 = vmatprep.mubr.f32.mxu0 0.0
  %8529 = vmatmul.mubr.f32.gmra.mrb[0].mxu0 %v8078
  %v8530 = vpop.f32.mrb[0].mxu0
  %v8531 = vadd.f32 %v8266, %v8530
  %v8532 = vpop.f32.mrb[0].mxu0
  %8533 = vmatprep.mubr.f32.mxu0 0.0
  %8534 = vmatmul.mubr.f32.gmra.mrb[0].mxu0 %v8081
  %v8535 = vpop.f32.mrb[0].mxu0
  %v8536 = vadd.f32 %v8271, %v8535
  %v8537 = vpop.f32.mrb[0].mxu0
  %8538 = vmatprep.mubr.f32.mxu0 0.0
  %8539 = vmatmul.mubr.f32.gmra.mrb[0].mxu0 %v8084
  %v8540 = vpop.f32.mrb[0].mxu0
  %v8541 = vadd.f32 %v8276, %v8540
  %v8542 = vpop.f32.mrb[0].mxu0
  %8543 = vmatprep.mubr.f32.mxu0 0.0
  %8544 = vmatmul.mubr.f32.gmra.mrb[0].mxu0 %v8087
  %v8545 = vpop.f32.mrb[0].mxu0
  %v8546 = vadd.f32 %v8281, %v8545
  %v8547 = vpop.f32.mrb[0].mxu0
  %8548 = vmatprep.mubr.f32.mxu0 0.0
  %8549 = vmatmul.mubr.f32.gmra.mrb[0].mxu0 %v8090
  %v8550 = vpop.f32.mrb[0].mxu0
  %v8551 = vadd.f32 %v8286, %v8550
  %v8552 = vpop.f32.mrb[0].mxu0
  %8553 = vmatprep.mubr.f32.mxu0 0.0
  %8554 = vmatmul.mubr.f32.gmra.mrb[0].mxu0 %v8093
  %v8555 = vpop.f32.mrb[0].mxu0
  %v8556 = vadd.f32 %v8291, %v8555
  %v8557 = vpop.f32.mrb[0].mxu0
  %8558 = vmatprep.mubr.f32.mxu0 0.0
  %8559 = vmatmul.mubr.f32.gmra.mrb[0].mxu0 %v8096
  %v8560 = vpop.f32.mrb[0].mxu0
  %v8561 = vadd.f32 %v8296, %v8560
  %v8562 = vpop.f32.mrb[0].mxu0
  %8563 = vmatprep.mubr.f32.mxu0 0.0
  %8564 = vmatmul.mubr.f32.gmra.mrb[0].mxu0 %v8099
  %v8565 = vpop.f32.mrb[0].mxu0
  %v8566 = vadd.f32 %v8301, %v8565
  %v8567 = vpop.f32.mrb[0].mxu0
  %8568 = vmatprep.mubr.f32.mxu0 0.0
  %8569 = vmatmul.mubr.f32.gmra.mrb[0].mxu0 %v8102
  %v8570 = vpop.f32.mrb[0].mxu0
  %v8571 = vadd.f32 %v8306, %v8570
  %v8572 = vpop.f32.mrb[0].mxu0
  %8573 = vmatprep.mubr.f32.mxu0 0.0
  %8574 = vmatmul.mubr.f32.gmra.mrb[0].mxu0 %v8105
  %v8575 = vpop.f32.mrb[0].mxu0
  %v8576 = vadd.f32 %v8311, %v8575
  %v8577 = vpop.f32.mrb[0].mxu0
  %8578 = vmatprep.mubr.f32.mxu0 0.0
  %8579 = vmatmul.mubr.f32.gmra.mrb[0].mxu0 %v8108
  %v8580 = vpop.f32.mrb[0].mxu0
  %v8581 = vadd.f32 %v8316, %v8580
  %v8582 = vpop.f32.mrb[0].mxu0
  %8583 = vmatprep.mubr.f32.mxu0 0.0
  %8584 = vmatmul.mubr.f32.gmra.mrb[0].mxu0 %v8111
  %v8585 = vpop.f32.mrb[0].mxu0
  %v8586 = vadd.f32 %v8321, %v8585
  %v8587 = vpop.f32.mrb[0].mxu0
  %8588 = vmatprep.mubr.f32.mxu0 0.0
  %8589 = vmatmul.mubr.f32.gmra.mrb[0].mxu0 %v8114
  %v8590 = vpop.f32.mrb[0].mxu0
  %v8591 = vadd.f32 %v8326, %v8590
  %v8592 = vpop.f32.mrb[0].mxu0
  %8593 = vmatprep.mubr.f32.mxu0 0.0
  %8594 = vmatmul.mubr.f32.gmra.mrb[0].mxu0 %v8117
  %v8595 = vpop.f32.mrb[0].mxu0
  %v8596 = vadd.f32 %v8331, %v8595
  %v8597 = vpop.f32.mrb[0].mxu0
  %8598 = vmatprep.mubr.f32.mxu0 0.0
  %8599 = vmatmul.mubr.f32.gmra.mrb[0].mxu0 %v8120
  %v8600 = vpop.f32.mrb[0].mxu0
  %v8601 = vadd.f32 %v8336, %v8600
  %v8602 = vpop.f32.mrb[0].mxu0
  %8603 = vmatprep.mubr.f32.mxu0 0.0
  %8604 = vmatmul.mubr.f32.gmra.mrb[0].mxu0 %v8123
  %v8605 = vpop.f32.mrb[0].mxu0
  %v8606 = vadd.f32 %v8341, %v8605
  %v8607 = vpop.f32.mrb[0].mxu0
  %8608 = vmatprep.mubr.f32.mxu0 0.0
  %8609 = vmatmul.mubr.f32.gmra.mrb[0].mxu0 %v8126
  %v8610 = vpop.f32.mrb[0].mxu0
  %v8611 = vadd.f32 %v8346, %v8610
  %v8612 = vpop.f32.mrb[0].mxu0
  %8613 = vmatprep.mubr.f32.mxu0 0.0
  %8614 = vmatmul.mubr.f32.gmra.mrb[0].mxu0 %v8129
  %v8615 = vpop.f32.mrb[0].mxu0
  %v8616 = vadd.f32 %v8351, %v8615
  %v8617 = vpop.f32.mrb[0].mxu0
  %8618 = vmatprep.mubr.f32.mxu0 0.0
  %8619 = vmatmul.mubr.f32.gmra.mrb[0].mxu0 %v8132
  %v8620 = vpop.f32.mrb[0].mxu0
  %v8621 = vadd.f32 %v8356, %v8620
  %v8622 = vpop.f32.mrb[0].mxu0
  %8623 = vmatprep.mubr.f32.mxu0 0.0
  %8624 = vmatmul.mubr.f32.gmra.mrb[0].mxu0 %v8135
  %v8625 = vpop.f32.mrb[0].mxu0
  %v8626 = vadd.f32 %v8361, %v8625
  %v8627 = vpop.f32.mrb[0].mxu0
  %8628 = vmatprep.mubr.f32.mxu0 0.0
  %8629 = vmatmul.mubr.f32.gmra.mrb[0].mxu0 %v8138
  %v8630 = vpop.f32.mrb[0].mxu0
  %v8631 = vadd.f32 %v8366, %v8630
  %v8632 = vpop.f32.mrb[0].mxu0
  %8633 = vmatprep.mubr.f32.mxu0 0.0
  %8634 = vmatmul.mubr.f32.gmra.mrb[0].mxu0 %v8141
  %v8635 = vpop.f32.mrb[0].mxu0
  %v8636 = vadd.f32 %v8371, %v8635
  %v8637 = vpop.f32.mrb[0].mxu0
  %8638 = vmatprep.mubr.f32.mxu0 0.0
  %8639 = vmatmul.mubr.f32.gmra.mrb[0].mxu0 %v8144
  %v8640 = vpop.f32.mrb[0].mxu0
  %v8641 = vadd.f32 %v8376, %v8640
  %v8642 = vpop.f32.mrb[0].mxu0
  %8643 = vmatprep.mubr.f32.mxu0 0.0
  %8644 = vmatmul.mubr.f32.gmra.mrb[0].mxu0 %v8147
  %v8645 = vpop.f32.mrb[0].mxu0
  %v8646 = vadd.f32 %v8381, %v8645
  %v8647 = vpop.f32.mrb[0].mxu0
  %8648 = vmatprep.mubr.f32.mxu0 0.0
  %8649 = vmatmul.mubr.f32.gmra.mrb[0].mxu0 %v8150
  %v8650 = vpop.f32.mrb[0].mxu0
  %v8651 = vadd.f32 %v8386, %v8650
  %v8652 = vpop.f32.mrb[0].mxu0
  %8653 = vmatprep.mubr.f32.mxu0 0.0
  %8654 = vmatmul.mubr.f32.gmra.mrb[0].mxu0 %v8153
  %v8655 = vpop.f32.mrb[0].mxu0
  %v8656 = vadd.f32 %v8391, %v8655
  %v8657 = vpop.f32.mrb[0].mxu0
  %8658 = vmatprep.mubr.f32.mxu0 0.0
  %8659 = vmatmul.mubr.f32.gmra.mrb[0].mxu0 %v8156
  %v8660 = vpop.f32.mrb[0].mxu0
  %v8661 = vadd.f32 %v8396, %v8660
  %v8662 = vpop.f32.mrb[0].mxu0
  %8663 = vmatprep.mubr.f32.mxu0 0.0
  %8664 = vmatmul.mubr.f32.gmra.mrb[0].mxu0 %v8159
  %v8665 = vpop.f32.mrb[0].mxu0
  %v8666 = vadd.f32 %v8401, %v8665
  %v8667 = vpop.f32.mrb[0].mxu0
  %8668 = vmatprep.mubr.f32.mxu0 0.0
  %8669 = vmatmul.mubr.f32.gmra.mrb[0].mxu0 %v8162
  %v8670 = vpop.f32.mrb[0].mxu0
  %v8671 = vadd.f32 %v8406, %v8670
  %v8672 = vpop.f32.mrb[0].mxu0
  %8673 = vmatprep.mubr.f32.mxu0 0.0
  %8674 = vmatmul.mubr.f32.gmra.mrb[0].mxu0 %v8165
  %v8675 = vpop.f32.mrb[0].mxu0
  %v8676 = vadd.f32 %v8411, %v8675
  %v8677 = vpop.f32.mrb[0].mxu0
  %8678 = vmatprep.mubr.f32.mxu0 0.0
  %8679 = vmatmul.mubr.f32.gmra.mrb[0].mxu0 %v8168
  %v8680 = vpop.f32.mrb[0].mxu0
  %v8681 = vadd.f32 %v8416, %v8680
  %v8682 = vpop.f32.mrb[0].mxu0
  %8683 = vmatprep.mubr.f32.mxu0 0.0
  %8684 = vmatmul.mubr.f32.gmra.mrb[0].mxu0 %v8171
  %v8685 = vpop.f32.mrb[0].mxu0
  %v8686 = vadd.f32 %v8421, %v8685
  %v8687 = vpop.f32.mrb[0].mxu0
  %8688 = vmatprep.mubr.f32.mxu0 0.0
  %8689 = vmatmul.mubr.f32.gmra.mrb[0].mxu0 %v8174
  %v8690 = vpop.f32.mrb[0].mxu0
  %v8691 = vadd.f32 %v8426, %v8690
  %v8692 = vpop.f32.mrb[0].mxu0
  %8693 = vmatprep.mubr.f32.mxu0 0.0
  %8694 = vmatmul.mubr.f32.gmra.mrb[0].mxu0 %v8177
  %v8695 = vpop.f32.mrb[0].mxu0
  %v8696 = vadd.f32 %v8431, %v8695
  %v8697 = vpop.f32.mrb[0].mxu0
  %8698 = vmatprep.mubr.f32.mxu0 0.0
  %8699 = vmatmul.mubr.f32.gmra.mrb[0].mxu0 %v8180
  %v8700 = vpop.f32.mrb[0].mxu0
  %v8701 = vadd.f32 %v8436, %v8700
  %v8702 = vpop.f32.mrb[0].mxu0
  %8703 = vmatprep.mubr.f32.mxu0 0.0
  %8704 = vmatmul.mubr.f32.gmra.mrb[0].mxu0 %v8183
  %v8705 = vpop.f32.mrb[0].mxu0
  %v8706 = vadd.f32 %v8441, %v8705
  %v8707 = vpop.f32.mrb[0].mxu0
  %8708 = vmatprep.mubr.f32.mxu0 0.0
  %8709 = vmatmul.mubr.f32.gmra.mrb[0].mxu0 %v8186
  %v8710 = vpop.f32.mrb[0].mxu0
  %v8711 = vadd.f32 %v8446, %v8710
  %v8712 = vpop.f32.mrb[0].mxu0
  %8713 = vmatprep.mubr.f32.mxu0 0.0
  %8714 = vmatmul.mubr.f32.gmra.mrb[0].mxu0 %v8189
  %v8715 = vpop.f32.mrb[0].mxu0
  %v8716 = vadd.f32 %v8451, %v8715
  %v8717 = vpop.f32.mrb[0].mxu0
  %8718 = vmatprep.mubr.f32.mxu0 0.0
  %8719 = vmatmul.mubr.f32.gmra.mrb[0].mxu0 %v8192
  %v8720 = vpop.f32.mrb[0].mxu0
  %v8721 = vadd.f32 %v8456, %v8720
  %v8722 = vpop.f32.mrb[0].mxu0
  %8723 = vdwg.mxu0
  %8724 = vst.msk [vmem:[%s3] sm:$0xff] %vm2486, %v8526
  %8725 = vst.msk [vmem:[%s3 + $0x8] sm:$0xff] %vm2486, %v8531
  %8726 = vst.msk [vmem:[%s3 + $0x10] sm:$0xff] %vm2486, %v8536
  %8727 = vst.msk [vmem:[%s3 + $0x18] sm:$0xff] %vm2486, %v8541
  %8728 = vst.msk [vmem:[%s3 + $0x20] sm:$0xff] %vm2486, %v8546
  %8729 = vst.msk [vmem:[%s3 + $0x28] sm:$0xff] %vm2486, %v8551
  %8730 = vst.msk [vmem:[%s3 + $0x30] sm:$0xff] %vm2486, %v8556
  %8731 = vst.msk [vmem:[%s3 + $0x38] sm:$0xff] %vm2486, %v8561
  %8732 = vst.msk [vmem:[%s3 + $0x40] sm:$0xff] %vm2486, %v8566
  %8733 = vst.msk [vmem:[%s3 + $0x48] sm:$0xff] %vm2486, %v8571
  %8734 = vst.msk [vmem:[%s3 + $0x50] sm:$0xff] %vm2486, %v8576
  %8735 = vst.msk [vmem:[%s3 + $0x58] sm:$0xff] %vm2486, %v8581
  %8736 = vst.msk [vmem:[%s3 + $0x60] sm:$0xff] %vm2486, %v8586
  %8737 = vst.msk [vmem:[%s3 + $0x68] sm:$0xff] %vm2486, %v8591
  %8738 = vst.msk [vmem:[%s3 + $0x70] sm:$0xff] %vm2486, %v8596
  %8739 = vst.msk [vmem:[%s3 + $0x78] sm:$0xff] %vm2486, %v8601
  %8740 = vst.msk [vmem:[%s3 + $0x80] sm:$0xff] %vm2486, %v8606
  %8741 = vst.msk [vmem:[%s3 + $0x88] sm:$0xff] %vm2486, %v8611
  %8742 = vst.msk [vmem:[%s3 + $0x90] sm:$0xff] %vm2486, %v8616
  %8743 = vst.msk [vmem:[%s3 + $0x98] sm:$0xff] %vm2486, %v8621
  %8744 = vst.msk [vmem:[%s3 + $0xa0] sm:$0xff] %vm2486, %v8626
  %8745 = vst.msk [vmem:[%s3 + $0xa8] sm:$0xff] %vm2486, %v8631
  %8746 = vst.msk [vmem:[%s3 + $0xb0] sm:$0xff] %vm2486, %v8636
  %8747 = vst.msk [vmem:[%s3 + $0xb8] sm:$0xff] %vm2486, %v8641
  %8748 = vst.msk [vmem:[%s3 + $0xc0] sm:$0xff] %vm2486, %v8646
  %8749 = vst.msk [vmem:[%s3 + $0xc8] sm:$0xff] %vm2486, %v8651
  %8750 = vst.msk [vmem:[%s3 + $0xd0] sm:$0xff] %vm2486, %v8656
  %8751 = vst.msk [vmem:[%s3 + $0xd8] sm:$0xff] %vm2486, %v8661
  %8752 = vst.msk [vmem:[%s3 + $0xe0] sm:$0xff] %vm2486, %v8666
  %8753 = vst.msk [vmem:[%s3 + $0xe8] sm:$0xff] %vm2486, %v8671
  %8754 = vst.msk [vmem:[%s3 + $0xf0] sm:$0xff] %vm2486, %v8676
  %8755 = vst.msk [vmem:[%s3 + $0xf8] sm:$0xff] %vm2486, %v8681
  %8756 = vst.msk [vmem:[%s3 + $0x100] sm:$0xff] %vm2486, %v8686
  %8757 = vst.msk [vmem:[%s3 + $0x108] sm:$0xff] %vm2486, %v8691
  %8758 = vst.msk [vmem:[%s3 + $0x110] sm:$0xff] %vm2486, %v8696
  %8759 = vst.msk [vmem:[%s3 + $0x118] sm:$0xff] %vm2486, %v8701
  %8760 = vst.msk [vmem:[%s3 + $0x120] sm:$0xff] %vm2486, %v8706
  %8761 = vst.msk [vmem:[%s3 + $0x128] sm:$0xff] %vm2486, %v8711
  %8762 = vst.msk [vmem:[%s3 + $0x130] sm:$0xff] %vm2486, %v8716
  %8763 = vst.msk [vmem:[%s3 + $0x138] sm:$0xff] %vm2486, %v8721
  // Predicated region
  $region14: #{multihead_attention_forward.1} parent=0 // pred_check
    _
  $region15: #{multihead_attention_forward.1} parent=0 // pred_check_branch
    %8765 = sbr.rel (0) target = $region17
  $region16: #{multihead_attention_forward.1} parent=0 // pred_region
    _
  $region17: #{multihead_attention_forward.1} parent=0 // pred_fallthru
    _
  // Predicated region
  $region18: #{multihead_attention_forward.1} parent=0 // pred_check
    _
  $region19: #{multihead_attention_forward.1} parent=0 // pred_check_branch
    %8767 = sbr.rel (0) target = $region21
  $region20: #{multihead_attention_forward.1} parent=0 // pred_region
    _
  $region21: #{multihead_attention_forward.1} parent=0 // pred_fallthru
    _
  // Predicated region
  $region22: #{multihead_attention_forward.1} parent=0 // pred_check
    _
  $region23: #{multihead_attention_forward.1} parent=0 // pred_check_branch
    %8769 = sbr.rel (0) target = $region25
  $region24: #{multihead_attention_forward.1} parent=0 // pred_region
    _
  $region25: #{multihead_attention_forward.1} parent=0 // pred_fallthru
    _
  // Predicated region
  $region26: #{multihead_attention_forward.1} parent=0 // pred_check
    _
  $region27: #{multihead_attention_forward.1} parent=0 // pred_check_branch
    %8771 = sbr.rel (0) target = $region29
  $region28: #{multihead_attention_forward.1} parent=0 // pred_region
    _
  $region29: #{multihead_attention_forward.1} parent=0 // pred_fallthru
    _

</llo_original>
